<compile_context>
chip_gen: v6e
topology: v6e:2x2x1
jax: 0.10.0
libtpu: 0.0.40
codegen_flags: <defaults>
</compile_context>

<pallas_src>
import jax
import jax.numpy as jnp
from jax.experimental import pallas as pl
from jax.experimental.pallas import tpu as pltpu

K1PAD = 160  # layer-1 im2col features: 3*7*7 = 147, zero-padded to 160


# ----------------------------------------------------------------------------
# Fused kernel: the whole MyNet forward for ONE image per grid step.
#   p1_ref : (4, 64, 160)  bf16  layer-1 patches, parity-grouped, 8x8-padded rows
#   w1_ref : (160, 128)    bf16  folded conv1+BN weight (Kpad x Cpad)
#   w2_ref : (25, 128, 128) bf16 folded conv2+BN weight per 5x5 kernel position
#   w3_ref : (9, 128, 128)  bf16 folded conv3+BN weight per 3x3 kernel position
#   wl_ref : (10, 64, 128)  bf16 Linear weight permuted to (j, oh*8+ow, c), zero
#                                at padded spatial rows (oh==7 or ow==7)
#   sh*_ref: (1, 128) f32   folded BN/bias shifts (zero in padded channels)
#   bl_ref : (1, 10)  f32   Linear bias
#   out_ref: (1, 10)  f32   logits for this image
#   f1_ref : (4, 10, 10, 128) f32 scratch: parity-split, padded layer-1 output
#   f2_ref : (10, 10, 128)    f32 scratch: padded layer-2 output
# ----------------------------------------------------------------------------
def _mynet_kernel(p1_ref, w1_ref, w2_ref, w3_ref, wl_ref,
                  sh1_ref, sh2_ref, sh3_ref, bl_ref,
                  out_ref, f1_ref, f2_ref):
    # Re-zero the activation scratch every grid step: the borders implement the
    # convs' zero padding and the scratch persists across grid iterations.
    f1_ref[...] = jnp.zeros(f1_ref.shape, f1_ref.dtype)
    f2_ref[...] = jnp.zeros(f2_ref.shape, f2_ref.dtype)

    # ---- L1: Conv(3->32, 7x7, s2, p1) + BN + ReLU --------------------------
    # One MXU matmul per output-parity group (M = 8*8, padded rows are junk and
    # get dropped by the [:7,:7] store).  Real f1 data lands at [1:8, 1:8].
    for g in range(4):
        y = jnp.dot(p1_ref[g], w1_ref[...], preferred_element_type=jnp.float32)
        y = jnp.maximum(y + sh1_ref[...], 0.0)            # (64,128) f32
        y = y.reshape(8, 8, 128)                          # tile-aligned reshape
        f1_ref[g, 1:8, 1:8, :] = y[:7, :7, :]

    # ---- L2: Conv(32->64, 5x5, s2, p2) + BN + ReLU -------------------------
    # Stride-2 im2col via the parity buffers: kernel position (ki,kj) reads a
    # unit-stride (8,8,128) window from the (ki%2, kj%2) parity buffer.
    acc = jnp.zeros((64, 128), jnp.float32)
    for ki in range(5):
        for kj in range(5):
            g = (ki % 2) * 2 + (kj % 2)
            r0, c0 = ki // 2, kj // 2
            lhs = f1_ref[g, r0:r0 + 8, c0:c0 + 8, :]      # (8,8,128) f32
            lhs = lhs.reshape(64, 128).astype(jnp.bfloat16)
            acc = acc + jnp.dot(lhs, w2_ref[ki * 5 + kj],
                                preferred_element_type=jnp.float32)
    y2 = jnp.maximum(acc + sh2_ref[...], 0.0).reshape(8, 8, 128)
    f2_ref[1:8, 1:8, :] = y2[:7, :7, :]                   # drop junk row/col 7

    # ---- L3: Conv(64->128, 3x3, s1, p1) + BN + ReLU ------------------------
    acc = jnp.zeros((64, 128), jnp.float32)
    for ki in range(3):
        for kj in range(3):
            lhs = f2_ref[ki:ki + 8, kj:kj + 8, :].reshape(64, 128)
            acc = acc + jnp.dot(lhs.astype(jnp.bfloat16), w3_ref[ki * 3 + kj],
                                preferred_element_type=jnp.float32)
    f3 = jnp.maximum(acc + sh3_ref[...], 0.0)             # (64,128) f32

    # ---- Linear(6272 -> 10) -------------------------------------------------
    # 10 Frobenius inner products on the VPU; the permuted weight is zero at the
    # padded spatial rows, so the junk rows of f3 contribute nothing.
    lane = jax.lax.broadcasted_iota(jnp.int32, (1, 10), 1)
    row = bl_ref[...]                                     # (1,10) f32
    for j in range(10):
        s = jnp.sum(f3 * wl_ref[j].astype(jnp.float32), keepdims=True)  # (1,1)
        row = row + jnp.where(lane == j, s, 0.0)
    out_ref[...] = row


def _fused_pallas_forward(p1, fp):
    n = p1.shape[0]
    whole = lambda a: pl.BlockSpec(a.shape, lambda b, nd=a.ndim: (0,) * nd)
    out = pl.pallas_call(
        _mynet_kernel,
        out_shape=jax.ShapeDtypeStruct((n, 1, 10), jnp.float32),
        grid=(n,),
        in_specs=[
            pl.BlockSpec((None, 4, 64, K1PAD), lambda b: (b, 0, 0, 0)),  # per-image patches
            whole(fp["w1"]), whole(fp["w2"]), whole(fp["w3"]), whole(fp["wl"]),
            whole(fp["sh1"]), whole(fp["sh2"]), whole(fp["sh3"]), whole(fp["bl"]),
        ],
        out_specs=pl.BlockSpec((None, 1, 10), lambda b: (b, 0, 0)),
        scratch_shapes=[
            pltpu.VMEM((4, 10, 10, 128), jnp.float32),   # parity-split padded f1
            pltpu.VMEM((10, 10, 128), jnp.float32),      # padded f2
        ],
        compiler_params=pltpu.CompilerParams(
            dimension_semantics=("parallel",),           # batch -> both TCs on v7x
            vmem_limit_bytes=32 * 1024 * 1024,           # ~3 MiB actually used
        ),
    )(p1, fp["w1"], fp["w2"], fp["w3"], fp["wl"],
      fp["sh1"], fp["sh2"], fp["sh3"], fp["bl"])
    return out.reshape(n, 10)


# ----------------------------------------------------------------------------
# Wrapper: layer-1 im2col (one XLA op) + parity/8x8 reorder, then the fused call.
# ----------------------------------------------------------------------------
@jax.jit
def mynet_forward(x_nchw, fp):
    n = x_nchw.shape[0]
    x = jnp.transpose(x_nchw, (0, 2, 3, 1)).astype(jnp.bfloat16)       # NHWC, bf16
    # Feature order of the patches is (cin, kh, kw) -- matches torch W.reshape(cout,-1).
    patches = jax.lax.conv_general_dilated_patches(
        x, (7, 7), (2, 2), ((1, 1), (1, 1)),
        dimension_numbers=("NHWC", "HWIO", "NHWC"))                     # (N,14,14,147)
    # Group the 14x14 output positions by (row parity, col parity) and pad each
    # 7x7 group to 8x8 rows (zeros) + pad K 147 -> 160, so the kernel writes the
    # parity buffers with unit-stride stores and tile-aligned reshapes only.
    p1 = patches.reshape(n, 7, 2, 7, 2, 147)
    p1 = jnp.transpose(p1, (0, 2, 4, 1, 3, 5))                          # (N,2,2,7,7,147)
    p1 = jnp.pad(p1, ((0, 0), (0, 0), (0, 0), (0, 1), (0, 1), (0, K1PAD - 147)))
    p1 = p1.reshape(n, 4, 64, K1PAD)
    return _fused_pallas_forward(p1, fp)


# ----------------------------------------------------------------------------
# One-time offline parameter fold: BN into conv weights, channel/K zero padding,
# per-kernel-position weight blocks, bf16 casts, Linear weight permutation.
# ----------------------------------------------------------------------------
def fold_params(p, eps=1e-5):
    fp = {}
    # L1: (cout=32) -> weight (K1PAD, 128)
    s1 = p["g1"] / jnp.sqrt(p["v1"] + eps)
    w1 = p["W1"].reshape(32, -1).T * s1[None, :]                        # (147, 32)
    fp["w1"] = jnp.pad(w1, ((0, K1PAD - 147), (0, 96))).astype(jnp.bfloat16)
    sh1 = (p["b1"] - p["m1"]) * s1 + p["be1"]
    fp["sh1"] = jnp.pad(sh1.reshape(1, -1), ((0, 0), (0, 96))).astype(jnp.float32)
    # L2: per kernel position (ki*5+kj) -> (cin_pad=128, cout_pad=128)
    s2 = p["g2"] / jnp.sqrt(p["v2"] + eps)
    w2 = jnp.transpose(p["W2"] * s2[:, None, None, None], (2, 3, 1, 0))  # (5,5,32,64)
    w2 = jnp.pad(w2, ((0, 0), (0, 0), (0, 96), (0, 64)))                 # (5,5,128,128)
    fp["w2"] = w2.reshape(25, 128, 128).astype(jnp.bfloat16)
    sh2 = (p["b2"] - p["m2"]) * s2 + p["be2"]
    fp["sh2"] = jnp.pad(sh2.reshape(1, -1), ((0, 0), (0, 64))).astype(jnp.float32)
    # L3: per kernel position (ki*3+kj) -> (128, 128)
    s3 = p["g3"] / jnp.sqrt(p["v3"] + eps)
    w3 = jnp.transpose(p["W3"] * s3[:, None, None, None], (2, 3, 1, 0))  # (3,3,64,128)
    w3 = jnp.pad(w3, ((0, 0), (0, 0), (0, 64), (0, 0)))                  # (3,3,128,128)
    fp["w3"] = w3.reshape(9, 128, 128).astype(jnp.bfloat16)
    fp["sh3"] = ((p["b3"] - p["m3"]) * s3 + p["be3"]).reshape(1, -1).astype(jnp.float32)
    # Linear: WL (10, 6272=c*49+h*7+w) -> (10, oh*8+ow, c), zero at padded rows.
    wl = p["WL"].reshape(10, 128, 7, 7).transpose(0, 2, 3, 1)            # (10,7,7,128)
    wl = jnp.pad(wl, ((0, 0), (0, 1), (0, 1), (0, 0)))                   # (10,8,8,128)
    fp["wl"] = wl.reshape(10, 64, 128).astype(jnp.bfloat16)
    fp["bl"] = p["bL"].reshape(1, 10).astype(jnp.float32)
    return fp


# ----------------------------------------------------------------------------
# Plain f32 XLA reference (conv -> BN(eval) -> relu, flatten NCHW, linear).
# ----------------------------------------------------------------------------
@jax.jit
def reference_forward(x, p, eps=1e-5):
    def block(h, W, b, g, be, m, v, stride, pad):
        h = jax.lax.conv_general_dilated(
            h, W, (stride, stride), ((pad, pad), (pad, pad)),
            dimension_numbers=("NCHW", "OIHW", "NCHW"),
            precision=jax.lax.Precision.HIGHEST)
        h = h + b[None, :, None, None]
        scale = g / jnp.sqrt(v + eps)
        h = (h - m[None, :, None, None]) * scale[None, :, None, None] + be[None, :, None, None]
        return jnp.maximum(h, 0.0)

    h = block(x, p["W1"], p["b1"], p["g1"], p["be1"], p["m1"], p["v1"], 2, 1)
    h = block(h, p["W2"], p["b2"], p["g2"], p["be2"], p["m2"], p["v2"], 2, 2)
    h = block(h, p["W3"], p["b3"], p["g3"], p["be3"], p["m3"], p["v3"], 1, 1)
    flat = h.reshape(h.shape[0], -1)
    return jnp.dot(flat, p["WL"].T, precision=jax.lax.Precision.HIGHEST) + p["bL"]


def init_params(key):
    ks = jax.random.split(key, 16)
    def nrm(k, shape, s):
        return (s * jax.random.normal(k, shape)).astype(jnp.float32)
    p = {}
    # L1: Conv2d(3, 32, 7, 2, 1) + BatchNorm2d(32)
    p["W1"] = nrm(ks[0], (32, 3, 7, 7), 0.05); p["b1"] = nrm(ks[1], (32,), 0.05)
    p["g1"] = 1.0 + nrm(ks[2], (32,), 0.1); p["be1"] = nrm(ks[3], (32,), 0.1)
    p["m1"] = nrm(ks[4], (32,), 0.1); p["v1"] = 1.0 + jnp.abs(nrm(ks[5], (32,), 0.1))
    # L2: Conv2d(32, 64, 5, 2, 2) + BatchNorm2d(64)
    p["W2"] = nrm(ks[6], (64, 32, 5, 5), 0.03); p["b2"] = nrm(ks[7], (64,), 0.05)
    p["g2"] = 1.0 + nrm(ks[8], (64,), 0.1); p["be2"] = nrm(ks[9], (64,), 0.1)
    p["m2"] = nrm(ks[10], (64,), 0.1); p["v2"] = 1.0 + jnp.abs(nrm(ks[11], (64,), 0.1))
    # L3: Conv2d(64, 128, 3, 1, 1) + BatchNorm2d(128)
    p["W3"] = nrm(ks[12], (128, 64, 3, 3), 0.03); p["b3"] = nrm(ks[13], (128,), 0.05)
    k_a, k_b, k_c, k_d = jax.random.split(ks[14], 4)
    p["g3"] = 1.0 + nrm(k_a, (128,), 0.1); p["be3"] = nrm(k_b, (128,), 0.1)
    p["m3"] = nrm(k_c, (128,), 0.1); p["v3"] = 1.0 + jnp.abs(nrm(k_d, (128,), 0.1))
    # L: Linear(6272, 10)
    k_w, k_bb = jax.random.split(ks[15], 2)
    p["WL"] = nrm(k_w, (10, 6272), 0.02); p["bL"] = nrm(k_bb, (10,), 0.02)
    return p


if __name__ == "__main__":
    key = jax.random.PRNGKey(0)
    k_x, k_p = jax.random.split(key)
    # Linear(6272 = 128*7*7) implies a 3x32x32 (CIFAR-like) input.
    x = jax.random.normal(k_x, (2, 3, 32, 32), dtype=jnp.float32)
    params = init_params(k_p)
    # TODO(synk): BatchNorm runs in eval mode with synthetic running stats (the
    # reference script loads a trained checkpoint 'model1.pth', not replicated here).
    fp = fold_params(params)     # one-time offline fold
    out = jax.block_until_ready(mynet_forward(x, fp))
    assert out.shape == (2, 10) and out.dtype == jnp.float32
    # One-off numerical check vs. the plain f32 XLA reference: validates the BN fold,
    # the im2col feature ordering and the parity-buffer indexing (bf16 tolerance).
    ref = jax.block_until_ready(reference_forward(x, params))
    err = float(jnp.max(jnp.abs(out - ref)))
    scale = float(jnp.max(jnp.abs(ref))) + 1e-6
    assert err <= 0.2 * scale, f"kernel/reference mismatch: err={err:.5f} scale={scale:.5f}"
    print("KERNEL_OK")
</pallas_src>

<mosaic_0001>
module attributes {stable_mosaic.version = 11 : i64} {
  func.func @_mynet_kernel(%arg0: i32, %arg1: memref<1x4x64x160xbf16, #tpu.memory_space<vmem>>, %arg2: memref<160x128xbf16, #tpu.memory_space<vmem>>, %arg3: memref<25x128x128xbf16, #tpu.memory_space<vmem>>, %arg4: memref<9x128x128xbf16, #tpu.memory_space<vmem>>, %arg5: memref<10x64x128xbf16, #tpu.memory_space<vmem>>, %arg6: memref<1x128xf32, #tpu.memory_space<vmem>>, %arg7: memref<1x128xf32, #tpu.memory_space<vmem>>, %arg8: memref<1x128xf32, #tpu.memory_space<vmem>>, %arg9: memref<1x10xf32, #tpu.memory_space<vmem>>, %arg10: memref<1x1x10xf32, #tpu.memory_space<vmem>>, %arg11: memref<4x10x10x128xf32, #tpu.memory_space<vmem>>, %arg12: memref<10x10x128xf32, #tpu.memory_space<vmem>>) attributes {dimension_semantics = [#tpu.dimension_semantics<parallel>], iteration_bounds = array<i64: 2>, scalar_prefetch = 0 : i64, scratch_operands = 2 : i64, tpu.core_type = #tpu.core_type<tc>, window_params = [{transform_indices = @transform_0, window_bounds = array<i64: 1, 4, 64, 160>}, {pipeline_mode = #tpu.pipeline_mode<synchronous>, transform_indices = @transform_1, window_bounds = array<i64: 160, 128>}, {pipeline_mode = #tpu.pipeline_mode<synchronous>, transform_indices = @transform_2, window_bounds = array<i64: 25, 128, 128>}, {pipeline_mode = #tpu.pipeline_mode<synchronous>, transform_indices = @transform_3, window_bounds = array<i64: 9, 128, 128>}, {pipeline_mode = #tpu.pipeline_mode<synchronous>, transform_indices = @transform_4, window_bounds = array<i64: 10, 64, 128>}, {pipeline_mode = #tpu.pipeline_mode<synchronous>, transform_indices = @transform_5, window_bounds = array<i64: 1, 128>}, {pipeline_mode = #tpu.pipeline_mode<synchronous>, transform_indices = @transform_6, window_bounds = array<i64: 1, 128>}, {pipeline_mode = #tpu.pipeline_mode<synchronous>, transform_indices = @transform_7, window_bounds = array<i64: 1, 128>}, {pipeline_mode = #tpu.pipeline_mode<synchronous>, transform_indices = @transform_8, window_bounds = array<i64: 1, 10>}, {transform_indices = @transform_9, window_bounds = array<i64: 1, 1, 10>}]} {
    %cst = arith.constant 0.000000e+00 : f32
    %0 = vector.broadcast %cst : f32 to vector<4x10x10x128xf32>
    %c0 = arith.constant 0 : index
    %c0_0 = arith.constant 0 : index
    %c0_1 = arith.constant 0 : index
    %c0_2 = arith.constant 0 : index
    %1 = vector.load %arg11[%c0, %c0_0, %c0_1, %c0_2] : memref<4x10x10x128xf32, #tpu.memory_space<vmem>>, vector<4x10x10x128xf32>
    tpu.vector_store %arg11[%c0, %c0_0, %c0_1, %c0_2], %0 {strides = array<i32>} : memref<4x10x10x128xf32, #tpu.memory_space<vmem>>, vector<4x10x10x128xf32>,
    %cst_3 = arith.constant 0.000000e+00 : f32
    %2 = vector.broadcast %cst_3 : f32 to vector<10x10x128xf32>
    %c0_4 = arith.constant 0 : index
    %c0_5 = arith.constant 0 : index
    %c0_6 = arith.constant 0 : index
    %3 = vector.load %arg12[%c0_4, %c0_5, %c0_6] : memref<10x10x128xf32, #tpu.memory_space<vmem>>, vector<10x10x128xf32>
    tpu.vector_store %arg12[%c0_4, %c0_5, %c0_6], %2 {strides = array<i32>} : memref<10x10x128xf32, #tpu.memory_space<vmem>>, vector<10x10x128xf32>,
    %c0_7 = arith.constant 0 : index
    %c0_8 = arith.constant 0 : index
    %c0_9 = arith.constant 0 : index
    %c0_10 = arith.constant 0 : index
    %4 = vector.load %arg1[%c0_7, %c0_8, %c0_9, %c0_10] : memref<1x4x64x160xbf16, #tpu.memory_space<vmem>>, vector<1x1x64x160xbf16>
    %5 = vector.shape_cast %4 : vector<1x1x64x160xbf16> to vector<64x160xbf16>
    %c0_11 = arith.constant 0 : index
    %c0_12 = arith.constant 0 : index
    %6 = vector.load %arg2[%c0_11, %c0_12] : memref<160x128xbf16, #tpu.memory_space<vmem>>, vector<160x128xbf16>
    %cst_13 = arith.constant dense<0.000000e+00> : vector<64x128xf32>
    %7 = tpu.matmul %5, %6, %cst_13 {dimension_numbers = #tpu.dot_dimension_numbers<[1], [0], [0], [1], [0, 0, 1, 1], [], []>} : vector<64x160xbf16>, vector<160x128xbf16>, vector<64x128xf32> -> vector<64x128xf32>
    %c0_14 = arith.constant 0 : index
    %c0_15 = arith.constant 0 : index
    %8 = vector.load %arg6[%c0_14, %c0_15] : memref<1x128xf32, #tpu.memory_space<vmem>>, vector<1x128xf32>
    %9 = vector.broadcast %8 : vector<1x128xf32> to vector<64x128xf32>
    %10 = arith.addf %7, %9 : vector<64x128xf32>
    %cst_16 = arith.constant 0.000000e+00 : f32
    %11 = vector.broadcast %cst_16 : f32 to vector<64x128xf32>
    %12 = arith.maximumf %10, %11 : vector<64x128xf32>
    %13 = vector.shape_cast %12 : vector<64x128xf32> to vector<8x8x128xf32>
    %14 = vector.extract_strided_slice %13 {offsets = [0, 0, 0], sizes = [7, 7, 128], strides = [1, 1, 1]} : vector<8x8x128xf32> to vector<7x7x128xf32>
    %c0_17 = arith.constant 0 : index
    %c1 = arith.constant 1 : index
    %c1_18 = arith.constant 1 : index
    %c0_19 = arith.constant 0 : index
    %15 = vector.load %arg11[%c0_17, %c1, %c1_18, %c0_19] : memref<4x10x10x128xf32, #tpu.memory_space<vmem>>, vector<1x7x7x128xf32>
    %16 = vector.shape_cast %15 : vector<1x7x7x128xf32> to vector<7x7x128xf32>
    %17 = vector.shape_cast %14 : vector<7x7x128xf32> to vector<1x7x7x128xf32>
    tpu.vector_store %arg11[%c0_17, %c1, %c1_18, %c0_19], %17 {strides = array<i32>} : memref<4x10x10x128xf32, #tpu.memory_space<vmem>>, vector<1x7x7x128xf32>,
    %c0_20 = arith.constant 0 : index
    %c1_21 = arith.constant 1 : index
    %c0_22 = arith.constant 0 : index
    %c0_23 = arith.constant 0 : index
    %18 = vector.load %arg1[%c0_20, %c1_21, %c0_22, %c0_23] : memref<1x4x64x160xbf16, #tpu.memory_space<vmem>>, vector<1x1x64x160xbf16>
    %19 = vector.shape_cast %18 : vector<1x1x64x160xbf16> to vector<64x160xbf16>
    %c0_24 = arith.constant 0 : index
    %c0_25 = arith.constant 0 : index
    %20 = vector.load %arg2[%c0_24, %c0_25] : memref<160x128xbf16, #tpu.memory_space<vmem>>, vector<160x128xbf16>
    %cst_26 = arith.constant dense<0.000000e+00> : vector<64x128xf32>
    %21 = tpu.matmul %19, %20, %cst_26 {dimension_numbers = #tpu.dot_dimension_numbers<[1], [0], [0], [1], [0, 0, 1, 1], [], []>} : vector<64x160xbf16>, vector<160x128xbf16>, vector<64x128xf32> -> vector<64x128xf32>
    %c0_27 = arith.constant 0 : index
    %c0_28 = arith.constant 0 : index
    %22 = vector.load %arg6[%c0_27, %c0_28] : memref<1x128xf32, #tpu.memory_space<vmem>>, vector<1x128xf32>
    %23 = vector.broadcast %22 : vector<1x128xf32> to vector<64x128xf32>
    %24 = arith.addf %21, %23 : vector<64x128xf32>
    %cst_29 = arith.constant 0.000000e+00 : f32
    %25 = vector.broadcast %cst_29 : f32 to vector<64x128xf32>
    %26 = arith.maximumf %24, %25 : vector<64x128xf32>
    %27 = vector.shape_cast %26 : vector<64x128xf32> to vector<8x8x128xf32>
    %28 = vector.extract_strided_slice %27 {offsets = [0, 0, 0], sizes = [7, 7, 128], strides = [1, 1, 1]} : vector<8x8x128xf32> to vector<7x7x128xf32>
    %c1_30 = arith.constant 1 : index
    %c1_31 = arith.constant 1 : index
    %c1_32 = arith.constant 1 : index
    %c0_33 = arith.constant 0 : index
    %29 = vector.load %arg11[%c1_30, %c1_31, %c1_32, %c0_33] : memref<4x10x10x128xf32, #tpu.memory_space<vmem>>, vector<1x7x7x128xf32>
    %30 = vector.shape_cast %29 : vector<1x7x7x128xf32> to vector<7x7x128xf32>
    %31 = vector.shape_cast %28 : vector<7x7x128xf32> to vector<1x7x7x128xf32>
    tpu.vector_store %arg11[%c1_30, %c1_31, %c1_32, %c0_33], %31 {strides = array<i32>} : memref<4x10x10x128xf32, #tpu.memory_space<vmem>>, vector<1x7x7x128xf32>,
    %c0_34 = arith.constant 0 : index
    %c2 = arith.constant 2 : index
    %c0_35 = arith.constant 0 : index
    %c0_36 = arith.constant 0 : index
    %32 = vector.load %arg1[%c0_34, %c2, %c0_35, %c0_36] : memref<1x4x64x160xbf16, #tpu.memory_space<vmem>>, vector<1x1x64x160xbf16>
    %33 = vector.shape_cast %32 : vector<1x1x64x160xbf16> to vector<64x160xbf16>
    %c0_37 = arith.constant 0 : index
    %c0_38 = arith.constant 0 : index
    %34 = vector.load %arg2[%c0_37, %c0_38] : memref<160x128xbf16, #tpu.memory_space<vmem>>, vector<160x128xbf16>
    %cst_39 = arith.constant dense<0.000000e+00> : vector<64x128xf32>
    %35 = tpu.matmul %33, %34, %cst_39 {dimension_numbers = #tpu.dot_dimension_numbers<[1], [0], [0], [1], [0, 0, 1, 1], [], []>} : vector<64x160xbf16>, vector<160x128xbf16>, vector<64x128xf32> -> vector<64x128xf32>
    %c0_40 = arith.constant 0 : index
    %c0_41 = arith.constant 0 : index
    %36 = vector.load %arg6[%c0_40, %c0_41] : memref<1x128xf32, #tpu.memory_space<vmem>>, vector<1x128xf32>
    %37 = vector.broadcast %36 : vector<1x128xf32> to vector<64x128xf32>
    %38 = arith.addf %35, %37 : vector<64x128xf32>
    %cst_42 = arith.constant 0.000000e+00 : f32
    %39 = vector.broadcast %cst_42 : f32 to vector<64x128xf32>
    %40 = arith.maximumf %38, %39 : vector<64x128xf32>
    %41 = vector.shape_cast %40 : vector<64x128xf32> to vector<8x8x128xf32>
    %42 = vector.extract_strided_slice %41 {offsets = [0, 0, 0], sizes = [7, 7, 128], strides = [1, 1, 1]} : vector<8x8x128xf32> to vector<7x7x128xf32>
    %c2_43 = arith.constant 2 : index
    %c1_44 = arith.constant 1 : index
    %c1_45 = arith.constant 1 : index
    %c0_46 = arith.constant 0 : index
    %43 = vector.load %arg11[%c2_43, %c1_44, %c1_45, %c0_46] : memref<4x10x10x128xf32, #tpu.memory_space<vmem>>, vector<1x7x7x128xf32>
    %44 = vector.shape_cast %43 : vector<1x7x7x128xf32> to vector<7x7x128xf32>
    %45 = vector.shape_cast %42 : vector<7x7x128xf32> to vector<1x7x7x128xf32>
    tpu.vector_store %arg11[%c2_43, %c1_44, %c1_45, %c0_46], %45 {strides = array<i32>} : memref<4x10x10x128xf32, #tpu.memory_space<vmem>>, vector<1x7x7x128xf32>,
    %c0_47 = arith.constant 0 : index
    %c3 = arith.constant 3 : index
    %c0_48 = arith.constant 0 : index
    %c0_49 = arith.constant 0 : index
    %46 = vector.load %arg1[%c0_47, %c3, %c0_48, %c0_49] : memref<1x4x64x160xbf16, #tpu.memory_space<vmem>>, vector<1x1x64x160xbf16>
    %47 = vector.shape_cast %46 : vector<1x1x64x160xbf16> to vector<64x160xbf16>
    %c0_50 = arith.constant 0 : index
    %c0_51 = arith.constant 0 : index
    %48 = vector.load %arg2[%c0_50, %c0_51] : memref<160x128xbf16, #tpu.memory_space<vmem>>, vector<160x128xbf16>
    %cst_52 = arith.constant dense<0.000000e+00> : vector<64x128xf32>
    %49 = tpu.matmul %47, %48, %cst_52 {dimension_numbers = #tpu.dot_dimension_numbers<[1], [0], [0], [1], [0, 0, 1, 1], [], []>} : vector<64x160xbf16>, vector<160x128xbf16>, vector<64x128xf32> -> vector<64x128xf32>
    %c0_53 = arith.constant 0 : index
    %c0_54 = arith.constant 0 : index
    %50 = vector.load %arg6[%c0_53, %c0_54] : memref<1x128xf32, #tpu.memory_space<vmem>>, vector<1x128xf32>
    %51 = vector.broadcast %50 : vector<1x128xf32> to vector<64x128xf32>
    %52 = arith.addf %49, %51 : vector<64x128xf32>
    %cst_55 = arith.constant 0.000000e+00 : f32
    %53 = vector.broadcast %cst_55 : f32 to vector<64x128xf32>
    %54 = arith.maximumf %52, %53 : vector<64x128xf32>
    %55 = vector.shape_cast %54 : vector<64x128xf32> to vector<8x8x128xf32>
    %56 = vector.extract_strided_slice %55 {offsets = [0, 0, 0], sizes = [7, 7, 128], strides = [1, 1, 1]} : vector<8x8x128xf32> to vector<7x7x128xf32>
    %c3_56 = arith.constant 3 : index
    %c1_57 = arith.constant 1 : index
    %c1_58 = arith.constant 1 : index
    %c0_59 = arith.constant 0 : index
    %57 = vector.load %arg11[%c3_56, %c1_57, %c1_58, %c0_59] : memref<4x10x10x128xf32, #tpu.memory_space<vmem>>, vector<1x7x7x128xf32>
    %58 = vector.shape_cast %57 : vector<1x7x7x128xf32> to vector<7x7x128xf32>
    %59 = vector.shape_cast %56 : vector<7x7x128xf32> to vector<1x7x7x128xf32>
    tpu.vector_store %arg11[%c3_56, %c1_57, %c1_58, %c0_59], %59 {strides = array<i32>} : memref<4x10x10x128xf32, #tpu.memory_space<vmem>>, vector<1x7x7x128xf32>,
    %cst_60 = arith.constant 0.000000e+00 : f32
    %60 = vector.broadcast %cst_60 : f32 to vector<64x128xf32>
    %c0_61 = arith.constant 0 : index
    %c0_62 = arith.constant 0 : index
    %c0_63 = arith.constant 0 : index
    %c0_64 = arith.constant 0 : index
    %61 = vector.load %arg11[%c0_61, %c0_62, %c0_63, %c0_64] : memref<4x10x10x128xf32, #tpu.memory_space<vmem>>, vector<1x8x8x128xf32>
    %62 = vector.shape_cast %61 : vector<1x8x8x128xf32> to vector<8x8x128xf32>
    %63 = vector.shape_cast %62 : vector<8x8x128xf32> to vector<64x128xf32>
    %64 = arith.truncf %63 : vector<64x128xf32> to vector<64x128xbf16>
    %c0_65 = arith.constant 0 : index
    %c0_66 = arith.constant 0 : index
    %c0_67 = arith.constant 0 : index
    %65 = vector.load %arg3[%c0_65, %c0_66, %c0_67] : memref<25x128x128xbf16, #tpu.memory_space<vmem>>, vector<1x128x128xbf16>
    %66 = vector.shape_cast %65 : vector<1x128x128xbf16> to vector<128x128xbf16>
    %cst_68 = arith.constant dense<0.000000e+00> : vector<64x128xf32>
    %67 = tpu.matmul %64, %66, %cst_68 {dimension_numbers = #tpu.dot_dimension_numbers<[1], [0], [0], [1], [0, 0, 1, 1], [], []>} : vector<64x128xbf16>, vector<128x128xbf16>, vector<64x128xf32> -> vector<64x128xf32>
    %68 = arith.addf %60, %67 : vector<64x128xf32>
    %c1_69 = arith.constant 1 : index
    %c0_70 = arith.constant 0 : index
    %c0_71 = arith.constant 0 : index
    %c0_72 = arith.constant 0 : index
    %69 = vector.load %arg11[%c1_69, %c0_70, %c0_71, %c0_72] : memref<4x10x10x128xf32, #tpu.memory_space<vmem>>, vector<1x8x8x128xf32>
    %70 = vector.shape_cast %69 : vector<1x8x8x128xf32> to vector<8x8x128xf32>
    %71 = vector.shape_cast %70 : vector<8x8x128xf32> to vector<64x128xf32>
    %72 = arith.truncf %71 : vector<64x128xf32> to vector<64x128xbf16>
    %c1_73 = arith.constant 1 : index
    %c0_74 = arith.constant 0 : index
    %c0_75 = arith.constant 0 : index
    %73 = vector.load %arg3[%c1_73, %c0_74, %c0_75] : memref<25x128x128xbf16, #tpu.memory_space<vmem>>, vector<1x128x128xbf16>
    %74 = vector.shape_cast %73 : vector<1x128x128xbf16> to vector<128x128xbf16>
    %cst_76 = arith.constant dense<0.000000e+00> : vector<64x128xf32>
    %75 = tpu.matmul %72, %74, %cst_76 {dimension_numbers = #tpu.dot_dimension_numbers<[1], [0], [0], [1], [0, 0, 1, 1], [], []>} : vector<64x128xbf16>, vector<128x128xbf16>, vector<64x128xf32> -> vector<64x128xf32>
    %76 = arith.addf %68, %75 : vector<64x128xf32>
    %c0_77 = arith.constant 0 : index
    %c0_78 = arith.constant 0 : index
    %c1_79 = arith.constant 1 : index
    %c0_80 = arith.constant 0 : index
    %77 = vector.load %arg11[%c0_77, %c0_78, %c1_79, %c0_80] : memref<4x10x10x128xf32, #tpu.memory_space<vmem>>, vector<1x8x8x128xf32>
    %78 = vector.shape_cast %77 : vector<1x8x8x128xf32> to vector<8x8x128xf32>
    %79 = vector.shape_cast %78 : vector<8x8x128xf32> to vector<64x128xf32>
    %80 = arith.truncf %79 : vector<64x128xf32> to vector<64x128xbf16>
    %c2_81 = arith.constant 2 : index
    %c0_82 = arith.constant 0 : index
    %c0_83 = arith.constant 0 : index
    %81 = vector.load %arg3[%c2_81, %c0_82, %c0_83] : memref<25x128x128xbf16, #tpu.memory_space<vmem>>, vector<1x128x128xbf16>
    %82 = vector.shape_cast %81 : vector<1x128x128xbf16> to vector<128x128xbf16>
    %cst_84 = arith.constant dense<0.000000e+00> : vector<64x128xf32>
    %83 = tpu.matmul %80, %82, %cst_84 {dimension_numbers = #tpu.dot_dimension_numbers<[1], [0], [0], [1], [0, 0, 1, 1], [], []>} : vector<64x128xbf16>, vector<128x128xbf16>, vector<64x128xf32> -> vector<64x128xf32>
    %84 = arith.addf %76, %83 : vector<64x128xf32>
    %c1_85 = arith.constant 1 : index
    %c0_86 = arith.constant 0 : index
    %c1_87 = arith.constant 1 : index
    %c0_88 = arith.constant 0 : index
    %85 = vector.load %arg11[%c1_85, %c0_86, %c1_87, %c0_88] : memref<4x10x10x128xf32, #tpu.memory_space<vmem>>, vector<1x8x8x128xf32>
    %86 = vector.shape_cast %85 : vector<1x8x8x128xf32> to vector<8x8x128xf32>
    %87 = vector.shape_cast %86 : vector<8x8x128xf32> to vector<64x128xf32>
    %88 = arith.truncf %87 : vector<64x128xf32> to vector<64x128xbf16>
    %c3_89 = arith.constant 3 : index
    %c0_90 = arith.constant 0 : index
    %c0_91 = arith.constant 0 : index
    %89 = vector.load %arg3[%c3_89, %c0_90, %c0_91] : memref<25x128x128xbf16, #tpu.memory_space<vmem>>, vector<1x128x128xbf16>
    %90 = vector.shape_cast %89 : vector<1x128x128xbf16> to vector<128x128xbf16>
    %cst_92 = arith.constant dense<0.000000e+00> : vector<64x128xf32>
    %91 = tpu.matmul %88, %90, %cst_92 {dimension_numbers = #tpu.dot_dimension_numbers<[1], [0], [0], [1], [0, 0, 1, 1], [], []>} : vector<64x128xbf16>, vector<128x128xbf16>, vector<64x128xf32> -> vector<64x128xf32>
    %92 = arith.addf %84, %91 : vector<64x128xf32>
    %c0_93 = arith.constant 0 : index
    %c0_94 = arith.constant 0 : index
    %c2_95 = arith.constant 2 : index
    %c0_96 = arith.constant 0 : index
    %93 = vector.load %arg11[%c0_93, %c0_94, %c2_95, %c0_96] : memref<4x10x10x128xf32, #tpu.memory_space<vmem>>, vector<1x8x8x128xf32>
    %94 = vector.shape_cast %93 : vector<1x8x8x128xf32> to vector<8x8x128xf32>
    %95 = vector.shape_cast %94 : vector<8x8x128xf32> to vector<64x128xf32>
    %96 = arith.truncf %95 : vector<64x128xf32> to vector<64x128xbf16>
    %c4 = arith.constant 4 : index
    %c0_97 = arith.constant 0 : index
    %c0_98 = arith.constant 0 : index
    %97 = vector.load %arg3[%c4, %c0_97, %c0_98] : memref<25x128x128xbf16, #tpu.memory_space<vmem>>, vector<1x128x128xbf16>
    %98 = vector.shape_cast %97 : vector<1x128x128xbf16> to vector<128x128xbf16>
    %cst_99 = arith.constant dense<0.000000e+00> : vector<64x128xf32>
    %99 = tpu.matmul %96, %98, %cst_99 {dimension_numbers = #tpu.dot_dimension_numbers<[1], [0], [0], [1], [0, 0, 1, 1], [], []>} : vector<64x128xbf16>, vector<128x128xbf16>, vector<64x128xf32> -> vector<64x128xf32>
    %100 = arith.addf %92, %99 : vector<64x128xf32>
    %c2_100 = arith.constant 2 : index
    %c0_101 = arith.constant 0 : index
    %c0_102 = arith.constant 0 : index
    %c0_103 = arith.constant 0 : index
    %101 = vector.load %arg11[%c2_100, %c0_101, %c0_102, %c0_103] : memref<4x10x10x128xf32, #tpu.memory_space<vmem>>, vector<1x8x8x128xf32>
    %102 = vector.shape_cast %101 : vector<1x8x8x128xf32> to vector<8x8x128xf32>
    %103 = vector.shape_cast %102 : vector<8x8x128xf32> to vector<64x128xf32>
    %104 = arith.truncf %103 : vector<64x128xf32> to vector<64x128xbf16>
    %c5 = arith.constant 5 : index
    %c0_104 = arith.constant 0 : index
    %c0_105 = arith.constant 0 : index
    %105 = vector.load %arg3[%c5, %c0_104, %c0_105] : memref<25x128x128xbf16, #tpu.memory_space<vmem>>, vector<1x128x128xbf16>
    %106 = vector.shape_cast %105 : vector<1x128x128xbf16> to vector<128x128xbf16>
    %cst_106 = arith.constant dense<0.000000e+00> : vector<64x128xf32>
    %107 = tpu.matmul %104, %106, %cst_106 {dimension_numbers = #tpu.dot_dimension_numbers<[1], [0], [0], [1], [0, 0, 1, 1], [], []>} : vector<64x128xbf16>, vector<128x128xbf16>, vector<64x128xf32> -> vector<64x128xf32>
    %108 = arith.addf %100, %107 : vector<64x128xf32>
    %c3_107 = arith.constant 3 : index
    %c0_108 = arith.constant 0 : index
    %c0_109 = arith.constant 0 : index
    %c0_110 = arith.constant 0 : index
    %109 = vector.load %arg11[%c3_107, %c0_108, %c0_109, %c0_110] : memref<4x10x10x128xf32, #tpu.memory_space<vmem>>, vector<1x8x8x128xf32>
    %110 = vector.shape_cast %109 : vector<1x8x8x128xf32> to vector<8x8x128xf32>
    %111 = vector.shape_cast %110 : vector<8x8x128xf32> to vector<64x128xf32>
    %112 = arith.truncf %111 : vector<64x128xf32> to vector<64x128xbf16>
    %c6 = arith.constant 6 : index
    %c0_111 = arith.constant 0 : index
    %c0_112 = arith.constant 0 : index
    %113 = vector.load %arg3[%c6, %c0_111, %c0_112] : memref<25x128x128xbf16, #tpu.memory_space<vmem>>, vector<1x128x128xbf16>
    %114 = vector.shape_cast %113 : vector<1x128x128xbf16> to vector<128x128xbf16>
    %cst_113 = arith.constant dense<0.000000e+00> : vector<64x128xf32>
    %115 = tpu.matmul %112, %114, %cst_113 {dimension_numbers = #tpu.dot_dimension_numbers<[1], [0], [0], [1], [0, 0, 1, 1], [], []>} : vector<64x128xbf16>, vector<128x128xbf16>, vector<64x128xf32> -> vector<64x128xf32>
    %116 = arith.addf %108, %115 : vector<64x128xf32>
    %c2_114 = arith.constant 2 : index
    %c0_115 = arith.constant 0 : index
    %c1_116 = arith.constant 1 : index
    %c0_117 = arith.constant 0 : index
    %117 = vector.load %arg11[%c2_114, %c0_115, %c1_116, %c0_117] : memref<4x10x10x128xf32, #tpu.memory_space<vmem>>, vector<1x8x8x128xf32>
    %118 = vector.shape_cast %117 : vector<1x8x8x128xf32> to vector<8x8x128xf32>
    %119 = vector.shape_cast %118 : vector<8x8x128xf32> to vector<64x128xf32>
    %120 = arith.truncf %119 : vector<64x128xf32> to vector<64x128xbf16>
    %c7 = arith.constant 7 : index
    %c0_118 = arith.constant 0 : index
    %c0_119 = arith.constant 0 : index
    %121 = vector.load %arg3[%c7, %c0_118, %c0_119] : memref<25x128x128xbf16, #tpu.memory_space<vmem>>, vector<1x128x128xbf16>
    %122 = vector.shape_cast %121 : vector<1x128x128xbf16> to vector<128x128xbf16>
    %cst_120 = arith.constant dense<0.000000e+00> : vector<64x128xf32>
    %123 = tpu.matmul %120, %122, %cst_120 {dimension_numbers = #tpu.dot_dimension_numbers<[1], [0], [0], [1], [0, 0, 1, 1], [], []>} : vector<64x128xbf16>, vector<128x128xbf16>, vector<64x128xf32> -> vector<64x128xf32>
    %124 = arith.addf %116, %123 : vector<64x128xf32>
    %c3_121 = arith.constant 3 : index
    %c0_122 = arith.constant 0 : index
    %c1_123 = arith.constant 1 : index
    %c0_124 = arith.constant 0 : index
    %125 = vector.load %arg11[%c3_121, %c0_122, %c1_123, %c0_124] : memref<4x10x10x128xf32, #tpu.memory_space<vmem>>, vector<1x8x8x128xf32>
    %126 = vector.shape_cast %125 : vector<1x8x8x128xf32> to vector<8x8x128xf32>
    %127 = vector.shape_cast %126 : vector<8x8x128xf32> to vector<64x128xf32>
    %128 = arith.truncf %127 : vector<64x128xf32> to vector<64x128xbf16>
    %c8 = arith.constant 8 : index
    %c0_125 = arith.constant 0 : index
    %c0_126 = arith.constant 0 : index
    %129 = vector.load %arg3[%c8, %c0_125, %c0_126] : memref<25x128x128xbf16, #tpu.memory_space<vmem>>, vector<1x128x128xbf16>
    %130 = vector.shape_cast %129 : vector<1x128x128xbf16> to vector<128x128xbf16>
    %cst_127 = arith.constant dense<0.000000e+00> : vector<64x128xf32>
    %131 = tpu.matmul %128, %130, %cst_127 {dimension_numbers = #tpu.dot_dimension_numbers<[1], [0], [0], [1], [0, 0, 1, 1], [], []>} : vector<64x128xbf16>, vector<128x128xbf16>, vector<64x128xf32> -> vector<64x128xf32>
    %132 = arith.addf %124, %131 : vector<64x128xf32>
    %c2_128 = arith.constant 2 : index
    %c0_129 = arith.constant 0 : index
    %c2_130 = arith.constant 2 : index
    %c0_131 = arith.constant 0 : index
    %133 = vector.load %arg11[%c2_128, %c0_129, %c2_130, %c0_131] : memref<4x10x10x128xf32, #tpu.memory_space<vmem>>, vector<1x8x8x128xf32>
    %134 = vector.shape_cast %133 : vector<1x8x8x128xf32> to vector<8x8x128xf32>
    %135 = vector.shape_cast %134 : vector<8x8x128xf32> to vector<64x128xf32>
    %136 = arith.truncf %135 : vector<64x128xf32> to vector<64x128xbf16>
    %c9 = arith.constant 9 : index
    %c0_132 = arith.constant 0 : index
    %c0_133 = arith.constant 0 : index
    %137 = vector.load %arg3[%c9, %c0_132, %c0_133] : memref<25x128x128xbf16, #tpu.memory_space<vmem>>, vector<1x128x128xbf16>
    %138 = vector.shape_cast %137 : vector<1x128x128xbf16> to vector<128x128xbf16>
    %cst_134 = arith.constant dense<0.000000e+00> : vector<64x128xf32>
    %139 = tpu.matmul %136, %138, %cst_134 {dimension_numbers = #tpu.dot_dimension_numbers<[1], [0], [0], [1], [0, 0, 1, 1], [], []>} : vector<64x128xbf16>, vector<128x128xbf16>, vector<64x128xf32> -> vector<64x128xf32>
    %140 = arith.addf %132, %139 : vector<64x128xf32>
    %c0_135 = arith.constant 0 : index
    %c1_136 = arith.constant 1 : index
    %c0_137 = arith.constant 0 : index
    %c0_138 = arith.constant 0 : index
    %141 = vector.load %arg11[%c0_135, %c1_136, %c0_137, %c0_138] : memref<4x10x10x128xf32, #tpu.memory_space<vmem>>, vector<1x8x8x128xf32>
    %142 = vector.shape_cast %141 : vector<1x8x8x128xf32> to vector<8x8x128xf32>
    %143 = vector.shape_cast %142 : vector<8x8x128xf32> to vector<64x128xf32>
    %144 = arith.truncf %143 : vector<64x128xf32> to vector<64x128xbf16>
    %c10 = arith.constant 10 : index
    %c0_139 = arith.constant 0 : index
    %c0_140 = arith.constant 0 : index
    %145 = vector.load %arg3[%c10, %c0_139, %c0_140] : memref<25x128x128xbf16, #tpu.memory_space<vmem>>, vector<1x128x128xbf16>
    %146 = vector.shape_cast %145 : vector<1x128x128xbf16> to vector<128x128xbf16>
    %cst_141 = arith.constant dense<0.000000e+00> : vector<64x128xf32>
    %147 = tpu.matmul %144, %146, %cst_141 {dimension_numbers = #tpu.dot_dimension_numbers<[1], [0], [0], [1], [0, 0, 1, 1], [], []>} : vector<64x128xbf16>, vector<128x128xbf16>, vector<64x128xf32> -> vector<64x128xf32>
    %148 = arith.addf %140, %147 : vector<64x128xf32>
    %c1_142 = arith.constant 1 : index
    %c1_143 = arith.constant 1 : index
    %c0_144 = arith.constant 0 : index
    %c0_145 = arith.constant 0 : index
    %149 = vector.load %arg11[%c1_142, %c1_143, %c0_144, %c0_145] : memref<4x10x10x128xf32, #tpu.memory_space<vmem>>, vector<1x8x8x128xf32>
    %150 = vector.shape_cast %149 : vector<1x8x8x128xf32> to vector<8x8x128xf32>
    %151 = vector.shape_cast %150 : vector<8x8x128xf32> to vector<64x128xf32>
    %152 = arith.truncf %151 : vector<64x128xf32> to vector<64x128xbf16>
    %c11 = arith.constant 11 : index
    %c0_146 = arith.constant 0 : index
    %c0_147 = arith.constant 0 : index
    %153 = vector.load %arg3[%c11, %c0_146, %c0_147] : memref<25x128x128xbf16, #tpu.memory_space<vmem>>, vector<1x128x128xbf16>
    %154 = vector.shape_cast %153 : vector<1x128x128xbf16> to vector<128x128xbf16>
    %cst_148 = arith.constant dense<0.000000e+00> : vector<64x128xf32>
    %155 = tpu.matmul %152, %154, %cst_148 {dimension_numbers = #tpu.dot_dimension_numbers<[1], [0], [0], [1], [0, 0, 1, 1], [], []>} : vector<64x128xbf16>, vector<128x128xbf16>, vector<64x128xf32> -> vector<64x128xf32>
    %156 = arith.addf %148, %155 : vector<64x128xf32>
    %c0_149 = arith.constant 0 : index
    %c1_150 = arith.constant 1 : index
    %c1_151 = arith.constant 1 : index
    %c0_152 = arith.constant 0 : index
    %157 = vector.load %arg11[%c0_149, %c1_150, %c1_151, %c0_152] : memref<4x10x10x128xf32, #tpu.memory_space<vmem>>, vector<1x8x8x128xf32>
    %158 = vector.shape_cast %157 : vector<1x8x8x128xf32> to vector<8x8x128xf32>
    %159 = vector.shape_cast %158 : vector<8x8x128xf32> to vector<64x128xf32>
    %160 = arith.truncf %159 : vector<64x128xf32> to vector<64x128xbf16>
    %c12 = arith.constant 12 : index
    %c0_153 = arith.constant 0 : index
    %c0_154 = arith.constant 0 : index
    %161 = vector.load %arg3[%c12, %c0_153, %c0_154] : memref<25x128x128xbf16, #tpu.memory_space<vmem>>, vector<1x128x128xbf16>
    %162 = vector.shape_cast %161 : vector<1x128x128xbf16> to vector<128x128xbf16>
    %cst_155 = arith.constant dense<0.000000e+00> : vector<64x128xf32>
    %163 = tpu.matmul %160, %162, %cst_155 {dimension_numbers = #tpu.dot_dimension_numbers<[1], [0], [0], [1], [0, 0, 1, 1], [], []>} : vector<64x128xbf16>, vector<128x128xbf16>, vector<64x128xf32> -> vector<64x128xf32>
    %164 = arith.addf %156, %163 : vector<64x128xf32>
    %c1_156 = arith.constant 1 : index
    %c1_157 = arith.constant 1 : index
    %c1_158 = arith.constant 1 : index
    %c0_159 = arith.constant 0 : index
    %165 = vector.load %arg11[%c1_156, %c1_157, %c1_158, %c0_159] : memref<4x10x10x128xf32, #tpu.memory_space<vmem>>, vector<1x8x8x128xf32>
    %166 = vector.shape_cast %165 : vector<1x8x8x128xf32> to vector<8x8x128xf32>
    %167 = vector.shape_cast %166 : vector<8x8x128xf32> to vector<64x128xf32>
    %168 = arith.truncf %167 : vector<64x128xf32> to vector<64x128xbf16>
    %c13 = arith.constant 13 : index
    %c0_160 = arith.constant 0 : index
    %c0_161 = arith.constant 0 : index
    %169 = vector.load %arg3[%c13, %c0_160, %c0_161] : memref<25x128x128xbf16, #tpu.memory_space<vmem>>, vector<1x128x128xbf16>
    %170 = vector.shape_cast %169 : vector<1x128x128xbf16> to vector<128x128xbf16>
    %cst_162 = arith.constant dense<0.000000e+00> : vector<64x128xf32>
    %171 = tpu.matmul %168, %170, %cst_162 {dimension_numbers = #tpu.dot_dimension_numbers<[1], [0], [0], [1], [0, 0, 1, 1], [], []>} : vector<64x128xbf16>, vector<128x128xbf16>, vector<64x128xf32> -> vector<64x128xf32>
    %172 = arith.addf %164, %171 : vector<64x128xf32>
    %c0_163 = arith.constant 0 : index
    %c1_164 = arith.constant 1 : index
    %c2_165 = arith.constant 2 : index
    %c0_166 = arith.constant 0 : index
    %173 = vector.load %arg11[%c0_163, %c1_164, %c2_165, %c0_166] : memref<4x10x10x128xf32, #tpu.memory_space<vmem>>, vector<1x8x8x128xf32>
    %174 = vector.shape_cast %173 : vector<1x8x8x128xf32> to vector<8x8x128xf32>
    %175 = vector.shape_cast %174 : vector<8x8x128xf32> to vector<64x128xf32>
    %176 = arith.truncf %175 : vector<64x128xf32> to vector<64x128xbf16>
    %c14 = arith.constant 14 : index
    %c0_167 = arith.constant 0 : index
    %c0_168 = arith.constant 0 : index
    %177 = vector.load %arg3[%c14, %c0_167, %c0_168] : memref<25x128x128xbf16, #tpu.memory_space<vmem>>, vector<1x128x128xbf16>
    %178 = vector.shape_cast %177 : vector<1x128x128xbf16> to vector<128x128xbf16>
    %cst_169 = arith.constant dense<0.000000e+00> : vector<64x128xf32>
    %179 = tpu.matmul %176, %178, %cst_169 {dimension_numbers = #tpu.dot_dimension_numbers<[1], [0], [0], [1], [0, 0, 1, 1], [], []>} : vector<64x128xbf16>, vector<128x128xbf16>, vector<64x128xf32> -> vector<64x128xf32>
    %180 = arith.addf %172, %179 : vector<64x128xf32>
    %c2_170 = arith.constant 2 : index
    %c1_171 = arith.constant 1 : index
    %c0_172 = arith.constant 0 : index
    %c0_173 = arith.constant 0 : index
    %181 = vector.load %arg11[%c2_170, %c1_171, %c0_172, %c0_173] : memref<4x10x10x128xf32, #tpu.memory_space<vmem>>, vector<1x8x8x128xf32>
    %182 = vector.shape_cast %181 : vector<1x8x8x128xf32> to vector<8x8x128xf32>
    %183 = vector.shape_cast %182 : vector<8x8x128xf32> to vector<64x128xf32>
    %184 = arith.truncf %183 : vector<64x128xf32> to vector<64x128xbf16>
    %c15 = arith.constant 15 : index
    %c0_174 = arith.constant 0 : index
    %c0_175 = arith.constant 0 : index
    %185 = vector.load %arg3[%c15, %c0_174, %c0_175] : memref<25x128x128xbf16, #tpu.memory_space<vmem>>, vector<1x128x128xbf16>
    %186 = vector.shape_cast %185 : vector<1x128x128xbf16> to vector<128x128xbf16>
    %cst_176 = arith.constant dense<0.000000e+00> : vector<64x128xf32>
    %187 = tpu.matmul %184, %186, %cst_176 {dimension_numbers = #tpu.dot_dimension_numbers<[1], [0], [0], [1], [0, 0, 1, 1], [], []>} : vector<64x128xbf16>, vector<128x128xbf16>, vector<64x128xf32> -> vector<64x128xf32>
    %188 = arith.addf %180, %187 : vector<64x128xf32>
    %c3_177 = arith.constant 3 : index
    %c1_178 = arith.constant 1 : index
    %c0_179 = arith.constant 0 : index
    %c0_180 = arith.constant 0 : index
    %189 = vector.load %arg11[%c3_177, %c1_178, %c0_179, %c0_180] : memref<4x10x10x128xf32, #tpu.memory_space<vmem>>, vector<1x8x8x128xf32>
    %190 = vector.shape_cast %189 : vector<1x8x8x128xf32> to vector<8x8x128xf32>
    %191 = vector.shape_cast %190 : vector<8x8x128xf32> to vector<64x128xf32>
    %192 = arith.truncf %191 : vector<64x128xf32> to vector<64x128xbf16>
    %c16 = arith.constant 16 : index
    %c0_181 = arith.constant 0 : index
    %c0_182 = arith.constant 0 : index
    %193 = vector.load %arg3[%c16, %c0_181, %c0_182] : memref<25x128x128xbf16, #tpu.memory_space<vmem>>, vector<1x128x128xbf16>
    %194 = vector.shape_cast %193 : vector<1x128x128xbf16> to vector<128x128xbf16>
    %cst_183 = arith.constant dense<0.000000e+00> : vector<64x128xf32>
    %195 = tpu.matmul %192, %194, %cst_183 {dimension_numbers = #tpu.dot_dimension_numbers<[1], [0], [0], [1], [0, 0, 1, 1], [], []>} : vector<64x128xbf16>, vector<128x128xbf16>, vector<64x128xf32> -> vector<64x128xf32>
    %196 = arith.addf %188, %195 : vector<64x128xf32>
    %c2_184 = arith.constant 2 : index
    %c1_185 = arith.constant 1 : index
    %c1_186 = arith.constant 1 : index
    %c0_187 = arith.constant 0 : index
    %197 = vector.load %arg11[%c2_184, %c1_185, %c1_186, %c0_187] : memref<4x10x10x128xf32, #tpu.memory_space<vmem>>, vector<1x8x8x128xf32>
    %198 = vector.shape_cast %197 : vector<1x8x8x128xf32> to vector<8x8x128xf32>
    %199 = vector.shape_cast %198 : vector<8x8x128xf32> to vector<64x128xf32>
    %200 = arith.truncf %199 : vector<64x128xf32> to vector<64x128xbf16>
    %c17 = arith.constant 17 : index
    %c0_188 = arith.constant 0 : index
    %c0_189 = arith.constant 0 : index
    %201 = vector.load %arg3[%c17, %c0_188, %c0_189] : memref<25x128x128xbf16, #tpu.memory_space<vmem>>, vector<1x128x128xbf16>
    %202 = vector.shape_cast %201 : vector<1x128x128xbf16> to vector<128x128xbf16>
    %cst_190 = arith.constant dense<0.000000e+00> : vector<64x128xf32>
    %203 = tpu.matmul %200, %202, %cst_190 {dimension_numbers = #tpu.dot_dimension_numbers<[1], [0], [0], [1], [0, 0, 1, 1], [], []>} : vector<64x128xbf16>, vector<128x128xbf16>, vector<64x128xf32> -> vector<64x128xf32>
    %204 = arith.addf %196, %203 : vector<64x128xf32>
    %c3_191 = arith.constant 3 : index
    %c1_192 = arith.constant 1 : index
    %c1_193 = arith.constant 1 : index
    %c0_194 = arith.constant 0 : index
    %205 = vector.load %arg11[%c3_191, %c1_192, %c1_193, %c0_194] : memref<4x10x10x128xf32, #tpu.memory_space<vmem>>, vector<1x8x8x128xf32>
    %206 = vector.shape_cast %205 : vector<1x8x8x128xf32> to vector<8x8x128xf32>
    %207 = vector.shape_cast %206 : vector<8x8x128xf32> to vector<64x128xf32>
    %208 = arith.truncf %207 : vector<64x128xf32> to vector<64x128xbf16>
    %c18 = arith.constant 18 : index
    %c0_195 = arith.constant 0 : index
    %c0_196 = arith.constant 0 : index
    %209 = vector.load %arg3[%c18, %c0_195, %c0_196] : memref<25x128x128xbf16, #tpu.memory_space<vmem>>, vector<1x128x128xbf16>
    %210 = vector.shape_cast %209 : vector<1x128x128xbf16> to vector<128x128xbf16>
    %cst_197 = arith.constant dense<0.000000e+00> : vector<64x128xf32>
    %211 = tpu.matmul %208, %210, %cst_197 {dimension_numbers = #tpu.dot_dimension_numbers<[1], [0], [0], [1], [0, 0, 1, 1], [], []>} : vector<64x128xbf16>, vector<128x128xbf16>, vector<64x128xf32> -> vector<64x128xf32>
    %212 = arith.addf %204, %211 : vector<64x128xf32>
    %c2_198 = arith.constant 2 : index
    %c1_199 = arith.constant 1 : index
    %c2_200 = arith.constant 2 : index
    %c0_201 = arith.constant 0 : index
    %213 = vector.load %arg11[%c2_198, %c1_199, %c2_200, %c0_201] : memref<4x10x10x128xf32, #tpu.memory_space<vmem>>, vector<1x8x8x128xf32>
    %214 = vector.shape_cast %213 : vector<1x8x8x128xf32> to vector<8x8x128xf32>
    %215 = vector.shape_cast %214 : vector<8x8x128xf32> to vector<64x128xf32>
    %216 = arith.truncf %215 : vector<64x128xf32> to vector<64x128xbf16>
    %c19 = arith.constant 19 : index
    %c0_202 = arith.constant 0 : index
    %c0_203 = arith.constant 0 : index
    %217 = vector.load %arg3[%c19, %c0_202, %c0_203] : memref<25x128x128xbf16, #tpu.memory_space<vmem>>, vector<1x128x128xbf16>
    %218 = vector.shape_cast %217 : vector<1x128x128xbf16> to vector<128x128xbf16>
    %cst_204 = arith.constant dense<0.000000e+00> : vector<64x128xf32>
    %219 = tpu.matmul %216, %218, %cst_204 {dimension_numbers = #tpu.dot_dimension_numbers<[1], [0], [0], [1], [0, 0, 1, 1], [], []>} : vector<64x128xbf16>, vector<128x128xbf16>, vector<64x128xf32> -> vector<64x128xf32>
    %220 = arith.addf %212, %219 : vector<64x128xf32>
    %c0_205 = arith.constant 0 : index
    %c2_206 = arith.constant 2 : index
    %c0_207 = arith.constant 0 : index
    %c0_208 = arith.constant 0 : index
    %221 = vector.load %arg11[%c0_205, %c2_206, %c0_207, %c0_208] : memref<4x10x10x128xf32, #tpu.memory_space<vmem>>, vector<1x8x8x128xf32>
    %222 = vector.shape_cast %221 : vector<1x8x8x128xf32> to vector<8x8x128xf32>
    %223 = vector.shape_cast %222 : vector<8x8x128xf32> to vector<64x128xf32>
    %224 = arith.truncf %223 : vector<64x128xf32> to vector<64x128xbf16>
    %c20 = arith.constant 20 : index
    %c0_209 = arith.constant 0 : index
    %c0_210 = arith.constant 0 : index
    %225 = vector.load %arg3[%c20, %c0_209, %c0_210] : memref<25x128x128xbf16, #tpu.memory_space<vmem>>, vector<1x128x128xbf16>
    %226 = vector.shape_cast %225 : vector<1x128x128xbf16> to vector<128x128xbf16>
    %cst_211 = arith.constant dense<0.000000e+00> : vector<64x128xf32>
    %227 = tpu.matmul %224, %226, %cst_211 {dimension_numbers = #tpu.dot_dimension_numbers<[1], [0], [0], [1], [0, 0, 1, 1], [], []>} : vector<64x128xbf16>, vector<128x128xbf16>, vector<64x128xf32> -> vector<64x128xf32>
    %228 = arith.addf %220, %227 : vector<64x128xf32>
    %c1_212 = arith.constant 1 : index
    %c2_213 = arith.constant 2 : index
    %c0_214 = arith.constant 0 : index
    %c0_215 = arith.constant 0 : index
    %229 = vector.load %arg11[%c1_212, %c2_213, %c0_214, %c0_215] : memref<4x10x10x128xf32, #tpu.memory_space<vmem>>, vector<1x8x8x128xf32>
    %230 = vector.shape_cast %229 : vector<1x8x8x128xf32> to vector<8x8x128xf32>
    %231 = vector.shape_cast %230 : vector<8x8x128xf32> to vector<64x128xf32>
    %232 = arith.truncf %231 : vector<64x128xf32> to vector<64x128xbf16>
    %c21 = arith.constant 21 : index
    %c0_216 = arith.constant 0 : index
    %c0_217 = arith.constant 0 : index
    %233 = vector.load %arg3[%c21, %c0_216, %c0_217] : memref<25x128x128xbf16, #tpu.memory_space<vmem>>, vector<1x128x128xbf16>
    %234 = vector.shape_cast %233 : vector<1x128x128xbf16> to vector<128x128xbf16>
    %cst_218 = arith.constant dense<0.000000e+00> : vector<64x128xf32>
    %235 = tpu.matmul %232, %234, %cst_218 {dimension_numbers = #tpu.dot_dimension_numbers<[1], [0], [0], [1], [0, 0, 1, 1], [], []>} : vector<64x128xbf16>, vector<128x128xbf16>, vector<64x128xf32> -> vector<64x128xf32>
    %236 = arith.addf %228, %235 : vector<64x128xf32>
    %c0_219 = arith.constant 0 : index
    %c2_220 = arith.constant 2 : index
    %c1_221 = arith.constant 1 : index
    %c0_222 = arith.constant 0 : index
    %237 = vector.load %arg11[%c0_219, %c2_220, %c1_221, %c0_222] : memref<4x10x10x128xf32, #tpu.memory_space<vmem>>, vector<1x8x8x128xf32>
    %238 = vector.shape_cast %237 : vector<1x8x8x128xf32> to vector<8x8x128xf32>
    %239 = vector.shape_cast %238 : vector<8x8x128xf32> to vector<64x128xf32>
    %240 = arith.truncf %239 : vector<64x128xf32> to vector<64x128xbf16>
    %c22 = arith.constant 22 : index
    %c0_223 = arith.constant 0 : index
    %c0_224 = arith.constant 0 : index
    %241 = vector.load %arg3[%c22, %c0_223, %c0_224] : memref<25x128x128xbf16, #tpu.memory_space<vmem>>, vector<1x128x128xbf16>
    %242 = vector.shape_cast %241 : vector<1x128x128xbf16> to vector<128x128xbf16>
    %cst_225 = arith.constant dense<0.000000e+00> : vector<64x128xf32>
    %243 = tpu.matmul %240, %242, %cst_225 {dimension_numbers = #tpu.dot_dimension_numbers<[1], [0], [0], [1], [0, 0, 1, 1], [], []>} : vector<64x128xbf16>, vector<128x128xbf16>, vector<64x128xf32> -> vector<64x128xf32>
    %244 = arith.addf %236, %243 : vector<64x128xf32>
    %c1_226 = arith.constant 1 : index
    %c2_227 = arith.constant 2 : index
    %c1_228 = arith.constant 1 : index
    %c0_229 = arith.constant 0 : index
    %245 = vector.load %arg11[%c1_226, %c2_227, %c1_228, %c0_229] : memref<4x10x10x128xf32, #tpu.memory_space<vmem>>, vector<1x8x8x128xf32>
    %246 = vector.shape_cast %245 : vector<1x8x8x128xf32> to vector<8x8x128xf32>
    %247 = vector.shape_cast %246 : vector<8x8x128xf32> to vector<64x128xf32>
    %248 = arith.truncf %247 : vector<64x128xf32> to vector<64x128xbf16>
    %c23 = arith.constant 23 : index
    %c0_230 = arith.constant 0 : index
    %c0_231 = arith.constant 0 : index
    %249 = vector.load %arg3[%c23, %c0_230, %c0_231] : memref<25x128x128xbf16, #tpu.memory_space<vmem>>, vector<1x128x128xbf16>
    %250 = vector.shape_cast %249 : vector<1x128x128xbf16> to vector<128x128xbf16>
    %cst_232 = arith.constant dense<0.000000e+00> : vector<64x128xf32>
    %251 = tpu.matmul %248, %250, %cst_232 {dimension_numbers = #tpu.dot_dimension_numbers<[1], [0], [0], [1], [0, 0, 1, 1], [], []>} : vector<64x128xbf16>, vector<128x128xbf16>, vector<64x128xf32> -> vector<64x128xf32>
    %252 = arith.addf %244, %251 : vector<64x128xf32>
    %c0_233 = arith.constant 0 : index
    %c2_234 = arith.constant 2 : index
    %c2_235 = arith.constant 2 : index
    %c0_236 = arith.constant 0 : index
    %253 = vector.load %arg11[%c0_233, %c2_234, %c2_235, %c0_236] : memref<4x10x10x128xf32, #tpu.memory_space<vmem>>, vector<1x8x8x128xf32>
    %254 = vector.shape_cast %253 : vector<1x8x8x128xf32> to vector<8x8x128xf32>
    %255 = vector.shape_cast %254 : vector<8x8x128xf32> to vector<64x128xf32>
    %256 = arith.truncf %255 : vector<64x128xf32> to vector<64x128xbf16>
    %c24 = arith.constant 24 : index
    %c0_237 = arith.constant 0 : index
    %c0_238 = arith.constant 0 : index
    %257 = vector.load %arg3[%c24, %c0_237, %c0_238] : memref<25x128x128xbf16, #tpu.memory_space<vmem>>, vector<1x128x128xbf16>
    %258 = vector.shape_cast %257 : vector<1x128x128xbf16> to vector<128x128xbf16>
    %cst_239 = arith.constant dense<0.000000e+00> : vector<64x128xf32>
    %259 = tpu.matmul %256, %258, %cst_239 {dimension_numbers = #tpu.dot_dimension_numbers<[1], [0], [0], [1], [0, 0, 1, 1], [], []>} : vector<64x128xbf16>, vector<128x128xbf16>, vector<64x128xf32> -> vector<64x128xf32>
    %260 = arith.addf %252, %259 : vector<64x128xf32>
    %c0_240 = arith.constant 0 : index
    %c0_241 = arith.constant 0 : index
    %261 = vector.load %arg7[%c0_240, %c0_241] : memref<1x128xf32, #tpu.memory_space<vmem>>, vector<1x128xf32>
    %262 = vector.broadcast %261 : vector<1x128xf32> to vector<64x128xf32>
    %263 = arith.addf %260, %262 : vector<64x128xf32>
    %cst_242 = arith.constant 0.000000e+00 : f32
    %264 = vector.broadcast %cst_242 : f32 to vector<64x128xf32>
    %265 = arith.maximumf %263, %264 : vector<64x128xf32>
    %266 = vector.shape_cast %265 : vector<64x128xf32> to vector<8x8x128xf32>
    %267 = vector.extract_strided_slice %266 {offsets = [0, 0, 0], sizes = [7, 7, 128], strides = [1, 1, 1]} : vector<8x8x128xf32> to vector<7x7x128xf32>
    %c1_243 = arith.constant 1 : index
    %c1_244 = arith.constant 1 : index
    %c0_245 = arith.constant 0 : index
    %268 = vector.load %arg12[%c1_243, %c1_244, %c0_245] : memref<10x10x128xf32, #tpu.memory_space<vmem>>, vector<7x7x128xf32>
    tpu.vector_store %arg12[%c1_243, %c1_244, %c0_245], %267 {strides = array<i32>} : memref<10x10x128xf32, #tpu.memory_space<vmem>>, vector<7x7x128xf32>,
    %cst_246 = arith.constant 0.000000e+00 : f32
    %269 = vector.broadcast %cst_246 : f32 to vector<64x128xf32>
    %c0_247 = arith.constant 0 : index
    %c0_248 = arith.constant 0 : index
    %c0_249 = arith.constant 0 : index
    %270 = vector.load %arg12[%c0_247, %c0_248, %c0_249] : memref<10x10x128xf32, #tpu.memory_space<vmem>>, vector<8x8x128xf32>
    %271 = vector.shape_cast %270 : vector<8x8x128xf32> to vector<64x128xf32>
    %272 = arith.truncf %271 : vector<64x128xf32> to vector<64x128xbf16>
    %c0_250 = arith.constant 0 : index
    %c0_251 = arith.constant 0 : index
    %c0_252 = arith.constant 0 : index
    %273 = vector.load %arg4[%c0_250, %c0_251, %c0_252] : memref<9x128x128xbf16, #tpu.memory_space<vmem>>, vector<1x128x128xbf16>
    %274 = vector.shape_cast %273 : vector<1x128x128xbf16> to vector<128x128xbf16>
    %cst_253 = arith.constant dense<0.000000e+00> : vector<64x128xf32>
    %275 = tpu.matmul %272, %274, %cst_253 {dimension_numbers = #tpu.dot_dimension_numbers<[1], [0], [0], [1], [0, 0, 1, 1], [], []>} : vector<64x128xbf16>, vector<128x128xbf16>, vector<64x128xf32> -> vector<64x128xf32>
    %276 = arith.addf %269, %275 : vector<64x128xf32>
    %c0_254 = arith.constant 0 : index
    %c1_255 = arith.constant 1 : index
    %c0_256 = arith.constant 0 : index
    %277 = vector.load %arg12[%c0_254, %c1_255, %c0_256] : memref<10x10x128xf32, #tpu.memory_space<vmem>>, vector<8x8x128xf32>
    %278 = vector.shape_cast %277 : vector<8x8x128xf32> to vector<64x128xf32>
    %279 = arith.truncf %278 : vector<64x128xf32> to vector<64x128xbf16>
    %c1_257 = arith.constant 1 : index
    %c0_258 = arith.constant 0 : index
    %c0_259 = arith.constant 0 : index
    %280 = vector.load %arg4[%c1_257, %c0_258, %c0_259] : memref<9x128x128xbf16, #tpu.memory_space<vmem>>, vector<1x128x128xbf16>
    %281 = vector.shape_cast %280 : vector<1x128x128xbf16> to vector<128x128xbf16>
    %cst_260 = arith.constant dense<0.000000e+00> : vector<64x128xf32>
    %282 = tpu.matmul %279, %281, %cst_260 {dimension_numbers = #tpu.dot_dimension_numbers<[1], [0], [0], [1], [0, 0, 1, 1], [], []>} : vector<64x128xbf16>, vector<128x128xbf16>, vector<64x128xf32> -> vector<64x128xf32>
    %283 = arith.addf %276, %282 : vector<64x128xf32>
    %c0_261 = arith.constant 0 : index
    %c2_262 = arith.constant 2 : index
    %c0_263 = arith.constant 0 : index
    %284 = vector.load %arg12[%c0_261, %c2_262, %c0_263] : memref<10x10x128xf32, #tpu.memory_space<vmem>>, vector<8x8x128xf32>
    %285 = vector.shape_cast %284 : vector<8x8x128xf32> to vector<64x128xf32>
    %286 = arith.truncf %285 : vector<64x128xf32> to vector<64x128xbf16>
    %c2_264 = arith.constant 2 : index
    %c0_265 = arith.constant 0 : index
    %c0_266 = arith.constant 0 : index
    %287 = vector.load %arg4[%c2_264, %c0_265, %c0_266] : memref<9x128x128xbf16, #tpu.memory_space<vmem>>, vector<1x128x128xbf16>
    %288 = vector.shape_cast %287 : vector<1x128x128xbf16> to vector<128x128xbf16>
    %cst_267 = arith.constant dense<0.000000e+00> : vector<64x128xf32>
    %289 = tpu.matmul %286, %288, %cst_267 {dimension_numbers = #tpu.dot_dimension_numbers<[1], [0], [0], [1], [0, 0, 1, 1], [], []>} : vector<64x128xbf16>, vector<128x128xbf16>, vector<64x128xf32> -> vector<64x128xf32>
    %290 = arith.addf %283, %289 : vector<64x128xf32>
    %c1_268 = arith.constant 1 : index
    %c0_269 = arith.constant 0 : index
    %c0_270 = arith.constant 0 : index
    %291 = vector.load %arg12[%c1_268, %c0_269, %c0_270] : memref<10x10x128xf32, #tpu.memory_space<vmem>>, vector<8x8x128xf32>
    %292 = vector.shape_cast %291 : vector<8x8x128xf32> to vector<64x128xf32>
    %293 = arith.truncf %292 : vector<64x128xf32> to vector<64x128xbf16>
    %c3_271 = arith.constant 3 : index
    %c0_272 = arith.constant 0 : index
    %c0_273 = arith.constant 0 : index
    %294 = vector.load %arg4[%c3_271, %c0_272, %c0_273] : memref<9x128x128xbf16, #tpu.memory_space<vmem>>, vector<1x128x128xbf16>
    %295 = vector.shape_cast %294 : vector<1x128x128xbf16> to vector<128x128xbf16>
    %cst_274 = arith.constant dense<0.000000e+00> : vector<64x128xf32>
    %296 = tpu.matmul %293, %295, %cst_274 {dimension_numbers = #tpu.dot_dimension_numbers<[1], [0], [0], [1], [0, 0, 1, 1], [], []>} : vector<64x128xbf16>, vector<128x128xbf16>, vector<64x128xf32> -> vector<64x128xf32>
    %297 = arith.addf %290, %296 : vector<64x128xf32>
    %c1_275 = arith.constant 1 : index
    %c1_276 = arith.constant 1 : index
    %c0_277 = arith.constant 0 : index
    %298 = vector.load %arg12[%c1_275, %c1_276, %c0_277] : memref<10x10x128xf32, #tpu.memory_space<vmem>>, vector<8x8x128xf32>
    %299 = vector.shape_cast %298 : vector<8x8x128xf32> to vector<64x128xf32>
    %300 = arith.truncf %299 : vector<64x128xf32> to vector<64x128xbf16>
    %c4_278 = arith.constant 4 : index
    %c0_279 = arith.constant 0 : index
    %c0_280 = arith.constant 0 : index
    %301 = vector.load %arg4[%c4_278, %c0_279, %c0_280] : memref<9x128x128xbf16, #tpu.memory_space<vmem>>, vector<1x128x128xbf16>
    %302 = vector.shape_cast %301 : vector<1x128x128xbf16> to vector<128x128xbf16>
    %cst_281 = arith.constant dense<0.000000e+00> : vector<64x128xf32>
    %303 = tpu.matmul %300, %302, %cst_281 {dimension_numbers = #tpu.dot_dimension_numbers<[1], [0], [0], [1], [0, 0, 1, 1], [], []>} : vector<64x128xbf16>, vector<128x128xbf16>, vector<64x128xf32> -> vector<64x128xf32>
    %304 = arith.addf %297, %303 : vector<64x128xf32>
    %c1_282 = arith.constant 1 : index
    %c2_283 = arith.constant 2 : index
    %c0_284 = arith.constant 0 : index
    %305 = vector.load %arg12[%c1_282, %c2_283, %c0_284] : memref<10x10x128xf32, #tpu.memory_space<vmem>>, vector<8x8x128xf32>
    %306 = vector.shape_cast %305 : vector<8x8x128xf32> to vector<64x128xf32>
    %307 = arith.truncf %306 : vector<64x128xf32> to vector<64x128xbf16>
    %c5_285 = arith.constant 5 : index
    %c0_286 = arith.constant 0 : index
    %c0_287 = arith.constant 0 : index
    %308 = vector.load %arg4[%c5_285, %c0_286, %c0_287] : memref<9x128x128xbf16, #tpu.memory_space<vmem>>, vector<1x128x128xbf16>
    %309 = vector.shape_cast %308 : vector<1x128x128xbf16> to vector<128x128xbf16>
    %cst_288 = arith.constant dense<0.000000e+00> : vector<64x128xf32>
    %310 = tpu.matmul %307, %309, %cst_288 {dimension_numbers = #tpu.dot_dimension_numbers<[1], [0], [0], [1], [0, 0, 1, 1], [], []>} : vector<64x128xbf16>, vector<128x128xbf16>, vector<64x128xf32> -> vector<64x128xf32>
    %311 = arith.addf %304, %310 : vector<64x128xf32>
    %c2_289 = arith.constant 2 : index
    %c0_290 = arith.constant 0 : index
    %c0_291 = arith.constant 0 : index
    %312 = vector.load %arg12[%c2_289, %c0_290, %c0_291] : memref<10x10x128xf32, #tpu.memory_space<vmem>>, vector<8x8x128xf32>
    %313 = vector.shape_cast %312 : vector<8x8x128xf32> to vector<64x128xf32>
    %314 = arith.truncf %313 : vector<64x128xf32> to vector<64x128xbf16>
    %c6_292 = arith.constant 6 : index
    %c0_293 = arith.constant 0 : index
    %c0_294 = arith.constant 0 : index
    %315 = vector.load %arg4[%c6_292, %c0_293, %c0_294] : memref<9x128x128xbf16, #tpu.memory_space<vmem>>, vector<1x128x128xbf16>
    %316 = vector.shape_cast %315 : vector<1x128x128xbf16> to vector<128x128xbf16>
    %cst_295 = arith.constant dense<0.000000e+00> : vector<64x128xf32>
    %317 = tpu.matmul %314, %316, %cst_295 {dimension_numbers = #tpu.dot_dimension_numbers<[1], [0], [0], [1], [0, 0, 1, 1], [], []>} : vector<64x128xbf16>, vector<128x128xbf16>, vector<64x128xf32> -> vector<64x128xf32>
    %318 = arith.addf %311, %317 : vector<64x128xf32>
    %c2_296 = arith.constant 2 : index
    %c1_297 = arith.constant 1 : index
    %c0_298 = arith.constant 0 : index
    %319 = vector.load %arg12[%c2_296, %c1_297, %c0_298] : memref<10x10x128xf32, #tpu.memory_space<vmem>>, vector<8x8x128xf32>
    %320 = vector.shape_cast %319 : vector<8x8x128xf32> to vector<64x128xf32>
    %321 = arith.truncf %320 : vector<64x128xf32> to vector<64x128xbf16>
    %c7_299 = arith.constant 7 : index
    %c0_300 = arith.constant 0 : index
    %c0_301 = arith.constant 0 : index
    %322 = vector.load %arg4[%c7_299, %c0_300, %c0_301] : memref<9x128x128xbf16, #tpu.memory_space<vmem>>, vector<1x128x128xbf16>
    %323 = vector.shape_cast %322 : vector<1x128x128xbf16> to vector<128x128xbf16>
    %cst_302 = arith.constant dense<0.000000e+00> : vector<64x128xf32>
    %324 = tpu.matmul %321, %323, %cst_302 {dimension_numbers = #tpu.dot_dimension_numbers<[1], [0], [0], [1], [0, 0, 1, 1], [], []>} : vector<64x128xbf16>, vector<128x128xbf16>, vector<64x128xf32> -> vector<64x128xf32>
    %325 = arith.addf %318, %324 : vector<64x128xf32>
    %c2_303 = arith.constant 2 : index
    %c2_304 = arith.constant 2 : index
    %c0_305 = arith.constant 0 : index
    %326 = vector.load %arg12[%c2_303, %c2_304, %c0_305] : memref<10x10x128xf32, #tpu.memory_space<vmem>>, vector<8x8x128xf32>
    %327 = vector.shape_cast %326 : vector<8x8x128xf32> to vector<64x128xf32>
    %328 = arith.truncf %327 : vector<64x128xf32> to vector<64x128xbf16>
    %c8_306 = arith.constant 8 : index
    %c0_307 = arith.constant 0 : index
    %c0_308 = arith.constant 0 : index
    %329 = vector.load %arg4[%c8_306, %c0_307, %c0_308] : memref<9x128x128xbf16, #tpu.memory_space<vmem>>, vector<1x128x128xbf16>
    %330 = vector.shape_cast %329 : vector<1x128x128xbf16> to vector<128x128xbf16>
    %cst_309 = arith.constant dense<0.000000e+00> : vector<64x128xf32>
    %331 = tpu.matmul %328, %330, %cst_309 {dimension_numbers = #tpu.dot_dimension_numbers<[1], [0], [0], [1], [0, 0, 1, 1], [], []>} : vector<64x128xbf16>, vector<128x128xbf16>, vector<64x128xf32> -> vector<64x128xf32>
    %332 = arith.addf %325, %331 : vector<64x128xf32>
    %c0_310 = arith.constant 0 : index
    %c0_311 = arith.constant 0 : index
    %333 = vector.load %arg8[%c0_310, %c0_311] : memref<1x128xf32, #tpu.memory_space<vmem>>, vector<1x128xf32>
    %334 = vector.broadcast %333 : vector<1x128xf32> to vector<64x128xf32>
    %335 = arith.addf %332, %334 : vector<64x128xf32>
    %cst_312 = arith.constant 0.000000e+00 : f32
    %336 = vector.broadcast %cst_312 : f32 to vector<64x128xf32>
    %337 = arith.maximumf %335, %336 : vector<64x128xf32>
    %338 = tpu.iota {dimensions = array<i32: 1>} : vector<1x10xi32>
    %c0_313 = arith.constant 0 : index
    %c0_314 = arith.constant 0 : index
    %339 = vector.load %arg9[%c0_313, %c0_314] : memref<1x10xf32, #tpu.memory_space<vmem>>, vector<1x10xf32>
    %c0_315 = arith.constant 0 : index
    %c0_316 = arith.constant 0 : index
    %c0_317 = arith.constant 0 : index
    %340 = vector.load %arg5[%c0_315, %c0_316, %c0_317] : memref<10x64x128xbf16, #tpu.memory_space<vmem>>, vector<1x64x128xbf16>
    %341 = vector.shape_cast %340 : vector<1x64x128xbf16> to vector<64x128xbf16>
    %342 = arith.extf %341 : vector<64x128xbf16> to vector<64x128xf32>
    %343 = arith.mulf %337, %342 : vector<64x128xf32>
    %344 = vector.shape_cast %343 : vector<64x128xf32> to vector<1x64x128xf32>
    %cst_318 = arith.constant dense<0.000000e+00> : vector<1xf32>
    %345 = vector.multi_reduction <add>, %344, %cst_318 [1, 2] : vector<1x64x128xf32> to vector<1xf32>
    %346 = vector.shape_cast %345 : vector<1xf32> to vector<1x1x1xf32>
    %347 = vector.extract %346[0, 0, 0] : f32 from vector<1x1x1xf32>
    %348 = vector.broadcast %347 : f32 to vector<1x1xf32>
    %c0_i32 = arith.constant 0 : i32
    %349 = vector.broadcast %c0_i32 : i32 to vector<1x10xi32>
    %350 = arith.cmpi eq, %338, %349 : vector<1x10xi32>
    %cst_319 = arith.constant 0.000000e+00 : f32
    %351 = vector.shape_cast %348 : vector<1x1xf32> to vector<1x1xf32>
    %352 = vector.broadcast %351 : vector<1x1xf32> to vector<1x10xf32>
    %353 = vector.broadcast %cst_319 : f32 to vector<1x10xf32>
    %354 = arith.select %350, %352, %353 : vector<1x10xi1>, vector<1x10xf32>
    %355 = arith.addf %339, %354 : vector<1x10xf32>
    %c1_320 = arith.constant 1 : index
    %c0_321 = arith.constant 0 : index
    %c0_322 = arith.constant 0 : index
    %356 = vector.load %arg5[%c1_320, %c0_321, %c0_322] : memref<10x64x128xbf16, #tpu.memory_space<vmem>>, vector<1x64x128xbf16>
    %357 = vector.shape_cast %356 : vector<1x64x128xbf16> to vector<64x128xbf16>
    %358 = arith.extf %357 : vector<64x128xbf16> to vector<64x128xf32>
    %359 = arith.mulf %337, %358 : vector<64x128xf32>
    %360 = vector.shape_cast %359 : vector<64x128xf32> to vector<1x64x128xf32>
    %cst_323 = arith.constant dense<0.000000e+00> : vector<1xf32>
    %361 = vector.multi_reduction <add>, %360, %cst_323 [1, 2] : vector<1x64x128xf32> to vector<1xf32>
    %362 = vector.shape_cast %361 : vector<1xf32> to vector<1x1x1xf32>
    %363 = vector.extract %362[0, 0, 0] : f32 from vector<1x1x1xf32>
    %364 = vector.broadcast %363 : f32 to vector<1x1xf32>
    %c1_i32 = arith.constant 1 : i32
    %365 = vector.broadcast %c1_i32 : i32 to vector<1x10xi32>
    %366 = arith.cmpi eq, %338, %365 : vector<1x10xi32>
    %cst_324 = arith.constant 0.000000e+00 : f32
    %367 = vector.shape_cast %364 : vector<1x1xf32> to vector<1x1xf32>
    %368 = vector.broadcast %367 : vector<1x1xf32> to vector<1x10xf32>
    %369 = vector.broadcast %cst_324 : f32 to vector<1x10xf32>
    %370 = arith.select %366, %368, %369 : vector<1x10xi1>, vector<1x10xf32>
    %371 = arith.addf %355, %370 : vector<1x10xf32>
    %c2_325 = arith.constant 2 : index
    %c0_326 = arith.constant 0 : index
    %c0_327 = arith.constant 0 : index
    %372 = vector.load %arg5[%c2_325, %c0_326, %c0_327] : memref<10x64x128xbf16, #tpu.memory_space<vmem>>, vector<1x64x128xbf16>
    %373 = vector.shape_cast %372 : vector<1x64x128xbf16> to vector<64x128xbf16>
    %374 = arith.extf %373 : vector<64x128xbf16> to vector<64x128xf32>
    %375 = arith.mulf %337, %374 : vector<64x128xf32>
    %376 = vector.shape_cast %375 : vector<64x128xf32> to vector<1x64x128xf32>
    %cst_328 = arith.constant dense<0.000000e+00> : vector<1xf32>
    %377 = vector.multi_reduction <add>, %376, %cst_328 [1, 2] : vector<1x64x128xf32> to vector<1xf32>
    %378 = vector.shape_cast %377 : vector<1xf32> to vector<1x1x1xf32>
    %379 = vector.extract %378[0, 0, 0] : f32 from vector<1x1x1xf32>
    %380 = vector.broadcast %379 : f32 to vector<1x1xf32>
    %c2_i32 = arith.constant 2 : i32
    %381 = vector.broadcast %c2_i32 : i32 to vector<1x10xi32>
    %382 = arith.cmpi eq, %338, %381 : vector<1x10xi32>
    %cst_329 = arith.constant 0.000000e+00 : f32
    %383 = vector.shape_cast %380 : vector<1x1xf32> to vector<1x1xf32>
    %384 = vector.broadcast %383 : vector<1x1xf32> to vector<1x10xf32>
    %385 = vector.broadcast %cst_329 : f32 to vector<1x10xf32>
    %386 = arith.select %382, %384, %385 : vector<1x10xi1>, vector<1x10xf32>
    %387 = arith.addf %371, %386 : vector<1x10xf32>
    %c3_330 = arith.constant 3 : index
    %c0_331 = arith.constant 0 : index
    %c0_332 = arith.constant 0 : index
    %388 = vector.load %arg5[%c3_330, %c0_331, %c0_332] : memref<10x64x128xbf16, #tpu.memory_space<vmem>>, vector<1x64x128xbf16>
    %389 = vector.shape_cast %388 : vector<1x64x128xbf16> to vector<64x128xbf16>
    %390 = arith.extf %389 : vector<64x128xbf16> to vector<64x128xf32>
    %391 = arith.mulf %337, %390 : vector<64x128xf32>
    %392 = vector.shape_cast %391 : vector<64x128xf32> to vector<1x64x128xf32>
    %cst_333 = arith.constant dense<0.000000e+00> : vector<1xf32>
    %393 = vector.multi_reduction <add>, %392, %cst_333 [1, 2] : vector<1x64x128xf32> to vector<1xf32>
    %394 = vector.shape_cast %393 : vector<1xf32> to vector<1x1x1xf32>
    %395 = vector.extract %394[0, 0, 0] : f32 from vector<1x1x1xf32>
    %396 = vector.broadcast %395 : f32 to vector<1x1xf32>
    %c3_i32 = arith.constant 3 : i32
    %397 = vector.broadcast %c3_i32 : i32 to vector<1x10xi32>
    %398 = arith.cmpi eq, %338, %397 : vector<1x10xi32>
    %cst_334 = arith.constant 0.000000e+00 : f32
    %399 = vector.shape_cast %396 : vector<1x1xf32> to vector<1x1xf32>
    %400 = vector.broadcast %399 : vector<1x1xf32> to vector<1x10xf32>
    %401 = vector.broadcast %cst_334 : f32 to vector<1x10xf32>
    %402 = arith.select %398, %400, %401 : vector<1x10xi1>, vector<1x10xf32>
    %403 = arith.addf %387, %402 : vector<1x10xf32>
    %c4_335 = arith.constant 4 : index
    %c0_336 = arith.constant 0 : index
    %c0_337 = arith.constant 0 : index
    %404 = vector.load %arg5[%c4_335, %c0_336, %c0_337] : memref<10x64x128xbf16, #tpu.memory_space<vmem>>, vector<1x64x128xbf16>
    %405 = vector.shape_cast %404 : vector<1x64x128xbf16> to vector<64x128xbf16>
    %406 = arith.extf %405 : vector<64x128xbf16> to vector<64x128xf32>
    %407 = arith.mulf %337, %406 : vector<64x128xf32>
    %408 = vector.shape_cast %407 : vector<64x128xf32> to vector<1x64x128xf32>
    %cst_338 = arith.constant dense<0.000000e+00> : vector<1xf32>
    %409 = vector.multi_reduction <add>, %408, %cst_338 [1, 2] : vector<1x64x128xf32> to vector<1xf32>
    %410 = vector.shape_cast %409 : vector<1xf32> to vector<1x1x1xf32>
    %411 = vector.extract %410[0, 0, 0] : f32 from vector<1x1x1xf32>
    %412 = vector.broadcast %411 : f32 to vector<1x1xf32>
    %c4_i32 = arith.constant 4 : i32
    %413 = vector.broadcast %c4_i32 : i32 to vector<1x10xi32>
    %414 = arith.cmpi eq, %338, %413 : vector<1x10xi32>
    %cst_339 = arith.constant 0.000000e+00 : f32
    %415 = vector.shape_cast %412 : vector<1x1xf32> to vector<1x1xf32>
    %416 = vector.broadcast %415 : vector<1x1xf32> to vector<1x10xf32>
    %417 = vector.broadcast %cst_339 : f32 to vector<1x10xf32>
    %418 = arith.select %414, %416, %417 : vector<1x10xi1>, vector<1x10xf32>
    %419 = arith.addf %403, %418 : vector<1x10xf32>
    %c5_340 = arith.constant 5 : index
    %c0_341 = arith.constant 0 : index
    %c0_342 = arith.constant 0 : index
    %420 = vector.load %arg5[%c5_340, %c0_341, %c0_342] : memref<10x64x128xbf16, #tpu.memory_space<vmem>>, vector<1x64x128xbf16>
    %421 = vector.shape_cast %420 : vector<1x64x128xbf16> to vector<64x128xbf16>
    %422 = arith.extf %421 : vector<64x128xbf16> to vector<64x128xf32>
    %423 = arith.mulf %337, %422 : vector<64x128xf32>
    %424 = vector.shape_cast %423 : vector<64x128xf32> to vector<1x64x128xf32>
    %cst_343 = arith.constant dense<0.000000e+00> : vector<1xf32>
    %425 = vector.multi_reduction <add>, %424, %cst_343 [1, 2] : vector<1x64x128xf32> to vector<1xf32>
    %426 = vector.shape_cast %425 : vector<1xf32> to vector<1x1x1xf32>
    %427 = vector.extract %426[0, 0, 0] : f32 from vector<1x1x1xf32>
    %428 = vector.broadcast %427 : f32 to vector<1x1xf32>
    %c5_i32 = arith.constant 5 : i32
    %429 = vector.broadcast %c5_i32 : i32 to vector<1x10xi32>
    %430 = arith.cmpi eq, %338, %429 : vector<1x10xi32>
    %cst_344 = arith.constant 0.000000e+00 : f32
    %431 = vector.shape_cast %428 : vector<1x1xf32> to vector<1x1xf32>
    %432 = vector.broadcast %431 : vector<1x1xf32> to vector<1x10xf32>
    %433 = vector.broadcast %cst_344 : f32 to vector<1x10xf32>
    %434 = arith.select %430, %432, %433 : vector<1x10xi1>, vector<1x10xf32>
    %435 = arith.addf %419, %434 : vector<1x10xf32>
    %c6_345 = arith.constant 6 : index
    %c0_346 = arith.constant 0 : index
    %c0_347 = arith.constant 0 : index
    %436 = vector.load %arg5[%c6_345, %c0_346, %c0_347] : memref<10x64x128xbf16, #tpu.memory_space<vmem>>, vector<1x64x128xbf16>
    %437 = vector.shape_cast %436 : vector<1x64x128xbf16> to vector<64x128xbf16>
    %438 = arith.extf %437 : vector<64x128xbf16> to vector<64x128xf32>
    %439 = arith.mulf %337, %438 : vector<64x128xf32>
    %440 = vector.shape_cast %439 : vector<64x128xf32> to vector<1x64x128xf32>
    %cst_348 = arith.constant dense<0.000000e+00> : vector<1xf32>
    %441 = vector.multi_reduction <add>, %440, %cst_348 [1, 2] : vector<1x64x128xf32> to vector<1xf32>
    %442 = vector.shape_cast %441 : vector<1xf32> to vector<1x1x1xf32>
    %443 = vector.extract %442[0, 0, 0] : f32 from vector<1x1x1xf32>
    %444 = vector.broadcast %443 : f32 to vector<1x1xf32>
    %c6_i32 = arith.constant 6 : i32
    %445 = vector.broadcast %c6_i32 : i32 to vector<1x10xi32>
    %446 = arith.cmpi eq, %338, %445 : vector<1x10xi32>
    %cst_349 = arith.constant 0.000000e+00 : f32
    %447 = vector.shape_cast %444 : vector<1x1xf32> to vector<1x1xf32>
    %448 = vector.broadcast %447 : vector<1x1xf32> to vector<1x10xf32>
    %449 = vector.broadcast %cst_349 : f32 to vector<1x10xf32>
    %450 = arith.select %446, %448, %449 : vector<1x10xi1>, vector<1x10xf32>
    %451 = arith.addf %435, %450 : vector<1x10xf32>
    %c7_350 = arith.constant 7 : index
    %c0_351 = arith.constant 0 : index
    %c0_352 = arith.constant 0 : index
    %452 = vector.load %arg5[%c7_350, %c0_351, %c0_352] : memref<10x64x128xbf16, #tpu.memory_space<vmem>>, vector<1x64x128xbf16>
    %453 = vector.shape_cast %452 : vector<1x64x128xbf16> to vector<64x128xbf16>
    %454 = arith.extf %453 : vector<64x128xbf16> to vector<64x128xf32>
    %455 = arith.mulf %337, %454 : vector<64x128xf32>
    %456 = vector.shape_cast %455 : vector<64x128xf32> to vector<1x64x128xf32>
    %cst_353 = arith.constant dense<0.000000e+00> : vector<1xf32>
    %457 = vector.multi_reduction <add>, %456, %cst_353 [1, 2] : vector<1x64x128xf32> to vector<1xf32>
    %458 = vector.shape_cast %457 : vector<1xf32> to vector<1x1x1xf32>
    %459 = vector.extract %458[0, 0, 0] : f32 from vector<1x1x1xf32>
    %460 = vector.broadcast %459 : f32 to vector<1x1xf32>
    %c7_i32 = arith.constant 7 : i32
    %461 = vector.broadcast %c7_i32 : i32 to vector<1x10xi32>
    %462 = arith.cmpi eq, %338, %461 : vector<1x10xi32>
    %cst_354 = arith.constant 0.000000e+00 : f32
    %463 = vector.shape_cast %460 : vector<1x1xf32> to vector<1x1xf32>
    %464 = vector.broadcast %463 : vector<1x1xf32> to vector<1x10xf32>
    %465 = vector.broadcast %cst_354 : f32 to vector<1x10xf32>
    %466 = arith.select %462, %464, %465 : vector<1x10xi1>, vector<1x10xf32>
    %467 = arith.addf %451, %466 : vector<1x10xf32>
    %c8_355 = arith.constant 8 : index
    %c0_356 = arith.constant 0 : index
    %c0_357 = arith.constant 0 : index
    %468 = vector.load %arg5[%c8_355, %c0_356, %c0_357] : memref<10x64x128xbf16, #tpu.memory_space<vmem>>, vector<1x64x128xbf16>
    %469 = vector.shape_cast %468 : vector<1x64x128xbf16> to vector<64x128xbf16>
    %470 = arith.extf %469 : vector<64x128xbf16> to vector<64x128xf32>
    %471 = arith.mulf %337, %470 : vector<64x128xf32>
    %472 = vector.shape_cast %471 : vector<64x128xf32> to vector<1x64x128xf32>
    %cst_358 = arith.constant dense<0.000000e+00> : vector<1xf32>
    %473 = vector.multi_reduction <add>, %472, %cst_358 [1, 2] : vector<1x64x128xf32> to vector<1xf32>
    %474 = vector.shape_cast %473 : vector<1xf32> to vector<1x1x1xf32>
    %475 = vector.extract %474[0, 0, 0] : f32 from vector<1x1x1xf32>
    %476 = vector.broadcast %475 : f32 to vector<1x1xf32>
    %c8_i32 = arith.constant 8 : i32
    %477 = vector.broadcast %c8_i32 : i32 to vector<1x10xi32>
    %478 = arith.cmpi eq, %338, %477 : vector<1x10xi32>
    %cst_359 = arith.constant 0.000000e+00 : f32
    %479 = vector.shape_cast %476 : vector<1x1xf32> to vector<1x1xf32>
    %480 = vector.broadcast %479 : vector<1x1xf32> to vector<1x10xf32>
    %481 = vector.broadcast %cst_359 : f32 to vector<1x10xf32>
    %482 = arith.select %478, %480, %481 : vector<1x10xi1>, vector<1x10xf32>
    %483 = arith.addf %467, %482 : vector<1x10xf32>
    %c9_360 = arith.constant 9 : index
    %c0_361 = arith.constant 0 : index
    %c0_362 = arith.constant 0 : index
    %484 = vector.load %arg5[%c9_360, %c0_361, %c0_362] : memref<10x64x128xbf16, #tpu.memory_space<vmem>>, vector<1x64x128xbf16>
    %485 = vector.shape_cast %484 : vector<1x64x128xbf16> to vector<64x128xbf16>
    %486 = arith.extf %485 : vector<64x128xbf16> to vector<64x128xf32>
    %487 = arith.mulf %337, %486 : vector<64x128xf32>
    %488 = vector.shape_cast %487 : vector<64x128xf32> to vector<1x64x128xf32>
    %cst_363 = arith.constant dense<0.000000e+00> : vector<1xf32>
    %489 = vector.multi_reduction <add>, %488, %cst_363 [1, 2] : vector<1x64x128xf32> to vector<1xf32>
    %490 = vector.shape_cast %489 : vector<1xf32> to vector<1x1x1xf32>
    %491 = vector.extract %490[0, 0, 0] : f32 from vector<1x1x1xf32>
    %492 = vector.broadcast %491 : f32 to vector<1x1xf32>
    %c9_i32 = arith.constant 9 : i32
    %493 = vector.broadcast %c9_i32 : i32 to vector<1x10xi32>
    %494 = arith.cmpi eq, %338, %493 : vector<1x10xi32>
    %cst_364 = arith.constant 0.000000e+00 : f32
    %495 = vector.shape_cast %492 : vector<1x1xf32> to vector<1x1xf32>
    %496 = vector.broadcast %495 : vector<1x1xf32> to vector<1x10xf32>
    %497 = vector.broadcast %cst_364 : f32 to vector<1x10xf32>
    %498 = arith.select %494, %496, %497 : vector<1x10xi1>, vector<1x10xf32>
    %499 = arith.addf %483, %498 : vector<1x10xf32>
    %c0_365 = arith.constant 0 : index
    %c0_366 = arith.constant 0 : index
    %c0_367 = arith.constant 0 : index
    %500 = vector.load %arg10[%c0_365, %c0_366, %c0_367] : memref<1x1x10xf32, #tpu.memory_space<vmem>>, vector<1x1x10xf32>
    %501 = vector.shape_cast %500 : vector<1x1x10xf32> to vector<1x10xf32>
    %502 = vector.shape_cast %499 : vector<1x10xf32> to vector<1x1x10xf32>
    tpu.vector_store %arg10[%c0_365, %c0_366, %c0_367], %502 {strides = array<i32>} : memref<1x1x10xf32, #tpu.memory_space<vmem>>, vector<1x1x10xf32>,
    return
  }
  func.func @transform_0(%arg0: i32) -> (i32, i32, i32, i32) {
    %c0_i32 = arith.constant 0 : i32
    %c0_i32_0 = arith.constant 0 : i32
    %c0_i32_1 = arith.constant 0 : i32
    %c0_i32_2 = arith.constant 0 : i32
    return %arg0, %c0_i32, %c0_i32_0, %c0_i32_1 : i32, i32, i32, i32
  }
  func.func @transform_1(%arg0: i32) -> (i32, i32) {
    %c0_i32 = arith.constant 0 : i32
    %c0_i32_0 = arith.constant 0 : i32
    %c0_i32_1 = arith.constant 0 : i32
    return %c0_i32, %c0_i32_0 : i32, i32
  }
  func.func @transform_2(%arg0: i32) -> (i32, i32, i32) {
    %c0_i32 = arith.constant 0 : i32
    %c0_i32_0 = arith.constant 0 : i32
    %c0_i32_1 = arith.constant 0 : i32
    %c0_i32_2 = arith.constant 0 : i32
    return %c0_i32, %c0_i32_0, %c0_i32_1 : i32, i32, i32
  }
  func.func @transform_3(%arg0: i32) -> (i32, i32, i32) {
    %c0_i32 = arith.constant 0 : i32
    %c0_i32_0 = arith.constant 0 : i32
    %c0_i32_1 = arith.constant 0 : i32
    %c0_i32_2 = arith.constant 0 : i32
    return %c0_i32, %c0_i32_0, %c0_i32_1 : i32, i32, i32
  }
  func.func @transform_4(%arg0: i32) -> (i32, i32, i32) {
    %c0_i32 = arith.constant 0 : i32
    %c0_i32_0 = arith.constant 0 : i32
    %c0_i32_1 = arith.constant 0 : i32
    %c0_i32_2 = arith.constant 0 : i32
    return %c0_i32, %c0_i32_0, %c0_i32_1 : i32, i32, i32
  }
  func.func @transform_5(%arg0: i32) -> (i32, i32) {
    %c0_i32 = arith.constant 0 : i32
    %c0_i32_0 = arith.constant 0 : i32
    %c0_i32_1 = arith.constant 0 : i32
    return %c0_i32, %c0_i32_0 : i32, i32
  }
  func.func @transform_6(%arg0: i32) -> (i32, i32) {
    %c0_i32 = arith.constant 0 : i32
    %c0_i32_0 = arith.constant 0 : i32
    %c0_i32_1 = arith.constant 0 : i32
    return %c0_i32, %c0_i32_0 : i32, i32
  }
  func.func @transform_7(%arg0: i32) -> (i32, i32) {
    %c0_i32 = arith.constant 0 : i32
    %c0_i32_0 = arith.constant 0 : i32
    %c0_i32_1 = arith.constant 0 : i32
    return %c0_i32, %c0_i32_0 : i32, i32
  }
  func.func @transform_8(%arg0: i32) -> (i32, i32) {
    %c0_i32 = arith.constant 0 : i32
    %c0_i32_0 = arith.constant 0 : i32
    %c0_i32_1 = arith.constant 0 : i32
    return %c0_i32, %c0_i32_0 : i32, i32
  }
  func.func @transform_9(%arg0: i32) -> (i32, i32, i32) {
    %c0_i32 = arith.constant 0 : i32
    %c0_i32_0 = arith.constant 0 : i32
    %c0_i32_1 = arith.constant 0 : i32
    return %arg0, %c0_i32, %c0_i32_0 : i32, i32, i32
  }
}

</mosaic_0001>

<llo_original>
// kernel: mynet_forward.1
$region0: #{mynet_forward.1}
  #allocation0 [shape = 'u32[]', space=smem, size = 0x4, offset = 0x4, fixed_abs, tag = 'smem constant byte address 0x4 - core index']
  #allocation1 [shape = 'u32[144,128]{1,0:T(1,128)}', space=vmem, size = 0x12000, scoped, tag = 'internal scratch']
  #allocation2 [shape = 'f32[4,10,10,128]{3,2,1,0:T(8,128)}', space=vmem, size = 0x50000, scoped, tag = 'scratch operand']
  #allocation3 [shape = 'f32[10,10,128]{2,1,0:T(8,128)}', space=vmem, size = 0x14000, scoped, tag = 'scratch operand']
  %s0 = inlined_call_operand.vmem [shape: bf16[2,4,64,160], index: 0, kind: input, shape index: {}]
  %s1 = inlined_call_operand.vmem [shape: bf16[160,128], index: 1, kind: input, shape index: {}]
  %s2 = inlined_call_operand.vmem [shape: bf16[25,128,128], index: 2, kind: input, shape index: {}]
  %s3 = inlined_call_operand.vmem [shape: bf16[9,128,128], index: 3, kind: input, shape index: {}]
  %s4 = inlined_call_operand.vmem [shape: bf16[10,64,128], index: 4, kind: input, shape index: {}]
  %s5 = inlined_call_operand.vmem [shape: f32[1,128], index: 5, kind: input, shape index: {}]
  %s6 = inlined_call_operand.vmem [shape: f32[1,128], index: 6, kind: input, shape index: {}]
  %s7 = inlined_call_operand.vmem [shape: f32[1,128], index: 7, kind: input, shape index: {}]
  %s8 = inlined_call_operand.vmem [shape: f32[1,10], index: 8, kind: input, shape index: {}]
  %s9 = inlined_call_operand.hbm [shape: f32[2,1,10], index: 9, kind: output, shape index: {}]
  %s10 = sld [smem:[#allocation0]]
  $region69: #{mynet_forward.1} parent=0
    _
  %s12 = ssub.s32 1, %s10
  %s13 = scalar_select 0, %s12, %s10
  $region1: #{mynet_forward.1} parent=0
    #allocation4 [shape = 'u8[1024]{0}', space=vmem, size = 0x400, scoped, tag = 'output window, operand 0']
    #allocation5 [shape = 's32[2]{0}', space=sflag, size = 0x8, scoped, tag = 'scoped memory for mynet_forward.1']
    %14 = vsyncpa [#allocation5], 0
    %s15 = scalar_lea.sflag [#allocation5], 1
    %16 = vsyncpa %s15, 0
    loop: start=0, step=1, limit=4
    $region2: #{mynet_forward.1} parent=1 // loop_pre_header
      _
    $region3: #{mynet_forward.1} parent=1 // loop_header
      %s18 = sphi 0, %s22
      %p19 = scmp.ge.s32.totalorder %s18, 4
      %s28 = sphi 0, %s30
      %s31 = sphi 0, %s28
      %s32 = sphi 0, %s31
      %s48 = sphi 0, %s32
      %s52 = sphi 0, %s52
      %s54 = sphi 0, %s52
      %s55 = sphi 0, %s54
      %s69 = sphi 0, %s55
      %s73 = sphi 0, %s73
      %s75 = sphi 0, %s73
      %s76 = sphi 0, %s75
      %s90 = sphi 0, %s76
      %s94 = sphi 0, %s94
      %s96 = sphi 0, %s94
      %s97 = sphi 0, %s96
      %s111 = sphi 0, %s97
      %s115 = sphi 0, %s115
      %s117 = sphi 0, %s115
      %s118 = sphi 0, %s117
      %s132 = sphi 0, %s118
      %s136 = sphi 0, %s136
      %s138 = sphi 0, %s136
      %s139 = sphi 0, %s138
      %s153 = sphi 0, %s139
      %s157 = sphi 0, %s157
      %s159 = sphi 0, %s157
      %s160 = sphi 0, %s159
      %s174 = sphi 0, %s160
      %s178 = sphi 0, %s178
      %s180 = sphi 0, %s178
      %s181 = sphi 0, %s180
      %s195 = sphi 0, %s181
      %s199 = sphi 0, %s199
      %s201 = sphi 0, %s199
      %s202 = sphi 0, %s201
      %s216 = sphi 0, %s202
      %s222 = sphi 0, %s224
      %s225 = sphi 0, %s222
      %s226 = sphi 0, %s225
      %s242 = sphi 0, %s226
    $region4: #{mynet_forward.1} parent=1 // loop_header_branch
      %21 = sbr.rel (%p19) target = $region8
    $region5: #{mynet_forward.1} parent=1 // loop_body
      %s23 = ssub.s32 %s18, 1
      %s24 = ssub.s32 %s18, 2
      %s25 = sadd.s32 %s18, 1
      %s26 = ssub.s32 %s18, %s25
      %p27 = scmp.eq.s32.totalorder %s26, 0
      %s29 = sadd.s32 %s28, 1
      %s30 = scalar_select %p27, %s28, %s29
      %p33 = pneg %p27
      %p34 = scmp.eq.s32.totalorder %s18, 1
      %p35 = por %p33, %p34
      %p36 = scmp.ne.s32.totalorder %s28, %s31
      %p37 = scmp.eq.s32.totalorder %s18, 0
      %p38 = por %p36, %p37
      %p39 = scmp.ne.s32.totalorder %s28, %s31
      %p40 = scmp.eq.s32.totalorder %s23, 1
      %p41 = por %p39, %p40
      %p42 = scmp.ne.s32.totalorder %s31, %s32
      %p43 = scmp.eq.s32.totalorder %s23, 0
      %p44 = por %p42, %p43
      %p45 = scmp.ne.s32.totalorder %s31, %s32
      %p46 = scmp.eq.s32.totalorder %s24, 1
      %p47 = por %p45, %p46
      %p49 = scmp.ne.s32.totalorder %s32, %s48
      %p50 = scmp.eq.s32.totalorder %s24, 0
      %p51 = por %p49, %p50
      %s53 = sadd.s32 %s52, 1
      %p56 = scmp.eq.s32.totalorder %s18, 1
      %p57 = scmp.ne.s32.totalorder %s52, %s54
      %p58 = scmp.eq.s32.totalorder %s18, 0
      %p59 = por %p57, %p58
      %p60 = scmp.ne.s32.totalorder %s52, %s54
      %p61 = scmp.eq.s32.totalorder %s23, 1
      %p62 = por %p60, %p61
      %p63 = scmp.ne.s32.totalorder %s54, %s55
      %p64 = scmp.eq.s32.totalorder %s23, 0
      %p65 = por %p63, %p64
      %p66 = scmp.ne.s32.totalorder %s54, %s55
      %p67 = scmp.eq.s32.totalorder %s24, 1
      %p68 = por %p66, %p67
      %p70 = scmp.ne.s32.totalorder %s55, %s69
      %p71 = scmp.eq.s32.totalorder %s24, 0
      %p72 = por %p70, %p71
      %s74 = sadd.s32 %s73, 1
      %p77 = scmp.eq.s32.totalorder %s18, 1
      %p78 = scmp.ne.s32.totalorder %s73, %s75
      %p79 = scmp.eq.s32.totalorder %s18, 0
      %p80 = por %p78, %p79
      %p81 = scmp.ne.s32.totalorder %s73, %s75
      %p82 = scmp.eq.s32.totalorder %s23, 1
      %p83 = por %p81, %p82
      %p84 = scmp.ne.s32.totalorder %s75, %s76
      %p85 = scmp.eq.s32.totalorder %s23, 0
      %p86 = por %p84, %p85
      %p87 = scmp.ne.s32.totalorder %s75, %s76
      %p88 = scmp.eq.s32.totalorder %s24, 1
      %p89 = por %p87, %p88
      %p91 = scmp.ne.s32.totalorder %s76, %s90
      %p92 = scmp.eq.s32.totalorder %s24, 0
      %p93 = por %p91, %p92
      %s95 = sadd.s32 %s94, 1
      %p98 = scmp.eq.s32.totalorder %s18, 1
      %p99 = scmp.ne.s32.totalorder %s94, %s96
      %p100 = scmp.eq.s32.totalorder %s18, 0
      %p101 = por %p99, %p100
      %p102 = scmp.ne.s32.totalorder %s94, %s96
      %p103 = scmp.eq.s32.totalorder %s23, 1
      %p104 = por %p102, %p103
      %p105 = scmp.ne.s32.totalorder %s96, %s97
      %p106 = scmp.eq.s32.totalorder %s23, 0
      %p107 = por %p105, %p106
      %p108 = scmp.ne.s32.totalorder %s96, %s97
      %p109 = scmp.eq.s32.totalorder %s24, 1
      %p110 = por %p108, %p109
      %p112 = scmp.ne.s32.totalorder %s97, %s111
      %p113 = scmp.eq.s32.totalorder %s24, 0
      %p114 = por %p112, %p113
      %s116 = sadd.s32 %s115, 1
      %p119 = scmp.eq.s32.totalorder %s18, 1
      %p120 = scmp.ne.s32.totalorder %s115, %s117
      %p121 = scmp.eq.s32.totalorder %s18, 0
      %p122 = por %p120, %p121
      %p123 = scmp.ne.s32.totalorder %s115, %s117
      %p124 = scmp.eq.s32.totalorder %s23, 1
      %p125 = por %p123, %p124
      %p126 = scmp.ne.s32.totalorder %s117, %s118
      %p127 = scmp.eq.s32.totalorder %s23, 0
      %p128 = por %p126, %p127
      %p129 = scmp.ne.s32.totalorder %s117, %s118
      %p130 = scmp.eq.s32.totalorder %s24, 1
      %p131 = por %p129, %p130
      %p133 = scmp.ne.s32.totalorder %s118, %s132
      %p134 = scmp.eq.s32.totalorder %s24, 0
      %p135 = por %p133, %p134
      %s137 = sadd.s32 %s136, 1
      %p140 = scmp.eq.s32.totalorder %s18, 1
      %p141 = scmp.ne.s32.totalorder %s136, %s138
      %p142 = scmp.eq.s32.totalorder %s18, 0
      %p143 = por %p141, %p142
      %p144 = scmp.ne.s32.totalorder %s136, %s138
      %p145 = scmp.eq.s32.totalorder %s23, 1
      %p146 = por %p144, %p145
      %p147 = scmp.ne.s32.totalorder %s138, %s139
      %p148 = scmp.eq.s32.totalorder %s23, 0
      %p149 = por %p147, %p148
      %p150 = scmp.ne.s32.totalorder %s138, %s139
      %p151 = scmp.eq.s32.totalorder %s24, 1
      %p152 = por %p150, %p151
      %p154 = scmp.ne.s32.totalorder %s139, %s153
      %p155 = scmp.eq.s32.totalorder %s24, 0
      %p156 = por %p154, %p155
      %s158 = sadd.s32 %s157, 1
      %p161 = scmp.eq.s32.totalorder %s18, 1
      %p162 = scmp.ne.s32.totalorder %s157, %s159
      %p163 = scmp.eq.s32.totalorder %s18, 0
      %p164 = por %p162, %p163
      %p165 = scmp.ne.s32.totalorder %s157, %s159
      %p166 = scmp.eq.s32.totalorder %s23, 1
      %p167 = por %p165, %p166
      %p168 = scmp.ne.s32.totalorder %s159, %s160
      %p169 = scmp.eq.s32.totalorder %s23, 0
      %p170 = por %p168, %p169
      %p171 = scmp.ne.s32.totalorder %s159, %s160
      %p172 = scmp.eq.s32.totalorder %s24, 1
      %p173 = por %p171, %p172
      %p175 = scmp.ne.s32.totalorder %s160, %s174
      %p176 = scmp.eq.s32.totalorder %s24, 0
      %p177 = por %p175, %p176
      %s179 = sadd.s32 %s178, 1
      %p182 = scmp.eq.s32.totalorder %s18, 1
      %p183 = scmp.ne.s32.totalorder %s178, %s180
      %p184 = scmp.eq.s32.totalorder %s18, 0
      %p185 = por %p183, %p184
      %p186 = scmp.ne.s32.totalorder %s178, %s180
      %p187 = scmp.eq.s32.totalorder %s23, 1
      %p188 = por %p186, %p187
      %p189 = scmp.ne.s32.totalorder %s180, %s181
      %p190 = scmp.eq.s32.totalorder %s23, 0
      %p191 = por %p189, %p190
      %p192 = scmp.ne.s32.totalorder %s180, %s181
      %p193 = scmp.eq.s32.totalorder %s24, 1
      %p194 = por %p192, %p193
      %p196 = scmp.ne.s32.totalorder %s181, %s195
      %p197 = scmp.eq.s32.totalorder %s24, 0
      %p198 = por %p196, %p197
      %s200 = sadd.s32 %s199, 1
      %p203 = scmp.eq.s32.totalorder %s18, 1
      %p204 = scmp.ne.s32.totalorder %s199, %s201
      %p205 = scmp.eq.s32.totalorder %s18, 0
      %p206 = por %p204, %p205
      %p207 = scmp.ne.s32.totalorder %s199, %s201
      %p208 = scmp.eq.s32.totalorder %s23, 1
      %p209 = por %p207, %p208
      %p210 = scmp.ne.s32.totalorder %s201, %s202
      %p211 = scmp.eq.s32.totalorder %s23, 0
      %p212 = por %p210, %p211
      %p213 = scmp.ne.s32.totalorder %s201, %s202
      %p214 = scmp.eq.s32.totalorder %s24, 1
      %p215 = por %p213, %p214
      %p217 = scmp.ne.s32.totalorder %s202, %s216
      %p218 = scmp.eq.s32.totalorder %s24, 0
      %p219 = por %p217, %p218
      %s220 = ssub.s32 %s18, %s25
      %p221 = scmp.eq.s32.totalorder %s220, 0
      %s223 = sadd.s32 %s222, 1
      %s224 = scalar_select %p221, %s222, %s223
      %p227 = pneg %p221
      %p228 = scmp.eq.s32.totalorder %s18, 1
      %p229 = por %p227, %p228
      %p230 = scmp.ne.s32.totalorder %s222, %s225
      %p231 = scmp.eq.s32.totalorder %s18, 0
      %p232 = por %p230, %p231
      %p233 = scmp.ne.s32.totalorder %s222, %s225
      %p234 = scmp.eq.s32.totalorder %s23, 1
      %p235 = por %p233, %p234
      %p236 = scmp.ne.s32.totalorder %s225, %s226
      %p237 = scmp.eq.s32.totalorder %s23, 0
      %p238 = por %p236, %p237
      %p239 = scmp.ne.s32.totalorder %s225, %s226
      %p240 = scmp.eq.s32.totalorder %s24, 1
      %p241 = por %p239, %p240
      %p243 = scmp.ne.s32.totalorder %s226, %s242
      %p244 = scmp.eq.s32.totalorder %s24, 0
      %p245 = por %p243, %p244
      %p246 = scmp.le.s32.totalorder 1, %s18
      %p247 = scmp.lt.s32.totalorder %s18, 3
      %p248 = pnand %p246, %p247
      %p249 = pneg %p248
      // Predicated region
      $region9: #{mynet_forward.1} parent=5 // pred_check
        _
      $region10: #{mynet_forward.1} parent=5 // pred_check_branch
        %251 = sbr.rel (%p248) target = $region12
      $region11: #{mynet_forward.1} parent=5 // pred_region
        %s252 = ssub.s32 %s18, 1
        // Predicated region
        $region13: #{mynet_forward.1} parent=11 // pred_check
          %p253 = pneg %p65
        $region14: #{mynet_forward.1} parent=11 // pred_check_branch
          %255 = sbr.rel (%p253) target = $region16
        $region15: #{mynet_forward.1} parent=11 // pred_region
          _
        $region16: #{mynet_forward.1} parent=11 // pred_fallthru
          _
        // Predicated region
        $region17: #{mynet_forward.1} parent=11 // pred_check
          %p256 = pneg %p86
        $region18: #{mynet_forward.1} parent=11 // pred_check_branch
          %258 = sbr.rel (%p256) target = $region20
        $region19: #{mynet_forward.1} parent=11 // pred_region
          _
        $region20: #{mynet_forward.1} parent=11 // pred_fallthru
          _
        // Predicated region
        $region21: #{mynet_forward.1} parent=11 // pred_check
          %p259 = pneg %p107
        $region22: #{mynet_forward.1} parent=11 // pred_check_branch
          %261 = sbr.rel (%p259) target = $region24
        $region23: #{mynet_forward.1} parent=11 // pred_region
          _
        $region24: #{mynet_forward.1} parent=11 // pred_fallthru
          _
        // Predicated region
        $region25: #{mynet_forward.1} parent=11 // pred_check
          %p262 = pneg %p128
        $region26: #{mynet_forward.1} parent=11 // pred_check_branch
          %264 = sbr.rel (%p262) target = $region28
        $region27: #{mynet_forward.1} parent=11 // pred_region
          _
        $region28: #{mynet_forward.1} parent=11 // pred_fallthru
          _
        // Predicated region
        $region29: #{mynet_forward.1} parent=11 // pred_check
          %p265 = pneg %p149
        $region30: #{mynet_forward.1} parent=11 // pred_check_branch
          %267 = sbr.rel (%p265) target = $region32
        $region31: #{mynet_forward.1} parent=11 // pred_region
          _
        $region32: #{mynet_forward.1} parent=11 // pred_fallthru
          _
        // Predicated region
        $region33: #{mynet_forward.1} parent=11 // pred_check
          %p268 = pneg %p170
        $region34: #{mynet_forward.1} parent=11 // pred_check_branch
          %270 = sbr.rel (%p268) target = $region36
        $region35: #{mynet_forward.1} parent=11 // pred_region
          _
        $region36: #{mynet_forward.1} parent=11 // pred_fallthru
          _
        // Predicated region
        $region37: #{mynet_forward.1} parent=11 // pred_check
          %p271 = pneg %p191
        $region38: #{mynet_forward.1} parent=11 // pred_check_branch
          %273 = sbr.rel (%p271) target = $region40
        $region39: #{mynet_forward.1} parent=11 // pred_region
          _
        $region40: #{mynet_forward.1} parent=11 // pred_fallthru
          _
        // Predicated region
        $region41: #{mynet_forward.1} parent=11 // pred_check
          %p274 = pneg %p212
        $region42: #{mynet_forward.1} parent=11 // pred_check_branch
          %276 = sbr.rel (%p274) target = $region44
        $region43: #{mynet_forward.1} parent=11 // pred_region
          _
        $region44: #{mynet_forward.1} parent=11 // pred_fallthru
          _
      $region12: #{mynet_forward.1} parent=5 // pred_fallthru
        _
      %p277 = scmp.lt.s32.totalorder %s18, 2
      // Predicated region
      $region45: #{mynet_forward.1} parent=5 // pred_check
        %p278 = pneg %p277
      $region46: #{mynet_forward.1} parent=5 // pred_check_branch
        %280 = sbr.rel (%p278) target = $region48
      $region47: #{mynet_forward.1} parent=5 // pred_region
        // Predicated region
        $region49: #{mynet_forward.1} parent=47 // pred_check
          %p281 = pneg %p38
        $region50: #{mynet_forward.1} parent=47 // pred_check_branch
          %283 = sbr.rel (%p281) target = $region52
        $region51: #{mynet_forward.1} parent=47 // pred_region
          %p284 = scmp.lt.s32.totalorder %s18, 1
          %s285 = scalar_select %p284, %s18, 1
          %s286 = smul.addr %s285, 64
          %s287 = smul.addr %s286, 4
          %s288 = scalar_lea.vmem %s0, %s287
        $region52: #{mynet_forward.1} parent=47 // pred_fallthru
          _
      $region48: #{mynet_forward.1} parent=5 // pred_fallthru
        _
      %p289 = scmp.le.s32.totalorder 1, %s18
      %p290 = scmp.lt.s32.totalorder %s18, 3
      %p291 = pnand %p289, %p290
      %p292 = pneg %p291
      // Predicated region
      $region53: #{mynet_forward.1} parent=5 // pred_check
        _
      $region54: #{mynet_forward.1} parent=5 // pred_check_branch
        %294 = sbr.rel (%p291) target = $region56
      $region55: #{mynet_forward.1} parent=5 // pred_region
        %s295 = ssub.s32 %s18, 1
        %p296 = scmp.lt.s32.totalorder %s23, 1
        %s297 = scalar_select %p296, %s23, 1
        %s298 = smul.addr %s297, 64
        %s299 = smul.addr %s298, 4
        %s300 = scalar_lea.vmem %s0, %s299
        %p301 = pneg %p44
        %p302 = pneg %p41
        %p303 = pneg %p65
        %p304 = pneg %p62
        %p305 = pneg %p86
        %p306 = pneg %p83
        %p307 = pneg %p107
        %p308 = pneg %p104
        %p309 = pneg %p128
        %p310 = pneg %p125
        %p311 = pneg %p149
        %p312 = pneg %p146
        %p313 = pneg %p170
        %p314 = pneg %p167
        %p315 = pneg %p191
        %p316 = pneg %p188
        %p317 = pneg %p212
        %p318 = pneg %p209
        %p319 = pneg %p238
        %p320 = pneg %p235
        %s321 = sand.u32 %s225, 1
        %s322 = scalar_lea.sflag [#allocation5], %s321
        %s323 = sand.u32 %s225, 1
        %s324 = scalar_lea.vmem [#allocation4], %s323
        %p325 = scmp.lt.s32.totalorder %s23, 1
        %s326 = scalar_select %p325, %s23, 1
        %s327 = smul.addr %s326, 64
        %s328 = smul.addr %s327, 4
        %s329 = scalar_lea.vmem %s0, %s328
        %331 = vst [vmem:[#allocation2] sm:$0xff] 0.0
        %332 = vst [vmem:[#allocation2 + $0x8] sm:$0x3] 0.0
        %333 = vst [vmem:[#allocation2 + $0x10] sm:$0xff] 0.0
        %334 = vst [vmem:[#allocation2 + $0x18] sm:$0x3] 0.0
        %335 = vst [vmem:[#allocation2 + $0x20] sm:$0xff] 0.0
        %336 = vst [vmem:[#allocation2 + $0x28] sm:$0x3] 0.0
        %337 = vst [vmem:[#allocation2 + $0x30] sm:$0xff] 0.0
        %338 = vst [vmem:[#allocation2 + $0x38] sm:$0x3] 0.0
        %339 = vst [vmem:[#allocation2 + $0x40] sm:$0xff] 0.0
        %340 = vst [vmem:[#allocation2 + $0x48] sm:$0x3] 0.0
        %341 = vst [vmem:[#allocation2 + $0x50] sm:$0xff] 0.0
        %342 = vst [vmem:[#allocation2 + $0x58] sm:$0x3] 0.0
        %343 = vst [vmem:[#allocation2 + $0x60] sm:$0xff] 0.0
        %344 = vst [vmem:[#allocation2 + $0x68] sm:$0x3] 0.0
        %345 = vst [vmem:[#allocation2 + $0x70] sm:$0xff] 0.0
        %346 = vst [vmem:[#allocation2 + $0x78] sm:$0x3] 0.0
        %347 = vst [vmem:[#allocation2 + $0x80] sm:$0xff] 0.0
        %348 = vst [vmem:[#allocation2 + $0x88] sm:$0x3] 0.0
        %349 = vst [vmem:[#allocation2 + $0x90] sm:$0xff] 0.0
        %350 = vst [vmem:[#allocation2 + $0x98] sm:$0x3] 0.0
        %351 = vst [vmem:[#allocation2 + $0xa0] sm:$0xff] 0.0
        %352 = vst [vmem:[#allocation2 + $0xa8] sm:$0x3] 0.0
        %353 = vst [vmem:[#allocation2 + $0xb0] sm:$0xff] 0.0
        %354 = vst [vmem:[#allocation2 + $0xb8] sm:$0x3] 0.0
        %355 = vst [vmem:[#allocation2 + $0xc0] sm:$0xff] 0.0
        %356 = vst [vmem:[#allocation2 + $0xc8] sm:$0x3] 0.0
        %357 = vst [vmem:[#allocation2 + $0xd0] sm:$0xff] 0.0
        %358 = vst [vmem:[#allocation2 + $0xd8] sm:$0x3] 0.0
        %359 = vst [vmem:[#allocation2 + $0xe0] sm:$0xff] 0.0
        %360 = vst [vmem:[#allocation2 + $0xe8] sm:$0x3] 0.0
        %361 = vst [vmem:[#allocation2 + $0xf0] sm:$0xff] 0.0
        %362 = vst [vmem:[#allocation2 + $0xf8] sm:$0x3] 0.0
        %363 = vst [vmem:[#allocation2 + $0x100] sm:$0xff] 0.0
        %364 = vst [vmem:[#allocation2 + $0x108] sm:$0x3] 0.0
        %365 = vst [vmem:[#allocation2 + $0x110] sm:$0xff] 0.0
        %366 = vst [vmem:[#allocation2 + $0x118] sm:$0x3] 0.0
        %367 = vst [vmem:[#allocation2 + $0x120] sm:$0xff] 0.0
        %368 = vst [vmem:[#allocation2 + $0x128] sm:$0x3] 0.0
        %369 = vst [vmem:[#allocation2 + $0x130] sm:$0xff] 0.0
        %370 = vst [vmem:[#allocation2 + $0x138] sm:$0x3] 0.0
        %371 = vst [vmem:[#allocation2 + $0x140] sm:$0xff] 0.0
        %372 = vst [vmem:[#allocation2 + $0x148] sm:$0x3] 0.0
        %373 = vst [vmem:[#allocation2 + $0x150] sm:$0xff] 0.0
        %374 = vst [vmem:[#allocation2 + $0x158] sm:$0x3] 0.0
        %375 = vst [vmem:[#allocation2 + $0x160] sm:$0xff] 0.0
        %376 = vst [vmem:[#allocation2 + $0x168] sm:$0x3] 0.0
        %377 = vst [vmem:[#allocation2 + $0x170] sm:$0xff] 0.0
        %378 = vst [vmem:[#allocation2 + $0x178] sm:$0x3] 0.0
        %379 = vst [vmem:[#allocation2 + $0x180] sm:$0xff] 0.0
        %380 = vst [vmem:[#allocation2 + $0x188] sm:$0x3] 0.0
        %381 = vst [vmem:[#allocation2 + $0x190] sm:$0xff] 0.0
        %382 = vst [vmem:[#allocation2 + $0x198] sm:$0x3] 0.0
        %383 = vst [vmem:[#allocation2 + $0x1a0] sm:$0xff] 0.0
        %384 = vst [vmem:[#allocation2 + $0x1a8] sm:$0x3] 0.0
        %385 = vst [vmem:[#allocation2 + $0x1b0] sm:$0xff] 0.0
        %386 = vst [vmem:[#allocation2 + $0x1b8] sm:$0x3] 0.0
        %387 = vst [vmem:[#allocation2 + $0x1c0] sm:$0xff] 0.0
        %388 = vst [vmem:[#allocation2 + $0x1c8] sm:$0x3] 0.0
        %389 = vst [vmem:[#allocation2 + $0x1d0] sm:$0xff] 0.0
        %390 = vst [vmem:[#allocation2 + $0x1d8] sm:$0x3] 0.0
        %391 = vst [vmem:[#allocation2 + $0x1e0] sm:$0xff] 0.0
        %392 = vst [vmem:[#allocation2 + $0x1e8] sm:$0x3] 0.0
        %393 = vst [vmem:[#allocation2 + $0x1f0] sm:$0xff] 0.0
        %394 = vst [vmem:[#allocation2 + $0x1f8] sm:$0x3] 0.0
        %395 = vst [vmem:[#allocation2 + $0x200] sm:$0xff] 0.0
        %396 = vst [vmem:[#allocation2 + $0x208] sm:$0x3] 0.0
        %397 = vst [vmem:[#allocation2 + $0x210] sm:$0xff] 0.0
        %398 = vst [vmem:[#allocation2 + $0x218] sm:$0x3] 0.0
        %399 = vst [vmem:[#allocation2 + $0x220] sm:$0xff] 0.0
        %400 = vst [vmem:[#allocation2 + $0x228] sm:$0x3] 0.0
        %401 = vst [vmem:[#allocation2 + $0x230] sm:$0xff] 0.0
        %402 = vst [vmem:[#allocation2 + $0x238] sm:$0x3] 0.0
        %403 = vst [vmem:[#allocation2 + $0x240] sm:$0xff] 0.0
        %404 = vst [vmem:[#allocation2 + $0x248] sm:$0x3] 0.0
        %405 = vst [vmem:[#allocation2 + $0x250] sm:$0xff] 0.0
        %406 = vst [vmem:[#allocation2 + $0x258] sm:$0x3] 0.0
        %407 = vst [vmem:[#allocation2 + $0x260] sm:$0xff] 0.0
        %408 = vst [vmem:[#allocation2 + $0x268] sm:$0x3] 0.0
        %409 = vst [vmem:[#allocation2 + $0x270] sm:$0xff] 0.0
        %410 = vst [vmem:[#allocation2 + $0x278] sm:$0x3] 0.0
        %411 = vst [vmem:[#allocation3] sm:$0xff] 0.0
        %412 = vst [vmem:[#allocation3 + $0x8] sm:$0x3] 0.0
        %413 = vst [vmem:[#allocation3 + $0x10] sm:$0xff] 0.0
        %414 = vst [vmem:[#allocation3 + $0x18] sm:$0x3] 0.0
        %415 = vst [vmem:[#allocation3 + $0x20] sm:$0xff] 0.0
        %416 = vst [vmem:[#allocation3 + $0x28] sm:$0x3] 0.0
        %417 = vst [vmem:[#allocation3 + $0x30] sm:$0xff] 0.0
        %418 = vst [vmem:[#allocation3 + $0x38] sm:$0x3] 0.0
        %419 = vst [vmem:[#allocation3 + $0x40] sm:$0xff] 0.0
        %420 = vst [vmem:[#allocation3 + $0x48] sm:$0x3] 0.0
        %421 = vst [vmem:[#allocation3 + $0x50] sm:$0xff] 0.0
        %422 = vst [vmem:[#allocation3 + $0x58] sm:$0x3] 0.0
        %423 = vst [vmem:[#allocation3 + $0x60] sm:$0xff] 0.0
        %424 = vst [vmem:[#allocation3 + $0x68] sm:$0x3] 0.0
        %425 = vst [vmem:[#allocation3 + $0x70] sm:$0xff] 0.0
        %426 = vst [vmem:[#allocation3 + $0x78] sm:$0x3] 0.0
        %427 = vst [vmem:[#allocation3 + $0x80] sm:$0xff] 0.0
        %428 = vst [vmem:[#allocation3 + $0x88] sm:$0x3] 0.0
        %429 = vst [vmem:[#allocation3 + $0x90] sm:$0xff] 0.0
        %430 = vst [vmem:[#allocation3 + $0x98] sm:$0x3] 0.0
        %v431 = vld [vmem:[%s329] sm:$0xff]
        %v432 = vld [vmem:[%s329 + $0x8] sm:$0xff]
        %v433 = vld [vmem:[%s329 + $0x10] sm:$0xff]
        %v434 = vld [vmem:[%s329 + $0x18] sm:$0xff]
        %v435 = vld [vmem:[%s329 + $0x20] sm:$0xff]
        %v436 = vld [vmem:[%s329 + $0x28] sm:$0xff]
        %v437 = vld [vmem:[%s329 + $0x30] sm:$0xff]
        %v438 = vld [vmem:[%s329 + $0x38] sm:$0xff]
        %v439 = vld [vmem:[%s1] sm:$0xf]
        %v440 = vld [vmem:[%s1 + $0x4] sm:$0xf]
        %v441 = vld [vmem:[%s1 + $0x8] sm:$0xf]
        %v442 = vld [vmem:[%s1 + $0xc] sm:$0xf]
        %v443 = vld [vmem:[%s1 + $0x10] sm:$0xf]
        %v444 = vld [vmem:[%s1 + $0x14] sm:$0xf]
        %v445 = vld [vmem:[%s1 + $0x18] sm:$0xf]
        %v446 = vld [vmem:[%s1 + $0x1c] sm:$0xf]
        %v447 = vld [vmem:[%s1 + $0x20] sm:$0xf]
        %v448 = vld [vmem:[%s1 + $0x24] sm:$0xf]
        %v449 = vld [vmem:[%s1 + $0x28] sm:$0xf]
        %v450 = vld [vmem:[%s1 + $0x2c] sm:$0xf]
        %v451 = vld [vmem:[%s1 + $0x30] sm:$0xf]
        %v452 = vld [vmem:[%s1 + $0x34] sm:$0xf]
        %v453 = vld [vmem:[%s1 + $0x38] sm:$0xf]
        %v454 = vld [vmem:[%s1 + $0x3c] sm:$0xf]
        %v455 = vld [vmem:[%s1 + $0x40] sm:$0xf]
        %v456 = vld [vmem:[%s1 + $0x44] sm:$0xf]
        %v457 = vld [vmem:[%s1 + $0x48] sm:$0xf]
        %v458 = vld [vmem:[%s1 + $0x4c] sm:$0xf]
        %v459 = vld [vmem:[%s5] sm:$0x1]
        %v461 = vlaneseq
        %v462 = vshrl.u32 %v461, 7
        %v463 = vsub.s32 0, %v462
        %v464 = vrot.slane %v459, %v463
        %v474 = vunpack.c.l.b16 %v431
        %v475 = vunpack.c.h.b16 %v431
        %v476 = vunpack.c.l.b16 %v432
        %v477 = vunpack.c.h.b16 %v432
        %v478 = vunpack.c.l.b16 %v433
        %v479 = vunpack.c.h.b16 %v433
        %v480 = vunpack.c.l.b16 %v434
        %v481 = vunpack.c.h.b16 %v434
        %v482 = vunpack.c.l.b16 %v435
        %v483 = vunpack.c.h.b16 %v435
        %v484 = vunpack.c.l.b16 %v436
        %v485 = vunpack.c.h.b16 %v436
        %v486 = vunpack.c.l.b16 %v437
        %v487 = vunpack.c.h.b16 %v437
        %v488 = vunpack.c.l.b16 %v438
        %v489 = vunpack.c.h.b16 %v438
        %v490 = vpack.c.b16 %v476, %v474
        %v491 = vpack.c.b16 %v477, %v475
        %v492 = vpack.c.b16 %v480, %v478
        %v493 = vpack.c.b16 %v481, %v479
        %v494 = vpack.c.b16 %v484, %v482
        %v495 = vpack.c.b16 %v485, %v483
        %v496 = vpack.c.b16 %v488, %v486
        %v497 = vpack.c.b16 %v489, %v487
        %v522 = vunpack.c.l.b16 %v439
        %v523 = vunpack.c.l.b16 %v440
        %v524 = vunpack.c.l.b16 %v441
        %v525 = vunpack.c.l.b16 %v442
        %v526 = vunpack.c.l.b16 %v443
        %v527 = vunpack.c.l.b16 %v444
        %v528 = vunpack.c.l.b16 %v445
        %v529 = vunpack.c.l.b16 %v446
        %v530 = vunpack.c.l.b16 %v447
        %v531 = vunpack.c.l.b16 %v448
        %v532 = vunpack.c.l.b16 %v449
        %v533 = vunpack.c.l.b16 %v450
        %v534 = vunpack.c.l.b16 %v451
        %v535 = vunpack.c.l.b16 %v452
        %v536 = vunpack.c.l.b16 %v453
        %v537 = vunpack.c.l.b16 %v454
        %v538 = vunpack.c.l.b16 %v455
        %v539 = vunpack.c.l.b16 %v456
        %v540 = vunpack.c.l.b16 %v457
        %v541 = vunpack.c.l.b16 %v458
        %v542 = vpack.c.b16 %v523, %v522
        %v543 = vpack.c.b16 %v525, %v524
        %v544 = vpack.c.b16 %v527, %v526
        %v545 = vpack.c.b16 %v529, %v528
        %v546 = vpack.c.b16 %v531, %v530
        %v547 = vpack.c.b16 %v533, %v532
        %v548 = vpack.c.b16 %v535, %v534
        %v549 = vpack.c.b16 %v537, %v536
        %v550 = vpack.c.b16 %v539, %v538
        %v551 = vpack.c.b16 %v541, %v540
        %vm562 = vcmask 261120
        %v564 = vsel %vm562, %v491, 0
        %v567 = vsel %vm562, %v493, 0
        %v570 = vsel %vm562, %v495, 0
        %v573 = vsel %vm562, %v497, 0
        %575 = vmatprep.subr.bf16.mxu0 0
        %576 = vmatpush1.bf16.msra.mxu0 %v549
        %577 = vmatprep.subr.bf16.mxu0 0
        %578 = vmatpush1.bf16.msra.mxu0 %v548
        %579 = vmatprep.subr.bf16.mxu0 0
        %580 = vmatpush1.bf16.msra.mxu0 %v547
        %581 = vmatprep.subr.bf16.mxu0 0
        %582 = vmatpush1.bf16.msra.mxu0 %v546
        %583 = vmatprep.subr.bf16.mxu0 0
        %584 = vmatpush1.bf16.msra.mxu0 %v545
        %585 = vmatprep.subr.bf16.mxu0 0
        %586 = vmatpush1.bf16.msra.mxu0 %v544
        %587 = vmatprep.subr.bf16.mxu0 0
        %588 = vmatpush1.bf16.msra.mxu0 %v543
        %589 = vmatprep.subr.bf16.mxu0 0
        %590 = vmatpush1.bf16.msra.mxu0 %v542
        %591 = vmatprep.subr.bf16.mxu0 0
        %592 = vmatpush2.bf16.msra.mxu0 0
        %593 = vmatprep.subr.bf16.mxu0 0
        %594 = vmatpush2.bf16.msra.mxu0 0
        %595 = vmatprep.subr.bf16.mxu0 0
        %596 = vmatpush2.bf16.msra.mxu0 0
        %597 = vmatprep.subr.bf16.mxu0 0
        %598 = vmatpush2.bf16.msra.mxu0 0
        %599 = vmatprep.subr.bf16.mxu0 0
        %600 = vmatpush2.bf16.msra.mxu0 0
        %601 = vmatprep.subr.bf16.mxu0 0
        %602 = vmatpush2.bf16.msra.mxu0 0
        %603 = vmatprep.subr.bf16.mxu0 0
        %604 = vmatpush2.bf16.msra.mxu0 %v551
        %605 = vmatprep.subr.bf16.mxu0 0
        %606 = vmatpush2.bf16.msra.mxu0 %v550
        %607 = vmatprep.mubr.bf16.mxu0 %v564
        %608 = vmatmul.mubr.bf16.gmra.mxu0 %v490
        %v609 = vpop.f32.mrf.mxu0
        %v610 = vadd.f32 %v464, %v609
        %v611 = vpop.f32.mrf.mxu0
        %v612 = vpop.f32.mrf.mxu0
        %v613 = vadd.f32 %v464, %v612
        %v614 = vpop.f32.mrf.mxu0
        %615 = vmatprep.mubr.bf16.mxu0 %v567
        %616 = vmatmul.mubr.bf16.gmra.mxu0 %v492
        %v617 = vpop.f32.mrf.mxu0
        %v618 = vadd.f32 %v464, %v617
        %v619 = vpop.f32.mrf.mxu0
        %v620 = vpop.f32.mrf.mxu0
        %v621 = vadd.f32 %v464, %v620
        %v622 = vpop.f32.mrf.mxu0
        %623 = vmatprep.mubr.bf16.mxu0 %v570
        %624 = vmatmul.mubr.bf16.gmra.mxu0 %v494
        %v625 = vpop.f32.mrf.mxu0
        %v626 = vadd.f32 %v464, %v625
        %v627 = vpop.f32.mrf.mxu0
        %v628 = vpop.f32.mrf.mxu0
        %v629 = vadd.f32 %v464, %v628
        %v630 = vpop.f32.mrf.mxu0
        %631 = vmatprep.mubr.bf16.mxu0 %v573
        %632 = vmatmul.mubr.bf16.gmra.mxu0 %v496
        %v633 = vpop.f32.mrf.mxu0
        %v634 = vadd.f32 %v464, %v633
        %v635 = vpop.f32.mrf.mxu0
        %v636 = vpop.f32.mrf.mxu0
        %v637 = vpop.f32.mrf.mxu0
        %638 = vdwg.mxu0
        %v639 = vmax.f32 %v610, 0.0
        %v640 = vmax.f32 %v613, 0.0
        %v641 = vmax.f32 %v618, 0.0
        %v642 = vmax.f32 %v621, 0.0
        %v643 = vmax.f32 %v626, 0.0
        %v644 = vmax.f32 %v629, 0.0
        %v645 = vmax.f32 %v634, 0.0
        %s646 = scalar_lea.vmem [#allocation2], 16
        %647 = vst [vmem:[%s646 + $0x1] sm:$0x7f] %v639
        %648 = vst [vmem:[%s646 + $0x11] sm:$0x7f] %v640
        %649 = vst [vmem:[%s646 + $0x21] sm:$0x7f] %v641
        %650 = vst [vmem:[%s646 + $0x31] sm:$0x7f] %v642
        %651 = vst [vmem:[%s646 + $0x41] sm:$0x7f] %v643
        %652 = vst [vmem:[%s646 + $0x51] sm:$0x7f] %v644
        %653 = vst [vmem:[%s646 + $0x61] sm:$0x7f] %v645
        %s654 = scalar_lea.vmem %s329, 64
        %v655 = vld [vmem:[%s654] sm:$0xff]
        %v656 = vld [vmem:[%s654 + $0x8] sm:$0xff]
        %v657 = vld [vmem:[%s654 + $0x10] sm:$0xff]
        %v658 = vld [vmem:[%s654 + $0x18] sm:$0xff]
        %v659 = vld [vmem:[%s654 + $0x20] sm:$0xff]
        %v660 = vld [vmem:[%s654 + $0x28] sm:$0xff]
        %v661 = vld [vmem:[%s654 + $0x30] sm:$0xff]
        %v662 = vld [vmem:[%s654 + $0x38] sm:$0xff]
        %v663 = vld [vmem:[%s1] sm:$0xf]
        %v664 = vld [vmem:[%s1 + $0x4] sm:$0xf]
        %v665 = vld [vmem:[%s1 + $0x8] sm:$0xf]
        %v666 = vld [vmem:[%s1 + $0xc] sm:$0xf]
        %v667 = vld [vmem:[%s1 + $0x10] sm:$0xf]
        %v668 = vld [vmem:[%s1 + $0x14] sm:$0xf]
        %v669 = vld [vmem:[%s1 + $0x18] sm:$0xf]
        %v670 = vld [vmem:[%s1 + $0x1c] sm:$0xf]
        %v671 = vld [vmem:[%s1 + $0x20] sm:$0xf]
        %v672 = vld [vmem:[%s1 + $0x24] sm:$0xf]
        %v673 = vld [vmem:[%s1 + $0x28] sm:$0xf]
        %v674 = vld [vmem:[%s1 + $0x2c] sm:$0xf]
        %v675 = vld [vmem:[%s1 + $0x30] sm:$0xf]
        %v676 = vld [vmem:[%s1 + $0x34] sm:$0xf]
        %v677 = vld [vmem:[%s1 + $0x38] sm:$0xf]
        %v678 = vld [vmem:[%s1 + $0x3c] sm:$0xf]
        %v679 = vld [vmem:[%s1 + $0x40] sm:$0xf]
        %v680 = vld [vmem:[%s1 + $0x44] sm:$0xf]
        %v681 = vld [vmem:[%s1 + $0x48] sm:$0xf]
        %v682 = vld [vmem:[%s1 + $0x4c] sm:$0xf]
        %v683 = vld [vmem:[%s5] sm:$0x1]
        %v685 = vlaneseq
        %v686 = vshrl.u32 %v685, 7
        %v687 = vsub.s32 0, %v686
        %v688 = vrot.slane %v683, %v687
        %v698 = vunpack.c.l.b16 %v655
        %v699 = vunpack.c.h.b16 %v655
        %v700 = vunpack.c.l.b16 %v656
        %v701 = vunpack.c.h.b16 %v656
        %v702 = vunpack.c.l.b16 %v657
        %v703 = vunpack.c.h.b16 %v657
        %v704 = vunpack.c.l.b16 %v658
        %v705 = vunpack.c.h.b16 %v658
        %v706 = vunpack.c.l.b16 %v659
        %v707 = vunpack.c.h.b16 %v659
        %v708 = vunpack.c.l.b16 %v660
        %v709 = vunpack.c.h.b16 %v660
        %v710 = vunpack.c.l.b16 %v661
        %v711 = vunpack.c.h.b16 %v661
        %v712 = vunpack.c.l.b16 %v662
        %v713 = vunpack.c.h.b16 %v662
        %v714 = vpack.c.b16 %v700, %v698
        %v715 = vpack.c.b16 %v701, %v699
        %v716 = vpack.c.b16 %v704, %v702
        %v717 = vpack.c.b16 %v705, %v703
        %v718 = vpack.c.b16 %v708, %v706
        %v719 = vpack.c.b16 %v709, %v707
        %v720 = vpack.c.b16 %v712, %v710
        %v721 = vpack.c.b16 %v713, %v711
        %v746 = vunpack.c.l.b16 %v663
        %v747 = vunpack.c.l.b16 %v664
        %v748 = vunpack.c.l.b16 %v665
        %v749 = vunpack.c.l.b16 %v666
        %v750 = vunpack.c.l.b16 %v667
        %v751 = vunpack.c.l.b16 %v668
        %v752 = vunpack.c.l.b16 %v669
        %v753 = vunpack.c.l.b16 %v670
        %v754 = vunpack.c.l.b16 %v671
        %v755 = vunpack.c.l.b16 %v672
        %v756 = vunpack.c.l.b16 %v673
        %v757 = vunpack.c.l.b16 %v674
        %v758 = vunpack.c.l.b16 %v675
        %v759 = vunpack.c.l.b16 %v676
        %v760 = vunpack.c.l.b16 %v677
        %v761 = vunpack.c.l.b16 %v678
        %v762 = vunpack.c.l.b16 %v679
        %v763 = vunpack.c.l.b16 %v680
        %v764 = vunpack.c.l.b16 %v681
        %v765 = vunpack.c.l.b16 %v682
        %v766 = vpack.c.b16 %v747, %v746
        %v767 = vpack.c.b16 %v749, %v748
        %v768 = vpack.c.b16 %v751, %v750
        %v769 = vpack.c.b16 %v753, %v752
        %v770 = vpack.c.b16 %v755, %v754
        %v771 = vpack.c.b16 %v757, %v756
        %v772 = vpack.c.b16 %v759, %v758
        %v773 = vpack.c.b16 %v761, %v760
        %v774 = vpack.c.b16 %v763, %v762
        %v775 = vpack.c.b16 %v765, %v764
        %v787 = vsel %vm562, %v715, 0
        %v790 = vsel %vm562, %v717, 0
        %v793 = vsel %vm562, %v719, 0
        %v796 = vsel %vm562, %v721, 0
        %798 = vmatprep.subr.bf16.mxu0 0
        %799 = vmatpush1.bf16.msra.mxu0 %v773
        %800 = vmatprep.subr.bf16.mxu0 0
        %801 = vmatpush1.bf16.msra.mxu0 %v772
        %802 = vmatprep.subr.bf16.mxu0 0
        %803 = vmatpush1.bf16.msra.mxu0 %v771
        %804 = vmatprep.subr.bf16.mxu0 0
        %805 = vmatpush1.bf16.msra.mxu0 %v770
        %806 = vmatprep.subr.bf16.mxu0 0
        %807 = vmatpush1.bf16.msra.mxu0 %v769
        %808 = vmatprep.subr.bf16.mxu0 0
        %809 = vmatpush1.bf16.msra.mxu0 %v768
        %810 = vmatprep.subr.bf16.mxu0 0
        %811 = vmatpush1.bf16.msra.mxu0 %v767
        %812 = vmatprep.subr.bf16.mxu0 0
        %813 = vmatpush1.bf16.msra.mxu0 %v766
        %814 = vmatprep.subr.bf16.mxu0 0
        %815 = vmatpush2.bf16.msra.mxu0 0
        %816 = vmatprep.subr.bf16.mxu0 0
        %817 = vmatpush2.bf16.msra.mxu0 0
        %818 = vmatprep.subr.bf16.mxu0 0
        %819 = vmatpush2.bf16.msra.mxu0 0
        %820 = vmatprep.subr.bf16.mxu0 0
        %821 = vmatpush2.bf16.msra.mxu0 0
        %822 = vmatprep.subr.bf16.mxu0 0
        %823 = vmatpush2.bf16.msra.mxu0 0
        %824 = vmatprep.subr.bf16.mxu0 0
        %825 = vmatpush2.bf16.msra.mxu0 0
        %826 = vmatprep.subr.bf16.mxu0 0
        %827 = vmatpush2.bf16.msra.mxu0 %v775
        %828 = vmatprep.subr.bf16.mxu0 0
        %829 = vmatpush2.bf16.msra.mxu0 %v774
        %830 = vmatprep.mubr.bf16.mxu0 %v787
        %831 = vmatmul.mubr.bf16.gmra.mxu0 %v714
        %v832 = vpop.f32.mrf.mxu0
        %v833 = vadd.f32 %v688, %v832
        %v834 = vpop.f32.mrf.mxu0
        %v835 = vpop.f32.mrf.mxu0
        %v836 = vadd.f32 %v688, %v835
        %v837 = vpop.f32.mrf.mxu0
        %838 = vmatprep.mubr.bf16.mxu0 %v790
        %839 = vmatmul.mubr.bf16.gmra.mxu0 %v716
        %v840 = vpop.f32.mrf.mxu0
        %v841 = vadd.f32 %v688, %v840
        %v842 = vpop.f32.mrf.mxu0
        %v843 = vpop.f32.mrf.mxu0
        %v844 = vadd.f32 %v688, %v843
        %v845 = vpop.f32.mrf.mxu0
        %846 = vmatprep.mubr.bf16.mxu0 %v793
        %847 = vmatmul.mubr.bf16.gmra.mxu0 %v718
        %v848 = vpop.f32.mrf.mxu0
        %v849 = vadd.f32 %v688, %v848
        %v850 = vpop.f32.mrf.mxu0
        %v851 = vpop.f32.mrf.mxu0
        %v852 = vadd.f32 %v688, %v851
        %v853 = vpop.f32.mrf.mxu0
        %854 = vmatprep.mubr.bf16.mxu0 %v796
        %855 = vmatmul.mubr.bf16.gmra.mxu0 %v720
        %v856 = vpop.f32.mrf.mxu0
        %v857 = vadd.f32 %v688, %v856
        %v858 = vpop.f32.mrf.mxu0
        %v859 = vpop.f32.mrf.mxu0
        %v860 = vpop.f32.mrf.mxu0
        %861 = vdwg.mxu0
        %v862 = vmax.f32 %v833, 0.0
        %v863 = vmax.f32 %v836, 0.0
        %v864 = vmax.f32 %v841, 0.0
        %v865 = vmax.f32 %v844, 0.0
        %v866 = vmax.f32 %v849, 0.0
        %v867 = vmax.f32 %v852, 0.0
        %v868 = vmax.f32 %v857, 0.0
        %s869 = scalar_lea.vmem [#allocation2], 176
        %870 = vst [vmem:[%s869 + $0x1] sm:$0x7f] %v862
        %871 = vst [vmem:[%s869 + $0x11] sm:$0x7f] %v863
        %872 = vst [vmem:[%s869 + $0x21] sm:$0x7f] %v864
        %873 = vst [vmem:[%s869 + $0x31] sm:$0x7f] %v865
        %874 = vst [vmem:[%s869 + $0x41] sm:$0x7f] %v866
        %875 = vst [vmem:[%s869 + $0x51] sm:$0x7f] %v867
        %876 = vst [vmem:[%s869 + $0x61] sm:$0x7f] %v868
        %s877 = scalar_lea.vmem %s329, 128
        %v878 = vld [vmem:[%s877] sm:$0xff]
        %v879 = vld [vmem:[%s877 + $0x8] sm:$0xff]
        %v880 = vld [vmem:[%s877 + $0x10] sm:$0xff]
        %v881 = vld [vmem:[%s877 + $0x18] sm:$0xff]
        %v882 = vld [vmem:[%s877 + $0x20] sm:$0xff]
        %v883 = vld [vmem:[%s877 + $0x28] sm:$0xff]
        %v884 = vld [vmem:[%s877 + $0x30] sm:$0xff]
        %v885 = vld [vmem:[%s877 + $0x38] sm:$0xff]
        %v886 = vld [vmem:[%s1] sm:$0xf]
        %v887 = vld [vmem:[%s1 + $0x4] sm:$0xf]
        %v888 = vld [vmem:[%s1 + $0x8] sm:$0xf]
        %v889 = vld [vmem:[%s1 + $0xc] sm:$0xf]
        %v890 = vld [vmem:[%s1 + $0x10] sm:$0xf]
        %v891 = vld [vmem:[%s1 + $0x14] sm:$0xf]
        %v892 = vld [vmem:[%s1 + $0x18] sm:$0xf]
        %v893 = vld [vmem:[%s1 + $0x1c] sm:$0xf]
        %v894 = vld [vmem:[%s1 + $0x20] sm:$0xf]
        %v895 = vld [vmem:[%s1 + $0x24] sm:$0xf]
        %v896 = vld [vmem:[%s1 + $0x28] sm:$0xf]
        %v897 = vld [vmem:[%s1 + $0x2c] sm:$0xf]
        %v898 = vld [vmem:[%s1 + $0x30] sm:$0xf]
        %v899 = vld [vmem:[%s1 + $0x34] sm:$0xf]
        %v900 = vld [vmem:[%s1 + $0x38] sm:$0xf]
        %v901 = vld [vmem:[%s1 + $0x3c] sm:$0xf]
        %v902 = vld [vmem:[%s1 + $0x40] sm:$0xf]
        %v903 = vld [vmem:[%s1 + $0x44] sm:$0xf]
        %v904 = vld [vmem:[%s1 + $0x48] sm:$0xf]
        %v905 = vld [vmem:[%s1 + $0x4c] sm:$0xf]
        %v906 = vld [vmem:[%s5] sm:$0x1]
        %v908 = vlaneseq
        %v909 = vshrl.u32 %v908, 7
        %v910 = vsub.s32 0, %v909
        %v911 = vrot.slane %v906, %v910
        %v921 = vunpack.c.l.b16 %v878
        %v922 = vunpack.c.h.b16 %v878
        %v923 = vunpack.c.l.b16 %v879
        %v924 = vunpack.c.h.b16 %v879
        %v925 = vunpack.c.l.b16 %v880
        %v926 = vunpack.c.h.b16 %v880
        %v927 = vunpack.c.l.b16 %v881
        %v928 = vunpack.c.h.b16 %v881
        %v929 = vunpack.c.l.b16 %v882
        %v930 = vunpack.c.h.b16 %v882
        %v931 = vunpack.c.l.b16 %v883
        %v932 = vunpack.c.h.b16 %v883
        %v933 = vunpack.c.l.b16 %v884
        %v934 = vunpack.c.h.b16 %v884
        %v935 = vunpack.c.l.b16 %v885
        %v936 = vunpack.c.h.b16 %v885
        %v937 = vpack.c.b16 %v923, %v921
        %v938 = vpack.c.b16 %v924, %v922
        %v939 = vpack.c.b16 %v927, %v925
        %v940 = vpack.c.b16 %v928, %v926
        %v941 = vpack.c.b16 %v931, %v929
        %v942 = vpack.c.b16 %v932, %v930
        %v943 = vpack.c.b16 %v935, %v933
        %v944 = vpack.c.b16 %v936, %v934
        %v969 = vunpack.c.l.b16 %v886
        %v970 = vunpack.c.l.b16 %v887
        %v971 = vunpack.c.l.b16 %v888
        %v972 = vunpack.c.l.b16 %v889
        %v973 = vunpack.c.l.b16 %v890
        %v974 = vunpack.c.l.b16 %v891
        %v975 = vunpack.c.l.b16 %v892
        %v976 = vunpack.c.l.b16 %v893
        %v977 = vunpack.c.l.b16 %v894
        %v978 = vunpack.c.l.b16 %v895
        %v979 = vunpack.c.l.b16 %v896
        %v980 = vunpack.c.l.b16 %v897
        %v981 = vunpack.c.l.b16 %v898
        %v982 = vunpack.c.l.b16 %v899
        %v983 = vunpack.c.l.b16 %v900
        %v984 = vunpack.c.l.b16 %v901
        %v985 = vunpack.c.l.b16 %v902
        %v986 = vunpack.c.l.b16 %v903
        %v987 = vunpack.c.l.b16 %v904
        %v988 = vunpack.c.l.b16 %v905
        %v989 = vpack.c.b16 %v970, %v969
        %v990 = vpack.c.b16 %v972, %v971
        %v991 = vpack.c.b16 %v974, %v973
        %v992 = vpack.c.b16 %v976, %v975
        %v993 = vpack.c.b16 %v978, %v977
        %v994 = vpack.c.b16 %v980, %v979
        %v995 = vpack.c.b16 %v982, %v981
        %v996 = vpack.c.b16 %v984, %v983
        %v997 = vpack.c.b16 %v986, %v985
        %v998 = vpack.c.b16 %v988, %v987
        %v1010 = vsel %vm562, %v938, 0
        %v1013 = vsel %vm562, %v940, 0
        %v1016 = vsel %vm562, %v942, 0
        %v1019 = vsel %vm562, %v944, 0
        %1021 = vmatprep.subr.bf16.mxu0 0
        %1022 = vmatpush1.bf16.msra.mxu0 %v996
        %1023 = vmatprep.subr.bf16.mxu0 0
        %1024 = vmatpush1.bf16.msra.mxu0 %v995
        %1025 = vmatprep.subr.bf16.mxu0 0
        %1026 = vmatpush1.bf16.msra.mxu0 %v994
        %1027 = vmatprep.subr.bf16.mxu0 0
        %1028 = vmatpush1.bf16.msra.mxu0 %v993
        %1029 = vmatprep.subr.bf16.mxu0 0
        %1030 = vmatpush1.bf16.msra.mxu0 %v992
        %1031 = vmatprep.subr.bf16.mxu0 0
        %1032 = vmatpush1.bf16.msra.mxu0 %v991
        %1033 = vmatprep.subr.bf16.mxu0 0
        %1034 = vmatpush1.bf16.msra.mxu0 %v990
        %1035 = vmatprep.subr.bf16.mxu0 0
        %1036 = vmatpush1.bf16.msra.mxu0 %v989
        %1037 = vmatprep.subr.bf16.mxu0 0
        %1038 = vmatpush2.bf16.msra.mxu0 0
        %1039 = vmatprep.subr.bf16.mxu0 0
        %1040 = vmatpush2.bf16.msra.mxu0 0
        %1041 = vmatprep.subr.bf16.mxu0 0
        %1042 = vmatpush2.bf16.msra.mxu0 0
        %1043 = vmatprep.subr.bf16.mxu0 0
        %1044 = vmatpush2.bf16.msra.mxu0 0
        %1045 = vmatprep.subr.bf16.mxu0 0
        %1046 = vmatpush2.bf16.msra.mxu0 0
        %1047 = vmatprep.subr.bf16.mxu0 0
        %1048 = vmatpush2.bf16.msra.mxu0 0
        %1049 = vmatprep.subr.bf16.mxu0 0
        %1050 = vmatpush2.bf16.msra.mxu0 %v998
        %1051 = vmatprep.subr.bf16.mxu0 0
        %1052 = vmatpush2.bf16.msra.mxu0 %v997
        %1053 = vmatprep.mubr.bf16.mxu0 %v1010
        %1054 = vmatmul.mubr.bf16.gmra.mxu0 %v937
        %v1055 = vpop.f32.mrf.mxu0
        %v1056 = vadd.f32 %v911, %v1055
        %v1057 = vpop.f32.mrf.mxu0
        %v1058 = vpop.f32.mrf.mxu0
        %v1059 = vadd.f32 %v911, %v1058
        %v1060 = vpop.f32.mrf.mxu0
        %1061 = vmatprep.mubr.bf16.mxu0 %v1013
        %1062 = vmatmul.mubr.bf16.gmra.mxu0 %v939
        %v1063 = vpop.f32.mrf.mxu0
        %v1064 = vadd.f32 %v911, %v1063
        %v1065 = vpop.f32.mrf.mxu0
        %v1066 = vpop.f32.mrf.mxu0
        %v1067 = vadd.f32 %v911, %v1066
        %v1068 = vpop.f32.mrf.mxu0
        %1069 = vmatprep.mubr.bf16.mxu0 %v1016
        %1070 = vmatmul.mubr.bf16.gmra.mxu0 %v941
        %v1071 = vpop.f32.mrf.mxu0
        %v1072 = vadd.f32 %v911, %v1071
        %v1073 = vpop.f32.mrf.mxu0
        %v1074 = vpop.f32.mrf.mxu0
        %v1075 = vadd.f32 %v911, %v1074
        %v1076 = vpop.f32.mrf.mxu0
        %1077 = vmatprep.mubr.bf16.mxu0 %v1019
        %1078 = vmatmul.mubr.bf16.gmra.mxu0 %v943
        %v1079 = vpop.f32.mrf.mxu0
        %v1080 = vadd.f32 %v911, %v1079
        %v1081 = vpop.f32.mrf.mxu0
        %v1082 = vpop.f32.mrf.mxu0
        %v1083 = vpop.f32.mrf.mxu0
        %1084 = vdwg.mxu0
        %v1085 = vmax.f32 %v1056, 0.0
        %v1086 = vmax.f32 %v1059, 0.0
        %v1087 = vmax.f32 %v1064, 0.0
        %v1088 = vmax.f32 %v1067, 0.0
        %v1089 = vmax.f32 %v1072, 0.0
        %v1090 = vmax.f32 %v1075, 0.0
        %v1091 = vmax.f32 %v1080, 0.0
        %s1092 = scalar_lea.vmem [#allocation2], 336
        %1093 = vst [vmem:[%s1092 + $0x1] sm:$0x7f] %v1085
        %1094 = vst [vmem:[%s1092 + $0x11] sm:$0x7f] %v1086
        %1095 = vst [vmem:[%s1092 + $0x21] sm:$0x7f] %v1087
        %1096 = vst [vmem:[%s1092 + $0x31] sm:$0x7f] %v1088
        %1097 = vst [vmem:[%s1092 + $0x41] sm:$0x7f] %v1089
        %1098 = vst [vmem:[%s1092 + $0x51] sm:$0x7f] %v1090
        %1099 = vst [vmem:[%s1092 + $0x61] sm:$0x7f] %v1091
        %s1100 = scalar_lea.vmem %s329, 192
        %v1101 = vld [vmem:[%s1100] sm:$0xff]
        %v1102 = vld [vmem:[%s1100 + $0x8] sm:$0xff]
        %v1103 = vld [vmem:[%s1100 + $0x10] sm:$0xff]
        %v1104 = vld [vmem:[%s1100 + $0x18] sm:$0xff]
        %v1105 = vld [vmem:[%s1100 + $0x20] sm:$0xff]
        %v1106 = vld [vmem:[%s1100 + $0x28] sm:$0xff]
        %v1107 = vld [vmem:[%s1100 + $0x30] sm:$0xff]
        %v1108 = vld [vmem:[%s1100 + $0x38] sm:$0xff]
        %v1109 = vld [vmem:[%s1] sm:$0xf]
        %v1110 = vld [vmem:[%s1 + $0x4] sm:$0xf]
        %v1111 = vld [vmem:[%s1 + $0x8] sm:$0xf]
        %v1112 = vld [vmem:[%s1 + $0xc] sm:$0xf]
        %v1113 = vld [vmem:[%s1 + $0x10] sm:$0xf]
        %v1114 = vld [vmem:[%s1 + $0x14] sm:$0xf]
        %v1115 = vld [vmem:[%s1 + $0x18] sm:$0xf]
        %v1116 = vld [vmem:[%s1 + $0x1c] sm:$0xf]
        %v1117 = vld [vmem:[%s1 + $0x20] sm:$0xf]
        %v1118 = vld [vmem:[%s1 + $0x24] sm:$0xf]
        %v1119 = vld [vmem:[%s1 + $0x28] sm:$0xf]
        %v1120 = vld [vmem:[%s1 + $0x2c] sm:$0xf]
        %v1121 = vld [vmem:[%s1 + $0x30] sm:$0xf]
        %v1122 = vld [vmem:[%s1 + $0x34] sm:$0xf]
        %v1123 = vld [vmem:[%s1 + $0x38] sm:$0xf]
        %v1124 = vld [vmem:[%s1 + $0x3c] sm:$0xf]
        %v1125 = vld [vmem:[%s1 + $0x40] sm:$0xf]
        %v1126 = vld [vmem:[%s1 + $0x44] sm:$0xf]
        %v1127 = vld [vmem:[%s1 + $0x48] sm:$0xf]
        %v1128 = vld [vmem:[%s1 + $0x4c] sm:$0xf]
        %v1129 = vld [vmem:[%s5] sm:$0x1]
        %v1131 = vlaneseq
        %v1132 = vshrl.u32 %v1131, 7
        %v1133 = vsub.s32 0, %v1132
        %v1134 = vrot.slane %v1129, %v1133
        %v1144 = vunpack.c.l.b16 %v1101
        %v1145 = vunpack.c.h.b16 %v1101
        %v1146 = vunpack.c.l.b16 %v1102
        %v1147 = vunpack.c.h.b16 %v1102
        %v1148 = vunpack.c.l.b16 %v1103
        %v1149 = vunpack.c.h.b16 %v1103
        %v1150 = vunpack.c.l.b16 %v1104
        %v1151 = vunpack.c.h.b16 %v1104
        %v1152 = vunpack.c.l.b16 %v1105
        %v1153 = vunpack.c.h.b16 %v1105
        %v1154 = vunpack.c.l.b16 %v1106
        %v1155 = vunpack.c.h.b16 %v1106
        %v1156 = vunpack.c.l.b16 %v1107
        %v1157 = vunpack.c.h.b16 %v1107
        %v1158 = vunpack.c.l.b16 %v1108
        %v1159 = vunpack.c.h.b16 %v1108
        %v1160 = vpack.c.b16 %v1146, %v1144
        %v1161 = vpack.c.b16 %v1147, %v1145
        %v1162 = vpack.c.b16 %v1150, %v1148
        %v1163 = vpack.c.b16 %v1151, %v1149
        %v1164 = vpack.c.b16 %v1154, %v1152
        %v1165 = vpack.c.b16 %v1155, %v1153
        %v1166 = vpack.c.b16 %v1158, %v1156
        %v1167 = vpack.c.b16 %v1159, %v1157
        %v1192 = vunpack.c.l.b16 %v1109
        %v1193 = vunpack.c.l.b16 %v1110
        %v1194 = vunpack.c.l.b16 %v1111
        %v1195 = vunpack.c.l.b16 %v1112
        %v1196 = vunpack.c.l.b16 %v1113
        %v1197 = vunpack.c.l.b16 %v1114
        %v1198 = vunpack.c.l.b16 %v1115
        %v1199 = vunpack.c.l.b16 %v1116
        %v1200 = vunpack.c.l.b16 %v1117
        %v1201 = vunpack.c.l.b16 %v1118
        %v1202 = vunpack.c.l.b16 %v1119
        %v1203 = vunpack.c.l.b16 %v1120
        %v1204 = vunpack.c.l.b16 %v1121
        %v1205 = vunpack.c.l.b16 %v1122
        %v1206 = vunpack.c.l.b16 %v1123
        %v1207 = vunpack.c.l.b16 %v1124
        %v1208 = vunpack.c.l.b16 %v1125
        %v1209 = vunpack.c.l.b16 %v1126
        %v1210 = vunpack.c.l.b16 %v1127
        %v1211 = vunpack.c.l.b16 %v1128
        %v1212 = vpack.c.b16 %v1193, %v1192
        %v1213 = vpack.c.b16 %v1195, %v1194
        %v1214 = vpack.c.b16 %v1197, %v1196
        %v1215 = vpack.c.b16 %v1199, %v1198
        %v1216 = vpack.c.b16 %v1201, %v1200
        %v1217 = vpack.c.b16 %v1203, %v1202
        %v1218 = vpack.c.b16 %v1205, %v1204
        %v1219 = vpack.c.b16 %v1207, %v1206
        %v1220 = vpack.c.b16 %v1209, %v1208
        %v1221 = vpack.c.b16 %v1211, %v1210
        %v1233 = vsel %vm562, %v1161, 0
        %v1236 = vsel %vm562, %v1163, 0
        %v1239 = vsel %vm562, %v1165, 0
        %v1242 = vsel %vm562, %v1167, 0
        %1244 = vmatprep.subr.bf16.mxu0 0
        %1245 = vmatpush1.bf16.msra.mxu0 %v1219
        %1246 = vmatprep.subr.bf16.mxu0 0
        %1247 = vmatpush1.bf16.msra.mxu0 %v1218
        %1248 = vmatprep.subr.bf16.mxu0 0
        %1249 = vmatpush1.bf16.msra.mxu0 %v1217
        %1250 = vmatprep.subr.bf16.mxu0 0
        %1251 = vmatpush1.bf16.msra.mxu0 %v1216
        %1252 = vmatprep.subr.bf16.mxu0 0
        %1253 = vmatpush1.bf16.msra.mxu0 %v1215
        %1254 = vmatprep.subr.bf16.mxu0 0
        %1255 = vmatpush1.bf16.msra.mxu0 %v1214
        %1256 = vmatprep.subr.bf16.mxu0 0
        %1257 = vmatpush1.bf16.msra.mxu0 %v1213
        %1258 = vmatprep.subr.bf16.mxu0 0
        %1259 = vmatpush1.bf16.msra.mxu0 %v1212
        %1260 = vmatprep.subr.bf16.mxu0 0
        %1261 = vmatpush2.bf16.msra.mxu0 0
        %1262 = vmatprep.subr.bf16.mxu0 0
        %1263 = vmatpush2.bf16.msra.mxu0 0
        %1264 = vmatprep.subr.bf16.mxu0 0
        %1265 = vmatpush2.bf16.msra.mxu0 0
        %1266 = vmatprep.subr.bf16.mxu0 0
        %1267 = vmatpush2.bf16.msra.mxu0 0
        %1268 = vmatprep.subr.bf16.mxu0 0
        %1269 = vmatpush2.bf16.msra.mxu0 0
        %1270 = vmatprep.subr.bf16.mxu0 0
        %1271 = vmatpush2.bf16.msra.mxu0 0
        %1272 = vmatprep.subr.bf16.mxu0 0
        %1273 = vmatpush2.bf16.msra.mxu0 %v1221
        %1274 = vmatprep.subr.bf16.mxu0 0
        %1275 = vmatpush2.bf16.msra.mxu0 %v1220
        %1276 = vmatprep.mubr.bf16.mxu0 %v1233
        %1277 = vmatmul.mubr.bf16.gmra.mxu0 %v1160
        %v1278 = vpop.f32.mrf.mxu0
        %v1279 = vadd.f32 %v1134, %v1278
        %v1280 = vpop.f32.mrf.mxu0
        %v1281 = vpop.f32.mrf.mxu0
        %v1282 = vadd.f32 %v1134, %v1281
        %v1283 = vpop.f32.mrf.mxu0
        %1284 = vmatprep.mubr.bf16.mxu0 %v1236
        %1285 = vmatmul.mubr.bf16.gmra.mxu0 %v1162
        %v1286 = vpop.f32.mrf.mxu0
        %v1287 = vadd.f32 %v1134, %v1286
        %v1288 = vpop.f32.mrf.mxu0
        %v1289 = vpop.f32.mrf.mxu0
        %v1290 = vadd.f32 %v1134, %v1289
        %v1291 = vpop.f32.mrf.mxu0
        %1292 = vmatprep.mubr.bf16.mxu0 %v1239
        %1293 = vmatmul.mubr.bf16.gmra.mxu0 %v1164
        %v1294 = vpop.f32.mrf.mxu0
        %v1295 = vadd.f32 %v1134, %v1294
        %v1296 = vpop.f32.mrf.mxu0
        %v1297 = vpop.f32.mrf.mxu0
        %v1298 = vadd.f32 %v1134, %v1297
        %v1299 = vpop.f32.mrf.mxu0
        %1300 = vmatprep.mubr.bf16.mxu0 %v1242
        %1301 = vmatmul.mubr.bf16.gmra.mxu0 %v1166
        %v1302 = vpop.f32.mrf.mxu0
        %v1303 = vadd.f32 %v1134, %v1302
        %v1304 = vpop.f32.mrf.mxu0
        %v1305 = vpop.f32.mrf.mxu0
        %v1306 = vpop.f32.mrf.mxu0
        %1307 = vdwg.mxu0
        %v1308 = vmax.f32 %v1279, 0.0
        %v1309 = vmax.f32 %v1282, 0.0
        %v1310 = vmax.f32 %v1287, 0.0
        %v1311 = vmax.f32 %v1290, 0.0
        %v1312 = vmax.f32 %v1295, 0.0
        %v1313 = vmax.f32 %v1298, 0.0
        %v1314 = vmax.f32 %v1303, 0.0
        %s1315 = scalar_lea.vmem [#allocation2], 496
        %1316 = vst [vmem:[%s1315 + $0x1] sm:$0x7f] %v1308
        %1317 = vst [vmem:[%s1315 + $0x11] sm:$0x7f] %v1309
        %1318 = vst [vmem:[%s1315 + $0x21] sm:$0x7f] %v1310
        %1319 = vst [vmem:[%s1315 + $0x31] sm:$0x7f] %v1311
        %1320 = vst [vmem:[%s1315 + $0x41] sm:$0x7f] %v1312
        %1321 = vst [vmem:[%s1315 + $0x51] sm:$0x7f] %v1313
        %1322 = vst [vmem:[%s1315 + $0x61] sm:$0x7f] %v1314
        %v1323 = vld [vmem:[#allocation2] sm:$0xff]
        %v1324 = vld [vmem:[#allocation2 + $0x10] sm:$0xff]
        %v1325 = vld [vmem:[#allocation2 + $0x20] sm:$0xff]
        %v1326 = vld [vmem:[#allocation2 + $0x30] sm:$0xff]
        %v1327 = vld [vmem:[#allocation2 + $0x40] sm:$0xff]
        %v1328 = vld [vmem:[#allocation2 + $0x50] sm:$0xff]
        %v1329 = vld [vmem:[#allocation2 + $0x60] sm:$0xff]
        %v1330 = vld [vmem:[#allocation2 + $0x70] sm:$0xff]
        %v1331 = vpack.c.bf16 %v1324, %v1323
        %v1332 = vpack.c.bf16 %v1326, %v1325
        %v1333 = vpack.c.bf16 %v1328, %v1327
        %v1334 = vpack.c.bf16 %v1330, %v1329
        %v1335 = vld [vmem:[%s2] sm:$0xf]
        %v1336 = vld [vmem:[%s2 + $0x4] sm:$0xf]
        %v1337 = vld [vmem:[%s2 + $0x8] sm:$0xf]
        %v1338 = vld [vmem:[%s2 + $0xc] sm:$0xf]
        %v1339 = vld [vmem:[%s2 + $0x10] sm:$0xf]
        %v1340 = vld [vmem:[%s2 + $0x14] sm:$0xf]
        %v1341 = vld [vmem:[%s2 + $0x18] sm:$0xf]
        %v1342 = vld [vmem:[%s2 + $0x1c] sm:$0xf]
        %v1343 = vld [vmem:[%s2 + $0x20] sm:$0xf]
        %v1344 = vld [vmem:[%s2 + $0x24] sm:$0xf]
        %v1345 = vld [vmem:[%s2 + $0x28] sm:$0xf]
        %v1346 = vld [vmem:[%s2 + $0x2c] sm:$0xf]
        %v1347 = vld [vmem:[%s2 + $0x30] sm:$0xf]
        %v1348 = vld [vmem:[%s2 + $0x34] sm:$0xf]
        %v1349 = vld [vmem:[%s2 + $0x38] sm:$0xf]
        %v1350 = vld [vmem:[%s2 + $0x3c] sm:$0xf]
        %s1351 = scalar_lea.vmem [#allocation2], 160
        %v1352 = vld [vmem:[%s1351] sm:$0xff]
        %v1353 = vld [vmem:[%s1351 + $0x10] sm:$0xff]
        %v1354 = vld [vmem:[%s1351 + $0x20] sm:$0xff]
        %v1355 = vld [vmem:[%s1351 + $0x30] sm:$0xff]
        %v1356 = vld [vmem:[%s1351 + $0x40] sm:$0xff]
        %v1357 = vld [vmem:[%s1351 + $0x50] sm:$0xff]
        %v1358 = vld [vmem:[%s1351 + $0x60] sm:$0xff]
        %v1359 = vld [vmem:[%s1351 + $0x70] sm:$0xff]
        %v1360 = vpack.c.bf16 %v1353, %v1352
        %v1361 = vpack.c.bf16 %v1355, %v1354
        %v1362 = vpack.c.bf16 %v1357, %v1356
        %v1363 = vpack.c.bf16 %v1359, %v1358
        %s1364 = scalar_lea.vmem %s2, 64
        %v1365 = vld [vmem:[%s1364] sm:$0xf]
        %v1366 = vld [vmem:[%s1364 + $0x4] sm:$0xf]
        %v1367 = vld [vmem:[%s1364 + $0x8] sm:$0xf]
        %v1368 = vld [vmem:[%s1364 + $0xc] sm:$0xf]
        %v1369 = vld [vmem:[%s1364 + $0x10] sm:$0xf]
        %v1370 = vld [vmem:[%s1364 + $0x14] sm:$0xf]
        %v1371 = vld [vmem:[%s1364 + $0x18] sm:$0xf]
        %v1372 = vld [vmem:[%s1364 + $0x1c] sm:$0xf]
        %v1373 = vld [vmem:[%s1364 + $0x20] sm:$0xf]
        %v1374 = vld [vmem:[%s1364 + $0x24] sm:$0xf]
        %v1375 = vld [vmem:[%s1364 + $0x28] sm:$0xf]
        %v1376 = vld [vmem:[%s1364 + $0x2c] sm:$0xf]
        %v1377 = vld [vmem:[%s1364 + $0x30] sm:$0xf]
        %v1378 = vld [vmem:[%s1364 + $0x34] sm:$0xf]
        %v1379 = vld [vmem:[%s1364 + $0x38] sm:$0xf]
        %v1380 = vld [vmem:[%s1364 + $0x3c] sm:$0xf]
        %v1397 = vunpack.c.l.b16 %v1365
        %v1398 = vunpack.c.l.b16 %v1366
        %v1399 = vunpack.c.l.b16 %v1367
        %v1400 = vunpack.c.l.b16 %v1368
        %v1401 = vunpack.c.l.b16 %v1369
        %v1402 = vunpack.c.l.b16 %v1370
        %v1403 = vunpack.c.l.b16 %v1371
        %v1404 = vunpack.c.l.b16 %v1372
        %v1405 = vunpack.c.l.b16 %v1373
        %v1406 = vunpack.c.l.b16 %v1374
        %v1407 = vunpack.c.l.b16 %v1375
        %v1408 = vunpack.c.l.b16 %v1376
        %v1409 = vunpack.c.l.b16 %v1377
        %v1410 = vunpack.c.l.b16 %v1378
        %v1411 = vunpack.c.l.b16 %v1379
        %v1412 = vunpack.c.l.b16 %v1380
        %v1413 = vpack.c.b16 %v1398, %v1397
        %v1414 = vpack.c.b16 %v1400, %v1399
        %v1415 = vpack.c.b16 %v1402, %v1401
        %v1416 = vpack.c.b16 %v1404, %v1403
        %v1417 = vpack.c.b16 %v1406, %v1405
        %v1418 = vpack.c.b16 %v1408, %v1407
        %v1419 = vpack.c.b16 %v1410, %v1409
        %v1420 = vpack.c.b16 %v1412, %v1411
        %1429 = vmatprep.subr.bf16.mxu0 0
        %1430 = vmatpush1.bf16.msra.mxu0 %v1420
        %1431 = vmatprep.subr.bf16.mxu0 0
        %1432 = vmatpush1.bf16.msra.mxu0 %v1419
        %1433 = vmatprep.subr.bf16.mxu0 0
        %1434 = vmatpush1.bf16.msra.mxu0 %v1418
        %1435 = vmatprep.subr.bf16.mxu0 0
        %1436 = vmatpush1.bf16.msra.mxu0 %v1417
        %1437 = vmatprep.subr.bf16.mxu0 0
        %1438 = vmatpush1.bf16.msra.mxu0 %v1416
        %1439 = vmatprep.subr.bf16.mxu0 0
        %1440 = vmatpush1.bf16.msra.mxu0 %v1415
        %1441 = vmatprep.subr.bf16.mxu0 0
        %1442 = vmatpush1.bf16.msra.mxu0 %v1414
        %1443 = vmatprep.subr.bf16.mxu0 0
        %1444 = vmatpush1.bf16.msra.mxu0 %v1413
        %1445 = vmatprep.subr.bf16.mxu0 0
        %1446 = vmatpush2.bf16.msra.mxu0 0
        %1447 = vmatprep.subr.bf16.mxu0 0
        %1448 = vmatpush2.bf16.msra.mxu0 0
        %1449 = vmatprep.subr.bf16.mxu0 0
        %1450 = vmatpush2.bf16.msra.mxu0 0
        %1451 = vmatprep.subr.bf16.mxu0 0
        %1452 = vmatpush2.bf16.msra.mxu0 0
        %1453 = vmatprep.subr.bf16.mxu0 0
        %1454 = vmatpush2.bf16.msra.mxu0 0
        %1455 = vmatprep.subr.bf16.mxu0 0
        %1456 = vmatpush2.bf16.msra.mxu0 0
        %1457 = vmatprep.subr.bf16.mxu0 0
        %1458 = vmatpush2.bf16.msra.mxu0 0
        %1459 = vmatprep.subr.bf16.mxu0 0
        %1460 = vmatpush2.bf16.msra.mxu0 0
        %1461 = vmatprep.mubr.bf16.mxu0 0
        %1462 = vmatmul.mubr.bf16.gmra.mxu0 %v1360
        %v1463 = vpop.f32.mrf.mxu0
        %v1464 = vadd.f32 0.0, %v1463
        %v1465 = vpop.f32.mrf.mxu0
        %v1466 = vpop.f32.mrf.mxu0
        %v1467 = vadd.f32 0.0, %v1466
        %v1468 = vpop.f32.mrf.mxu0
        %1469 = vmatprep.mubr.bf16.mxu0 0
        %1470 = vmatmul.mubr.bf16.gmra.mxu0 %v1361
        %v1471 = vpop.f32.mrf.mxu0
        %v1472 = vadd.f32 0.0, %v1471
        %v1473 = vpop.f32.mrf.mxu0
        %v1474 = vpop.f32.mrf.mxu0
        %v1475 = vadd.f32 0.0, %v1474
        %v1476 = vpop.f32.mrf.mxu0
        %1477 = vmatprep.mubr.bf16.mxu0 0
        %1478 = vmatmul.mubr.bf16.gmra.mxu0 %v1362
        %v1479 = vpop.f32.mrf.mxu0
        %v1480 = vadd.f32 0.0, %v1479
        %v1481 = vpop.f32.mrf.mxu0
        %v1482 = vpop.f32.mrf.mxu0
        %v1483 = vadd.f32 0.0, %v1482
        %v1484 = vpop.f32.mrf.mxu0
        %1485 = vmatprep.mubr.bf16.mxu0 0
        %1486 = vmatmul.mubr.bf16.gmra.mxu0 %v1363
        %v1487 = vpop.f32.mrf.mxu0
        %v1488 = vadd.f32 0.0, %v1487
        %v1489 = vpop.f32.mrf.mxu0
        %v1490 = vpop.f32.mrf.mxu0
        %v1491 = vpop.f32.mrf.mxu0
        %1492 = vdwg.mxu0
        %v1509 = vunpack.c.l.b16 %v1335
        %v1510 = vunpack.c.l.b16 %v1336
        %v1511 = vunpack.c.l.b16 %v1337
        %v1512 = vunpack.c.l.b16 %v1338
        %v1513 = vunpack.c.l.b16 %v1339
        %v1514 = vunpack.c.l.b16 %v1340
        %v1515 = vunpack.c.l.b16 %v1341
        %v1516 = vunpack.c.l.b16 %v1342
        %v1517 = vunpack.c.l.b16 %v1343
        %v1518 = vunpack.c.l.b16 %v1344
        %v1519 = vunpack.c.l.b16 %v1345
        %v1520 = vunpack.c.l.b16 %v1346
        %v1521 = vunpack.c.l.b16 %v1347
        %v1522 = vunpack.c.l.b16 %v1348
        %v1523 = vunpack.c.l.b16 %v1349
        %v1524 = vunpack.c.l.b16 %v1350
        %v1525 = vpack.c.b16 %v1510, %v1509
        %v1526 = vpack.c.b16 %v1512, %v1511
        %v1527 = vpack.c.b16 %v1514, %v1513
        %v1528 = vpack.c.b16 %v1516, %v1515
        %v1529 = vpack.c.b16 %v1518, %v1517
        %v1530 = vpack.c.b16 %v1520, %v1519
        %v1531 = vpack.c.b16 %v1522, %v1521
        %v1532 = vpack.c.b16 %v1524, %v1523
        %1541 = vmatprep.subr.bf16.mxu0 0
        %1542 = vmatpush1.bf16.msra.mxu0 %v1532
        %1543 = vmatprep.subr.bf16.mxu0 0
        %1544 = vmatpush1.bf16.msra.mxu0 %v1531
        %1545 = vmatprep.subr.bf16.mxu0 0
        %1546 = vmatpush1.bf16.msra.mxu0 %v1530
        %1547 = vmatprep.subr.bf16.mxu0 0
        %1548 = vmatpush1.bf16.msra.mxu0 %v1529
        %1549 = vmatprep.subr.bf16.mxu0 0
        %1550 = vmatpush1.bf16.msra.mxu0 %v1528
        %1551 = vmatprep.subr.bf16.mxu0 0
        %1552 = vmatpush1.bf16.msra.mxu0 %v1527
        %1553 = vmatprep.subr.bf16.mxu0 0
        %1554 = vmatpush1.bf16.msra.mxu0 %v1526
        %1555 = vmatprep.subr.bf16.mxu0 0
        %1556 = vmatpush1.bf16.msra.mxu0 %v1525
        %1557 = vmatprep.subr.bf16.mxu0 0
        %1558 = vmatpush2.bf16.msra.mxu0 0
        %1559 = vmatprep.subr.bf16.mxu0 0
        %1560 = vmatpush2.bf16.msra.mxu0 0
        %1561 = vmatprep.subr.bf16.mxu0 0
        %1562 = vmatpush2.bf16.msra.mxu0 0
        %1563 = vmatprep.subr.bf16.mxu0 0
        %1564 = vmatpush2.bf16.msra.mxu0 0
        %1565 = vmatprep.subr.bf16.mxu0 0
        %1566 = vmatpush2.bf16.msra.mxu0 0
        %1567 = vmatprep.subr.bf16.mxu0 0
        %1568 = vmatpush2.bf16.msra.mxu0 0
        %1569 = vmatprep.subr.bf16.mxu0 0
        %1570 = vmatpush2.bf16.msra.mxu0 0
        %1571 = vmatprep.subr.bf16.mxu0 0
        %1572 = vmatpush2.bf16.msra.mxu0 0
        %1573 = vmatprep.mubr.bf16.mxu0 0
        %1574 = vmatmul.mubr.bf16.gmra.mxu0 %v1331
        %v1575 = vpop.f32.mrf.mxu0
        %v1576 = vadd.f32 %v1464, %v1575
        %v1577 = vpop.f32.mrf.mxu0
        %v1578 = vpop.f32.mrf.mxu0
        %v1579 = vadd.f32 %v1467, %v1578
        %v1580 = vpop.f32.mrf.mxu0
        %1581 = vmatprep.mubr.bf16.mxu0 0
        %1582 = vmatmul.mubr.bf16.gmra.mxu0 %v1332
        %v1583 = vpop.f32.mrf.mxu0
        %v1584 = vadd.f32 %v1472, %v1583
        %v1585 = vpop.f32.mrf.mxu0
        %v1586 = vpop.f32.mrf.mxu0
        %v1587 = vadd.f32 %v1475, %v1586
        %v1588 = vpop.f32.mrf.mxu0
        %1589 = vmatprep.mubr.bf16.mxu0 0
        %1590 = vmatmul.mubr.bf16.gmra.mxu0 %v1333
        %v1591 = vpop.f32.mrf.mxu0
        %v1592 = vadd.f32 %v1480, %v1591
        %v1593 = vpop.f32.mrf.mxu0
        %v1594 = vpop.f32.mrf.mxu0
        %v1595 = vadd.f32 %v1483, %v1594
        %v1596 = vpop.f32.mrf.mxu0
        %1597 = vmatprep.mubr.bf16.mxu0 0
        %1598 = vmatmul.mubr.bf16.gmra.mxu0 %v1334
        %v1599 = vpop.f32.mrf.mxu0
        %v1600 = vadd.f32 %v1488, %v1599
        %v1601 = vpop.f32.mrf.mxu0
        %v1602 = vpop.f32.mrf.mxu0
        %v1603 = vpop.f32.mrf.mxu0
        %1604 = vdwg.mxu0
        %v1605 = vld [vmem:[#allocation2 + $0x1] sm:$0xff]
        %v1606 = vld [vmem:[#allocation2 + $0x11] sm:$0xff]
        %v1607 = vld [vmem:[#allocation2 + $0x21] sm:$0xff]
        %v1608 = vld [vmem:[#allocation2 + $0x31] sm:$0xff]
        %v1609 = vld [vmem:[#allocation2 + $0x41] sm:$0xff]
        %v1610 = vld [vmem:[#allocation2 + $0x51] sm:$0xff]
        %v1611 = vld [vmem:[#allocation2 + $0x61] sm:$0xff]
        %v1612 = vld [vmem:[#allocation2 + $0x71] sm:$0xff]
        %v1613 = vpack.c.bf16 %v1606, %v1605
        %v1614 = vpack.c.bf16 %v1608, %v1607
        %v1615 = vpack.c.bf16 %v1610, %v1609
        %v1616 = vpack.c.bf16 %v1612, %v1611
        %s1617 = scalar_lea.vmem %s2, 128
        %v1618 = vld [vmem:[%s1617] sm:$0xf]
        %v1619 = vld [vmem:[%s1617 + $0x4] sm:$0xf]
        %v1620 = vld [vmem:[%s1617 + $0x8] sm:$0xf]
        %v1621 = vld [vmem:[%s1617 + $0xc] sm:$0xf]
        %v1622 = vld [vmem:[%s1617 + $0x10] sm:$0xf]
        %v1623 = vld [vmem:[%s1617 + $0x14] sm:$0xf]
        %v1624 = vld [vmem:[%s1617 + $0x18] sm:$0xf]
        %v1625 = vld [vmem:[%s1617 + $0x1c] sm:$0xf]
        %v1626 = vld [vmem:[%s1617 + $0x20] sm:$0xf]
        %v1627 = vld [vmem:[%s1617 + $0x24] sm:$0xf]
        %v1628 = vld [vmem:[%s1617 + $0x28] sm:$0xf]
        %v1629 = vld [vmem:[%s1617 + $0x2c] sm:$0xf]
        %v1630 = vld [vmem:[%s1617 + $0x30] sm:$0xf]
        %v1631 = vld [vmem:[%s1617 + $0x34] sm:$0xf]
        %v1632 = vld [vmem:[%s1617 + $0x38] sm:$0xf]
        %v1633 = vld [vmem:[%s1617 + $0x3c] sm:$0xf]
        %v1650 = vunpack.c.l.b16 %v1618
        %v1651 = vunpack.c.l.b16 %v1619
        %v1652 = vunpack.c.l.b16 %v1620
        %v1653 = vunpack.c.l.b16 %v1621
        %v1654 = vunpack.c.l.b16 %v1622
        %v1655 = vunpack.c.l.b16 %v1623
        %v1656 = vunpack.c.l.b16 %v1624
        %v1657 = vunpack.c.l.b16 %v1625
        %v1658 = vunpack.c.l.b16 %v1626
        %v1659 = vunpack.c.l.b16 %v1627
        %v1660 = vunpack.c.l.b16 %v1628
        %v1661 = vunpack.c.l.b16 %v1629
        %v1662 = vunpack.c.l.b16 %v1630
        %v1663 = vunpack.c.l.b16 %v1631
        %v1664 = vunpack.c.l.b16 %v1632
        %v1665 = vunpack.c.l.b16 %v1633
        %v1666 = vpack.c.b16 %v1651, %v1650
        %v1667 = vpack.c.b16 %v1653, %v1652
        %v1668 = vpack.c.b16 %v1655, %v1654
        %v1669 = vpack.c.b16 %v1657, %v1656
        %v1670 = vpack.c.b16 %v1659, %v1658
        %v1671 = vpack.c.b16 %v1661, %v1660
        %v1672 = vpack.c.b16 %v1663, %v1662
        %v1673 = vpack.c.b16 %v1665, %v1664
        %1682 = vmatprep.subr.bf16.mxu0 0
        %1683 = vmatpush1.bf16.msra.mxu0 %v1673
        %1684 = vmatprep.subr.bf16.mxu0 0
        %1685 = vmatpush1.bf16.msra.mxu0 %v1672
        %1686 = vmatprep.subr.bf16.mxu0 0
        %1687 = vmatpush1.bf16.msra.mxu0 %v1671
        %1688 = vmatprep.subr.bf16.mxu0 0
        %1689 = vmatpush1.bf16.msra.mxu0 %v1670
        %1690 = vmatprep.subr.bf16.mxu0 0
        %1691 = vmatpush1.bf16.msra.mxu0 %v1669
        %1692 = vmatprep.subr.bf16.mxu0 0
        %1693 = vmatpush1.bf16.msra.mxu0 %v1668
        %1694 = vmatprep.subr.bf16.mxu0 0
        %1695 = vmatpush1.bf16.msra.mxu0 %v1667
        %1696 = vmatprep.subr.bf16.mxu0 0
        %1697 = vmatpush1.bf16.msra.mxu0 %v1666
        %1698 = vmatprep.subr.bf16.mxu0 0
        %1699 = vmatpush2.bf16.msra.mxu0 0
        %1700 = vmatprep.subr.bf16.mxu0 0
        %1701 = vmatpush2.bf16.msra.mxu0 0
        %1702 = vmatprep.subr.bf16.mxu0 0
        %1703 = vmatpush2.bf16.msra.mxu0 0
        %1704 = vmatprep.subr.bf16.mxu0 0
        %1705 = vmatpush2.bf16.msra.mxu0 0
        %1706 = vmatprep.subr.bf16.mxu0 0
        %1707 = vmatpush2.bf16.msra.mxu0 0
        %1708 = vmatprep.subr.bf16.mxu0 0
        %1709 = vmatpush2.bf16.msra.mxu0 0
        %1710 = vmatprep.subr.bf16.mxu0 0
        %1711 = vmatpush2.bf16.msra.mxu0 0
        %1712 = vmatprep.subr.bf16.mxu0 0
        %1713 = vmatpush2.bf16.msra.mxu0 0
        %1714 = vmatprep.mubr.bf16.mxu0 0
        %1715 = vmatmul.mubr.bf16.gmra.mxu0 %v1613
        %v1716 = vpop.f32.mrf.mxu0
        %v1717 = vadd.f32 0.0, %v1716
        %v1718 = vpop.f32.mrf.mxu0
        %v1719 = vpop.f32.mrf.mxu0
        %v1720 = vadd.f32 0.0, %v1719
        %v1721 = vpop.f32.mrf.mxu0
        %1722 = vmatprep.mubr.bf16.mxu0 0
        %1723 = vmatmul.mubr.bf16.gmra.mxu0 %v1614
        %v1724 = vpop.f32.mrf.mxu0
        %v1725 = vadd.f32 0.0, %v1724
        %v1726 = vpop.f32.mrf.mxu0
        %v1727 = vpop.f32.mrf.mxu0
        %v1728 = vadd.f32 0.0, %v1727
        %v1729 = vpop.f32.mrf.mxu0
        %1730 = vmatprep.mubr.bf16.mxu0 0
        %1731 = vmatmul.mubr.bf16.gmra.mxu0 %v1615
        %v1732 = vpop.f32.mrf.mxu0
        %v1733 = vadd.f32 0.0, %v1732
        %v1734 = vpop.f32.mrf.mxu0
        %v1735 = vpop.f32.mrf.mxu0
        %v1736 = vadd.f32 0.0, %v1735
        %v1737 = vpop.f32.mrf.mxu0
        %1738 = vmatprep.mubr.bf16.mxu0 0
        %1739 = vmatmul.mubr.bf16.gmra.mxu0 %v1616
        %v1740 = vpop.f32.mrf.mxu0
        %v1741 = vadd.f32 0.0, %v1740
        %v1742 = vpop.f32.mrf.mxu0
        %v1743 = vpop.f32.mrf.mxu0
        %v1744 = vpop.f32.mrf.mxu0
        %1745 = vdwg.mxu0
        %v1746 = vadd.f32 %v1576, %v1717
        %v1747 = vadd.f32 %v1579, %v1720
        %v1748 = vadd.f32 %v1584, %v1725
        %v1749 = vadd.f32 %v1587, %v1728
        %v1750 = vadd.f32 %v1592, %v1733
        %v1751 = vadd.f32 %v1595, %v1736
        %v1752 = vadd.f32 %v1600, %v1741
        %v1753 = vld [vmem:[%s1351 + $0x1] sm:$0xff]
        %v1754 = vld [vmem:[%s1351 + $0x11] sm:$0xff]
        %v1755 = vld [vmem:[%s1351 + $0x21] sm:$0xff]
        %v1756 = vld [vmem:[%s1351 + $0x31] sm:$0xff]
        %v1757 = vld [vmem:[%s1351 + $0x41] sm:$0xff]
        %v1758 = vld [vmem:[%s1351 + $0x51] sm:$0xff]
        %v1759 = vld [vmem:[%s1351 + $0x61] sm:$0xff]
        %v1760 = vld [vmem:[%s1351 + $0x71] sm:$0xff]
        %v1761 = vpack.c.bf16 %v1754, %v1753
        %v1762 = vpack.c.bf16 %v1756, %v1755
        %v1763 = vpack.c.bf16 %v1758, %v1757
        %v1764 = vpack.c.bf16 %v1760, %v1759
        %s1765 = scalar_lea.vmem %s2, 192
        %v1766 = vld [vmem:[%s1765] sm:$0xf]
        %v1767 = vld [vmem:[%s1765 + $0x4] sm:$0xf]
        %v1768 = vld [vmem:[%s1765 + $0x8] sm:$0xf]
        %v1769 = vld [vmem:[%s1765 + $0xc] sm:$0xf]
        %v1770 = vld [vmem:[%s1765 + $0x10] sm:$0xf]
        %v1771 = vld [vmem:[%s1765 + $0x14] sm:$0xf]
        %v1772 = vld [vmem:[%s1765 + $0x18] sm:$0xf]
        %v1773 = vld [vmem:[%s1765 + $0x1c] sm:$0xf]
        %v1774 = vld [vmem:[%s1765 + $0x20] sm:$0xf]
        %v1775 = vld [vmem:[%s1765 + $0x24] sm:$0xf]
        %v1776 = vld [vmem:[%s1765 + $0x28] sm:$0xf]
        %v1777 = vld [vmem:[%s1765 + $0x2c] sm:$0xf]
        %v1778 = vld [vmem:[%s1765 + $0x30] sm:$0xf]
        %v1779 = vld [vmem:[%s1765 + $0x34] sm:$0xf]
        %v1780 = vld [vmem:[%s1765 + $0x38] sm:$0xf]
        %v1781 = vld [vmem:[%s1765 + $0x3c] sm:$0xf]
        %v1798 = vunpack.c.l.b16 %v1766
        %v1799 = vunpack.c.l.b16 %v1767
        %v1800 = vunpack.c.l.b16 %v1768
        %v1801 = vunpack.c.l.b16 %v1769
        %v1802 = vunpack.c.l.b16 %v1770
        %v1803 = vunpack.c.l.b16 %v1771
        %v1804 = vunpack.c.l.b16 %v1772
        %v1805 = vunpack.c.l.b16 %v1773
        %v1806 = vunpack.c.l.b16 %v1774
        %v1807 = vunpack.c.l.b16 %v1775
        %v1808 = vunpack.c.l.b16 %v1776
        %v1809 = vunpack.c.l.b16 %v1777
        %v1810 = vunpack.c.l.b16 %v1778
        %v1811 = vunpack.c.l.b16 %v1779
        %v1812 = vunpack.c.l.b16 %v1780
        %v1813 = vunpack.c.l.b16 %v1781
        %v1814 = vpack.c.b16 %v1799, %v1798
        %v1815 = vpack.c.b16 %v1801, %v1800
        %v1816 = vpack.c.b16 %v1803, %v1802
        %v1817 = vpack.c.b16 %v1805, %v1804
        %v1818 = vpack.c.b16 %v1807, %v1806
        %v1819 = vpack.c.b16 %v1809, %v1808
        %v1820 = vpack.c.b16 %v1811, %v1810
        %v1821 = vpack.c.b16 %v1813, %v1812
        %1830 = vmatprep.subr.bf16.mxu0 0
        %1831 = vmatpush1.bf16.msra.mxu0 %v1821
        %1832 = vmatprep.subr.bf16.mxu0 0
        %1833 = vmatpush1.bf16.msra.mxu0 %v1820
        %1834 = vmatprep.subr.bf16.mxu0 0
        %1835 = vmatpush1.bf16.msra.mxu0 %v1819
        %1836 = vmatprep.subr.bf16.mxu0 0
        %1837 = vmatpush1.bf16.msra.mxu0 %v1818
        %1838 = vmatprep.subr.bf16.mxu0 0
        %1839 = vmatpush1.bf16.msra.mxu0 %v1817
        %1840 = vmatprep.subr.bf16.mxu0 0
        %1841 = vmatpush1.bf16.msra.mxu0 %v1816
        %1842 = vmatprep.subr.bf16.mxu0 0
        %1843 = vmatpush1.bf16.msra.mxu0 %v1815
        %1844 = vmatprep.subr.bf16.mxu0 0
        %1845 = vmatpush1.bf16.msra.mxu0 %v1814
        %1846 = vmatprep.subr.bf16.mxu0 0
        %1847 = vmatpush2.bf16.msra.mxu0 0
        %1848 = vmatprep.subr.bf16.mxu0 0
        %1849 = vmatpush2.bf16.msra.mxu0 0
        %1850 = vmatprep.subr.bf16.mxu0 0
        %1851 = vmatpush2.bf16.msra.mxu0 0
        %1852 = vmatprep.subr.bf16.mxu0 0
        %1853 = vmatpush2.bf16.msra.mxu0 0
        %1854 = vmatprep.subr.bf16.mxu0 0
        %1855 = vmatpush2.bf16.msra.mxu0 0
        %1856 = vmatprep.subr.bf16.mxu0 0
        %1857 = vmatpush2.bf16.msra.mxu0 0
        %1858 = vmatprep.subr.bf16.mxu0 0
        %1859 = vmatpush2.bf16.msra.mxu0 0
        %1860 = vmatprep.subr.bf16.mxu0 0
        %1861 = vmatpush2.bf16.msra.mxu0 0
        %1862 = vmatprep.mubr.bf16.mxu0 0
        %1863 = vmatmul.mubr.bf16.gmra.mxu0 %v1761
        %v1864 = vpop.f32.mrf.mxu0
        %v1865 = vadd.f32 0.0, %v1864
        %v1866 = vpop.f32.mrf.mxu0
        %v1867 = vpop.f32.mrf.mxu0
        %v1868 = vadd.f32 0.0, %v1867
        %v1869 = vpop.f32.mrf.mxu0
        %1870 = vmatprep.mubr.bf16.mxu0 0
        %1871 = vmatmul.mubr.bf16.gmra.mxu0 %v1762
        %v1872 = vpop.f32.mrf.mxu0
        %v1873 = vadd.f32 0.0, %v1872
        %v1874 = vpop.f32.mrf.mxu0
        %v1875 = vpop.f32.mrf.mxu0
        %v1876 = vadd.f32 0.0, %v1875
        %v1877 = vpop.f32.mrf.mxu0
        %1878 = vmatprep.mubr.bf16.mxu0 0
        %1879 = vmatmul.mubr.bf16.gmra.mxu0 %v1763
        %v1880 = vpop.f32.mrf.mxu0
        %v1881 = vadd.f32 0.0, %v1880
        %v1882 = vpop.f32.mrf.mxu0
        %v1883 = vpop.f32.mrf.mxu0
        %v1884 = vadd.f32 0.0, %v1883
        %v1885 = vpop.f32.mrf.mxu0
        %1886 = vmatprep.mubr.bf16.mxu0 0
        %1887 = vmatmul.mubr.bf16.gmra.mxu0 %v1764
        %v1888 = vpop.f32.mrf.mxu0
        %v1889 = vadd.f32 0.0, %v1888
        %v1890 = vpop.f32.mrf.mxu0
        %v1891 = vpop.f32.mrf.mxu0
        %v1892 = vpop.f32.mrf.mxu0
        %1893 = vdwg.mxu0
        %v1894 = vadd.f32 %v1746, %v1865
        %v1895 = vadd.f32 %v1747, %v1868
        %v1896 = vadd.f32 %v1748, %v1873
        %v1897 = vadd.f32 %v1749, %v1876
        %v1898 = vadd.f32 %v1750, %v1881
        %v1899 = vadd.f32 %v1751, %v1884
        %v1900 = vadd.f32 %v1752, %v1889
        %v1901 = vld [vmem:[#allocation2 + $0x2] sm:$0xff]
        %v1902 = vld [vmem:[#allocation2 + $0x12] sm:$0xff]
        %v1903 = vld [vmem:[#allocation2 + $0x22] sm:$0xff]
        %v1904 = vld [vmem:[#allocation2 + $0x32] sm:$0xff]
        %v1905 = vld [vmem:[#allocation2 + $0x42] sm:$0xff]
        %v1906 = vld [vmem:[#allocation2 + $0x52] sm:$0xff]
        %v1907 = vld [vmem:[#allocation2 + $0x62] sm:$0xff]
        %v1908 = vld [vmem:[#allocation2 + $0x72] sm:$0xff]
        %v1909 = vpack.c.bf16 %v1902, %v1901
        %v1910 = vpack.c.bf16 %v1904, %v1903
        %v1911 = vpack.c.bf16 %v1906, %v1905
        %v1912 = vpack.c.bf16 %v1908, %v1907
        %s1913 = scalar_lea.vmem %s2, 256
        %v1914 = vld [vmem:[%s1913] sm:$0xf]
        %v1915 = vld [vmem:[%s1913 + $0x4] sm:$0xf]
        %v1916 = vld [vmem:[%s1913 + $0x8] sm:$0xf]
        %v1917 = vld [vmem:[%s1913 + $0xc] sm:$0xf]
        %v1918 = vld [vmem:[%s1913 + $0x10] sm:$0xf]
        %v1919 = vld [vmem:[%s1913 + $0x14] sm:$0xf]
        %v1920 = vld [vmem:[%s1913 + $0x18] sm:$0xf]
        %v1921 = vld [vmem:[%s1913 + $0x1c] sm:$0xf]
        %v1922 = vld [vmem:[%s1913 + $0x20] sm:$0xf]
        %v1923 = vld [vmem:[%s1913 + $0x24] sm:$0xf]
        %v1924 = vld [vmem:[%s1913 + $0x28] sm:$0xf]
        %v1925 = vld [vmem:[%s1913 + $0x2c] sm:$0xf]
        %v1926 = vld [vmem:[%s1913 + $0x30] sm:$0xf]
        %v1927 = vld [vmem:[%s1913 + $0x34] sm:$0xf]
        %v1928 = vld [vmem:[%s1913 + $0x38] sm:$0xf]
        %v1929 = vld [vmem:[%s1913 + $0x3c] sm:$0xf]
        %v1946 = vunpack.c.l.b16 %v1914
        %v1947 = vunpack.c.l.b16 %v1915
        %v1948 = vunpack.c.l.b16 %v1916
        %v1949 = vunpack.c.l.b16 %v1917
        %v1950 = vunpack.c.l.b16 %v1918
        %v1951 = vunpack.c.l.b16 %v1919
        %v1952 = vunpack.c.l.b16 %v1920
        %v1953 = vunpack.c.l.b16 %v1921
        %v1954 = vunpack.c.l.b16 %v1922
        %v1955 = vunpack.c.l.b16 %v1923
        %v1956 = vunpack.c.l.b16 %v1924
        %v1957 = vunpack.c.l.b16 %v1925
        %v1958 = vunpack.c.l.b16 %v1926
        %v1959 = vunpack.c.l.b16 %v1927
        %v1960 = vunpack.c.l.b16 %v1928
        %v1961 = vunpack.c.l.b16 %v1929
        %v1962 = vpack.c.b16 %v1947, %v1946
        %v1963 = vpack.c.b16 %v1949, %v1948
        %v1964 = vpack.c.b16 %v1951, %v1950
        %v1965 = vpack.c.b16 %v1953, %v1952
        %v1966 = vpack.c.b16 %v1955, %v1954
        %v1967 = vpack.c.b16 %v1957, %v1956
        %v1968 = vpack.c.b16 %v1959, %v1958
        %v1969 = vpack.c.b16 %v1961, %v1960
        %1978 = vmatprep.subr.bf16.mxu0 0
        %1979 = vmatpush1.bf16.msra.mxu0 %v1969
        %1980 = vmatprep.subr.bf16.mxu0 0
        %1981 = vmatpush1.bf16.msra.mxu0 %v1968
        %1982 = vmatprep.subr.bf16.mxu0 0
        %1983 = vmatpush1.bf16.msra.mxu0 %v1967
        %1984 = vmatprep.subr.bf16.mxu0 0
        %1985 = vmatpush1.bf16.msra.mxu0 %v1966
        %1986 = vmatprep.subr.bf16.mxu0 0
        %1987 = vmatpush1.bf16.msra.mxu0 %v1965
        %1988 = vmatprep.subr.bf16.mxu0 0
        %1989 = vmatpush1.bf16.msra.mxu0 %v1964
        %1990 = vmatprep.subr.bf16.mxu0 0
        %1991 = vmatpush1.bf16.msra.mxu0 %v1963
        %1992 = vmatprep.subr.bf16.mxu0 0
        %1993 = vmatpush1.bf16.msra.mxu0 %v1962
        %1994 = vmatprep.subr.bf16.mxu0 0
        %1995 = vmatpush2.bf16.msra.mxu0 0
        %1996 = vmatprep.subr.bf16.mxu0 0
        %1997 = vmatpush2.bf16.msra.mxu0 0
        %1998 = vmatprep.subr.bf16.mxu0 0
        %1999 = vmatpush2.bf16.msra.mxu0 0
        %2000 = vmatprep.subr.bf16.mxu0 0
        %2001 = vmatpush2.bf16.msra.mxu0 0
        %2002 = vmatprep.subr.bf16.mxu0 0
        %2003 = vmatpush2.bf16.msra.mxu0 0
        %2004 = vmatprep.subr.bf16.mxu0 0
        %2005 = vmatpush2.bf16.msra.mxu0 0
        %2006 = vmatprep.subr.bf16.mxu0 0
        %2007 = vmatpush2.bf16.msra.mxu0 0
        %2008 = vmatprep.subr.bf16.mxu0 0
        %2009 = vmatpush2.bf16.msra.mxu0 0
        %2010 = vmatprep.mubr.bf16.mxu0 0
        %2011 = vmatmul.mubr.bf16.gmra.mxu0 %v1909
        %v2012 = vpop.f32.mrf.mxu0
        %v2013 = vadd.f32 0.0, %v2012
        %v2014 = vpop.f32.mrf.mxu0
        %v2015 = vpop.f32.mrf.mxu0
        %v2016 = vadd.f32 0.0, %v2015
        %v2017 = vpop.f32.mrf.mxu0
        %2018 = vmatprep.mubr.bf16.mxu0 0
        %2019 = vmatmul.mubr.bf16.gmra.mxu0 %v1910
        %v2020 = vpop.f32.mrf.mxu0
        %v2021 = vadd.f32 0.0, %v2020
        %v2022 = vpop.f32.mrf.mxu0
        %v2023 = vpop.f32.mrf.mxu0
        %v2024 = vadd.f32 0.0, %v2023
        %v2025 = vpop.f32.mrf.mxu0
        %2026 = vmatprep.mubr.bf16.mxu0 0
        %2027 = vmatmul.mubr.bf16.gmra.mxu0 %v1911
        %v2028 = vpop.f32.mrf.mxu0
        %v2029 = vadd.f32 0.0, %v2028
        %v2030 = vpop.f32.mrf.mxu0
        %v2031 = vpop.f32.mrf.mxu0
        %v2032 = vadd.f32 0.0, %v2031
        %v2033 = vpop.f32.mrf.mxu0
        %2034 = vmatprep.mubr.bf16.mxu0 0
        %2035 = vmatmul.mubr.bf16.gmra.mxu0 %v1912
        %v2036 = vpop.f32.mrf.mxu0
        %v2037 = vadd.f32 0.0, %v2036
        %v2038 = vpop.f32.mrf.mxu0
        %v2039 = vpop.f32.mrf.mxu0
        %v2040 = vpop.f32.mrf.mxu0
        %2041 = vdwg.mxu0
        %v2042 = vadd.f32 %v1894, %v2013
        %v2043 = vadd.f32 %v1895, %v2016
        %v2044 = vadd.f32 %v1896, %v2021
        %v2045 = vadd.f32 %v1897, %v2024
        %v2046 = vadd.f32 %v1898, %v2029
        %v2047 = vadd.f32 %v1899, %v2032
        %v2048 = vadd.f32 %v1900, %v2037
        %s2049 = scalar_lea.vmem [#allocation2], 320
        %v2050 = vld [vmem:[%s2049] sm:$0xff]
        %v2051 = vld [vmem:[%s2049 + $0x10] sm:$0xff]
        %v2052 = vld [vmem:[%s2049 + $0x20] sm:$0xff]
        %v2053 = vld [vmem:[%s2049 + $0x30] sm:$0xff]
        %v2054 = vld [vmem:[%s2049 + $0x40] sm:$0xff]
        %v2055 = vld [vmem:[%s2049 + $0x50] sm:$0xff]
        %v2056 = vld [vmem:[%s2049 + $0x60] sm:$0xff]
        %v2057 = vld [vmem:[%s2049 + $0x70] sm:$0xff]
        %v2058 = vpack.c.bf16 %v2051, %v2050
        %v2059 = vpack.c.bf16 %v2053, %v2052
        %v2060 = vpack.c.bf16 %v2055, %v2054
        %v2061 = vpack.c.bf16 %v2057, %v2056
        %s2062 = scalar_lea.vmem %s2, 320
        %v2063 = vld [vmem:[%s2062] sm:$0xf]
        %v2064 = vld [vmem:[%s2062 + $0x4] sm:$0xf]
        %v2065 = vld [vmem:[%s2062 + $0x8] sm:$0xf]
        %v2066 = vld [vmem:[%s2062 + $0xc] sm:$0xf]
        %v2067 = vld [vmem:[%s2062 + $0x10] sm:$0xf]
        %v2068 = vld [vmem:[%s2062 + $0x14] sm:$0xf]
        %v2069 = vld [vmem:[%s2062 + $0x18] sm:$0xf]
        %v2070 = vld [vmem:[%s2062 + $0x1c] sm:$0xf]
        %v2071 = vld [vmem:[%s2062 + $0x20] sm:$0xf]
        %v2072 = vld [vmem:[%s2062 + $0x24] sm:$0xf]
        %v2073 = vld [vmem:[%s2062 + $0x28] sm:$0xf]
        %v2074 = vld [vmem:[%s2062 + $0x2c] sm:$0xf]
        %v2075 = vld [vmem:[%s2062 + $0x30] sm:$0xf]
        %v2076 = vld [vmem:[%s2062 + $0x34] sm:$0xf]
        %v2077 = vld [vmem:[%s2062 + $0x38] sm:$0xf]
        %v2078 = vld [vmem:[%s2062 + $0x3c] sm:$0xf]
        %v2095 = vunpack.c.l.b16 %v2063
        %v2096 = vunpack.c.l.b16 %v2064
        %v2097 = vunpack.c.l.b16 %v2065
        %v2098 = vunpack.c.l.b16 %v2066
        %v2099 = vunpack.c.l.b16 %v2067
        %v2100 = vunpack.c.l.b16 %v2068
        %v2101 = vunpack.c.l.b16 %v2069
        %v2102 = vunpack.c.l.b16 %v2070
        %v2103 = vunpack.c.l.b16 %v2071
        %v2104 = vunpack.c.l.b16 %v2072
        %v2105 = vunpack.c.l.b16 %v2073
        %v2106 = vunpack.c.l.b16 %v2074
        %v2107 = vunpack.c.l.b16 %v2075
        %v2108 = vunpack.c.l.b16 %v2076
        %v2109 = vunpack.c.l.b16 %v2077
        %v2110 = vunpack.c.l.b16 %v2078
        %v2111 = vpack.c.b16 %v2096, %v2095
        %v2112 = vpack.c.b16 %v2098, %v2097
        %v2113 = vpack.c.b16 %v2100, %v2099
        %v2114 = vpack.c.b16 %v2102, %v2101
        %v2115 = vpack.c.b16 %v2104, %v2103
        %v2116 = vpack.c.b16 %v2106, %v2105
        %v2117 = vpack.c.b16 %v2108, %v2107
        %v2118 = vpack.c.b16 %v2110, %v2109
        %2127 = vmatprep.subr.bf16.mxu0 0
        %2128 = vmatpush1.bf16.msra.mxu0 %v2118
        %2129 = vmatprep.subr.bf16.mxu0 0
        %2130 = vmatpush1.bf16.msra.mxu0 %v2117
        %2131 = vmatprep.subr.bf16.mxu0 0
        %2132 = vmatpush1.bf16.msra.mxu0 %v2116
        %2133 = vmatprep.subr.bf16.mxu0 0
        %2134 = vmatpush1.bf16.msra.mxu0 %v2115
        %2135 = vmatprep.subr.bf16.mxu0 0
        %2136 = vmatpush1.bf16.msra.mxu0 %v2114
        %2137 = vmatprep.subr.bf16.mxu0 0
        %2138 = vmatpush1.bf16.msra.mxu0 %v2113
        %2139 = vmatprep.subr.bf16.mxu0 0
        %2140 = vmatpush1.bf16.msra.mxu0 %v2112
        %2141 = vmatprep.subr.bf16.mxu0 0
        %2142 = vmatpush1.bf16.msra.mxu0 %v2111
        %2143 = vmatprep.subr.bf16.mxu0 0
        %2144 = vmatpush2.bf16.msra.mxu0 0
        %2145 = vmatprep.subr.bf16.mxu0 0
        %2146 = vmatpush2.bf16.msra.mxu0 0
        %2147 = vmatprep.subr.bf16.mxu0 0
        %2148 = vmatpush2.bf16.msra.mxu0 0
        %2149 = vmatprep.subr.bf16.mxu0 0
        %2150 = vmatpush2.bf16.msra.mxu0 0
        %2151 = vmatprep.subr.bf16.mxu0 0
        %2152 = vmatpush2.bf16.msra.mxu0 0
        %2153 = vmatprep.subr.bf16.mxu0 0
        %2154 = vmatpush2.bf16.msra.mxu0 0
        %2155 = vmatprep.subr.bf16.mxu0 0
        %2156 = vmatpush2.bf16.msra.mxu0 0
        %2157 = vmatprep.subr.bf16.mxu0 0
        %2158 = vmatpush2.bf16.msra.mxu0 0
        %2159 = vmatprep.mubr.bf16.mxu0 0
        %2160 = vmatmul.mubr.bf16.gmra.mxu0 %v2058
        %v2161 = vpop.f32.mrf.mxu0
        %v2162 = vadd.f32 0.0, %v2161
        %v2163 = vpop.f32.mrf.mxu0
        %v2164 = vpop.f32.mrf.mxu0
        %v2165 = vadd.f32 0.0, %v2164
        %v2166 = vpop.f32.mrf.mxu0
        %2167 = vmatprep.mubr.bf16.mxu0 0
        %2168 = vmatmul.mubr.bf16.gmra.mxu0 %v2059
        %v2169 = vpop.f32.mrf.mxu0
        %v2170 = vadd.f32 0.0, %v2169
        %v2171 = vpop.f32.mrf.mxu0
        %v2172 = vpop.f32.mrf.mxu0
        %v2173 = vadd.f32 0.0, %v2172
        %v2174 = vpop.f32.mrf.mxu0
        %2175 = vmatprep.mubr.bf16.mxu0 0
        %2176 = vmatmul.mubr.bf16.gmra.mxu0 %v2060
        %v2177 = vpop.f32.mrf.mxu0
        %v2178 = vadd.f32 0.0, %v2177
        %v2179 = vpop.f32.mrf.mxu0
        %v2180 = vpop.f32.mrf.mxu0
        %v2181 = vadd.f32 0.0, %v2180
        %v2182 = vpop.f32.mrf.mxu0
        %2183 = vmatprep.mubr.bf16.mxu0 0
        %2184 = vmatmul.mubr.bf16.gmra.mxu0 %v2061
        %v2185 = vpop.f32.mrf.mxu0
        %v2186 = vadd.f32 0.0, %v2185
        %v2187 = vpop.f32.mrf.mxu0
        %v2188 = vpop.f32.mrf.mxu0
        %v2189 = vpop.f32.mrf.mxu0
        %2190 = vdwg.mxu0
        %v2191 = vadd.f32 %v2042, %v2162
        %v2192 = vadd.f32 %v2043, %v2165
        %v2193 = vadd.f32 %v2044, %v2170
        %v2194 = vadd.f32 %v2045, %v2173
        %v2195 = vadd.f32 %v2046, %v2178
        %v2196 = vadd.f32 %v2047, %v2181
        %v2197 = vadd.f32 %v2048, %v2186
        %s2198 = scalar_lea.vmem [#allocation2], 480
        %v2199 = vld [vmem:[%s2198] sm:$0xff]
        %v2200 = vld [vmem:[%s2198 + $0x10] sm:$0xff]
        %v2201 = vld [vmem:[%s2198 + $0x20] sm:$0xff]
        %v2202 = vld [vmem:[%s2198 + $0x30] sm:$0xff]
        %v2203 = vld [vmem:[%s2198 + $0x40] sm:$0xff]
        %v2204 = vld [vmem:[%s2198 + $0x50] sm:$0xff]
        %v2205 = vld [vmem:[%s2198 + $0x60] sm:$0xff]
        %v2206 = vld [vmem:[%s2198 + $0x70] sm:$0xff]
        %v2207 = vpack.c.bf16 %v2200, %v2199
        %v2208 = vpack.c.bf16 %v2202, %v2201
        %v2209 = vpack.c.bf16 %v2204, %v2203
        %v2210 = vpack.c.bf16 %v2206, %v2205
        %s2211 = scalar_lea.vmem %s2, 384
        %v2212 = vld [vmem:[%s2211] sm:$0xf]
        %v2213 = vld [vmem:[%s2211 + $0x4] sm:$0xf]
        %v2214 = vld [vmem:[%s2211 + $0x8] sm:$0xf]
        %v2215 = vld [vmem:[%s2211 + $0xc] sm:$0xf]
        %v2216 = vld [vmem:[%s2211 + $0x10] sm:$0xf]
        %v2217 = vld [vmem:[%s2211 + $0x14] sm:$0xf]
        %v2218 = vld [vmem:[%s2211 + $0x18] sm:$0xf]
        %v2219 = vld [vmem:[%s2211 + $0x1c] sm:$0xf]
        %v2220 = vld [vmem:[%s2211 + $0x20] sm:$0xf]
        %v2221 = vld [vmem:[%s2211 + $0x24] sm:$0xf]
        %v2222 = vld [vmem:[%s2211 + $0x28] sm:$0xf]
        %v2223 = vld [vmem:[%s2211 + $0x2c] sm:$0xf]
        %v2224 = vld [vmem:[%s2211 + $0x30] sm:$0xf]
        %v2225 = vld [vmem:[%s2211 + $0x34] sm:$0xf]
        %v2226 = vld [vmem:[%s2211 + $0x38] sm:$0xf]
        %v2227 = vld [vmem:[%s2211 + $0x3c] sm:$0xf]
        %v2244 = vunpack.c.l.b16 %v2212
        %v2245 = vunpack.c.l.b16 %v2213
        %v2246 = vunpack.c.l.b16 %v2214
        %v2247 = vunpack.c.l.b16 %v2215
        %v2248 = vunpack.c.l.b16 %v2216
        %v2249 = vunpack.c.l.b16 %v2217
        %v2250 = vunpack.c.l.b16 %v2218
        %v2251 = vunpack.c.l.b16 %v2219
        %v2252 = vunpack.c.l.b16 %v2220
        %v2253 = vunpack.c.l.b16 %v2221
        %v2254 = vunpack.c.l.b16 %v2222
        %v2255 = vunpack.c.l.b16 %v2223
        %v2256 = vunpack.c.l.b16 %v2224
        %v2257 = vunpack.c.l.b16 %v2225
        %v2258 = vunpack.c.l.b16 %v2226
        %v2259 = vunpack.c.l.b16 %v2227
        %v2260 = vpack.c.b16 %v2245, %v2244
        %v2261 = vpack.c.b16 %v2247, %v2246
        %v2262 = vpack.c.b16 %v2249, %v2248
        %v2263 = vpack.c.b16 %v2251, %v2250
        %v2264 = vpack.c.b16 %v2253, %v2252
        %v2265 = vpack.c.b16 %v2255, %v2254
        %v2266 = vpack.c.b16 %v2257, %v2256
        %v2267 = vpack.c.b16 %v2259, %v2258
        %2276 = vmatprep.subr.bf16.mxu0 0
        %2277 = vmatpush1.bf16.msra.mxu0 %v2267
        %2278 = vmatprep.subr.bf16.mxu0 0
        %2279 = vmatpush1.bf16.msra.mxu0 %v2266
        %2280 = vmatprep.subr.bf16.mxu0 0
        %2281 = vmatpush1.bf16.msra.mxu0 %v2265
        %2282 = vmatprep.subr.bf16.mxu0 0
        %2283 = vmatpush1.bf16.msra.mxu0 %v2264
        %2284 = vmatprep.subr.bf16.mxu0 0
        %2285 = vmatpush1.bf16.msra.mxu0 %v2263
        %2286 = vmatprep.subr.bf16.mxu0 0
        %2287 = vmatpush1.bf16.msra.mxu0 %v2262
        %2288 = vmatprep.subr.bf16.mxu0 0
        %2289 = vmatpush1.bf16.msra.mxu0 %v2261
        %2290 = vmatprep.subr.bf16.mxu0 0
        %2291 = vmatpush1.bf16.msra.mxu0 %v2260
        %2292 = vmatprep.subr.bf16.mxu0 0
        %2293 = vmatpush2.bf16.msra.mxu0 0
        %2294 = vmatprep.subr.bf16.mxu0 0
        %2295 = vmatpush2.bf16.msra.mxu0 0
        %2296 = vmatprep.subr.bf16.mxu0 0
        %2297 = vmatpush2.bf16.msra.mxu0 0
        %2298 = vmatprep.subr.bf16.mxu0 0
        %2299 = vmatpush2.bf16.msra.mxu0 0
        %2300 = vmatprep.subr.bf16.mxu0 0
        %2301 = vmatpush2.bf16.msra.mxu0 0
        %2302 = vmatprep.subr.bf16.mxu0 0
        %2303 = vmatpush2.bf16.msra.mxu0 0
        %2304 = vmatprep.subr.bf16.mxu0 0
        %2305 = vmatpush2.bf16.msra.mxu0 0
        %2306 = vmatprep.subr.bf16.mxu0 0
        %2307 = vmatpush2.bf16.msra.mxu0 0
        %2308 = vmatprep.mubr.bf16.mxu0 0
        %2309 = vmatmul.mubr.bf16.gmra.mxu0 %v2207
        %v2310 = vpop.f32.mrf.mxu0
        %v2311 = vadd.f32 0.0, %v2310
        %v2312 = vpop.f32.mrf.mxu0
        %v2313 = vpop.f32.mrf.mxu0
        %v2314 = vadd.f32 0.0, %v2313
        %v2315 = vpop.f32.mrf.mxu0
        %2316 = vmatprep.mubr.bf16.mxu0 0
        %2317 = vmatmul.mubr.bf16.gmra.mxu0 %v2208
        %v2318 = vpop.f32.mrf.mxu0
        %v2319 = vadd.f32 0.0, %v2318
        %v2320 = vpop.f32.mrf.mxu0
        %v2321 = vpop.f32.mrf.mxu0
        %v2322 = vadd.f32 0.0, %v2321
        %v2323 = vpop.f32.mrf.mxu0
        %2324 = vmatprep.mubr.bf16.mxu0 0
        %2325 = vmatmul.mubr.bf16.gmra.mxu0 %v2209
        %v2326 = vpop.f32.mrf.mxu0
        %v2327 = vadd.f32 0.0, %v2326
        %v2328 = vpop.f32.mrf.mxu0
        %v2329 = vpop.f32.mrf.mxu0
        %v2330 = vadd.f32 0.0, %v2329
        %v2331 = vpop.f32.mrf.mxu0
        %2332 = vmatprep.mubr.bf16.mxu0 0
        %2333 = vmatmul.mubr.bf16.gmra.mxu0 %v2210
        %v2334 = vpop.f32.mrf.mxu0
        %v2335 = vadd.f32 0.0, %v2334
        %v2336 = vpop.f32.mrf.mxu0
        %v2337 = vpop.f32.mrf.mxu0
        %v2338 = vpop.f32.mrf.mxu0
        %2339 = vdwg.mxu0
        %v2340 = vadd.f32 %v2191, %v2311
        %v2341 = vadd.f32 %v2192, %v2314
        %v2342 = vadd.f32 %v2193, %v2319
        %v2343 = vadd.f32 %v2194, %v2322
        %v2344 = vadd.f32 %v2195, %v2327
        %v2345 = vadd.f32 %v2196, %v2330
        %v2346 = vadd.f32 %v2197, %v2335
        %v2347 = vld [vmem:[%s2049 + $0x1] sm:$0xff]
        %v2348 = vld [vmem:[%s2049 + $0x11] sm:$0xff]
        %v2349 = vld [vmem:[%s2049 + $0x21] sm:$0xff]
        %v2350 = vld [vmem:[%s2049 + $0x31] sm:$0xff]
        %v2351 = vld [vmem:[%s2049 + $0x41] sm:$0xff]
        %v2352 = vld [vmem:[%s2049 + $0x51] sm:$0xff]
        %v2353 = vld [vmem:[%s2049 + $0x61] sm:$0xff]
        %v2354 = vld [vmem:[%s2049 + $0x71] sm:$0xff]
        %v2355 = vpack.c.bf16 %v2348, %v2347
        %v2356 = vpack.c.bf16 %v2350, %v2349
        %v2357 = vpack.c.bf16 %v2352, %v2351
        %v2358 = vpack.c.bf16 %v2354, %v2353
        %s2359 = scalar_lea.vmem %s2, 448
        %v2360 = vld [vmem:[%s2359] sm:$0xf]
        %v2361 = vld [vmem:[%s2359 + $0x4] sm:$0xf]
        %v2362 = vld [vmem:[%s2359 + $0x8] sm:$0xf]
        %v2363 = vld [vmem:[%s2359 + $0xc] sm:$0xf]
        %v2364 = vld [vmem:[%s2359 + $0x10] sm:$0xf]
        %v2365 = vld [vmem:[%s2359 + $0x14] sm:$0xf]
        %v2366 = vld [vmem:[%s2359 + $0x18] sm:$0xf]
        %v2367 = vld [vmem:[%s2359 + $0x1c] sm:$0xf]
        %v2368 = vld [vmem:[%s2359 + $0x20] sm:$0xf]
        %v2369 = vld [vmem:[%s2359 + $0x24] sm:$0xf]
        %v2370 = vld [vmem:[%s2359 + $0x28] sm:$0xf]
        %v2371 = vld [vmem:[%s2359 + $0x2c] sm:$0xf]
        %v2372 = vld [vmem:[%s2359 + $0x30] sm:$0xf]
        %v2373 = vld [vmem:[%s2359 + $0x34] sm:$0xf]
        %v2374 = vld [vmem:[%s2359 + $0x38] sm:$0xf]
        %v2375 = vld [vmem:[%s2359 + $0x3c] sm:$0xf]
        %v2392 = vunpack.c.l.b16 %v2360
        %v2393 = vunpack.c.l.b16 %v2361
        %v2394 = vunpack.c.l.b16 %v2362
        %v2395 = vunpack.c.l.b16 %v2363
        %v2396 = vunpack.c.l.b16 %v2364
        %v2397 = vunpack.c.l.b16 %v2365
        %v2398 = vunpack.c.l.b16 %v2366
        %v2399 = vunpack.c.l.b16 %v2367
        %v2400 = vunpack.c.l.b16 %v2368
        %v2401 = vunpack.c.l.b16 %v2369
        %v2402 = vunpack.c.l.b16 %v2370
        %v2403 = vunpack.c.l.b16 %v2371
        %v2404 = vunpack.c.l.b16 %v2372
        %v2405 = vunpack.c.l.b16 %v2373
        %v2406 = vunpack.c.l.b16 %v2374
        %v2407 = vunpack.c.l.b16 %v2375
        %v2408 = vpack.c.b16 %v2393, %v2392
        %v2409 = vpack.c.b16 %v2395, %v2394
        %v2410 = vpack.c.b16 %v2397, %v2396
        %v2411 = vpack.c.b16 %v2399, %v2398
        %v2412 = vpack.c.b16 %v2401, %v2400
        %v2413 = vpack.c.b16 %v2403, %v2402
        %v2414 = vpack.c.b16 %v2405, %v2404
        %v2415 = vpack.c.b16 %v2407, %v2406
        %2424 = vmatprep.subr.bf16.mxu0 0
        %2425 = vmatpush1.bf16.msra.mxu0 %v2415
        %2426 = vmatprep.subr.bf16.mxu0 0
        %2427 = vmatpush1.bf16.msra.mxu0 %v2414
        %2428 = vmatprep.subr.bf16.mxu0 0
        %2429 = vmatpush1.bf16.msra.mxu0 %v2413
        %2430 = vmatprep.subr.bf16.mxu0 0
        %2431 = vmatpush1.bf16.msra.mxu0 %v2412
        %2432 = vmatprep.subr.bf16.mxu0 0
        %2433 = vmatpush1.bf16.msra.mxu0 %v2411
        %2434 = vmatprep.subr.bf16.mxu0 0
        %2435 = vmatpush1.bf16.msra.mxu0 %v2410
        %2436 = vmatprep.subr.bf16.mxu0 0
        %2437 = vmatpush1.bf16.msra.mxu0 %v2409
        %2438 = vmatprep.subr.bf16.mxu0 0
        %2439 = vmatpush1.bf16.msra.mxu0 %v2408
        %2440 = vmatprep.subr.bf16.mxu0 0
        %2441 = vmatpush2.bf16.msra.mxu0 0
        %2442 = vmatprep.subr.bf16.mxu0 0
        %2443 = vmatpush2.bf16.msra.mxu0 0
        %2444 = vmatprep.subr.bf16.mxu0 0
        %2445 = vmatpush2.bf16.msra.mxu0 0
        %2446 = vmatprep.subr.bf16.mxu0 0
        %2447 = vmatpush2.bf16.msra.mxu0 0
        %2448 = vmatprep.subr.bf16.mxu0 0
        %2449 = vmatpush2.bf16.msra.mxu0 0
        %2450 = vmatprep.subr.bf16.mxu0 0
        %2451 = vmatpush2.bf16.msra.mxu0 0
        %2452 = vmatprep.subr.bf16.mxu0 0
        %2453 = vmatpush2.bf16.msra.mxu0 0
        %2454 = vmatprep.subr.bf16.mxu0 0
        %2455 = vmatpush2.bf16.msra.mxu0 0
        %2456 = vmatprep.mubr.bf16.mxu0 0
        %2457 = vmatmul.mubr.bf16.gmra.mxu0 %v2355
        %v2458 = vpop.f32.mrf.mxu0
        %v2459 = vadd.f32 0.0, %v2458
        %v2460 = vpop.f32.mrf.mxu0
        %v2461 = vpop.f32.mrf.mxu0
        %v2462 = vadd.f32 0.0, %v2461
        %v2463 = vpop.f32.mrf.mxu0
        %2464 = vmatprep.mubr.bf16.mxu0 0
        %2465 = vmatmul.mubr.bf16.gmra.mxu0 %v2356
        %v2466 = vpop.f32.mrf.mxu0
        %v2467 = vadd.f32 0.0, %v2466
        %v2468 = vpop.f32.mrf.mxu0
        %v2469 = vpop.f32.mrf.mxu0
        %v2470 = vadd.f32 0.0, %v2469
        %v2471 = vpop.f32.mrf.mxu0
        %2472 = vmatprep.mubr.bf16.mxu0 0
        %2473 = vmatmul.mubr.bf16.gmra.mxu0 %v2357
        %v2474 = vpop.f32.mrf.mxu0
        %v2475 = vadd.f32 0.0, %v2474
        %v2476 = vpop.f32.mrf.mxu0
        %v2477 = vpop.f32.mrf.mxu0
        %v2478 = vadd.f32 0.0, %v2477
        %v2479 = vpop.f32.mrf.mxu0
        %2480 = vmatprep.mubr.bf16.mxu0 0
        %2481 = vmatmul.mubr.bf16.gmra.mxu0 %v2358
        %v2482 = vpop.f32.mrf.mxu0
        %v2483 = vadd.f32 0.0, %v2482
        %v2484 = vpop.f32.mrf.mxu0
        %v2485 = vpop.f32.mrf.mxu0
        %v2486 = vpop.f32.mrf.mxu0
        %2487 = vdwg.mxu0
        %v2488 = vadd.f32 %v2340, %v2459
        %v2489 = vadd.f32 %v2341, %v2462
        %v2490 = vadd.f32 %v2342, %v2467
        %v2491 = vadd.f32 %v2343, %v2470
        %v2492 = vadd.f32 %v2344, %v2475
        %v2493 = vadd.f32 %v2345, %v2478
        %v2494 = vadd.f32 %v2346, %v2483
        %v2495 = vld [vmem:[%s2198 + $0x1] sm:$0xff]
        %v2496 = vld [vmem:[%s2198 + $0x11] sm:$0xff]
        %v2497 = vld [vmem:[%s2198 + $0x21] sm:$0xff]
        %v2498 = vld [vmem:[%s2198 + $0x31] sm:$0xff]
        %v2499 = vld [vmem:[%s2198 + $0x41] sm:$0xff]
        %v2500 = vld [vmem:[%s2198 + $0x51] sm:$0xff]
        %v2501 = vld [vmem:[%s2198 + $0x61] sm:$0xff]
        %v2502 = vld [vmem:[%s2198 + $0x71] sm:$0xff]
        %v2503 = vpack.c.bf16 %v2496, %v2495
        %v2504 = vpack.c.bf16 %v2498, %v2497
        %v2505 = vpack.c.bf16 %v2500, %v2499
        %v2506 = vpack.c.bf16 %v2502, %v2501
        %s2507 = scalar_lea.vmem %s2, 512
        %v2508 = vld [vmem:[%s2507] sm:$0xf]
        %v2509 = vld [vmem:[%s2507 + $0x4] sm:$0xf]
        %v2510 = vld [vmem:[%s2507 + $0x8] sm:$0xf]
        %v2511 = vld [vmem:[%s2507 + $0xc] sm:$0xf]
        %v2512 = vld [vmem:[%s2507 + $0x10] sm:$0xf]
        %v2513 = vld [vmem:[%s2507 + $0x14] sm:$0xf]
        %v2514 = vld [vmem:[%s2507 + $0x18] sm:$0xf]
        %v2515 = vld [vmem:[%s2507 + $0x1c] sm:$0xf]
        %v2516 = vld [vmem:[%s2507 + $0x20] sm:$0xf]
        %v2517 = vld [vmem:[%s2507 + $0x24] sm:$0xf]
        %v2518 = vld [vmem:[%s2507 + $0x28] sm:$0xf]
        %v2519 = vld [vmem:[%s2507 + $0x2c] sm:$0xf]
        %v2520 = vld [vmem:[%s2507 + $0x30] sm:$0xf]
        %v2521 = vld [vmem:[%s2507 + $0x34] sm:$0xf]
        %v2522 = vld [vmem:[%s2507 + $0x38] sm:$0xf]
        %v2523 = vld [vmem:[%s2507 + $0x3c] sm:$0xf]
        %v2540 = vunpack.c.l.b16 %v2508
        %v2541 = vunpack.c.l.b16 %v2509
        %v2542 = vunpack.c.l.b16 %v2510
        %v2543 = vunpack.c.l.b16 %v2511
        %v2544 = vunpack.c.l.b16 %v2512
        %v2545 = vunpack.c.l.b16 %v2513
        %v2546 = vunpack.c.l.b16 %v2514
        %v2547 = vunpack.c.l.b16 %v2515
        %v2548 = vunpack.c.l.b16 %v2516
        %v2549 = vunpack.c.l.b16 %v2517
        %v2550 = vunpack.c.l.b16 %v2518
        %v2551 = vunpack.c.l.b16 %v2519
        %v2552 = vunpack.c.l.b16 %v2520
        %v2553 = vunpack.c.l.b16 %v2521
        %v2554 = vunpack.c.l.b16 %v2522
        %v2555 = vunpack.c.l.b16 %v2523
        %v2556 = vpack.c.b16 %v2541, %v2540
        %v2557 = vpack.c.b16 %v2543, %v2542
        %v2558 = vpack.c.b16 %v2545, %v2544
        %v2559 = vpack.c.b16 %v2547, %v2546
        %v2560 = vpack.c.b16 %v2549, %v2548
        %v2561 = vpack.c.b16 %v2551, %v2550
        %v2562 = vpack.c.b16 %v2553, %v2552
        %v2563 = vpack.c.b16 %v2555, %v2554
        %2572 = vmatprep.subr.bf16.mxu0 0
        %2573 = vmatpush1.bf16.msra.mxu0 %v2563
        %2574 = vmatprep.subr.bf16.mxu0 0
        %2575 = vmatpush1.bf16.msra.mxu0 %v2562
        %2576 = vmatprep.subr.bf16.mxu0 0
        %2577 = vmatpush1.bf16.msra.mxu0 %v2561
        %2578 = vmatprep.subr.bf16.mxu0 0
        %2579 = vmatpush1.bf16.msra.mxu0 %v2560
        %2580 = vmatprep.subr.bf16.mxu0 0
        %2581 = vmatpush1.bf16.msra.mxu0 %v2559
        %2582 = vmatprep.subr.bf16.mxu0 0
        %2583 = vmatpush1.bf16.msra.mxu0 %v2558
        %2584 = vmatprep.subr.bf16.mxu0 0
        %2585 = vmatpush1.bf16.msra.mxu0 %v2557
        %2586 = vmatprep.subr.bf16.mxu0 0
        %2587 = vmatpush1.bf16.msra.mxu0 %v2556
        %2588 = vmatprep.subr.bf16.mxu0 0
        %2589 = vmatpush2.bf16.msra.mxu0 0
        %2590 = vmatprep.subr.bf16.mxu0 0
        %2591 = vmatpush2.bf16.msra.mxu0 0
        %2592 = vmatprep.subr.bf16.mxu0 0
        %2593 = vmatpush2.bf16.msra.mxu0 0
        %2594 = vmatprep.subr.bf16.mxu0 0
        %2595 = vmatpush2.bf16.msra.mxu0 0
        %2596 = vmatprep.subr.bf16.mxu0 0
        %2597 = vmatpush2.bf16.msra.mxu0 0
        %2598 = vmatprep.subr.bf16.mxu0 0
        %2599 = vmatpush2.bf16.msra.mxu0 0
        %2600 = vmatprep.subr.bf16.mxu0 0
        %2601 = vmatpush2.bf16.msra.mxu0 0
        %2602 = vmatprep.subr.bf16.mxu0 0
        %2603 = vmatpush2.bf16.msra.mxu0 0
        %2604 = vmatprep.mubr.bf16.mxu0 0
        %2605 = vmatmul.mubr.bf16.gmra.mxu0 %v2503
        %v2606 = vpop.f32.mrf.mxu0
        %v2607 = vadd.f32 0.0, %v2606
        %v2608 = vpop.f32.mrf.mxu0
        %v2609 = vpop.f32.mrf.mxu0
        %v2610 = vadd.f32 0.0, %v2609
        %v2611 = vpop.f32.mrf.mxu0
        %2612 = vmatprep.mubr.bf16.mxu0 0
        %2613 = vmatmul.mubr.bf16.gmra.mxu0 %v2504
        %v2614 = vpop.f32.mrf.mxu0
        %v2615 = vadd.f32 0.0, %v2614
        %v2616 = vpop.f32.mrf.mxu0
        %v2617 = vpop.f32.mrf.mxu0
        %v2618 = vadd.f32 0.0, %v2617
        %v2619 = vpop.f32.mrf.mxu0
        %2620 = vmatprep.mubr.bf16.mxu0 0
        %2621 = vmatmul.mubr.bf16.gmra.mxu0 %v2505
        %v2622 = vpop.f32.mrf.mxu0
        %v2623 = vadd.f32 0.0, %v2622
        %v2624 = vpop.f32.mrf.mxu0
        %v2625 = vpop.f32.mrf.mxu0
        %v2626 = vadd.f32 0.0, %v2625
        %v2627 = vpop.f32.mrf.mxu0
        %2628 = vmatprep.mubr.bf16.mxu0 0
        %2629 = vmatmul.mubr.bf16.gmra.mxu0 %v2506
        %v2630 = vpop.f32.mrf.mxu0
        %v2631 = vadd.f32 0.0, %v2630
        %v2632 = vpop.f32.mrf.mxu0
        %v2633 = vpop.f32.mrf.mxu0
        %v2634 = vpop.f32.mrf.mxu0
        %2635 = vdwg.mxu0
        %v2636 = vadd.f32 %v2488, %v2607
        %v2637 = vadd.f32 %v2489, %v2610
        %v2638 = vadd.f32 %v2490, %v2615
        %v2639 = vadd.f32 %v2491, %v2618
        %v2640 = vadd.f32 %v2492, %v2623
        %v2641 = vadd.f32 %v2493, %v2626
        %v2642 = vadd.f32 %v2494, %v2631
        %v2643 = vld [vmem:[%s2049 + $0x2] sm:$0xff]
        %v2644 = vld [vmem:[%s2049 + $0x12] sm:$0xff]
        %v2645 = vld [vmem:[%s2049 + $0x22] sm:$0xff]
        %v2646 = vld [vmem:[%s2049 + $0x32] sm:$0xff]
        %v2647 = vld [vmem:[%s2049 + $0x42] sm:$0xff]
        %v2648 = vld [vmem:[%s2049 + $0x52] sm:$0xff]
        %v2649 = vld [vmem:[%s2049 + $0x62] sm:$0xff]
        %v2650 = vld [vmem:[%s2049 + $0x72] sm:$0xff]
        %v2651 = vpack.c.bf16 %v2644, %v2643
        %v2652 = vpack.c.bf16 %v2646, %v2645
        %v2653 = vpack.c.bf16 %v2648, %v2647
        %v2654 = vpack.c.bf16 %v2650, %v2649
        %s2655 = scalar_lea.vmem %s2, 576
        %v2656 = vld [vmem:[%s2655] sm:$0xf]
        %v2657 = vld [vmem:[%s2655 + $0x4] sm:$0xf]
        %v2658 = vld [vmem:[%s2655 + $0x8] sm:$0xf]
        %v2659 = vld [vmem:[%s2655 + $0xc] sm:$0xf]
        %v2660 = vld [vmem:[%s2655 + $0x10] sm:$0xf]
        %v2661 = vld [vmem:[%s2655 + $0x14] sm:$0xf]
        %v2662 = vld [vmem:[%s2655 + $0x18] sm:$0xf]
        %v2663 = vld [vmem:[%s2655 + $0x1c] sm:$0xf]
        %v2664 = vld [vmem:[%s2655 + $0x20] sm:$0xf]
        %v2665 = vld [vmem:[%s2655 + $0x24] sm:$0xf]
        %v2666 = vld [vmem:[%s2655 + $0x28] sm:$0xf]
        %v2667 = vld [vmem:[%s2655 + $0x2c] sm:$0xf]
        %v2668 = vld [vmem:[%s2655 + $0x30] sm:$0xf]
        %v2669 = vld [vmem:[%s2655 + $0x34] sm:$0xf]
        %v2670 = vld [vmem:[%s2655 + $0x38] sm:$0xf]
        %v2671 = vld [vmem:[%s2655 + $0x3c] sm:$0xf]
        %v2688 = vunpack.c.l.b16 %v2656
        %v2689 = vunpack.c.l.b16 %v2657
        %v2690 = vunpack.c.l.b16 %v2658
        %v2691 = vunpack.c.l.b16 %v2659
        %v2692 = vunpack.c.l.b16 %v2660
        %v2693 = vunpack.c.l.b16 %v2661
        %v2694 = vunpack.c.l.b16 %v2662
        %v2695 = vunpack.c.l.b16 %v2663
        %v2696 = vunpack.c.l.b16 %v2664
        %v2697 = vunpack.c.l.b16 %v2665
        %v2698 = vunpack.c.l.b16 %v2666
        %v2699 = vunpack.c.l.b16 %v2667
        %v2700 = vunpack.c.l.b16 %v2668
        %v2701 = vunpack.c.l.b16 %v2669
        %v2702 = vunpack.c.l.b16 %v2670
        %v2703 = vunpack.c.l.b16 %v2671
        %v2704 = vpack.c.b16 %v2689, %v2688
        %v2705 = vpack.c.b16 %v2691, %v2690
        %v2706 = vpack.c.b16 %v2693, %v2692
        %v2707 = vpack.c.b16 %v2695, %v2694
        %v2708 = vpack.c.b16 %v2697, %v2696
        %v2709 = vpack.c.b16 %v2699, %v2698
        %v2710 = vpack.c.b16 %v2701, %v2700
        %v2711 = vpack.c.b16 %v2703, %v2702
        %2720 = vmatprep.subr.bf16.mxu0 0
        %2721 = vmatpush1.bf16.msra.mxu0 %v2711
        %2722 = vmatprep.subr.bf16.mxu0 0
        %2723 = vmatpush1.bf16.msra.mxu0 %v2710
        %2724 = vmatprep.subr.bf16.mxu0 0
        %2725 = vmatpush1.bf16.msra.mxu0 %v2709
        %2726 = vmatprep.subr.bf16.mxu0 0
        %2727 = vmatpush1.bf16.msra.mxu0 %v2708
        %2728 = vmatprep.subr.bf16.mxu0 0
        %2729 = vmatpush1.bf16.msra.mxu0 %v2707
        %2730 = vmatprep.subr.bf16.mxu0 0
        %2731 = vmatpush1.bf16.msra.mxu0 %v2706
        %2732 = vmatprep.subr.bf16.mxu0 0
        %2733 = vmatpush1.bf16.msra.mxu0 %v2705
        %2734 = vmatprep.subr.bf16.mxu0 0
        %2735 = vmatpush1.bf16.msra.mxu0 %v2704
        %2736 = vmatprep.subr.bf16.mxu0 0
        %2737 = vmatpush2.bf16.msra.mxu0 0
        %2738 = vmatprep.subr.bf16.mxu0 0
        %2739 = vmatpush2.bf16.msra.mxu0 0
        %2740 = vmatprep.subr.bf16.mxu0 0
        %2741 = vmatpush2.bf16.msra.mxu0 0
        %2742 = vmatprep.subr.bf16.mxu0 0
        %2743 = vmatpush2.bf16.msra.mxu0 0
        %2744 = vmatprep.subr.bf16.mxu0 0
        %2745 = vmatpush2.bf16.msra.mxu0 0
        %2746 = vmatprep.subr.bf16.mxu0 0
        %2747 = vmatpush2.bf16.msra.mxu0 0
        %2748 = vmatprep.subr.bf16.mxu0 0
        %2749 = vmatpush2.bf16.msra.mxu0 0
        %2750 = vmatprep.subr.bf16.mxu0 0
        %2751 = vmatpush2.bf16.msra.mxu0 0
        %2752 = vmatprep.mubr.bf16.mxu0 0
        %2753 = vmatmul.mubr.bf16.gmra.mxu0 %v2651
        %v2754 = vpop.f32.mrf.mxu0
        %v2755 = vadd.f32 0.0, %v2754
        %v2756 = vpop.f32.mrf.mxu0
        %v2757 = vpop.f32.mrf.mxu0
        %v2758 = vadd.f32 0.0, %v2757
        %v2759 = vpop.f32.mrf.mxu0
        %2760 = vmatprep.mubr.bf16.mxu0 0
        %2761 = vmatmul.mubr.bf16.gmra.mxu0 %v2652
        %v2762 = vpop.f32.mrf.mxu0
        %v2763 = vadd.f32 0.0, %v2762
        %v2764 = vpop.f32.mrf.mxu0
        %v2765 = vpop.f32.mrf.mxu0
        %v2766 = vadd.f32 0.0, %v2765
        %v2767 = vpop.f32.mrf.mxu0
        %2768 = vmatprep.mubr.bf16.mxu0 0
        %2769 = vmatmul.mubr.bf16.gmra.mxu0 %v2653
        %v2770 = vpop.f32.mrf.mxu0
        %v2771 = vadd.f32 0.0, %v2770
        %v2772 = vpop.f32.mrf.mxu0
        %v2773 = vpop.f32.mrf.mxu0
        %v2774 = vadd.f32 0.0, %v2773
        %v2775 = vpop.f32.mrf.mxu0
        %2776 = vmatprep.mubr.bf16.mxu0 0
        %2777 = vmatmul.mubr.bf16.gmra.mxu0 %v2654
        %v2778 = vpop.f32.mrf.mxu0
        %v2779 = vadd.f32 0.0, %v2778
        %v2780 = vpop.f32.mrf.mxu0
        %v2781 = vpop.f32.mrf.mxu0
        %v2782 = vpop.f32.mrf.mxu0
        %2783 = vdwg.mxu0
        %v2784 = vadd.f32 %v2636, %v2755
        %v2785 = vadd.f32 %v2637, %v2758
        %v2786 = vadd.f32 %v2638, %v2763
        %v2787 = vadd.f32 %v2639, %v2766
        %v2788 = vadd.f32 %v2640, %v2771
        %v2789 = vadd.f32 %v2641, %v2774
        %v2790 = vadd.f32 %v2642, %v2779
        %v2791 = vld [vmem:[%s646] sm:$0xff]
        %v2792 = vld [vmem:[%s646 + $0x10] sm:$0xff]
        %v2793 = vld [vmem:[%s646 + $0x20] sm:$0xff]
        %v2794 = vld [vmem:[%s646 + $0x30] sm:$0xff]
        %v2795 = vld [vmem:[%s646 + $0x40] sm:$0xff]
        %v2796 = vld [vmem:[%s646 + $0x50] sm:$0xff]
        %v2797 = vld [vmem:[%s646 + $0x60] sm:$0xff]
        %v2798 = vld [vmem:[%s646 + $0x70] sm:$0xff]
        %v2799 = vpack.c.bf16 %v2792, %v2791
        %v2800 = vpack.c.bf16 %v2794, %v2793
        %v2801 = vpack.c.bf16 %v2796, %v2795
        %v2802 = vpack.c.bf16 %v2798, %v2797
        %s2803 = scalar_lea.vmem %s2, 640
        %v2804 = vld [vmem:[%s2803] sm:$0xf]
        %v2805 = vld [vmem:[%s2803 + $0x4] sm:$0xf]
        %v2806 = vld [vmem:[%s2803 + $0x8] sm:$0xf]
        %v2807 = vld [vmem:[%s2803 + $0xc] sm:$0xf]
        %v2808 = vld [vmem:[%s2803 + $0x10] sm:$0xf]
        %v2809 = vld [vmem:[%s2803 + $0x14] sm:$0xf]
        %v2810 = vld [vmem:[%s2803 + $0x18] sm:$0xf]
        %v2811 = vld [vmem:[%s2803 + $0x1c] sm:$0xf]
        %v2812 = vld [vmem:[%s2803 + $0x20] sm:$0xf]
        %v2813 = vld [vmem:[%s2803 + $0x24] sm:$0xf]
        %v2814 = vld [vmem:[%s2803 + $0x28] sm:$0xf]
        %v2815 = vld [vmem:[%s2803 + $0x2c] sm:$0xf]
        %v2816 = vld [vmem:[%s2803 + $0x30] sm:$0xf]
        %v2817 = vld [vmem:[%s2803 + $0x34] sm:$0xf]
        %v2818 = vld [vmem:[%s2803 + $0x38] sm:$0xf]
        %v2819 = vld [vmem:[%s2803 + $0x3c] sm:$0xf]
        %v2836 = vunpack.c.l.b16 %v2804
        %v2837 = vunpack.c.l.b16 %v2805
        %v2838 = vunpack.c.l.b16 %v2806
        %v2839 = vunpack.c.l.b16 %v2807
        %v2840 = vunpack.c.l.b16 %v2808
        %v2841 = vunpack.c.l.b16 %v2809
        %v2842 = vunpack.c.l.b16 %v2810
        %v2843 = vunpack.c.l.b16 %v2811
        %v2844 = vunpack.c.l.b16 %v2812
        %v2845 = vunpack.c.l.b16 %v2813
        %v2846 = vunpack.c.l.b16 %v2814
        %v2847 = vunpack.c.l.b16 %v2815
        %v2848 = vunpack.c.l.b16 %v2816
        %v2849 = vunpack.c.l.b16 %v2817
        %v2850 = vunpack.c.l.b16 %v2818
        %v2851 = vunpack.c.l.b16 %v2819
        %v2852 = vpack.c.b16 %v2837, %v2836
        %v2853 = vpack.c.b16 %v2839, %v2838
        %v2854 = vpack.c.b16 %v2841, %v2840
        %v2855 = vpack.c.b16 %v2843, %v2842
        %v2856 = vpack.c.b16 %v2845, %v2844
        %v2857 = vpack.c.b16 %v2847, %v2846
        %v2858 = vpack.c.b16 %v2849, %v2848
        %v2859 = vpack.c.b16 %v2851, %v2850
        %2868 = vmatprep.subr.bf16.mxu0 0
        %2869 = vmatpush1.bf16.msra.mxu0 %v2859
        %2870 = vmatprep.subr.bf16.mxu0 0
        %2871 = vmatpush1.bf16.msra.mxu0 %v2858
        %2872 = vmatprep.subr.bf16.mxu0 0
        %2873 = vmatpush1.bf16.msra.mxu0 %v2857
        %2874 = vmatprep.subr.bf16.mxu0 0
        %2875 = vmatpush1.bf16.msra.mxu0 %v2856
        %2876 = vmatprep.subr.bf16.mxu0 0
        %2877 = vmatpush1.bf16.msra.mxu0 %v2855
        %2878 = vmatprep.subr.bf16.mxu0 0
        %2879 = vmatpush1.bf16.msra.mxu0 %v2854
        %2880 = vmatprep.subr.bf16.mxu0 0
        %2881 = vmatpush1.bf16.msra.mxu0 %v2853
        %2882 = vmatprep.subr.bf16.mxu0 0
        %2883 = vmatpush1.bf16.msra.mxu0 %v2852
        %2884 = vmatprep.subr.bf16.mxu0 0
        %2885 = vmatpush2.bf16.msra.mxu0 0
        %2886 = vmatprep.subr.bf16.mxu0 0
        %2887 = vmatpush2.bf16.msra.mxu0 0
        %2888 = vmatprep.subr.bf16.mxu0 0
        %2889 = vmatpush2.bf16.msra.mxu0 0
        %2890 = vmatprep.subr.bf16.mxu0 0
        %2891 = vmatpush2.bf16.msra.mxu0 0
        %2892 = vmatprep.subr.bf16.mxu0 0
        %2893 = vmatpush2.bf16.msra.mxu0 0
        %2894 = vmatprep.subr.bf16.mxu0 0
        %2895 = vmatpush2.bf16.msra.mxu0 0
        %2896 = vmatprep.subr.bf16.mxu0 0
        %2897 = vmatpush2.bf16.msra.mxu0 0
        %2898 = vmatprep.subr.bf16.mxu0 0
        %2899 = vmatpush2.bf16.msra.mxu0 0
        %2900 = vmatprep.mubr.bf16.mxu0 0
        %2901 = vmatmul.mubr.bf16.gmra.mxu0 %v2799
        %v2902 = vpop.f32.mrf.mxu0
        %v2903 = vadd.f32 0.0, %v2902
        %v2904 = vpop.f32.mrf.mxu0
        %v2905 = vpop.f32.mrf.mxu0
        %v2906 = vadd.f32 0.0, %v2905
        %v2907 = vpop.f32.mrf.mxu0
        %2908 = vmatprep.mubr.bf16.mxu0 0
        %2909 = vmatmul.mubr.bf16.gmra.mxu0 %v2800
        %v2910 = vpop.f32.mrf.mxu0
        %v2911 = vadd.f32 0.0, %v2910
        %v2912 = vpop.f32.mrf.mxu0
        %v2913 = vpop.f32.mrf.mxu0
        %v2914 = vadd.f32 0.0, %v2913
        %v2915 = vpop.f32.mrf.mxu0
        %2916 = vmatprep.mubr.bf16.mxu0 0
        %2917 = vmatmul.mubr.bf16.gmra.mxu0 %v2801
        %v2918 = vpop.f32.mrf.mxu0
        %v2919 = vadd.f32 0.0, %v2918
        %v2920 = vpop.f32.mrf.mxu0
        %v2921 = vpop.f32.mrf.mxu0
        %v2922 = vadd.f32 0.0, %v2921
        %v2923 = vpop.f32.mrf.mxu0
        %2924 = vmatprep.mubr.bf16.mxu0 0
        %2925 = vmatmul.mubr.bf16.gmra.mxu0 %v2802
        %v2926 = vpop.f32.mrf.mxu0
        %v2927 = vadd.f32 0.0, %v2926
        %v2928 = vpop.f32.mrf.mxu0
        %v2929 = vpop.f32.mrf.mxu0
        %v2930 = vpop.f32.mrf.mxu0
        %2931 = vdwg.mxu0
        %v2932 = vadd.f32 %v2784, %v2903
        %v2933 = vadd.f32 %v2785, %v2906
        %v2934 = vadd.f32 %v2786, %v2911
        %v2935 = vadd.f32 %v2787, %v2914
        %v2936 = vadd.f32 %v2788, %v2919
        %v2937 = vadd.f32 %v2789, %v2922
        %v2938 = vadd.f32 %v2790, %v2927
        %v2939 = vld [vmem:[%s869] sm:$0xff]
        %v2940 = vld [vmem:[%s869 + $0x10] sm:$0xff]
        %v2941 = vld [vmem:[%s869 + $0x20] sm:$0xff]
        %v2942 = vld [vmem:[%s869 + $0x30] sm:$0xff]
        %v2943 = vld [vmem:[%s869 + $0x40] sm:$0xff]
        %v2944 = vld [vmem:[%s869 + $0x50] sm:$0xff]
        %v2945 = vld [vmem:[%s869 + $0x60] sm:$0xff]
        %v2946 = vld [vmem:[%s869 + $0x70] sm:$0xff]
        %v2947 = vpack.c.bf16 %v2940, %v2939
        %v2948 = vpack.c.bf16 %v2942, %v2941
        %v2949 = vpack.c.bf16 %v2944, %v2943
        %v2950 = vpack.c.bf16 %v2946, %v2945
        %s2951 = scalar_lea.vmem %s2, 704
        %v2952 = vld [vmem:[%s2951] sm:$0xf]
        %v2953 = vld [vmem:[%s2951 + $0x4] sm:$0xf]
        %v2954 = vld [vmem:[%s2951 + $0x8] sm:$0xf]
        %v2955 = vld [vmem:[%s2951 + $0xc] sm:$0xf]
        %v2956 = vld [vmem:[%s2951 + $0x10] sm:$0xf]
        %v2957 = vld [vmem:[%s2951 + $0x14] sm:$0xf]
        %v2958 = vld [vmem:[%s2951 + $0x18] sm:$0xf]
        %v2959 = vld [vmem:[%s2951 + $0x1c] sm:$0xf]
        %v2960 = vld [vmem:[%s2951 + $0x20] sm:$0xf]
        %v2961 = vld [vmem:[%s2951 + $0x24] sm:$0xf]
        %v2962 = vld [vmem:[%s2951 + $0x28] sm:$0xf]
        %v2963 = vld [vmem:[%s2951 + $0x2c] sm:$0xf]
        %v2964 = vld [vmem:[%s2951 + $0x30] sm:$0xf]
        %v2965 = vld [vmem:[%s2951 + $0x34] sm:$0xf]
        %v2966 = vld [vmem:[%s2951 + $0x38] sm:$0xf]
        %v2967 = vld [vmem:[%s2951 + $0x3c] sm:$0xf]
        %v2984 = vunpack.c.l.b16 %v2952
        %v2985 = vunpack.c.l.b16 %v2953
        %v2986 = vunpack.c.l.b16 %v2954
        %v2987 = vunpack.c.l.b16 %v2955
        %v2988 = vunpack.c.l.b16 %v2956
        %v2989 = vunpack.c.l.b16 %v2957
        %v2990 = vunpack.c.l.b16 %v2958
        %v2991 = vunpack.c.l.b16 %v2959
        %v2992 = vunpack.c.l.b16 %v2960
        %v2993 = vunpack.c.l.b16 %v2961
        %v2994 = vunpack.c.l.b16 %v2962
        %v2995 = vunpack.c.l.b16 %v2963
        %v2996 = vunpack.c.l.b16 %v2964
        %v2997 = vunpack.c.l.b16 %v2965
        %v2998 = vunpack.c.l.b16 %v2966
        %v2999 = vunpack.c.l.b16 %v2967
        %v3000 = vpack.c.b16 %v2985, %v2984
        %v3001 = vpack.c.b16 %v2987, %v2986
        %v3002 = vpack.c.b16 %v2989, %v2988
        %v3003 = vpack.c.b16 %v2991, %v2990
        %v3004 = vpack.c.b16 %v2993, %v2992
        %v3005 = vpack.c.b16 %v2995, %v2994
        %v3006 = vpack.c.b16 %v2997, %v2996
        %v3007 = vpack.c.b16 %v2999, %v2998
        %3016 = vmatprep.subr.bf16.mxu0 0
        %3017 = vmatpush1.bf16.msra.mxu0 %v3007
        %3018 = vmatprep.subr.bf16.mxu0 0
        %3019 = vmatpush1.bf16.msra.mxu0 %v3006
        %3020 = vmatprep.subr.bf16.mxu0 0
        %3021 = vmatpush1.bf16.msra.mxu0 %v3005
        %3022 = vmatprep.subr.bf16.mxu0 0
        %3023 = vmatpush1.bf16.msra.mxu0 %v3004
        %3024 = vmatprep.subr.bf16.mxu0 0
        %3025 = vmatpush1.bf16.msra.mxu0 %v3003
        %3026 = vmatprep.subr.bf16.mxu0 0
        %3027 = vmatpush1.bf16.msra.mxu0 %v3002
        %3028 = vmatprep.subr.bf16.mxu0 0
        %3029 = vmatpush1.bf16.msra.mxu0 %v3001
        %3030 = vmatprep.subr.bf16.mxu0 0
        %3031 = vmatpush1.bf16.msra.mxu0 %v3000
        %3032 = vmatprep.subr.bf16.mxu0 0
        %3033 = vmatpush2.bf16.msra.mxu0 0
        %3034 = vmatprep.subr.bf16.mxu0 0
        %3035 = vmatpush2.bf16.msra.mxu0 0
        %3036 = vmatprep.subr.bf16.mxu0 0
        %3037 = vmatpush2.bf16.msra.mxu0 0
        %3038 = vmatprep.subr.bf16.mxu0 0
        %3039 = vmatpush2.bf16.msra.mxu0 0
        %3040 = vmatprep.subr.bf16.mxu0 0
        %3041 = vmatpush2.bf16.msra.mxu0 0
        %3042 = vmatprep.subr.bf16.mxu0 0
        %3043 = vmatpush2.bf16.msra.mxu0 0
        %3044 = vmatprep.subr.bf16.mxu0 0
        %3045 = vmatpush2.bf16.msra.mxu0 0
        %3046 = vmatprep.subr.bf16.mxu0 0
        %3047 = vmatpush2.bf16.msra.mxu0 0
        %3048 = vmatprep.mubr.bf16.mxu0 0
        %3049 = vmatmul.mubr.bf16.gmra.mxu0 %v2947
        %v3050 = vpop.f32.mrf.mxu0
        %v3051 = vadd.f32 0.0, %v3050
        %v3052 = vpop.f32.mrf.mxu0
        %v3053 = vpop.f32.mrf.mxu0
        %v3054 = vadd.f32 0.0, %v3053
        %v3055 = vpop.f32.mrf.mxu0
        %3056 = vmatprep.mubr.bf16.mxu0 0
        %3057 = vmatmul.mubr.bf16.gmra.mxu0 %v2948
        %v3058 = vpop.f32.mrf.mxu0
        %v3059 = vadd.f32 0.0, %v3058
        %v3060 = vpop.f32.mrf.mxu0
        %v3061 = vpop.f32.mrf.mxu0
        %v3062 = vadd.f32 0.0, %v3061
        %v3063 = vpop.f32.mrf.mxu0
        %3064 = vmatprep.mubr.bf16.mxu0 0
        %3065 = vmatmul.mubr.bf16.gmra.mxu0 %v2949
        %v3066 = vpop.f32.mrf.mxu0
        %v3067 = vadd.f32 0.0, %v3066
        %v3068 = vpop.f32.mrf.mxu0
        %v3069 = vpop.f32.mrf.mxu0
        %v3070 = vadd.f32 0.0, %v3069
        %v3071 = vpop.f32.mrf.mxu0
        %3072 = vmatprep.mubr.bf16.mxu0 0
        %3073 = vmatmul.mubr.bf16.gmra.mxu0 %v2950
        %v3074 = vpop.f32.mrf.mxu0
        %v3075 = vadd.f32 0.0, %v3074
        %v3076 = vpop.f32.mrf.mxu0
        %v3077 = vpop.f32.mrf.mxu0
        %v3078 = vpop.f32.mrf.mxu0
        %3079 = vdwg.mxu0
        %v3080 = vadd.f32 %v2932, %v3051
        %v3081 = vadd.f32 %v2933, %v3054
        %v3082 = vadd.f32 %v2934, %v3059
        %v3083 = vadd.f32 %v2935, %v3062
        %v3084 = vadd.f32 %v2936, %v3067
        %v3085 = vadd.f32 %v2937, %v3070
        %v3086 = vadd.f32 %v2938, %v3075
        %v3087 = vld [vmem:[%s646 + $0x1] sm:$0xff]
        %v3088 = vld [vmem:[%s646 + $0x11] sm:$0xff]
        %v3089 = vld [vmem:[%s646 + $0x21] sm:$0xff]
        %v3090 = vld [vmem:[%s646 + $0x31] sm:$0xff]
        %v3091 = vld [vmem:[%s646 + $0x41] sm:$0xff]
        %v3092 = vld [vmem:[%s646 + $0x51] sm:$0xff]
        %v3093 = vld [vmem:[%s646 + $0x61] sm:$0xff]
        %v3094 = vld [vmem:[%s646 + $0x71] sm:$0xff]
        %v3095 = vpack.c.bf16 %v3088, %v3087
        %v3096 = vpack.c.bf16 %v3090, %v3089
        %v3097 = vpack.c.bf16 %v3092, %v3091
        %v3098 = vpack.c.bf16 %v3094, %v3093
        %s3099 = scalar_lea.vmem %s2, 768
        %v3100 = vld [vmem:[%s3099] sm:$0xf]
        %v3101 = vld [vmem:[%s3099 + $0x4] sm:$0xf]
        %v3102 = vld [vmem:[%s3099 + $0x8] sm:$0xf]
        %v3103 = vld [vmem:[%s3099 + $0xc] sm:$0xf]
        %v3104 = vld [vmem:[%s3099 + $0x10] sm:$0xf]
        %v3105 = vld [vmem:[%s3099 + $0x14] sm:$0xf]
        %v3106 = vld [vmem:[%s3099 + $0x18] sm:$0xf]
        %v3107 = vld [vmem:[%s3099 + $0x1c] sm:$0xf]
        %v3108 = vld [vmem:[%s3099 + $0x20] sm:$0xf]
        %v3109 = vld [vmem:[%s3099 + $0x24] sm:$0xf]
        %v3110 = vld [vmem:[%s3099 + $0x28] sm:$0xf]
        %v3111 = vld [vmem:[%s3099 + $0x2c] sm:$0xf]
        %v3112 = vld [vmem:[%s3099 + $0x30] sm:$0xf]
        %v3113 = vld [vmem:[%s3099 + $0x34] sm:$0xf]
        %v3114 = vld [vmem:[%s3099 + $0x38] sm:$0xf]
        %v3115 = vld [vmem:[%s3099 + $0x3c] sm:$0xf]
        %v3132 = vunpack.c.l.b16 %v3100
        %v3133 = vunpack.c.l.b16 %v3101
        %v3134 = vunpack.c.l.b16 %v3102
        %v3135 = vunpack.c.l.b16 %v3103
        %v3136 = vunpack.c.l.b16 %v3104
        %v3137 = vunpack.c.l.b16 %v3105
        %v3138 = vunpack.c.l.b16 %v3106
        %v3139 = vunpack.c.l.b16 %v3107
        %v3140 = vunpack.c.l.b16 %v3108
        %v3141 = vunpack.c.l.b16 %v3109
        %v3142 = vunpack.c.l.b16 %v3110
        %v3143 = vunpack.c.l.b16 %v3111
        %v3144 = vunpack.c.l.b16 %v3112
        %v3145 = vunpack.c.l.b16 %v3113
        %v3146 = vunpack.c.l.b16 %v3114
        %v3147 = vunpack.c.l.b16 %v3115
        %v3148 = vpack.c.b16 %v3133, %v3132
        %v3149 = vpack.c.b16 %v3135, %v3134
        %v3150 = vpack.c.b16 %v3137, %v3136
        %v3151 = vpack.c.b16 %v3139, %v3138
        %v3152 = vpack.c.b16 %v3141, %v3140
        %v3153 = vpack.c.b16 %v3143, %v3142
        %v3154 = vpack.c.b16 %v3145, %v3144
        %v3155 = vpack.c.b16 %v3147, %v3146
        %3164 = vmatprep.subr.bf16.mxu0 0
        %3165 = vmatpush1.bf16.msra.mxu0 %v3155
        %3166 = vmatprep.subr.bf16.mxu0 0
        %3167 = vmatpush1.bf16.msra.mxu0 %v3154
        %3168 = vmatprep.subr.bf16.mxu0 0
        %3169 = vmatpush1.bf16.msra.mxu0 %v3153
        %3170 = vmatprep.subr.bf16.mxu0 0
        %3171 = vmatpush1.bf16.msra.mxu0 %v3152
        %3172 = vmatprep.subr.bf16.mxu0 0
        %3173 = vmatpush1.bf16.msra.mxu0 %v3151
        %3174 = vmatprep.subr.bf16.mxu0 0
        %3175 = vmatpush1.bf16.msra.mxu0 %v3150
        %3176 = vmatprep.subr.bf16.mxu0 0
        %3177 = vmatpush1.bf16.msra.mxu0 %v3149
        %3178 = vmatprep.subr.bf16.mxu0 0
        %3179 = vmatpush1.bf16.msra.mxu0 %v3148
        %3180 = vmatprep.subr.bf16.mxu0 0
        %3181 = vmatpush2.bf16.msra.mxu0 0
        %3182 = vmatprep.subr.bf16.mxu0 0
        %3183 = vmatpush2.bf16.msra.mxu0 0
        %3184 = vmatprep.subr.bf16.mxu0 0
        %3185 = vmatpush2.bf16.msra.mxu0 0
        %3186 = vmatprep.subr.bf16.mxu0 0
        %3187 = vmatpush2.bf16.msra.mxu0 0
        %3188 = vmatprep.subr.bf16.mxu0 0
        %3189 = vmatpush2.bf16.msra.mxu0 0
        %3190 = vmatprep.subr.bf16.mxu0 0
        %3191 = vmatpush2.bf16.msra.mxu0 0
        %3192 = vmatprep.subr.bf16.mxu0 0
        %3193 = vmatpush2.bf16.msra.mxu0 0
        %3194 = vmatprep.subr.bf16.mxu0 0
        %3195 = vmatpush2.bf16.msra.mxu0 0
        %3196 = vmatprep.mubr.bf16.mxu0 0
        %3197 = vmatmul.mubr.bf16.gmra.mxu0 %v3095
        %v3198 = vpop.f32.mrf.mxu0
        %v3199 = vadd.f32 0.0, %v3198
        %v3200 = vpop.f32.mrf.mxu0
        %v3201 = vpop.f32.mrf.mxu0
        %v3202 = vadd.f32 0.0, %v3201
        %v3203 = vpop.f32.mrf.mxu0
        %3204 = vmatprep.mubr.bf16.mxu0 0
        %3205 = vmatmul.mubr.bf16.gmra.mxu0 %v3096
        %v3206 = vpop.f32.mrf.mxu0
        %v3207 = vadd.f32 0.0, %v3206
        %v3208 = vpop.f32.mrf.mxu0
        %v3209 = vpop.f32.mrf.mxu0
        %v3210 = vadd.f32 0.0, %v3209
        %v3211 = vpop.f32.mrf.mxu0
        %3212 = vmatprep.mubr.bf16.mxu0 0
        %3213 = vmatmul.mubr.bf16.gmra.mxu0 %v3097
        %v3214 = vpop.f32.mrf.mxu0
        %v3215 = vadd.f32 0.0, %v3214
        %v3216 = vpop.f32.mrf.mxu0
        %v3217 = vpop.f32.mrf.mxu0
        %v3218 = vadd.f32 0.0, %v3217
        %v3219 = vpop.f32.mrf.mxu0
        %3220 = vmatprep.mubr.bf16.mxu0 0
        %3221 = vmatmul.mubr.bf16.gmra.mxu0 %v3098
        %v3222 = vpop.f32.mrf.mxu0
        %v3223 = vadd.f32 0.0, %v3222
        %v3224 = vpop.f32.mrf.mxu0
        %v3225 = vpop.f32.mrf.mxu0
        %v3226 = vpop.f32.mrf.mxu0
        %3227 = vdwg.mxu0
        %v3228 = vadd.f32 %v3080, %v3199
        %v3229 = vadd.f32 %v3081, %v3202
        %v3230 = vadd.f32 %v3082, %v3207
        %v3231 = vadd.f32 %v3083, %v3210
        %v3232 = vadd.f32 %v3084, %v3215
        %v3233 = vadd.f32 %v3085, %v3218
        %v3234 = vadd.f32 %v3086, %v3223
        %v3235 = vld [vmem:[%s869 + $0x1] sm:$0xff]
        %v3236 = vld [vmem:[%s869 + $0x11] sm:$0xff]
        %v3237 = vld [vmem:[%s869 + $0x21] sm:$0xff]
        %v3238 = vld [vmem:[%s869 + $0x31] sm:$0xff]
        %v3239 = vld [vmem:[%s869 + $0x41] sm:$0xff]
        %v3240 = vld [vmem:[%s869 + $0x51] sm:$0xff]
        %v3241 = vld [vmem:[%s869 + $0x61] sm:$0xff]
        %v3242 = vld [vmem:[%s869 + $0x71] sm:$0xff]
        %v3243 = vpack.c.bf16 %v3236, %v3235
        %v3244 = vpack.c.bf16 %v3238, %v3237
        %v3245 = vpack.c.bf16 %v3240, %v3239
        %v3246 = vpack.c.bf16 %v3242, %v3241
        %s3247 = scalar_lea.vmem %s2, 832
        %v3248 = vld [vmem:[%s3247] sm:$0xf]
        %v3249 = vld [vmem:[%s3247 + $0x4] sm:$0xf]
        %v3250 = vld [vmem:[%s3247 + $0x8] sm:$0xf]
        %v3251 = vld [vmem:[%s3247 + $0xc] sm:$0xf]
        %v3252 = vld [vmem:[%s3247 + $0x10] sm:$0xf]
        %v3253 = vld [vmem:[%s3247 + $0x14] sm:$0xf]
        %v3254 = vld [vmem:[%s3247 + $0x18] sm:$0xf]
        %v3255 = vld [vmem:[%s3247 + $0x1c] sm:$0xf]
        %v3256 = vld [vmem:[%s3247 + $0x20] sm:$0xf]
        %v3257 = vld [vmem:[%s3247 + $0x24] sm:$0xf]
        %v3258 = vld [vmem:[%s3247 + $0x28] sm:$0xf]
        %v3259 = vld [vmem:[%s3247 + $0x2c] sm:$0xf]
        %v3260 = vld [vmem:[%s3247 + $0x30] sm:$0xf]
        %v3261 = vld [vmem:[%s3247 + $0x34] sm:$0xf]
        %v3262 = vld [vmem:[%s3247 + $0x38] sm:$0xf]
        %v3263 = vld [vmem:[%s3247 + $0x3c] sm:$0xf]
        %v3280 = vunpack.c.l.b16 %v3248
        %v3281 = vunpack.c.l.b16 %v3249
        %v3282 = vunpack.c.l.b16 %v3250
        %v3283 = vunpack.c.l.b16 %v3251
        %v3284 = vunpack.c.l.b16 %v3252
        %v3285 = vunpack.c.l.b16 %v3253
        %v3286 = vunpack.c.l.b16 %v3254
        %v3287 = vunpack.c.l.b16 %v3255
        %v3288 = vunpack.c.l.b16 %v3256
        %v3289 = vunpack.c.l.b16 %v3257
        %v3290 = vunpack.c.l.b16 %v3258
        %v3291 = vunpack.c.l.b16 %v3259
        %v3292 = vunpack.c.l.b16 %v3260
        %v3293 = vunpack.c.l.b16 %v3261
        %v3294 = vunpack.c.l.b16 %v3262
        %v3295 = vunpack.c.l.b16 %v3263
        %v3296 = vpack.c.b16 %v3281, %v3280
        %v3297 = vpack.c.b16 %v3283, %v3282
        %v3298 = vpack.c.b16 %v3285, %v3284
        %v3299 = vpack.c.b16 %v3287, %v3286
        %v3300 = vpack.c.b16 %v3289, %v3288
        %v3301 = vpack.c.b16 %v3291, %v3290
        %v3302 = vpack.c.b16 %v3293, %v3292
        %v3303 = vpack.c.b16 %v3295, %v3294
        %3312 = vmatprep.subr.bf16.mxu0 0
        %3313 = vmatpush1.bf16.msra.mxu0 %v3303
        %3314 = vmatprep.subr.bf16.mxu0 0
        %3315 = vmatpush1.bf16.msra.mxu0 %v3302
        %3316 = vmatprep.subr.bf16.mxu0 0
        %3317 = vmatpush1.bf16.msra.mxu0 %v3301
        %3318 = vmatprep.subr.bf16.mxu0 0
        %3319 = vmatpush1.bf16.msra.mxu0 %v3300
        %3320 = vmatprep.subr.bf16.mxu0 0
        %3321 = vmatpush1.bf16.msra.mxu0 %v3299
        %3322 = vmatprep.subr.bf16.mxu0 0
        %3323 = vmatpush1.bf16.msra.mxu0 %v3298
        %3324 = vmatprep.subr.bf16.mxu0 0
        %3325 = vmatpush1.bf16.msra.mxu0 %v3297
        %3326 = vmatprep.subr.bf16.mxu0 0
        %3327 = vmatpush1.bf16.msra.mxu0 %v3296
        %3328 = vmatprep.subr.bf16.mxu0 0
        %3329 = vmatpush2.bf16.msra.mxu0 0
        %3330 = vmatprep.subr.bf16.mxu0 0
        %3331 = vmatpush2.bf16.msra.mxu0 0
        %3332 = vmatprep.subr.bf16.mxu0 0
        %3333 = vmatpush2.bf16.msra.mxu0 0
        %3334 = vmatprep.subr.bf16.mxu0 0
        %3335 = vmatpush2.bf16.msra.mxu0 0
        %3336 = vmatprep.subr.bf16.mxu0 0
        %3337 = vmatpush2.bf16.msra.mxu0 0
        %3338 = vmatprep.subr.bf16.mxu0 0
        %3339 = vmatpush2.bf16.msra.mxu0 0
        %3340 = vmatprep.subr.bf16.mxu0 0
        %3341 = vmatpush2.bf16.msra.mxu0 0
        %3342 = vmatprep.subr.bf16.mxu0 0
        %3343 = vmatpush2.bf16.msra.mxu0 0
        %3344 = vmatprep.mubr.bf16.mxu0 0
        %3345 = vmatmul.mubr.bf16.gmra.mxu0 %v3243
        %v3346 = vpop.f32.mrf.mxu0
        %v3347 = vadd.f32 0.0, %v3346
        %v3348 = vpop.f32.mrf.mxu0
        %v3349 = vpop.f32.mrf.mxu0
        %v3350 = vadd.f32 0.0, %v3349
        %v3351 = vpop.f32.mrf.mxu0
        %3352 = vmatprep.mubr.bf16.mxu0 0
        %3353 = vmatmul.mubr.bf16.gmra.mxu0 %v3244
        %v3354 = vpop.f32.mrf.mxu0
        %v3355 = vadd.f32 0.0, %v3354
        %v3356 = vpop.f32.mrf.mxu0
        %v3357 = vpop.f32.mrf.mxu0
        %v3358 = vadd.f32 0.0, %v3357
        %v3359 = vpop.f32.mrf.mxu0
        %3360 = vmatprep.mubr.bf16.mxu0 0
        %3361 = vmatmul.mubr.bf16.gmra.mxu0 %v3245
        %v3362 = vpop.f32.mrf.mxu0
        %v3363 = vadd.f32 0.0, %v3362
        %v3364 = vpop.f32.mrf.mxu0
        %v3365 = vpop.f32.mrf.mxu0
        %v3366 = vadd.f32 0.0, %v3365
        %v3367 = vpop.f32.mrf.mxu0
        %3368 = vmatprep.mubr.bf16.mxu0 0
        %3369 = vmatmul.mubr.bf16.gmra.mxu0 %v3246
        %v3370 = vpop.f32.mrf.mxu0
        %v3371 = vadd.f32 0.0, %v3370
        %v3372 = vpop.f32.mrf.mxu0
        %v3373 = vpop.f32.mrf.mxu0
        %v3374 = vpop.f32.mrf.mxu0
        %3375 = vdwg.mxu0
        %v3376 = vadd.f32 %v3228, %v3347
        %v3377 = vadd.f32 %v3229, %v3350
        %v3378 = vadd.f32 %v3230, %v3355
        %v3379 = vadd.f32 %v3231, %v3358
        %v3380 = vadd.f32 %v3232, %v3363
        %v3381 = vadd.f32 %v3233, %v3366
        %v3382 = vadd.f32 %v3234, %v3371
        %v3383 = vld [vmem:[%s646 + $0x2] sm:$0xff]
        %v3384 = vld [vmem:[%s646 + $0x12] sm:$0xff]
        %v3385 = vld [vmem:[%s646 + $0x22] sm:$0xff]
        %v3386 = vld [vmem:[%s646 + $0x32] sm:$0xff]
        %v3387 = vld [vmem:[%s646 + $0x42] sm:$0xff]
        %v3388 = vld [vmem:[%s646 + $0x52] sm:$0xff]
        %v3389 = vld [vmem:[%s646 + $0x62] sm:$0xff]
        %v3390 = vld [vmem:[%s646 + $0x72] sm:$0xff]
        %v3391 = vpack.c.bf16 %v3384, %v3383
        %v3392 = vpack.c.bf16 %v3386, %v3385
        %v3393 = vpack.c.bf16 %v3388, %v3387
        %v3394 = vpack.c.bf16 %v3390, %v3389
        %s3395 = scalar_lea.vmem %s2, 896
        %v3396 = vld [vmem:[%s3395] sm:$0xf]
        %v3397 = vld [vmem:[%s3395 + $0x4] sm:$0xf]
        %v3398 = vld [vmem:[%s3395 + $0x8] sm:$0xf]
        %v3399 = vld [vmem:[%s3395 + $0xc] sm:$0xf]
        %v3400 = vld [vmem:[%s3395 + $0x10] sm:$0xf]
        %v3401 = vld [vmem:[%s3395 + $0x14] sm:$0xf]
        %v3402 = vld [vmem:[%s3395 + $0x18] sm:$0xf]
        %v3403 = vld [vmem:[%s3395 + $0x1c] sm:$0xf]
        %v3404 = vld [vmem:[%s3395 + $0x20] sm:$0xf]
        %v3405 = vld [vmem:[%s3395 + $0x24] sm:$0xf]
        %v3406 = vld [vmem:[%s3395 + $0x28] sm:$0xf]
        %v3407 = vld [vmem:[%s3395 + $0x2c] sm:$0xf]
        %v3408 = vld [vmem:[%s3395 + $0x30] sm:$0xf]
        %v3409 = vld [vmem:[%s3395 + $0x34] sm:$0xf]
        %v3410 = vld [vmem:[%s3395 + $0x38] sm:$0xf]
        %v3411 = vld [vmem:[%s3395 + $0x3c] sm:$0xf]
        %v3428 = vunpack.c.l.b16 %v3396
        %v3429 = vunpack.c.l.b16 %v3397
        %v3430 = vunpack.c.l.b16 %v3398
        %v3431 = vunpack.c.l.b16 %v3399
        %v3432 = vunpack.c.l.b16 %v3400
        %v3433 = vunpack.c.l.b16 %v3401
        %v3434 = vunpack.c.l.b16 %v3402
        %v3435 = vunpack.c.l.b16 %v3403
        %v3436 = vunpack.c.l.b16 %v3404
        %v3437 = vunpack.c.l.b16 %v3405
        %v3438 = vunpack.c.l.b16 %v3406
        %v3439 = vunpack.c.l.b16 %v3407
        %v3440 = vunpack.c.l.b16 %v3408
        %v3441 = vunpack.c.l.b16 %v3409
        %v3442 = vunpack.c.l.b16 %v3410
        %v3443 = vunpack.c.l.b16 %v3411
        %v3444 = vpack.c.b16 %v3429, %v3428
        %v3445 = vpack.c.b16 %v3431, %v3430
        %v3446 = vpack.c.b16 %v3433, %v3432
        %v3447 = vpack.c.b16 %v3435, %v3434
        %v3448 = vpack.c.b16 %v3437, %v3436
        %v3449 = vpack.c.b16 %v3439, %v3438
        %v3450 = vpack.c.b16 %v3441, %v3440
        %v3451 = vpack.c.b16 %v3443, %v3442
        %3460 = vmatprep.subr.bf16.mxu0 0
        %3461 = vmatpush1.bf16.msra.mxu0 %v3451
        %3462 = vmatprep.subr.bf16.mxu0 0
        %3463 = vmatpush1.bf16.msra.mxu0 %v3450
        %3464 = vmatprep.subr.bf16.mxu0 0
        %3465 = vmatpush1.bf16.msra.mxu0 %v3449
        %3466 = vmatprep.subr.bf16.mxu0 0
        %3467 = vmatpush1.bf16.msra.mxu0 %v3448
        %3468 = vmatprep.subr.bf16.mxu0 0
        %3469 = vmatpush1.bf16.msra.mxu0 %v3447
        %3470 = vmatprep.subr.bf16.mxu0 0
        %3471 = vmatpush1.bf16.msra.mxu0 %v3446
        %3472 = vmatprep.subr.bf16.mxu0 0
        %3473 = vmatpush1.bf16.msra.mxu0 %v3445
        %3474 = vmatprep.subr.bf16.mxu0 0
        %3475 = vmatpush1.bf16.msra.mxu0 %v3444
        %3476 = vmatprep.subr.bf16.mxu0 0
        %3477 = vmatpush2.bf16.msra.mxu0 0
        %3478 = vmatprep.subr.bf16.mxu0 0
        %3479 = vmatpush2.bf16.msra.mxu0 0
        %3480 = vmatprep.subr.bf16.mxu0 0
        %3481 = vmatpush2.bf16.msra.mxu0 0
        %3482 = vmatprep.subr.bf16.mxu0 0
        %3483 = vmatpush2.bf16.msra.mxu0 0
        %3484 = vmatprep.subr.bf16.mxu0 0
        %3485 = vmatpush2.bf16.msra.mxu0 0
        %3486 = vmatprep.subr.bf16.mxu0 0
        %3487 = vmatpush2.bf16.msra.mxu0 0
        %3488 = vmatprep.subr.bf16.mxu0 0
        %3489 = vmatpush2.bf16.msra.mxu0 0
        %3490 = vmatprep.subr.bf16.mxu0 0
        %3491 = vmatpush2.bf16.msra.mxu0 0
        %3492 = vmatprep.mubr.bf16.mxu0 0
        %3493 = vmatmul.mubr.bf16.gmra.mxu0 %v3391
        %v3494 = vpop.f32.mrf.mxu0
        %v3495 = vadd.f32 0.0, %v3494
        %v3496 = vpop.f32.mrf.mxu0
        %v3497 = vpop.f32.mrf.mxu0
        %v3498 = vadd.f32 0.0, %v3497
        %v3499 = vpop.f32.mrf.mxu0
        %3500 = vmatprep.mubr.bf16.mxu0 0
        %3501 = vmatmul.mubr.bf16.gmra.mxu0 %v3392
        %v3502 = vpop.f32.mrf.mxu0
        %v3503 = vadd.f32 0.0, %v3502
        %v3504 = vpop.f32.mrf.mxu0
        %v3505 = vpop.f32.mrf.mxu0
        %v3506 = vadd.f32 0.0, %v3505
        %v3507 = vpop.f32.mrf.mxu0
        %3508 = vmatprep.mubr.bf16.mxu0 0
        %3509 = vmatmul.mubr.bf16.gmra.mxu0 %v3393
        %v3510 = vpop.f32.mrf.mxu0
        %v3511 = vadd.f32 0.0, %v3510
        %v3512 = vpop.f32.mrf.mxu0
        %v3513 = vpop.f32.mrf.mxu0
        %v3514 = vadd.f32 0.0, %v3513
        %v3515 = vpop.f32.mrf.mxu0
        %3516 = vmatprep.mubr.bf16.mxu0 0
        %3517 = vmatmul.mubr.bf16.gmra.mxu0 %v3394
        %v3518 = vpop.f32.mrf.mxu0
        %v3519 = vadd.f32 0.0, %v3518
        %v3520 = vpop.f32.mrf.mxu0
        %v3521 = vpop.f32.mrf.mxu0
        %v3522 = vpop.f32.mrf.mxu0
        %3523 = vdwg.mxu0
        %v3524 = vadd.f32 %v3376, %v3495
        %v3525 = vadd.f32 %v3377, %v3498
        %v3526 = vadd.f32 %v3378, %v3503
        %v3527 = vadd.f32 %v3379, %v3506
        %v3528 = vadd.f32 %v3380, %v3511
        %v3529 = vadd.f32 %v3381, %v3514
        %v3530 = vadd.f32 %v3382, %v3519
        %v3531 = vld [vmem:[%s1092] sm:$0xff]
        %v3532 = vld [vmem:[%s1092 + $0x10] sm:$0xff]
        %v3533 = vld [vmem:[%s1092 + $0x20] sm:$0xff]
        %v3534 = vld [vmem:[%s1092 + $0x30] sm:$0xff]
        %v3535 = vld [vmem:[%s1092 + $0x40] sm:$0xff]
        %v3536 = vld [vmem:[%s1092 + $0x50] sm:$0xff]
        %v3537 = vld [vmem:[%s1092 + $0x60] sm:$0xff]
        %v3538 = vld [vmem:[%s1092 + $0x70] sm:$0xff]
        %v3539 = vpack.c.bf16 %v3532, %v3531
        %v3540 = vpack.c.bf16 %v3534, %v3533
        %v3541 = vpack.c.bf16 %v3536, %v3535
        %v3542 = vpack.c.bf16 %v3538, %v3537
        %s3543 = scalar_lea.vmem %s2, 960
        %v3544 = vld [vmem:[%s3543] sm:$0xf]
        %v3545 = vld [vmem:[%s3543 + $0x4] sm:$0xf]
        %v3546 = vld [vmem:[%s3543 + $0x8] sm:$0xf]
        %v3547 = vld [vmem:[%s3543 + $0xc] sm:$0xf]
        %v3548 = vld [vmem:[%s3543 + $0x10] sm:$0xf]
        %v3549 = vld [vmem:[%s3543 + $0x14] sm:$0xf]
        %v3550 = vld [vmem:[%s3543 + $0x18] sm:$0xf]
        %v3551 = vld [vmem:[%s3543 + $0x1c] sm:$0xf]
        %v3552 = vld [vmem:[%s3543 + $0x20] sm:$0xf]
        %v3553 = vld [vmem:[%s3543 + $0x24] sm:$0xf]
        %v3554 = vld [vmem:[%s3543 + $0x28] sm:$0xf]
        %v3555 = vld [vmem:[%s3543 + $0x2c] sm:$0xf]
        %v3556 = vld [vmem:[%s3543 + $0x30] sm:$0xf]
        %v3557 = vld [vmem:[%s3543 + $0x34] sm:$0xf]
        %v3558 = vld [vmem:[%s3543 + $0x38] sm:$0xf]
        %v3559 = vld [vmem:[%s3543 + $0x3c] sm:$0xf]
        %v3576 = vunpack.c.l.b16 %v3544
        %v3577 = vunpack.c.l.b16 %v3545
        %v3578 = vunpack.c.l.b16 %v3546
        %v3579 = vunpack.c.l.b16 %v3547
        %v3580 = vunpack.c.l.b16 %v3548
        %v3581 = vunpack.c.l.b16 %v3549
        %v3582 = vunpack.c.l.b16 %v3550
        %v3583 = vunpack.c.l.b16 %v3551
        %v3584 = vunpack.c.l.b16 %v3552
        %v3585 = vunpack.c.l.b16 %v3553
        %v3586 = vunpack.c.l.b16 %v3554
        %v3587 = vunpack.c.l.b16 %v3555
        %v3588 = vunpack.c.l.b16 %v3556
        %v3589 = vunpack.c.l.b16 %v3557
        %v3590 = vunpack.c.l.b16 %v3558
        %v3591 = vunpack.c.l.b16 %v3559
        %v3592 = vpack.c.b16 %v3577, %v3576
        %v3593 = vpack.c.b16 %v3579, %v3578
        %v3594 = vpack.c.b16 %v3581, %v3580
        %v3595 = vpack.c.b16 %v3583, %v3582
        %v3596 = vpack.c.b16 %v3585, %v3584
        %v3597 = vpack.c.b16 %v3587, %v3586
        %v3598 = vpack.c.b16 %v3589, %v3588
        %v3599 = vpack.c.b16 %v3591, %v3590
        %3608 = vmatprep.subr.bf16.mxu0 0
        %3609 = vmatpush1.bf16.msra.mxu0 %v3599
        %3610 = vmatprep.subr.bf16.mxu0 0
        %3611 = vmatpush1.bf16.msra.mxu0 %v3598
        %3612 = vmatprep.subr.bf16.mxu0 0
        %3613 = vmatpush1.bf16.msra.mxu0 %v3597
        %3614 = vmatprep.subr.bf16.mxu0 0
        %3615 = vmatpush1.bf16.msra.mxu0 %v3596
        %3616 = vmatprep.subr.bf16.mxu0 0
        %3617 = vmatpush1.bf16.msra.mxu0 %v3595
        %3618 = vmatprep.subr.bf16.mxu0 0
        %3619 = vmatpush1.bf16.msra.mxu0 %v3594
        %3620 = vmatprep.subr.bf16.mxu0 0
        %3621 = vmatpush1.bf16.msra.mxu0 %v3593
        %3622 = vmatprep.subr.bf16.mxu0 0
        %3623 = vmatpush1.bf16.msra.mxu0 %v3592
        %3624 = vmatprep.subr.bf16.mxu0 0
        %3625 = vmatpush2.bf16.msra.mxu0 0
        %3626 = vmatprep.subr.bf16.mxu0 0
        %3627 = vmatpush2.bf16.msra.mxu0 0
        %3628 = vmatprep.subr.bf16.mxu0 0
        %3629 = vmatpush2.bf16.msra.mxu0 0
        %3630 = vmatprep.subr.bf16.mxu0 0
        %3631 = vmatpush2.bf16.msra.mxu0 0
        %3632 = vmatprep.subr.bf16.mxu0 0
        %3633 = vmatpush2.bf16.msra.mxu0 0
        %3634 = vmatprep.subr.bf16.mxu0 0
        %3635 = vmatpush2.bf16.msra.mxu0 0
        %3636 = vmatprep.subr.bf16.mxu0 0
        %3637 = vmatpush2.bf16.msra.mxu0 0
        %3638 = vmatprep.subr.bf16.mxu0 0
        %3639 = vmatpush2.bf16.msra.mxu0 0
        %3640 = vmatprep.mubr.bf16.mxu0 0
        %3641 = vmatmul.mubr.bf16.gmra.mxu0 %v3539
        %v3642 = vpop.f32.mrf.mxu0
        %v3643 = vadd.f32 0.0, %v3642
        %v3644 = vpop.f32.mrf.mxu0
        %v3645 = vpop.f32.mrf.mxu0
        %v3646 = vadd.f32 0.0, %v3645
        %v3647 = vpop.f32.mrf.mxu0
        %3648 = vmatprep.mubr.bf16.mxu0 0
        %3649 = vmatmul.mubr.bf16.gmra.mxu0 %v3540
        %v3650 = vpop.f32.mrf.mxu0
        %v3651 = vadd.f32 0.0, %v3650
        %v3652 = vpop.f32.mrf.mxu0
        %v3653 = vpop.f32.mrf.mxu0
        %v3654 = vadd.f32 0.0, %v3653
        %v3655 = vpop.f32.mrf.mxu0
        %3656 = vmatprep.mubr.bf16.mxu0 0
        %3657 = vmatmul.mubr.bf16.gmra.mxu0 %v3541
        %v3658 = vpop.f32.mrf.mxu0
        %v3659 = vadd.f32 0.0, %v3658
        %v3660 = vpop.f32.mrf.mxu0
        %v3661 = vpop.f32.mrf.mxu0
        %v3662 = vadd.f32 0.0, %v3661
        %v3663 = vpop.f32.mrf.mxu0
        %3664 = vmatprep.mubr.bf16.mxu0 0
        %3665 = vmatmul.mubr.bf16.gmra.mxu0 %v3542
        %v3666 = vpop.f32.mrf.mxu0
        %v3667 = vadd.f32 0.0, %v3666
        %v3668 = vpop.f32.mrf.mxu0
        %v3669 = vpop.f32.mrf.mxu0
        %v3670 = vpop.f32.mrf.mxu0
        %3671 = vdwg.mxu0
        %v3672 = vadd.f32 %v3524, %v3643
        %v3673 = vadd.f32 %v3525, %v3646
        %v3674 = vadd.f32 %v3526, %v3651
        %v3675 = vadd.f32 %v3527, %v3654
        %v3676 = vadd.f32 %v3528, %v3659
        %v3677 = vadd.f32 %v3529, %v3662
        %v3678 = vadd.f32 %v3530, %v3667
        %v3679 = vld [vmem:[%s1315] sm:$0xff]
        %v3680 = vld [vmem:[%s1315 + $0x10] sm:$0xff]
        %v3681 = vld [vmem:[%s1315 + $0x20] sm:$0xff]
        %v3682 = vld [vmem:[%s1315 + $0x30] sm:$0xff]
        %v3683 = vld [vmem:[%s1315 + $0x40] sm:$0xff]
        %v3684 = vld [vmem:[%s1315 + $0x50] sm:$0xff]
        %v3685 = vld [vmem:[%s1315 + $0x60] sm:$0xff]
        %v3686 = vld [vmem:[%s1315 + $0x70] sm:$0xff]
        %v3687 = vpack.c.bf16 %v3680, %v3679
        %v3688 = vpack.c.bf16 %v3682, %v3681
        %v3689 = vpack.c.bf16 %v3684, %v3683
        %v3690 = vpack.c.bf16 %v3686, %v3685
        %s3691 = scalar_lea.vmem %s2, 1024
        %v3692 = vld [vmem:[%s3691] sm:$0xf]
        %v3693 = vld [vmem:[%s3691 + $0x4] sm:$0xf]
        %v3694 = vld [vmem:[%s3691 + $0x8] sm:$0xf]
        %v3695 = vld [vmem:[%s3691 + $0xc] sm:$0xf]
        %v3696 = vld [vmem:[%s3691 + $0x10] sm:$0xf]
        %v3697 = vld [vmem:[%s3691 + $0x14] sm:$0xf]
        %v3698 = vld [vmem:[%s3691 + $0x18] sm:$0xf]
        %v3699 = vld [vmem:[%s3691 + $0x1c] sm:$0xf]
        %v3700 = vld [vmem:[%s3691 + $0x20] sm:$0xf]
        %v3701 = vld [vmem:[%s3691 + $0x24] sm:$0xf]
        %v3702 = vld [vmem:[%s3691 + $0x28] sm:$0xf]
        %v3703 = vld [vmem:[%s3691 + $0x2c] sm:$0xf]
        %v3704 = vld [vmem:[%s3691 + $0x30] sm:$0xf]
        %v3705 = vld [vmem:[%s3691 + $0x34] sm:$0xf]
        %v3706 = vld [vmem:[%s3691 + $0x38] sm:$0xf]
        %v3707 = vld [vmem:[%s3691 + $0x3c] sm:$0xf]
        %v3724 = vunpack.c.l.b16 %v3692
        %v3725 = vunpack.c.l.b16 %v3693
        %v3726 = vunpack.c.l.b16 %v3694
        %v3727 = vunpack.c.l.b16 %v3695
        %v3728 = vunpack.c.l.b16 %v3696
        %v3729 = vunpack.c.l.b16 %v3697
        %v3730 = vunpack.c.l.b16 %v3698
        %v3731 = vunpack.c.l.b16 %v3699
        %v3732 = vunpack.c.l.b16 %v3700
        %v3733 = vunpack.c.l.b16 %v3701
        %v3734 = vunpack.c.l.b16 %v3702
        %v3735 = vunpack.c.l.b16 %v3703
        %v3736 = vunpack.c.l.b16 %v3704
        %v3737 = vunpack.c.l.b16 %v3705
        %v3738 = vunpack.c.l.b16 %v3706
        %v3739 = vunpack.c.l.b16 %v3707
        %v3740 = vpack.c.b16 %v3725, %v3724
        %v3741 = vpack.c.b16 %v3727, %v3726
        %v3742 = vpack.c.b16 %v3729, %v3728
        %v3743 = vpack.c.b16 %v3731, %v3730
        %v3744 = vpack.c.b16 %v3733, %v3732
        %v3745 = vpack.c.b16 %v3735, %v3734
        %v3746 = vpack.c.b16 %v3737, %v3736
        %v3747 = vpack.c.b16 %v3739, %v3738
        %3756 = vmatprep.subr.bf16.mxu0 0
        %3757 = vmatpush1.bf16.msra.mxu0 %v3747
        %3758 = vmatprep.subr.bf16.mxu0 0
        %3759 = vmatpush1.bf16.msra.mxu0 %v3746
        %3760 = vmatprep.subr.bf16.mxu0 0
        %3761 = vmatpush1.bf16.msra.mxu0 %v3745
        %3762 = vmatprep.subr.bf16.mxu0 0
        %3763 = vmatpush1.bf16.msra.mxu0 %v3744
        %3764 = vmatprep.subr.bf16.mxu0 0
        %3765 = vmatpush1.bf16.msra.mxu0 %v3743
        %3766 = vmatprep.subr.bf16.mxu0 0
        %3767 = vmatpush1.bf16.msra.mxu0 %v3742
        %3768 = vmatprep.subr.bf16.mxu0 0
        %3769 = vmatpush1.bf16.msra.mxu0 %v3741
        %3770 = vmatprep.subr.bf16.mxu0 0
        %3771 = vmatpush1.bf16.msra.mxu0 %v3740
        %3772 = vmatprep.subr.bf16.mxu0 0
        %3773 = vmatpush2.bf16.msra.mxu0 0
        %3774 = vmatprep.subr.bf16.mxu0 0
        %3775 = vmatpush2.bf16.msra.mxu0 0
        %3776 = vmatprep.subr.bf16.mxu0 0
        %3777 = vmatpush2.bf16.msra.mxu0 0
        %3778 = vmatprep.subr.bf16.mxu0 0
        %3779 = vmatpush2.bf16.msra.mxu0 0
        %3780 = vmatprep.subr.bf16.mxu0 0
        %3781 = vmatpush2.bf16.msra.mxu0 0
        %3782 = vmatprep.subr.bf16.mxu0 0
        %3783 = vmatpush2.bf16.msra.mxu0 0
        %3784 = vmatprep.subr.bf16.mxu0 0
        %3785 = vmatpush2.bf16.msra.mxu0 0
        %3786 = vmatprep.subr.bf16.mxu0 0
        %3787 = vmatpush2.bf16.msra.mxu0 0
        %3788 = vmatprep.mubr.bf16.mxu0 0
        %3789 = vmatmul.mubr.bf16.gmra.mxu0 %v3687
        %v3790 = vpop.f32.mrf.mxu0
        %v3791 = vadd.f32 0.0, %v3790
        %v3792 = vpop.f32.mrf.mxu0
        %v3793 = vpop.f32.mrf.mxu0
        %v3794 = vadd.f32 0.0, %v3793
        %v3795 = vpop.f32.mrf.mxu0
        %3796 = vmatprep.mubr.bf16.mxu0 0
        %3797 = vmatmul.mubr.bf16.gmra.mxu0 %v3688
        %v3798 = vpop.f32.mrf.mxu0
        %v3799 = vadd.f32 0.0, %v3798
        %v3800 = vpop.f32.mrf.mxu0
        %v3801 = vpop.f32.mrf.mxu0
        %v3802 = vadd.f32 0.0, %v3801
        %v3803 = vpop.f32.mrf.mxu0
        %3804 = vmatprep.mubr.bf16.mxu0 0
        %3805 = vmatmul.mubr.bf16.gmra.mxu0 %v3689
        %v3806 = vpop.f32.mrf.mxu0
        %v3807 = vadd.f32 0.0, %v3806
        %v3808 = vpop.f32.mrf.mxu0
        %v3809 = vpop.f32.mrf.mxu0
        %v3810 = vadd.f32 0.0, %v3809
        %v3811 = vpop.f32.mrf.mxu0
        %3812 = vmatprep.mubr.bf16.mxu0 0
        %3813 = vmatmul.mubr.bf16.gmra.mxu0 %v3690
        %v3814 = vpop.f32.mrf.mxu0
        %v3815 = vadd.f32 0.0, %v3814
        %v3816 = vpop.f32.mrf.mxu0
        %v3817 = vpop.f32.mrf.mxu0
        %v3818 = vpop.f32.mrf.mxu0
        %3819 = vdwg.mxu0
        %v3820 = vadd.f32 %v3672, %v3791
        %v3821 = vadd.f32 %v3673, %v3794
        %v3822 = vadd.f32 %v3674, %v3799
        %v3823 = vadd.f32 %v3675, %v3802
        %v3824 = vadd.f32 %v3676, %v3807
        %v3825 = vadd.f32 %v3677, %v3810
        %v3826 = vadd.f32 %v3678, %v3815
        %v3827 = vld [vmem:[%s1092 + $0x1] sm:$0xff]
        %v3828 = vld [vmem:[%s1092 + $0x11] sm:$0xff]
        %v3829 = vld [vmem:[%s1092 + $0x21] sm:$0xff]
        %v3830 = vld [vmem:[%s1092 + $0x31] sm:$0xff]
        %v3831 = vld [vmem:[%s1092 + $0x41] sm:$0xff]
        %v3832 = vld [vmem:[%s1092 + $0x51] sm:$0xff]
        %v3833 = vld [vmem:[%s1092 + $0x61] sm:$0xff]
        %v3834 = vld [vmem:[%s1092 + $0x71] sm:$0xff]
        %v3835 = vpack.c.bf16 %v3828, %v3827
        %v3836 = vpack.c.bf16 %v3830, %v3829
        %v3837 = vpack.c.bf16 %v3832, %v3831
        %v3838 = vpack.c.bf16 %v3834, %v3833
        %s3839 = scalar_lea.vmem %s2, 1088
        %v3840 = vld [vmem:[%s3839] sm:$0xf]
        %v3841 = vld [vmem:[%s3839 + $0x4] sm:$0xf]
        %v3842 = vld [vmem:[%s3839 + $0x8] sm:$0xf]
        %v3843 = vld [vmem:[%s3839 + $0xc] sm:$0xf]
        %v3844 = vld [vmem:[%s3839 + $0x10] sm:$0xf]
        %v3845 = vld [vmem:[%s3839 + $0x14] sm:$0xf]
        %v3846 = vld [vmem:[%s3839 + $0x18] sm:$0xf]
        %v3847 = vld [vmem:[%s3839 + $0x1c] sm:$0xf]
        %v3848 = vld [vmem:[%s3839 + $0x20] sm:$0xf]
        %v3849 = vld [vmem:[%s3839 + $0x24] sm:$0xf]
        %v3850 = vld [vmem:[%s3839 + $0x28] sm:$0xf]
        %v3851 = vld [vmem:[%s3839 + $0x2c] sm:$0xf]
        %v3852 = vld [vmem:[%s3839 + $0x30] sm:$0xf]
        %v3853 = vld [vmem:[%s3839 + $0x34] sm:$0xf]
        %v3854 = vld [vmem:[%s3839 + $0x38] sm:$0xf]
        %v3855 = vld [vmem:[%s3839 + $0x3c] sm:$0xf]
        %v3872 = vunpack.c.l.b16 %v3840
        %v3873 = vunpack.c.l.b16 %v3841
        %v3874 = vunpack.c.l.b16 %v3842
        %v3875 = vunpack.c.l.b16 %v3843
        %v3876 = vunpack.c.l.b16 %v3844
        %v3877 = vunpack.c.l.b16 %v3845
        %v3878 = vunpack.c.l.b16 %v3846
        %v3879 = vunpack.c.l.b16 %v3847
        %v3880 = vunpack.c.l.b16 %v3848
        %v3881 = vunpack.c.l.b16 %v3849
        %v3882 = vunpack.c.l.b16 %v3850
        %v3883 = vunpack.c.l.b16 %v3851
        %v3884 = vunpack.c.l.b16 %v3852
        %v3885 = vunpack.c.l.b16 %v3853
        %v3886 = vunpack.c.l.b16 %v3854
        %v3887 = vunpack.c.l.b16 %v3855
        %v3888 = vpack.c.b16 %v3873, %v3872
        %v3889 = vpack.c.b16 %v3875, %v3874
        %v3890 = vpack.c.b16 %v3877, %v3876
        %v3891 = vpack.c.b16 %v3879, %v3878
        %v3892 = vpack.c.b16 %v3881, %v3880
        %v3893 = vpack.c.b16 %v3883, %v3882
        %v3894 = vpack.c.b16 %v3885, %v3884
        %v3895 = vpack.c.b16 %v3887, %v3886
        %3904 = vmatprep.subr.bf16.mxu0 0
        %3905 = vmatpush1.bf16.msra.mxu0 %v3895
        %3906 = vmatprep.subr.bf16.mxu0 0
        %3907 = vmatpush1.bf16.msra.mxu0 %v3894
        %3908 = vmatprep.subr.bf16.mxu0 0
        %3909 = vmatpush1.bf16.msra.mxu0 %v3893
        %3910 = vmatprep.subr.bf16.mxu0 0
        %3911 = vmatpush1.bf16.msra.mxu0 %v3892
        %3912 = vmatprep.subr.bf16.mxu0 0
        %3913 = vmatpush1.bf16.msra.mxu0 %v3891
        %3914 = vmatprep.subr.bf16.mxu0 0
        %3915 = vmatpush1.bf16.msra.mxu0 %v3890
        %3916 = vmatprep.subr.bf16.mxu0 0
        %3917 = vmatpush1.bf16.msra.mxu0 %v3889
        %3918 = vmatprep.subr.bf16.mxu0 0
        %3919 = vmatpush1.bf16.msra.mxu0 %v3888
        %3920 = vmatprep.subr.bf16.mxu0 0
        %3921 = vmatpush2.bf16.msra.mxu0 0
        %3922 = vmatprep.subr.bf16.mxu0 0
        %3923 = vmatpush2.bf16.msra.mxu0 0
        %3924 = vmatprep.subr.bf16.mxu0 0
        %3925 = vmatpush2.bf16.msra.mxu0 0
        %3926 = vmatprep.subr.bf16.mxu0 0
        %3927 = vmatpush2.bf16.msra.mxu0 0
        %3928 = vmatprep.subr.bf16.mxu0 0
        %3929 = vmatpush2.bf16.msra.mxu0 0
        %3930 = vmatprep.subr.bf16.mxu0 0
        %3931 = vmatpush2.bf16.msra.mxu0 0
        %3932 = vmatprep.subr.bf16.mxu0 0
        %3933 = vmatpush2.bf16.msra.mxu0 0
        %3934 = vmatprep.subr.bf16.mxu0 0
        %3935 = vmatpush2.bf16.msra.mxu0 0
        %3936 = vmatprep.mubr.bf16.mxu0 0
        %3937 = vmatmul.mubr.bf16.gmra.mxu0 %v3835
        %v3938 = vpop.f32.mrf.mxu0
        %v3939 = vadd.f32 0.0, %v3938
        %v3940 = vpop.f32.mrf.mxu0
        %v3941 = vpop.f32.mrf.mxu0
        %v3942 = vadd.f32 0.0, %v3941
        %v3943 = vpop.f32.mrf.mxu0
        %3944 = vmatprep.mubr.bf16.mxu0 0
        %3945 = vmatmul.mubr.bf16.gmra.mxu0 %v3836
        %v3946 = vpop.f32.mrf.mxu0
        %v3947 = vadd.f32 0.0, %v3946
        %v3948 = vpop.f32.mrf.mxu0
        %v3949 = vpop.f32.mrf.mxu0
        %v3950 = vadd.f32 0.0, %v3949
        %v3951 = vpop.f32.mrf.mxu0
        %3952 = vmatprep.mubr.bf16.mxu0 0
        %3953 = vmatmul.mubr.bf16.gmra.mxu0 %v3837
        %v3954 = vpop.f32.mrf.mxu0
        %v3955 = vadd.f32 0.0, %v3954
        %v3956 = vpop.f32.mrf.mxu0
        %v3957 = vpop.f32.mrf.mxu0
        %v3958 = vadd.f32 0.0, %v3957
        %v3959 = vpop.f32.mrf.mxu0
        %3960 = vmatprep.mubr.bf16.mxu0 0
        %3961 = vmatmul.mubr.bf16.gmra.mxu0 %v3838
        %v3962 = vpop.f32.mrf.mxu0
        %v3963 = vadd.f32 0.0, %v3962
        %v3964 = vpop.f32.mrf.mxu0
        %v3965 = vpop.f32.mrf.mxu0
        %v3966 = vpop.f32.mrf.mxu0
        %3967 = vdwg.mxu0
        %v3968 = vadd.f32 %v3820, %v3939
        %v3969 = vadd.f32 %v3821, %v3942
        %v3970 = vadd.f32 %v3822, %v3947
        %v3971 = vadd.f32 %v3823, %v3950
        %v3972 = vadd.f32 %v3824, %v3955
        %v3973 = vadd.f32 %v3825, %v3958
        %v3974 = vadd.f32 %v3826, %v3963
        %v3975 = vld [vmem:[%s1315 + $0x1] sm:$0xff]
        %v3976 = vld [vmem:[%s1315 + $0x11] sm:$0xff]
        %v3977 = vld [vmem:[%s1315 + $0x21] sm:$0xff]
        %v3978 = vld [vmem:[%s1315 + $0x31] sm:$0xff]
        %v3979 = vld [vmem:[%s1315 + $0x41] sm:$0xff]
        %v3980 = vld [vmem:[%s1315 + $0x51] sm:$0xff]
        %v3981 = vld [vmem:[%s1315 + $0x61] sm:$0xff]
        %v3982 = vld [vmem:[%s1315 + $0x71] sm:$0xff]
        %v3983 = vpack.c.bf16 %v3976, %v3975
        %v3984 = vpack.c.bf16 %v3978, %v3977
        %v3985 = vpack.c.bf16 %v3980, %v3979
        %v3986 = vpack.c.bf16 %v3982, %v3981
        %s3987 = scalar_lea.vmem %s2, 1152
        %v3988 = vld [vmem:[%s3987] sm:$0xf]
        %v3989 = vld [vmem:[%s3987 + $0x4] sm:$0xf]
        %v3990 = vld [vmem:[%s3987 + $0x8] sm:$0xf]
        %v3991 = vld [vmem:[%s3987 + $0xc] sm:$0xf]
        %v3992 = vld [vmem:[%s3987 + $0x10] sm:$0xf]
        %v3993 = vld [vmem:[%s3987 + $0x14] sm:$0xf]
        %v3994 = vld [vmem:[%s3987 + $0x18] sm:$0xf]
        %v3995 = vld [vmem:[%s3987 + $0x1c] sm:$0xf]
        %v3996 = vld [vmem:[%s3987 + $0x20] sm:$0xf]
        %v3997 = vld [vmem:[%s3987 + $0x24] sm:$0xf]
        %v3998 = vld [vmem:[%s3987 + $0x28] sm:$0xf]
        %v3999 = vld [vmem:[%s3987 + $0x2c] sm:$0xf]
        %v4000 = vld [vmem:[%s3987 + $0x30] sm:$0xf]
        %v4001 = vld [vmem:[%s3987 + $0x34] sm:$0xf]
        %v4002 = vld [vmem:[%s3987 + $0x38] sm:$0xf]
        %v4003 = vld [vmem:[%s3987 + $0x3c] sm:$0xf]
        %v4020 = vunpack.c.l.b16 %v3988
        %v4021 = vunpack.c.l.b16 %v3989
        %v4022 = vunpack.c.l.b16 %v3990
        %v4023 = vunpack.c.l.b16 %v3991
        %v4024 = vunpack.c.l.b16 %v3992
        %v4025 = vunpack.c.l.b16 %v3993
        %v4026 = vunpack.c.l.b16 %v3994
        %v4027 = vunpack.c.l.b16 %v3995
        %v4028 = vunpack.c.l.b16 %v3996
        %v4029 = vunpack.c.l.b16 %v3997
        %v4030 = vunpack.c.l.b16 %v3998
        %v4031 = vunpack.c.l.b16 %v3999
        %v4032 = vunpack.c.l.b16 %v4000
        %v4033 = vunpack.c.l.b16 %v4001
        %v4034 = vunpack.c.l.b16 %v4002
        %v4035 = vunpack.c.l.b16 %v4003
        %v4036 = vpack.c.b16 %v4021, %v4020
        %v4037 = vpack.c.b16 %v4023, %v4022
        %v4038 = vpack.c.b16 %v4025, %v4024
        %v4039 = vpack.c.b16 %v4027, %v4026
        %v4040 = vpack.c.b16 %v4029, %v4028
        %v4041 = vpack.c.b16 %v4031, %v4030
        %v4042 = vpack.c.b16 %v4033, %v4032
        %v4043 = vpack.c.b16 %v4035, %v4034
        %4052 = vmatprep.subr.bf16.mxu0 0
        %4053 = vmatpush1.bf16.msra.mxu0 %v4043
        %4054 = vmatprep.subr.bf16.mxu0 0
        %4055 = vmatpush1.bf16.msra.mxu0 %v4042
        %4056 = vmatprep.subr.bf16.mxu0 0
        %4057 = vmatpush1.bf16.msra.mxu0 %v4041
        %4058 = vmatprep.subr.bf16.mxu0 0
        %4059 = vmatpush1.bf16.msra.mxu0 %v4040
        %4060 = vmatprep.subr.bf16.mxu0 0
        %4061 = vmatpush1.bf16.msra.mxu0 %v4039
        %4062 = vmatprep.subr.bf16.mxu0 0
        %4063 = vmatpush1.bf16.msra.mxu0 %v4038
        %4064 = vmatprep.subr.bf16.mxu0 0
        %4065 = vmatpush1.bf16.msra.mxu0 %v4037
        %4066 = vmatprep.subr.bf16.mxu0 0
        %4067 = vmatpush1.bf16.msra.mxu0 %v4036
        %4068 = vmatprep.subr.bf16.mxu0 0
        %4069 = vmatpush2.bf16.msra.mxu0 0
        %4070 = vmatprep.subr.bf16.mxu0 0
        %4071 = vmatpush2.bf16.msra.mxu0 0
        %4072 = vmatprep.subr.bf16.mxu0 0
        %4073 = vmatpush2.bf16.msra.mxu0 0
        %4074 = vmatprep.subr.bf16.mxu0 0
        %4075 = vmatpush2.bf16.msra.mxu0 0
        %4076 = vmatprep.subr.bf16.mxu0 0
        %4077 = vmatpush2.bf16.msra.mxu0 0
        %4078 = vmatprep.subr.bf16.mxu0 0
        %4079 = vmatpush2.bf16.msra.mxu0 0
        %4080 = vmatprep.subr.bf16.mxu0 0
        %4081 = vmatpush2.bf16.msra.mxu0 0
        %4082 = vmatprep.subr.bf16.mxu0 0
        %4083 = vmatpush2.bf16.msra.mxu0 0
        %4084 = vmatprep.mubr.bf16.mxu0 0
        %4085 = vmatmul.mubr.bf16.gmra.mxu0 %v3983
        %v4086 = vpop.f32.mrf.mxu0
        %v4087 = vadd.f32 0.0, %v4086
        %v4088 = vpop.f32.mrf.mxu0
        %v4089 = vpop.f32.mrf.mxu0
        %v4090 = vadd.f32 0.0, %v4089
        %v4091 = vpop.f32.mrf.mxu0
        %4092 = vmatprep.mubr.bf16.mxu0 0
        %4093 = vmatmul.mubr.bf16.gmra.mxu0 %v3984
        %v4094 = vpop.f32.mrf.mxu0
        %v4095 = vadd.f32 0.0, %v4094
        %v4096 = vpop.f32.mrf.mxu0
        %v4097 = vpop.f32.mrf.mxu0
        %v4098 = vadd.f32 0.0, %v4097
        %v4099 = vpop.f32.mrf.mxu0
        %4100 = vmatprep.mubr.bf16.mxu0 0
        %4101 = vmatmul.mubr.bf16.gmra.mxu0 %v3985
        %v4102 = vpop.f32.mrf.mxu0
        %v4103 = vadd.f32 0.0, %v4102
        %v4104 = vpop.f32.mrf.mxu0
        %v4105 = vpop.f32.mrf.mxu0
        %v4106 = vadd.f32 0.0, %v4105
        %v4107 = vpop.f32.mrf.mxu0
        %4108 = vmatprep.mubr.bf16.mxu0 0
        %4109 = vmatmul.mubr.bf16.gmra.mxu0 %v3986
        %v4110 = vpop.f32.mrf.mxu0
        %v4111 = vadd.f32 0.0, %v4110
        %v4112 = vpop.f32.mrf.mxu0
        %v4113 = vpop.f32.mrf.mxu0
        %v4114 = vpop.f32.mrf.mxu0
        %4115 = vdwg.mxu0
        %v4116 = vadd.f32 %v3968, %v4087
        %v4117 = vadd.f32 %v3969, %v4090
        %v4118 = vadd.f32 %v3970, %v4095
        %v4119 = vadd.f32 %v3971, %v4098
        %v4120 = vadd.f32 %v3972, %v4103
        %v4121 = vadd.f32 %v3973, %v4106
        %v4122 = vadd.f32 %v3974, %v4111
        %v4123 = vld [vmem:[%s1092 + $0x2] sm:$0xff]
        %v4124 = vld [vmem:[%s1092 + $0x12] sm:$0xff]
        %v4125 = vld [vmem:[%s1092 + $0x22] sm:$0xff]
        %v4126 = vld [vmem:[%s1092 + $0x32] sm:$0xff]
        %v4127 = vld [vmem:[%s1092 + $0x42] sm:$0xff]
        %v4128 = vld [vmem:[%s1092 + $0x52] sm:$0xff]
        %v4129 = vld [vmem:[%s1092 + $0x62] sm:$0xff]
        %v4130 = vld [vmem:[%s1092 + $0x72] sm:$0xff]
        %v4131 = vpack.c.bf16 %v4124, %v4123
        %v4132 = vpack.c.bf16 %v4126, %v4125
        %v4133 = vpack.c.bf16 %v4128, %v4127
        %v4134 = vpack.c.bf16 %v4130, %v4129
        %s4135 = scalar_lea.vmem %s2, 1216
        %v4136 = vld [vmem:[%s4135] sm:$0xf]
        %v4137 = vld [vmem:[%s4135 + $0x4] sm:$0xf]
        %v4138 = vld [vmem:[%s4135 + $0x8] sm:$0xf]
        %v4139 = vld [vmem:[%s4135 + $0xc] sm:$0xf]
        %v4140 = vld [vmem:[%s4135 + $0x10] sm:$0xf]
        %v4141 = vld [vmem:[%s4135 + $0x14] sm:$0xf]
        %v4142 = vld [vmem:[%s4135 + $0x18] sm:$0xf]
        %v4143 = vld [vmem:[%s4135 + $0x1c] sm:$0xf]
        %v4144 = vld [vmem:[%s4135 + $0x20] sm:$0xf]
        %v4145 = vld [vmem:[%s4135 + $0x24] sm:$0xf]
        %v4146 = vld [vmem:[%s4135 + $0x28] sm:$0xf]
        %v4147 = vld [vmem:[%s4135 + $0x2c] sm:$0xf]
        %v4148 = vld [vmem:[%s4135 + $0x30] sm:$0xf]
        %v4149 = vld [vmem:[%s4135 + $0x34] sm:$0xf]
        %v4150 = vld [vmem:[%s4135 + $0x38] sm:$0xf]
        %v4151 = vld [vmem:[%s4135 + $0x3c] sm:$0xf]
        %v4168 = vunpack.c.l.b16 %v4136
        %v4169 = vunpack.c.l.b16 %v4137
        %v4170 = vunpack.c.l.b16 %v4138
        %v4171 = vunpack.c.l.b16 %v4139
        %v4172 = vunpack.c.l.b16 %v4140
        %v4173 = vunpack.c.l.b16 %v4141
        %v4174 = vunpack.c.l.b16 %v4142
        %v4175 = vunpack.c.l.b16 %v4143
        %v4176 = vunpack.c.l.b16 %v4144
        %v4177 = vunpack.c.l.b16 %v4145
        %v4178 = vunpack.c.l.b16 %v4146
        %v4179 = vunpack.c.l.b16 %v4147
        %v4180 = vunpack.c.l.b16 %v4148
        %v4181 = vunpack.c.l.b16 %v4149
        %v4182 = vunpack.c.l.b16 %v4150
        %v4183 = vunpack.c.l.b16 %v4151
        %v4184 = vpack.c.b16 %v4169, %v4168
        %v4185 = vpack.c.b16 %v4171, %v4170
        %v4186 = vpack.c.b16 %v4173, %v4172
        %v4187 = vpack.c.b16 %v4175, %v4174
        %v4188 = vpack.c.b16 %v4177, %v4176
        %v4189 = vpack.c.b16 %v4179, %v4178
        %v4190 = vpack.c.b16 %v4181, %v4180
        %v4191 = vpack.c.b16 %v4183, %v4182
        %4200 = vmatprep.subr.bf16.mxu0 0
        %4201 = vmatpush1.bf16.msra.mxu0 %v4191
        %4202 = vmatprep.subr.bf16.mxu0 0
        %4203 = vmatpush1.bf16.msra.mxu0 %v4190
        %4204 = vmatprep.subr.bf16.mxu0 0
        %4205 = vmatpush1.bf16.msra.mxu0 %v4189
        %4206 = vmatprep.subr.bf16.mxu0 0
        %4207 = vmatpush1.bf16.msra.mxu0 %v4188
        %4208 = vmatprep.subr.bf16.mxu0 0
        %4209 = vmatpush1.bf16.msra.mxu0 %v4187
        %4210 = vmatprep.subr.bf16.mxu0 0
        %4211 = vmatpush1.bf16.msra.mxu0 %v4186
        %4212 = vmatprep.subr.bf16.mxu0 0
        %4213 = vmatpush1.bf16.msra.mxu0 %v4185
        %4214 = vmatprep.subr.bf16.mxu0 0
        %4215 = vmatpush1.bf16.msra.mxu0 %v4184
        %4216 = vmatprep.subr.bf16.mxu0 0
        %4217 = vmatpush2.bf16.msra.mxu0 0
        %4218 = vmatprep.subr.bf16.mxu0 0
        %4219 = vmatpush2.bf16.msra.mxu0 0
        %4220 = vmatprep.subr.bf16.mxu0 0
        %4221 = vmatpush2.bf16.msra.mxu0 0
        %4222 = vmatprep.subr.bf16.mxu0 0
        %4223 = vmatpush2.bf16.msra.mxu0 0
        %4224 = vmatprep.subr.bf16.mxu0 0
        %4225 = vmatpush2.bf16.msra.mxu0 0
        %4226 = vmatprep.subr.bf16.mxu0 0
        %4227 = vmatpush2.bf16.msra.mxu0 0
        %4228 = vmatprep.subr.bf16.mxu0 0
        %4229 = vmatpush2.bf16.msra.mxu0 0
        %4230 = vmatprep.subr.bf16.mxu0 0
        %4231 = vmatpush2.bf16.msra.mxu0 0
        %4232 = vmatprep.mubr.bf16.mxu0 0
        %4233 = vmatmul.mubr.bf16.gmra.mxu0 %v4131
        %v4234 = vpop.f32.mrf.mxu0
        %v4235 = vadd.f32 0.0, %v4234
        %v4236 = vpop.f32.mrf.mxu0
        %v4237 = vpop.f32.mrf.mxu0
        %v4238 = vadd.f32 0.0, %v4237
        %v4239 = vpop.f32.mrf.mxu0
        %4240 = vmatprep.mubr.bf16.mxu0 0
        %4241 = vmatmul.mubr.bf16.gmra.mxu0 %v4132
        %v4242 = vpop.f32.mrf.mxu0
        %v4243 = vadd.f32 0.0, %v4242
        %v4244 = vpop.f32.mrf.mxu0
        %v4245 = vpop.f32.mrf.mxu0
        %v4246 = vadd.f32 0.0, %v4245
        %v4247 = vpop.f32.mrf.mxu0
        %4248 = vmatprep.mubr.bf16.mxu0 0
        %4249 = vmatmul.mubr.bf16.gmra.mxu0 %v4133
        %v4250 = vpop.f32.mrf.mxu0
        %v4251 = vadd.f32 0.0, %v4250
        %v4252 = vpop.f32.mrf.mxu0
        %v4253 = vpop.f32.mrf.mxu0
        %v4254 = vadd.f32 0.0, %v4253
        %v4255 = vpop.f32.mrf.mxu0
        %4256 = vmatprep.mubr.bf16.mxu0 0
        %4257 = vmatmul.mubr.bf16.gmra.mxu0 %v4134
        %v4258 = vpop.f32.mrf.mxu0
        %v4259 = vadd.f32 0.0, %v4258
        %v4260 = vpop.f32.mrf.mxu0
        %v4261 = vpop.f32.mrf.mxu0
        %v4262 = vpop.f32.mrf.mxu0
        %4263 = vdwg.mxu0
        %v4264 = vadd.f32 %v4116, %v4235
        %v4265 = vadd.f32 %v4117, %v4238
        %v4266 = vadd.f32 %v4118, %v4243
        %v4267 = vadd.f32 %v4119, %v4246
        %v4268 = vadd.f32 %v4120, %v4251
        %v4269 = vadd.f32 %v4121, %v4254
        %v4270 = vadd.f32 %v4122, %v4259
        %s4271 = scalar_lea.vmem [#allocation2], 32
        %v4272 = vld [vmem:[%s4271] sm:$0xff]
        %v4273 = vld [vmem:[%s4271 + $0x10] sm:$0xff]
        %v4274 = vld [vmem:[%s4271 + $0x20] sm:$0xff]
        %v4275 = vld [vmem:[%s4271 + $0x30] sm:$0xff]
        %v4276 = vld [vmem:[%s4271 + $0x40] sm:$0xff]
        %v4277 = vld [vmem:[%s4271 + $0x50] sm:$0xff]
        %v4278 = vld [vmem:[%s4271 + $0x60] sm:$0xff]
        %v4279 = vld [vmem:[%s4271 + $0x70] sm:$0xff]
        %v4280 = vpack.c.bf16 %v4273, %v4272
        %v4281 = vpack.c.bf16 %v4275, %v4274
        %v4282 = vpack.c.bf16 %v4277, %v4276
        %v4283 = vpack.c.bf16 %v4279, %v4278
        %s4284 = scalar_lea.vmem %s2, 1280
        %v4285 = vld [vmem:[%s4284] sm:$0xf]
        %v4286 = vld [vmem:[%s4284 + $0x4] sm:$0xf]
        %v4287 = vld [vmem:[%s4284 + $0x8] sm:$0xf]
        %v4288 = vld [vmem:[%s4284 + $0xc] sm:$0xf]
        %v4289 = vld [vmem:[%s4284 + $0x10] sm:$0xf]
        %v4290 = vld [vmem:[%s4284 + $0x14] sm:$0xf]
        %v4291 = vld [vmem:[%s4284 + $0x18] sm:$0xf]
        %v4292 = vld [vmem:[%s4284 + $0x1c] sm:$0xf]
        %v4293 = vld [vmem:[%s4284 + $0x20] sm:$0xf]
        %v4294 = vld [vmem:[%s4284 + $0x24] sm:$0xf]
        %v4295 = vld [vmem:[%s4284 + $0x28] sm:$0xf]
        %v4296 = vld [vmem:[%s4284 + $0x2c] sm:$0xf]
        %v4297 = vld [vmem:[%s4284 + $0x30] sm:$0xf]
        %v4298 = vld [vmem:[%s4284 + $0x34] sm:$0xf]
        %v4299 = vld [vmem:[%s4284 + $0x38] sm:$0xf]
        %v4300 = vld [vmem:[%s4284 + $0x3c] sm:$0xf]
        %v4317 = vunpack.c.l.b16 %v4285
        %v4318 = vunpack.c.l.b16 %v4286
        %v4319 = vunpack.c.l.b16 %v4287
        %v4320 = vunpack.c.l.b16 %v4288
        %v4321 = vunpack.c.l.b16 %v4289
        %v4322 = vunpack.c.l.b16 %v4290
        %v4323 = vunpack.c.l.b16 %v4291
        %v4324 = vunpack.c.l.b16 %v4292
        %v4325 = vunpack.c.l.b16 %v4293
        %v4326 = vunpack.c.l.b16 %v4294
        %v4327 = vunpack.c.l.b16 %v4295
        %v4328 = vunpack.c.l.b16 %v4296
        %v4329 = vunpack.c.l.b16 %v4297
        %v4330 = vunpack.c.l.b16 %v4298
        %v4331 = vunpack.c.l.b16 %v4299
        %v4332 = vunpack.c.l.b16 %v4300
        %v4333 = vpack.c.b16 %v4318, %v4317
        %v4334 = vpack.c.b16 %v4320, %v4319
        %v4335 = vpack.c.b16 %v4322, %v4321
        %v4336 = vpack.c.b16 %v4324, %v4323
        %v4337 = vpack.c.b16 %v4326, %v4325
        %v4338 = vpack.c.b16 %v4328, %v4327
        %v4339 = vpack.c.b16 %v4330, %v4329
        %v4340 = vpack.c.b16 %v4332, %v4331
        %4349 = vmatprep.subr.bf16.mxu0 0
        %4350 = vmatpush1.bf16.msra.mxu0 %v4340
        %4351 = vmatprep.subr.bf16.mxu0 0
        %4352 = vmatpush1.bf16.msra.mxu0 %v4339
        %4353 = vmatprep.subr.bf16.mxu0 0
        %4354 = vmatpush1.bf16.msra.mxu0 %v4338
        %4355 = vmatprep.subr.bf16.mxu0 0
        %4356 = vmatpush1.bf16.msra.mxu0 %v4337
        %4357 = vmatprep.subr.bf16.mxu0 0
        %4358 = vmatpush1.bf16.msra.mxu0 %v4336
        %4359 = vmatprep.subr.bf16.mxu0 0
        %4360 = vmatpush1.bf16.msra.mxu0 %v4335
        %4361 = vmatprep.subr.bf16.mxu0 0
        %4362 = vmatpush1.bf16.msra.mxu0 %v4334
        %4363 = vmatprep.subr.bf16.mxu0 0
        %4364 = vmatpush1.bf16.msra.mxu0 %v4333
        %4365 = vmatprep.subr.bf16.mxu0 0
        %4366 = vmatpush2.bf16.msra.mxu0 0
        %4367 = vmatprep.subr.bf16.mxu0 0
        %4368 = vmatpush2.bf16.msra.mxu0 0
        %4369 = vmatprep.subr.bf16.mxu0 0
        %4370 = vmatpush2.bf16.msra.mxu0 0
        %4371 = vmatprep.subr.bf16.mxu0 0
        %4372 = vmatpush2.bf16.msra.mxu0 0
        %4373 = vmatprep.subr.bf16.mxu0 0
        %4374 = vmatpush2.bf16.msra.mxu0 0
        %4375 = vmatprep.subr.bf16.mxu0 0
        %4376 = vmatpush2.bf16.msra.mxu0 0
        %4377 = vmatprep.subr.bf16.mxu0 0
        %4378 = vmatpush2.bf16.msra.mxu0 0
        %4379 = vmatprep.subr.bf16.mxu0 0
        %4380 = vmatpush2.bf16.msra.mxu0 0
        %4381 = vmatprep.mubr.bf16.mxu0 0
        %4382 = vmatmul.mubr.bf16.gmra.mxu0 %v4280
        %v4383 = vpop.f32.mrf.mxu0
        %v4384 = vadd.f32 0.0, %v4383
        %v4385 = vpop.f32.mrf.mxu0
        %v4386 = vpop.f32.mrf.mxu0
        %v4387 = vadd.f32 0.0, %v4386
        %v4388 = vpop.f32.mrf.mxu0
        %4389 = vmatprep.mubr.bf16.mxu0 0
        %4390 = vmatmul.mubr.bf16.gmra.mxu0 %v4281
        %v4391 = vpop.f32.mrf.mxu0
        %v4392 = vadd.f32 0.0, %v4391
        %v4393 = vpop.f32.mrf.mxu0
        %v4394 = vpop.f32.mrf.mxu0
        %v4395 = vadd.f32 0.0, %v4394
        %v4396 = vpop.f32.mrf.mxu0
        %4397 = vmatprep.mubr.bf16.mxu0 0
        %4398 = vmatmul.mubr.bf16.gmra.mxu0 %v4282
        %v4399 = vpop.f32.mrf.mxu0
        %v4400 = vadd.f32 0.0, %v4399
        %v4401 = vpop.f32.mrf.mxu0
        %v4402 = vpop.f32.mrf.mxu0
        %v4403 = vadd.f32 0.0, %v4402
        %v4404 = vpop.f32.mrf.mxu0
        %4405 = vmatprep.mubr.bf16.mxu0 0
        %4406 = vmatmul.mubr.bf16.gmra.mxu0 %v4283
        %v4407 = vpop.f32.mrf.mxu0
        %v4408 = vadd.f32 0.0, %v4407
        %v4409 = vpop.f32.mrf.mxu0
        %v4410 = vpop.f32.mrf.mxu0
        %v4411 = vpop.f32.mrf.mxu0
        %4412 = vdwg.mxu0
        %v4413 = vadd.f32 %v4264, %v4384
        %v4414 = vadd.f32 %v4265, %v4387
        %v4415 = vadd.f32 %v4266, %v4392
        %v4416 = vadd.f32 %v4267, %v4395
        %v4417 = vadd.f32 %v4268, %v4400
        %v4418 = vadd.f32 %v4269, %v4403
        %v4419 = vadd.f32 %v4270, %v4408
        %s4420 = scalar_lea.vmem [#allocation2], 192
        %v4421 = vld [vmem:[%s4420] sm:$0xff]
        %v4422 = vld [vmem:[%s4420 + $0x10] sm:$0xff]
        %v4423 = vld [vmem:[%s4420 + $0x20] sm:$0xff]
        %v4424 = vld [vmem:[%s4420 + $0x30] sm:$0xff]
        %v4425 = vld [vmem:[%s4420 + $0x40] sm:$0xff]
        %v4426 = vld [vmem:[%s4420 + $0x50] sm:$0xff]
        %v4427 = vld [vmem:[%s4420 + $0x60] sm:$0xff]
        %v4428 = vld [vmem:[%s4420 + $0x70] sm:$0xff]
        %v4429 = vpack.c.bf16 %v4422, %v4421
        %v4430 = vpack.c.bf16 %v4424, %v4423
        %v4431 = vpack.c.bf16 %v4426, %v4425
        %v4432 = vpack.c.bf16 %v4428, %v4427
        %s4433 = scalar_lea.vmem %s2, 1344
        %v4434 = vld [vmem:[%s4433] sm:$0xf]
        %v4435 = vld [vmem:[%s4433 + $0x4] sm:$0xf]
        %v4436 = vld [vmem:[%s4433 + $0x8] sm:$0xf]
        %v4437 = vld [vmem:[%s4433 + $0xc] sm:$0xf]
        %v4438 = vld [vmem:[%s4433 + $0x10] sm:$0xf]
        %v4439 = vld [vmem:[%s4433 + $0x14] sm:$0xf]
        %v4440 = vld [vmem:[%s4433 + $0x18] sm:$0xf]
        %v4441 = vld [vmem:[%s4433 + $0x1c] sm:$0xf]
        %v4442 = vld [vmem:[%s4433 + $0x20] sm:$0xf]
        %v4443 = vld [vmem:[%s4433 + $0x24] sm:$0xf]
        %v4444 = vld [vmem:[%s4433 + $0x28] sm:$0xf]
        %v4445 = vld [vmem:[%s4433 + $0x2c] sm:$0xf]
        %v4446 = vld [vmem:[%s4433 + $0x30] sm:$0xf]
        %v4447 = vld [vmem:[%s4433 + $0x34] sm:$0xf]
        %v4448 = vld [vmem:[%s4433 + $0x38] sm:$0xf]
        %v4449 = vld [vmem:[%s4433 + $0x3c] sm:$0xf]
        %v4466 = vunpack.c.l.b16 %v4434
        %v4467 = vunpack.c.l.b16 %v4435
        %v4468 = vunpack.c.l.b16 %v4436
        %v4469 = vunpack.c.l.b16 %v4437
        %v4470 = vunpack.c.l.b16 %v4438
        %v4471 = vunpack.c.l.b16 %v4439
        %v4472 = vunpack.c.l.b16 %v4440
        %v4473 = vunpack.c.l.b16 %v4441
        %v4474 = vunpack.c.l.b16 %v4442
        %v4475 = vunpack.c.l.b16 %v4443
        %v4476 = vunpack.c.l.b16 %v4444
        %v4477 = vunpack.c.l.b16 %v4445
        %v4478 = vunpack.c.l.b16 %v4446
        %v4479 = vunpack.c.l.b16 %v4447
        %v4480 = vunpack.c.l.b16 %v4448
        %v4481 = vunpack.c.l.b16 %v4449
        %v4482 = vpack.c.b16 %v4467, %v4466
        %v4483 = vpack.c.b16 %v4469, %v4468
        %v4484 = vpack.c.b16 %v4471, %v4470
        %v4485 = vpack.c.b16 %v4473, %v4472
        %v4486 = vpack.c.b16 %v4475, %v4474
        %v4487 = vpack.c.b16 %v4477, %v4476
        %v4488 = vpack.c.b16 %v4479, %v4478
        %v4489 = vpack.c.b16 %v4481, %v4480
        %4498 = vmatprep.subr.bf16.mxu0 0
        %4499 = vmatpush1.bf16.msra.mxu0 %v4489
        %4500 = vmatprep.subr.bf16.mxu0 0
        %4501 = vmatpush1.bf16.msra.mxu0 %v4488
        %4502 = vmatprep.subr.bf16.mxu0 0
        %4503 = vmatpush1.bf16.msra.mxu0 %v4487
        %4504 = vmatprep.subr.bf16.mxu0 0
        %4505 = vmatpush1.bf16.msra.mxu0 %v4486
        %4506 = vmatprep.subr.bf16.mxu0 0
        %4507 = vmatpush1.bf16.msra.mxu0 %v4485
        %4508 = vmatprep.subr.bf16.mxu0 0
        %4509 = vmatpush1.bf16.msra.mxu0 %v4484
        %4510 = vmatprep.subr.bf16.mxu0 0
        %4511 = vmatpush1.bf16.msra.mxu0 %v4483
        %4512 = vmatprep.subr.bf16.mxu0 0
        %4513 = vmatpush1.bf16.msra.mxu0 %v4482
        %4514 = vmatprep.subr.bf16.mxu0 0
        %4515 = vmatpush2.bf16.msra.mxu0 0
        %4516 = vmatprep.subr.bf16.mxu0 0
        %4517 = vmatpush2.bf16.msra.mxu0 0
        %4518 = vmatprep.subr.bf16.mxu0 0
        %4519 = vmatpush2.bf16.msra.mxu0 0
        %4520 = vmatprep.subr.bf16.mxu0 0
        %4521 = vmatpush2.bf16.msra.mxu0 0
        %4522 = vmatprep.subr.bf16.mxu0 0
        %4523 = vmatpush2.bf16.msra.mxu0 0
        %4524 = vmatprep.subr.bf16.mxu0 0
        %4525 = vmatpush2.bf16.msra.mxu0 0
        %4526 = vmatprep.subr.bf16.mxu0 0
        %4527 = vmatpush2.bf16.msra.mxu0 0
        %4528 = vmatprep.subr.bf16.mxu0 0
        %4529 = vmatpush2.bf16.msra.mxu0 0
        %4530 = vmatprep.mubr.bf16.mxu0 0
        %4531 = vmatmul.mubr.bf16.gmra.mxu0 %v4429
        %v4532 = vpop.f32.mrf.mxu0
        %v4533 = vadd.f32 0.0, %v4532
        %v4534 = vpop.f32.mrf.mxu0
        %v4535 = vpop.f32.mrf.mxu0
        %v4536 = vadd.f32 0.0, %v4535
        %v4537 = vpop.f32.mrf.mxu0
        %4538 = vmatprep.mubr.bf16.mxu0 0
        %4539 = vmatmul.mubr.bf16.gmra.mxu0 %v4430
        %v4540 = vpop.f32.mrf.mxu0
        %v4541 = vadd.f32 0.0, %v4540
        %v4542 = vpop.f32.mrf.mxu0
        %v4543 = vpop.f32.mrf.mxu0
        %v4544 = vadd.f32 0.0, %v4543
        %v4545 = vpop.f32.mrf.mxu0
        %4546 = vmatprep.mubr.bf16.mxu0 0
        %4547 = vmatmul.mubr.bf16.gmra.mxu0 %v4431
        %v4548 = vpop.f32.mrf.mxu0
        %v4549 = vadd.f32 0.0, %v4548
        %v4550 = vpop.f32.mrf.mxu0
        %v4551 = vpop.f32.mrf.mxu0
        %v4552 = vadd.f32 0.0, %v4551
        %v4553 = vpop.f32.mrf.mxu0
        %4554 = vmatprep.mubr.bf16.mxu0 0
        %4555 = vmatmul.mubr.bf16.gmra.mxu0 %v4432
        %v4556 = vpop.f32.mrf.mxu0
        %v4557 = vadd.f32 0.0, %v4556
        %v4558 = vpop.f32.mrf.mxu0
        %v4559 = vpop.f32.mrf.mxu0
        %v4560 = vpop.f32.mrf.mxu0
        %4561 = vdwg.mxu0
        %v4562 = vadd.f32 %v4413, %v4533
        %v4563 = vadd.f32 %v4414, %v4536
        %v4564 = vadd.f32 %v4415, %v4541
        %v4565 = vadd.f32 %v4416, %v4544
        %v4566 = vadd.f32 %v4417, %v4549
        %v4567 = vadd.f32 %v4418, %v4552
        %v4568 = vadd.f32 %v4419, %v4557
        %v4569 = vld [vmem:[%s4271 + $0x1] sm:$0xff]
        %v4570 = vld [vmem:[%s4271 + $0x11] sm:$0xff]
        %v4571 = vld [vmem:[%s4271 + $0x21] sm:$0xff]
        %v4572 = vld [vmem:[%s4271 + $0x31] sm:$0xff]
        %v4573 = vld [vmem:[%s4271 + $0x41] sm:$0xff]
        %v4574 = vld [vmem:[%s4271 + $0x51] sm:$0xff]
        %v4575 = vld [vmem:[%s4271 + $0x61] sm:$0xff]
        %v4576 = vld [vmem:[%s4271 + $0x71] sm:$0xff]
        %v4577 = vpack.c.bf16 %v4570, %v4569
        %v4578 = vpack.c.bf16 %v4572, %v4571
        %v4579 = vpack.c.bf16 %v4574, %v4573
        %v4580 = vpack.c.bf16 %v4576, %v4575
        %s4581 = scalar_lea.vmem %s2, 1408
        %v4582 = vld [vmem:[%s4581] sm:$0xf]
        %v4583 = vld [vmem:[%s4581 + $0x4] sm:$0xf]
        %v4584 = vld [vmem:[%s4581 + $0x8] sm:$0xf]
        %v4585 = vld [vmem:[%s4581 + $0xc] sm:$0xf]
        %v4586 = vld [vmem:[%s4581 + $0x10] sm:$0xf]
        %v4587 = vld [vmem:[%s4581 + $0x14] sm:$0xf]
        %v4588 = vld [vmem:[%s4581 + $0x18] sm:$0xf]
        %v4589 = vld [vmem:[%s4581 + $0x1c] sm:$0xf]
        %v4590 = vld [vmem:[%s4581 + $0x20] sm:$0xf]
        %v4591 = vld [vmem:[%s4581 + $0x24] sm:$0xf]
        %v4592 = vld [vmem:[%s4581 + $0x28] sm:$0xf]
        %v4593 = vld [vmem:[%s4581 + $0x2c] sm:$0xf]
        %v4594 = vld [vmem:[%s4581 + $0x30] sm:$0xf]
        %v4595 = vld [vmem:[%s4581 + $0x34] sm:$0xf]
        %v4596 = vld [vmem:[%s4581 + $0x38] sm:$0xf]
        %v4597 = vld [vmem:[%s4581 + $0x3c] sm:$0xf]
        %v4614 = vunpack.c.l.b16 %v4582
        %v4615 = vunpack.c.l.b16 %v4583
        %v4616 = vunpack.c.l.b16 %v4584
        %v4617 = vunpack.c.l.b16 %v4585
        %v4618 = vunpack.c.l.b16 %v4586
        %v4619 = vunpack.c.l.b16 %v4587
        %v4620 = vunpack.c.l.b16 %v4588
        %v4621 = vunpack.c.l.b16 %v4589
        %v4622 = vunpack.c.l.b16 %v4590
        %v4623 = vunpack.c.l.b16 %v4591
        %v4624 = vunpack.c.l.b16 %v4592
        %v4625 = vunpack.c.l.b16 %v4593
        %v4626 = vunpack.c.l.b16 %v4594
        %v4627 = vunpack.c.l.b16 %v4595
        %v4628 = vunpack.c.l.b16 %v4596
        %v4629 = vunpack.c.l.b16 %v4597
        %v4630 = vpack.c.b16 %v4615, %v4614
        %v4631 = vpack.c.b16 %v4617, %v4616
        %v4632 = vpack.c.b16 %v4619, %v4618
        %v4633 = vpack.c.b16 %v4621, %v4620
        %v4634 = vpack.c.b16 %v4623, %v4622
        %v4635 = vpack.c.b16 %v4625, %v4624
        %v4636 = vpack.c.b16 %v4627, %v4626
        %v4637 = vpack.c.b16 %v4629, %v4628
        %4646 = vmatprep.subr.bf16.mxu0 0
        %4647 = vmatpush1.bf16.msra.mxu0 %v4637
        %4648 = vmatprep.subr.bf16.mxu0 0
        %4649 = vmatpush1.bf16.msra.mxu0 %v4636
        %4650 = vmatprep.subr.bf16.mxu0 0
        %4651 = vmatpush1.bf16.msra.mxu0 %v4635
        %4652 = vmatprep.subr.bf16.mxu0 0
        %4653 = vmatpush1.bf16.msra.mxu0 %v4634
        %4654 = vmatprep.subr.bf16.mxu0 0
        %4655 = vmatpush1.bf16.msra.mxu0 %v4633
        %4656 = vmatprep.subr.bf16.mxu0 0
        %4657 = vmatpush1.bf16.msra.mxu0 %v4632
        %4658 = vmatprep.subr.bf16.mxu0 0
        %4659 = vmatpush1.bf16.msra.mxu0 %v4631
        %4660 = vmatprep.subr.bf16.mxu0 0
        %4661 = vmatpush1.bf16.msra.mxu0 %v4630
        %4662 = vmatprep.subr.bf16.mxu0 0
        %4663 = vmatpush2.bf16.msra.mxu0 0
        %4664 = vmatprep.subr.bf16.mxu0 0
        %4665 = vmatpush2.bf16.msra.mxu0 0
        %4666 = vmatprep.subr.bf16.mxu0 0
        %4667 = vmatpush2.bf16.msra.mxu0 0
        %4668 = vmatprep.subr.bf16.mxu0 0
        %4669 = vmatpush2.bf16.msra.mxu0 0
        %4670 = vmatprep.subr.bf16.mxu0 0
        %4671 = vmatpush2.bf16.msra.mxu0 0
        %4672 = vmatprep.subr.bf16.mxu0 0
        %4673 = vmatpush2.bf16.msra.mxu0 0
        %4674 = vmatprep.subr.bf16.mxu0 0
        %4675 = vmatpush2.bf16.msra.mxu0 0
        %4676 = vmatprep.subr.bf16.mxu0 0
        %4677 = vmatpush2.bf16.msra.mxu0 0
        %4678 = vmatprep.mubr.bf16.mxu0 0
        %4679 = vmatmul.mubr.bf16.gmra.mxu0 %v4577
        %v4680 = vpop.f32.mrf.mxu0
        %v4681 = vadd.f32 0.0, %v4680
        %v4682 = vpop.f32.mrf.mxu0
        %v4683 = vpop.f32.mrf.mxu0
        %v4684 = vadd.f32 0.0, %v4683
        %v4685 = vpop.f32.mrf.mxu0
        %4686 = vmatprep.mubr.bf16.mxu0 0
        %4687 = vmatmul.mubr.bf16.gmra.mxu0 %v4578
        %v4688 = vpop.f32.mrf.mxu0
        %v4689 = vadd.f32 0.0, %v4688
        %v4690 = vpop.f32.mrf.mxu0
        %v4691 = vpop.f32.mrf.mxu0
        %v4692 = vadd.f32 0.0, %v4691
        %v4693 = vpop.f32.mrf.mxu0
        %4694 = vmatprep.mubr.bf16.mxu0 0
        %4695 = vmatmul.mubr.bf16.gmra.mxu0 %v4579
        %v4696 = vpop.f32.mrf.mxu0
        %v4697 = vadd.f32 0.0, %v4696
        %v4698 = vpop.f32.mrf.mxu0
        %v4699 = vpop.f32.mrf.mxu0
        %v4700 = vadd.f32 0.0, %v4699
        %v4701 = vpop.f32.mrf.mxu0
        %4702 = vmatprep.mubr.bf16.mxu0 0
        %4703 = vmatmul.mubr.bf16.gmra.mxu0 %v4580
        %v4704 = vpop.f32.mrf.mxu0
        %v4705 = vadd.f32 0.0, %v4704
        %v4706 = vpop.f32.mrf.mxu0
        %v4707 = vpop.f32.mrf.mxu0
        %v4708 = vpop.f32.mrf.mxu0
        %4709 = vdwg.mxu0
        %v4710 = vadd.f32 %v4562, %v4681
        %v4711 = vadd.f32 %v4563, %v4684
        %v4712 = vadd.f32 %v4564, %v4689
        %v4713 = vadd.f32 %v4565, %v4692
        %v4714 = vadd.f32 %v4566, %v4697
        %v4715 = vadd.f32 %v4567, %v4700
        %v4716 = vadd.f32 %v4568, %v4705
        %v4717 = vld [vmem:[%s4420 + $0x1] sm:$0xff]
        %v4718 = vld [vmem:[%s4420 + $0x11] sm:$0xff]
        %v4719 = vld [vmem:[%s4420 + $0x21] sm:$0xff]
        %v4720 = vld [vmem:[%s4420 + $0x31] sm:$0xff]
        %v4721 = vld [vmem:[%s4420 + $0x41] sm:$0xff]
        %v4722 = vld [vmem:[%s4420 + $0x51] sm:$0xff]
        %v4723 = vld [vmem:[%s4420 + $0x61] sm:$0xff]
        %v4724 = vld [vmem:[%s4420 + $0x71] sm:$0xff]
        %v4725 = vpack.c.bf16 %v4718, %v4717
        %v4726 = vpack.c.bf16 %v4720, %v4719
        %v4727 = vpack.c.bf16 %v4722, %v4721
        %v4728 = vpack.c.bf16 %v4724, %v4723
        %s4729 = scalar_lea.vmem %s2, 1472
        %v4730 = vld [vmem:[%s4729] sm:$0xf]
        %v4731 = vld [vmem:[%s4729 + $0x4] sm:$0xf]
        %v4732 = vld [vmem:[%s4729 + $0x8] sm:$0xf]
        %v4733 = vld [vmem:[%s4729 + $0xc] sm:$0xf]
        %v4734 = vld [vmem:[%s4729 + $0x10] sm:$0xf]
        %v4735 = vld [vmem:[%s4729 + $0x14] sm:$0xf]
        %v4736 = vld [vmem:[%s4729 + $0x18] sm:$0xf]
        %v4737 = vld [vmem:[%s4729 + $0x1c] sm:$0xf]
        %v4738 = vld [vmem:[%s4729 + $0x20] sm:$0xf]
        %v4739 = vld [vmem:[%s4729 + $0x24] sm:$0xf]
        %v4740 = vld [vmem:[%s4729 + $0x28] sm:$0xf]
        %v4741 = vld [vmem:[%s4729 + $0x2c] sm:$0xf]
        %v4742 = vld [vmem:[%s4729 + $0x30] sm:$0xf]
        %v4743 = vld [vmem:[%s4729 + $0x34] sm:$0xf]
        %v4744 = vld [vmem:[%s4729 + $0x38] sm:$0xf]
        %v4745 = vld [vmem:[%s4729 + $0x3c] sm:$0xf]
        %v4762 = vunpack.c.l.b16 %v4730
        %v4763 = vunpack.c.l.b16 %v4731
        %v4764 = vunpack.c.l.b16 %v4732
        %v4765 = vunpack.c.l.b16 %v4733
        %v4766 = vunpack.c.l.b16 %v4734
        %v4767 = vunpack.c.l.b16 %v4735
        %v4768 = vunpack.c.l.b16 %v4736
        %v4769 = vunpack.c.l.b16 %v4737
        %v4770 = vunpack.c.l.b16 %v4738
        %v4771 = vunpack.c.l.b16 %v4739
        %v4772 = vunpack.c.l.b16 %v4740
        %v4773 = vunpack.c.l.b16 %v4741
        %v4774 = vunpack.c.l.b16 %v4742
        %v4775 = vunpack.c.l.b16 %v4743
        %v4776 = vunpack.c.l.b16 %v4744
        %v4777 = vunpack.c.l.b16 %v4745
        %v4778 = vpack.c.b16 %v4763, %v4762
        %v4779 = vpack.c.b16 %v4765, %v4764
        %v4780 = vpack.c.b16 %v4767, %v4766
        %v4781 = vpack.c.b16 %v4769, %v4768
        %v4782 = vpack.c.b16 %v4771, %v4770
        %v4783 = vpack.c.b16 %v4773, %v4772
        %v4784 = vpack.c.b16 %v4775, %v4774
        %v4785 = vpack.c.b16 %v4777, %v4776
        %4794 = vmatprep.subr.bf16.mxu0 0
        %4795 = vmatpush1.bf16.msra.mxu0 %v4785
        %4796 = vmatprep.subr.bf16.mxu0 0
        %4797 = vmatpush1.bf16.msra.mxu0 %v4784
        %4798 = vmatprep.subr.bf16.mxu0 0
        %4799 = vmatpush1.bf16.msra.mxu0 %v4783
        %4800 = vmatprep.subr.bf16.mxu0 0
        %4801 = vmatpush1.bf16.msra.mxu0 %v4782
        %4802 = vmatprep.subr.bf16.mxu0 0
        %4803 = vmatpush1.bf16.msra.mxu0 %v4781
        %4804 = vmatprep.subr.bf16.mxu0 0
        %4805 = vmatpush1.bf16.msra.mxu0 %v4780
        %4806 = vmatprep.subr.bf16.mxu0 0
        %4807 = vmatpush1.bf16.msra.mxu0 %v4779
        %4808 = vmatprep.subr.bf16.mxu0 0
        %4809 = vmatpush1.bf16.msra.mxu0 %v4778
        %4810 = vmatprep.subr.bf16.mxu0 0
        %4811 = vmatpush2.bf16.msra.mxu0 0
        %4812 = vmatprep.subr.bf16.mxu0 0
        %4813 = vmatpush2.bf16.msra.mxu0 0
        %4814 = vmatprep.subr.bf16.mxu0 0
        %4815 = vmatpush2.bf16.msra.mxu0 0
        %4816 = vmatprep.subr.bf16.mxu0 0
        %4817 = vmatpush2.bf16.msra.mxu0 0
        %4818 = vmatprep.subr.bf16.mxu0 0
        %4819 = vmatpush2.bf16.msra.mxu0 0
        %4820 = vmatprep.subr.bf16.mxu0 0
        %4821 = vmatpush2.bf16.msra.mxu0 0
        %4822 = vmatprep.subr.bf16.mxu0 0
        %4823 = vmatpush2.bf16.msra.mxu0 0
        %4824 = vmatprep.subr.bf16.mxu0 0
        %4825 = vmatpush2.bf16.msra.mxu0 0
        %4826 = vmatprep.mubr.bf16.mxu0 0
        %4827 = vmatmul.mubr.bf16.gmra.mxu0 %v4725
        %v4828 = vpop.f32.mrf.mxu0
        %v4829 = vadd.f32 0.0, %v4828
        %v4830 = vpop.f32.mrf.mxu0
        %v4831 = vpop.f32.mrf.mxu0
        %v4832 = vadd.f32 0.0, %v4831
        %v4833 = vpop.f32.mrf.mxu0
        %4834 = vmatprep.mubr.bf16.mxu0 0
        %4835 = vmatmul.mubr.bf16.gmra.mxu0 %v4726
        %v4836 = vpop.f32.mrf.mxu0
        %v4837 = vadd.f32 0.0, %v4836
        %v4838 = vpop.f32.mrf.mxu0
        %v4839 = vpop.f32.mrf.mxu0
        %v4840 = vadd.f32 0.0, %v4839
        %v4841 = vpop.f32.mrf.mxu0
        %4842 = vmatprep.mubr.bf16.mxu0 0
        %4843 = vmatmul.mubr.bf16.gmra.mxu0 %v4727
        %v4844 = vpop.f32.mrf.mxu0
        %v4845 = vadd.f32 0.0, %v4844
        %v4846 = vpop.f32.mrf.mxu0
        %v4847 = vpop.f32.mrf.mxu0
        %v4848 = vadd.f32 0.0, %v4847
        %v4849 = vpop.f32.mrf.mxu0
        %4850 = vmatprep.mubr.bf16.mxu0 0
        %4851 = vmatmul.mubr.bf16.gmra.mxu0 %v4728
        %v4852 = vpop.f32.mrf.mxu0
        %v4853 = vadd.f32 0.0, %v4852
        %v4854 = vpop.f32.mrf.mxu0
        %v4855 = vpop.f32.mrf.mxu0
        %v4856 = vpop.f32.mrf.mxu0
        %4857 = vdwg.mxu0
        %v4858 = vadd.f32 %v4710, %v4829
        %v4859 = vadd.f32 %v4711, %v4832
        %v4860 = vadd.f32 %v4712, %v4837
        %v4861 = vadd.f32 %v4713, %v4840
        %v4862 = vadd.f32 %v4714, %v4845
        %v4863 = vadd.f32 %v4715, %v4848
        %v4864 = vadd.f32 %v4716, %v4853
        %v4865 = vld [vmem:[%s4271 + $0x2] sm:$0xff]
        %v4866 = vld [vmem:[%s4271 + $0x12] sm:$0xff]
        %v4867 = vld [vmem:[%s4271 + $0x22] sm:$0xff]
        %v4868 = vld [vmem:[%s4271 + $0x32] sm:$0xff]
        %v4869 = vld [vmem:[%s4271 + $0x42] sm:$0xff]
        %v4870 = vld [vmem:[%s4271 + $0x52] sm:$0xff]
        %v4871 = vld [vmem:[%s4271 + $0x62] sm:$0xff]
        %v4872 = vld [vmem:[%s4271 + $0x72] sm:$0xff]
        %v4873 = vpack.c.bf16 %v4866, %v4865
        %v4874 = vpack.c.bf16 %v4868, %v4867
        %v4875 = vpack.c.bf16 %v4870, %v4869
        %v4876 = vpack.c.bf16 %v4872, %v4871
        %s4877 = scalar_lea.vmem %s2, 1536
        %v4878 = vld [vmem:[%s4877] sm:$0xf]
        %v4879 = vld [vmem:[%s4877 + $0x4] sm:$0xf]
        %v4880 = vld [vmem:[%s4877 + $0x8] sm:$0xf]
        %v4881 = vld [vmem:[%s4877 + $0xc] sm:$0xf]
        %v4882 = vld [vmem:[%s4877 + $0x10] sm:$0xf]
        %v4883 = vld [vmem:[%s4877 + $0x14] sm:$0xf]
        %v4884 = vld [vmem:[%s4877 + $0x18] sm:$0xf]
        %v4885 = vld [vmem:[%s4877 + $0x1c] sm:$0xf]
        %v4886 = vld [vmem:[%s4877 + $0x20] sm:$0xf]
        %v4887 = vld [vmem:[%s4877 + $0x24] sm:$0xf]
        %v4888 = vld [vmem:[%s4877 + $0x28] sm:$0xf]
        %v4889 = vld [vmem:[%s4877 + $0x2c] sm:$0xf]
        %v4890 = vld [vmem:[%s4877 + $0x30] sm:$0xf]
        %v4891 = vld [vmem:[%s4877 + $0x34] sm:$0xf]
        %v4892 = vld [vmem:[%s4877 + $0x38] sm:$0xf]
        %v4893 = vld [vmem:[%s4877 + $0x3c] sm:$0xf]
        %v4910 = vunpack.c.l.b16 %v4878
        %v4911 = vunpack.c.l.b16 %v4879
        %v4912 = vunpack.c.l.b16 %v4880
        %v4913 = vunpack.c.l.b16 %v4881
        %v4914 = vunpack.c.l.b16 %v4882
        %v4915 = vunpack.c.l.b16 %v4883
        %v4916 = vunpack.c.l.b16 %v4884
        %v4917 = vunpack.c.l.b16 %v4885
        %v4918 = vunpack.c.l.b16 %v4886
        %v4919 = vunpack.c.l.b16 %v4887
        %v4920 = vunpack.c.l.b16 %v4888
        %v4921 = vunpack.c.l.b16 %v4889
        %v4922 = vunpack.c.l.b16 %v4890
        %v4923 = vunpack.c.l.b16 %v4891
        %v4924 = vunpack.c.l.b16 %v4892
        %v4925 = vunpack.c.l.b16 %v4893
        %v4926 = vpack.c.b16 %v4911, %v4910
        %v4927 = vpack.c.b16 %v4913, %v4912
        %v4928 = vpack.c.b16 %v4915, %v4914
        %v4929 = vpack.c.b16 %v4917, %v4916
        %v4930 = vpack.c.b16 %v4919, %v4918
        %v4931 = vpack.c.b16 %v4921, %v4920
        %v4932 = vpack.c.b16 %v4923, %v4922
        %v4933 = vpack.c.b16 %v4925, %v4924
        %4942 = vmatprep.subr.bf16.mxu0 0
        %4943 = vmatpush1.bf16.msra.mxu0 %v4933
        %4944 = vmatprep.subr.bf16.mxu0 0
        %4945 = vmatpush1.bf16.msra.mxu0 %v4932
        %4946 = vmatprep.subr.bf16.mxu0 0
        %4947 = vmatpush1.bf16.msra.mxu0 %v4931
        %4948 = vmatprep.subr.bf16.mxu0 0
        %4949 = vmatpush1.bf16.msra.mxu0 %v4930
        %4950 = vmatprep.subr.bf16.mxu0 0
        %4951 = vmatpush1.bf16.msra.mxu0 %v4929
        %4952 = vmatprep.subr.bf16.mxu0 0
        %4953 = vmatpush1.bf16.msra.mxu0 %v4928
        %4954 = vmatprep.subr.bf16.mxu0 0
        %4955 = vmatpush1.bf16.msra.mxu0 %v4927
        %4956 = vmatprep.subr.bf16.mxu0 0
        %4957 = vmatpush1.bf16.msra.mxu0 %v4926
        %4958 = vmatprep.subr.bf16.mxu0 0
        %4959 = vmatpush2.bf16.msra.mxu0 0
        %4960 = vmatprep.subr.bf16.mxu0 0
        %4961 = vmatpush2.bf16.msra.mxu0 0
        %4962 = vmatprep.subr.bf16.mxu0 0
        %4963 = vmatpush2.bf16.msra.mxu0 0
        %4964 = vmatprep.subr.bf16.mxu0 0
        %4965 = vmatpush2.bf16.msra.mxu0 0
        %4966 = vmatprep.subr.bf16.mxu0 0
        %4967 = vmatpush2.bf16.msra.mxu0 0
        %4968 = vmatprep.subr.bf16.mxu0 0
        %4969 = vmatpush2.bf16.msra.mxu0 0
        %4970 = vmatprep.subr.bf16.mxu0 0
        %4971 = vmatpush2.bf16.msra.mxu0 0
        %4972 = vmatprep.subr.bf16.mxu0 0
        %4973 = vmatpush2.bf16.msra.mxu0 0
        %4974 = vmatprep.mubr.bf16.mxu0 0
        %4975 = vmatmul.mubr.bf16.gmra.mxu0 %v4873
        %v4976 = vpop.f32.mrf.mxu0
        %v4977 = vadd.f32 0.0, %v4976
        %v4978 = vpop.f32.mrf.mxu0
        %v4979 = vpop.f32.mrf.mxu0
        %v4980 = vadd.f32 0.0, %v4979
        %v4981 = vpop.f32.mrf.mxu0
        %4982 = vmatprep.mubr.bf16.mxu0 0
        %4983 = vmatmul.mubr.bf16.gmra.mxu0 %v4874
        %v4984 = vpop.f32.mrf.mxu0
        %v4985 = vadd.f32 0.0, %v4984
        %v4986 = vpop.f32.mrf.mxu0
        %v4987 = vpop.f32.mrf.mxu0
        %v4988 = vadd.f32 0.0, %v4987
        %v4989 = vpop.f32.mrf.mxu0
        %4990 = vmatprep.mubr.bf16.mxu0 0
        %4991 = vmatmul.mubr.bf16.gmra.mxu0 %v4875
        %v4992 = vpop.f32.mrf.mxu0
        %v4993 = vadd.f32 0.0, %v4992
        %v4994 = vpop.f32.mrf.mxu0
        %v4995 = vpop.f32.mrf.mxu0
        %v4996 = vadd.f32 0.0, %v4995
        %v4997 = vpop.f32.mrf.mxu0
        %4998 = vmatprep.mubr.bf16.mxu0 0
        %4999 = vmatmul.mubr.bf16.gmra.mxu0 %v4876
        %v5000 = vpop.f32.mrf.mxu0
        %v5001 = vadd.f32 0.0, %v5000
        %v5002 = vpop.f32.mrf.mxu0
        %v5003 = vpop.f32.mrf.mxu0
        %v5004 = vpop.f32.mrf.mxu0
        %5005 = vdwg.mxu0
        %v5006 = vadd.f32 %v4858, %v4977
        %v5007 = vadd.f32 %v4859, %v4980
        %v5008 = vadd.f32 %v4860, %v4985
        %v5009 = vadd.f32 %v4861, %v4988
        %v5010 = vadd.f32 %v4862, %v4993
        %v5011 = vadd.f32 %v4863, %v4996
        %v5012 = vadd.f32 %v4864, %v5001
        %v5013 = vld [vmem:[%s6] sm:$0x1]
        %v5015 = vlaneseq
        %v5016 = vshrl.u32 %v5015, 7
        %v5017 = vsub.s32 0, %v5016
        %v5018 = vrot.slane %v5013, %v5017
        %v5020 = vadd.f32 %v5006, %v5018
        %v5021 = vadd.f32 %v5007, %v5018
        %v5022 = vadd.f32 %v5008, %v5018
        %v5023 = vadd.f32 %v5009, %v5018
        %v5024 = vadd.f32 %v5010, %v5018
        %v5025 = vadd.f32 %v5011, %v5018
        %v5026 = vadd.f32 %v5012, %v5018
        %v5027 = vmax.f32 %v5020, 0.0
        %v5028 = vmax.f32 %v5021, 0.0
        %v5029 = vmax.f32 %v5022, 0.0
        %v5030 = vmax.f32 %v5023, 0.0
        %v5031 = vmax.f32 %v5024, 0.0
        %v5032 = vmax.f32 %v5025, 0.0
        %v5033 = vmax.f32 %v5026, 0.0
        %s5034 = scalar_lea.vmem [#allocation3], 16
        %5035 = vst [vmem:[%s5034 + $0x1] sm:$0x7f] %v5027
        %5036 = vst [vmem:[%s5034 + $0x11] sm:$0x7f] %v5028
        %5037 = vst [vmem:[%s5034 + $0x21] sm:$0x7f] %v5029
        %5038 = vst [vmem:[%s5034 + $0x31] sm:$0x7f] %v5030
        %5039 = vst [vmem:[%s5034 + $0x41] sm:$0x7f] %v5031
        %5040 = vst [vmem:[%s5034 + $0x51] sm:$0x7f] %v5032
        %5041 = vst [vmem:[%s5034 + $0x61] sm:$0x7f] %v5033
        %v5042 = vld [vmem:[#allocation3] sm:$0xff]
        %v5043 = vld [vmem:[#allocation3 + $0x10] sm:$0xff]
        %v5044 = vld [vmem:[#allocation3 + $0x20] sm:$0xff]
        %v5045 = vld [vmem:[#allocation3 + $0x30] sm:$0xff]
        %v5046 = vld [vmem:[#allocation3 + $0x40] sm:$0xff]
        %v5047 = vld [vmem:[#allocation3 + $0x50] sm:$0xff]
        %v5048 = vld [vmem:[#allocation3 + $0x60] sm:$0xff]
        %v5049 = vld [vmem:[#allocation3 + $0x70] sm:$0xff]
        %v5050 = vpack.c.bf16 %v5043, %v5042
        %v5051 = vpack.c.bf16 %v5045, %v5044
        %v5052 = vpack.c.bf16 %v5047, %v5046
        %v5053 = vpack.c.bf16 %v5049, %v5048
        %v5054 = vld [vmem:[%s3] sm:$0xf]
        %v5055 = vld [vmem:[%s3 + $0x4] sm:$0xf]
        %v5056 = vld [vmem:[%s3 + $0x8] sm:$0xf]
        %v5057 = vld [vmem:[%s3 + $0xc] sm:$0xf]
        %v5058 = vld [vmem:[%s3 + $0x10] sm:$0xf]
        %v5059 = vld [vmem:[%s3 + $0x14] sm:$0xf]
        %v5060 = vld [vmem:[%s3 + $0x18] sm:$0xf]
        %v5061 = vld [vmem:[%s3 + $0x1c] sm:$0xf]
        %v5062 = vld [vmem:[%s3 + $0x20] sm:$0xf]
        %v5063 = vld [vmem:[%s3 + $0x24] sm:$0xf]
        %v5064 = vld [vmem:[%s3 + $0x28] sm:$0xf]
        %v5065 = vld [vmem:[%s3 + $0x2c] sm:$0xf]
        %v5066 = vld [vmem:[%s3 + $0x30] sm:$0xf]
        %v5067 = vld [vmem:[%s3 + $0x34] sm:$0xf]
        %v5068 = vld [vmem:[%s3 + $0x38] sm:$0xf]
        %v5069 = vld [vmem:[%s3 + $0x3c] sm:$0xf]
        %v5070 = vld [vmem:[#allocation3 + $0x1] sm:$0xff]
        %v5071 = vld [vmem:[#allocation3 + $0x11] sm:$0xff]
        %v5072 = vld [vmem:[#allocation3 + $0x21] sm:$0xff]
        %v5073 = vld [vmem:[#allocation3 + $0x31] sm:$0xff]
        %v5074 = vld [vmem:[#allocation3 + $0x41] sm:$0xff]
        %v5075 = vld [vmem:[#allocation3 + $0x51] sm:$0xff]
        %v5076 = vld [vmem:[#allocation3 + $0x61] sm:$0xff]
        %v5077 = vld [vmem:[#allocation3 + $0x71] sm:$0xff]
        %v5078 = vpack.c.bf16 %v5071, %v5070
        %v5079 = vpack.c.bf16 %v5073, %v5072
        %v5080 = vpack.c.bf16 %v5075, %v5074
        %v5081 = vpack.c.bf16 %v5077, %v5076
        %s5082 = scalar_lea.vmem %s3, 64
        %v5083 = vld [vmem:[%s5082] sm:$0xf]
        %v5084 = vld [vmem:[%s5082 + $0x4] sm:$0xf]
        %v5085 = vld [vmem:[%s5082 + $0x8] sm:$0xf]
        %v5086 = vld [vmem:[%s5082 + $0xc] sm:$0xf]
        %v5087 = vld [vmem:[%s5082 + $0x10] sm:$0xf]
        %v5088 = vld [vmem:[%s5082 + $0x14] sm:$0xf]
        %v5089 = vld [vmem:[%s5082 + $0x18] sm:$0xf]
        %v5090 = vld [vmem:[%s5082 + $0x1c] sm:$0xf]
        %v5091 = vld [vmem:[%s5082 + $0x20] sm:$0xf]
        %v5092 = vld [vmem:[%s5082 + $0x24] sm:$0xf]
        %v5093 = vld [vmem:[%s5082 + $0x28] sm:$0xf]
        %v5094 = vld [vmem:[%s5082 + $0x2c] sm:$0xf]
        %v5095 = vld [vmem:[%s5082 + $0x30] sm:$0xf]
        %v5096 = vld [vmem:[%s5082 + $0x34] sm:$0xf]
        %v5097 = vld [vmem:[%s5082 + $0x38] sm:$0xf]
        %v5098 = vld [vmem:[%s5082 + $0x3c] sm:$0xf]
        %v5115 = vunpack.c.l.b16 %v5083
        %v5116 = vunpack.c.l.b16 %v5084
        %v5117 = vunpack.c.l.b16 %v5085
        %v5118 = vunpack.c.l.b16 %v5086
        %v5119 = vunpack.c.l.b16 %v5087
        %v5120 = vunpack.c.l.b16 %v5088
        %v5121 = vunpack.c.l.b16 %v5089
        %v5122 = vunpack.c.l.b16 %v5090
        %v5123 = vunpack.c.l.b16 %v5091
        %v5124 = vunpack.c.l.b16 %v5092
        %v5125 = vunpack.c.l.b16 %v5093
        %v5126 = vunpack.c.l.b16 %v5094
        %v5127 = vunpack.c.l.b16 %v5095
        %v5128 = vunpack.c.l.b16 %v5096
        %v5129 = vunpack.c.l.b16 %v5097
        %v5130 = vunpack.c.l.b16 %v5098
        %v5131 = vpack.c.b16 %v5116, %v5115
        %v5132 = vpack.c.b16 %v5118, %v5117
        %v5133 = vpack.c.b16 %v5120, %v5119
        %v5134 = vpack.c.b16 %v5122, %v5121
        %v5135 = vpack.c.b16 %v5124, %v5123
        %v5136 = vpack.c.b16 %v5126, %v5125
        %v5137 = vpack.c.b16 %v5128, %v5127
        %v5138 = vpack.c.b16 %v5130, %v5129
        %5147 = vmatprep.subr.bf16.mxu0 0
        %5148 = vmatpush1.bf16.msra.mxu0 %v5138
        %5149 = vmatprep.subr.bf16.mxu0 0
        %5150 = vmatpush1.bf16.msra.mxu0 %v5137
        %5151 = vmatprep.subr.bf16.mxu0 0
        %5152 = vmatpush1.bf16.msra.mxu0 %v5136
        %5153 = vmatprep.subr.bf16.mxu0 0
        %5154 = vmatpush1.bf16.msra.mxu0 %v5135
        %5155 = vmatprep.subr.bf16.mxu0 0
        %5156 = vmatpush1.bf16.msra.mxu0 %v5134
        %5157 = vmatprep.subr.bf16.mxu0 0
        %5158 = vmatpush1.bf16.msra.mxu0 %v5133
        %5159 = vmatprep.subr.bf16.mxu0 0
        %5160 = vmatpush1.bf16.msra.mxu0 %v5132
        %5161 = vmatprep.subr.bf16.mxu0 0
        %5162 = vmatpush1.bf16.msra.mxu0 %v5131
        %5163 = vmatprep.subr.bf16.mxu0 0
        %5164 = vmatpush2.bf16.msra.mxu0 0
        %5165 = vmatprep.subr.bf16.mxu0 0
        %5166 = vmatpush2.bf16.msra.mxu0 0
        %5167 = vmatprep.subr.bf16.mxu0 0
        %5168 = vmatpush2.bf16.msra.mxu0 0
        %5169 = vmatprep.subr.bf16.mxu0 0
        %5170 = vmatpush2.bf16.msra.mxu0 0
        %5171 = vmatprep.subr.bf16.mxu0 0
        %5172 = vmatpush2.bf16.msra.mxu0 0
        %5173 = vmatprep.subr.bf16.mxu0 0
        %5174 = vmatpush2.bf16.msra.mxu0 0
        %5175 = vmatprep.subr.bf16.mxu0 0
        %5176 = vmatpush2.bf16.msra.mxu0 0
        %5177 = vmatprep.subr.bf16.mxu0 0
        %5178 = vmatpush2.bf16.msra.mxu0 0
        %5179 = vmatprep.mubr.bf16.mxu0 0
        %5180 = vmatmul.mubr.bf16.gmra.mxu0 %v5078
        %v5181 = vpop.f32.mrf.mxu0
        %v5182 = vadd.f32 0.0, %v5181
        %v5183 = vpop.f32.mrf.mxu0
        %v5184 = vpop.f32.mrf.mxu0
        %v5185 = vadd.f32 0.0, %v5184
        %v5186 = vpop.f32.mrf.mxu0
        %5187 = vmatprep.mubr.bf16.mxu0 0
        %5188 = vmatmul.mubr.bf16.gmra.mxu0 %v5079
        %v5189 = vpop.f32.mrf.mxu0
        %v5190 = vadd.f32 0.0, %v5189
        %v5191 = vpop.f32.mrf.mxu0
        %v5192 = vpop.f32.mrf.mxu0
        %v5193 = vadd.f32 0.0, %v5192
        %v5194 = vpop.f32.mrf.mxu0
        %5195 = vmatprep.mubr.bf16.mxu0 0
        %5196 = vmatmul.mubr.bf16.gmra.mxu0 %v5080
        %v5197 = vpop.f32.mrf.mxu0
        %v5198 = vadd.f32 0.0, %v5197
        %v5199 = vpop.f32.mrf.mxu0
        %v5200 = vpop.f32.mrf.mxu0
        %v5201 = vadd.f32 0.0, %v5200
        %v5202 = vpop.f32.mrf.mxu0
        %5203 = vmatprep.mubr.bf16.mxu0 0
        %5204 = vmatmul.mubr.bf16.gmra.mxu0 %v5081
        %v5205 = vpop.f32.mrf.mxu0
        %v5206 = vadd.f32 0.0, %v5205
        %v5207 = vpop.f32.mrf.mxu0
        %v5208 = vpop.f32.mrf.mxu0
        %v5209 = vadd.f32 0.0, %v5208
        %v5210 = vpop.f32.mrf.mxu0
        %5211 = vdwg.mxu0
        %v5228 = vunpack.c.l.b16 %v5054
        %v5229 = vunpack.c.l.b16 %v5055
        %v5230 = vunpack.c.l.b16 %v5056
        %v5231 = vunpack.c.l.b16 %v5057
        %v5232 = vunpack.c.l.b16 %v5058
        %v5233 = vunpack.c.l.b16 %v5059
        %v5234 = vunpack.c.l.b16 %v5060
        %v5235 = vunpack.c.l.b16 %v5061
        %v5236 = vunpack.c.l.b16 %v5062
        %v5237 = vunpack.c.l.b16 %v5063
        %v5238 = vunpack.c.l.b16 %v5064
        %v5239 = vunpack.c.l.b16 %v5065
        %v5240 = vunpack.c.l.b16 %v5066
        %v5241 = vunpack.c.l.b16 %v5067
        %v5242 = vunpack.c.l.b16 %v5068
        %v5243 = vunpack.c.l.b16 %v5069
        %v5244 = vpack.c.b16 %v5229, %v5228
        %v5245 = vpack.c.b16 %v5231, %v5230
        %v5246 = vpack.c.b16 %v5233, %v5232
        %v5247 = vpack.c.b16 %v5235, %v5234
        %v5248 = vpack.c.b16 %v5237, %v5236
        %v5249 = vpack.c.b16 %v5239, %v5238
        %v5250 = vpack.c.b16 %v5241, %v5240
        %v5251 = vpack.c.b16 %v5243, %v5242
        %5260 = vmatprep.subr.bf16.mxu0 0
        %5261 = vmatpush1.bf16.msra.mxu0 %v5251
        %5262 = vmatprep.subr.bf16.mxu0 0
        %5263 = vmatpush1.bf16.msra.mxu0 %v5250
        %5264 = vmatprep.subr.bf16.mxu0 0
        %5265 = vmatpush1.bf16.msra.mxu0 %v5249
        %5266 = vmatprep.subr.bf16.mxu0 0
        %5267 = vmatpush1.bf16.msra.mxu0 %v5248
        %5268 = vmatprep.subr.bf16.mxu0 0
        %5269 = vmatpush1.bf16.msra.mxu0 %v5247
        %5270 = vmatprep.subr.bf16.mxu0 0
        %5271 = vmatpush1.bf16.msra.mxu0 %v5246
        %5272 = vmatprep.subr.bf16.mxu0 0
        %5273 = vmatpush1.bf16.msra.mxu0 %v5245
        %5274 = vmatprep.subr.bf16.mxu0 0
        %5275 = vmatpush1.bf16.msra.mxu0 %v5244
        %5276 = vmatprep.subr.bf16.mxu0 0
        %5277 = vmatpush2.bf16.msra.mxu0 0
        %5278 = vmatprep.subr.bf16.mxu0 0
        %5279 = vmatpush2.bf16.msra.mxu0 0
        %5280 = vmatprep.subr.bf16.mxu0 0
        %5281 = vmatpush2.bf16.msra.mxu0 0
        %5282 = vmatprep.subr.bf16.mxu0 0
        %5283 = vmatpush2.bf16.msra.mxu0 0
        %5284 = vmatprep.subr.bf16.mxu0 0
        %5285 = vmatpush2.bf16.msra.mxu0 0
        %5286 = vmatprep.subr.bf16.mxu0 0
        %5287 = vmatpush2.bf16.msra.mxu0 0
        %5288 = vmatprep.subr.bf16.mxu0 0
        %5289 = vmatpush2.bf16.msra.mxu0 0
        %5290 = vmatprep.subr.bf16.mxu0 0
        %5291 = vmatpush2.bf16.msra.mxu0 0
        %5292 = vmatprep.mubr.bf16.mxu0 0
        %5293 = vmatmul.mubr.bf16.gmra.mxu0 %v5050
        %v5294 = vpop.f32.mrf.mxu0
        %v5295 = vadd.f32 %v5182, %v5294
        %v5296 = vpop.f32.mrf.mxu0
        %v5297 = vpop.f32.mrf.mxu0
        %v5298 = vadd.f32 %v5185, %v5297
        %v5299 = vpop.f32.mrf.mxu0
        %5300 = vmatprep.mubr.bf16.mxu0 0
        %5301 = vmatmul.mubr.bf16.gmra.mxu0 %v5051
        %v5302 = vpop.f32.mrf.mxu0
        %v5303 = vadd.f32 %v5190, %v5302
        %v5304 = vpop.f32.mrf.mxu0
        %v5305 = vpop.f32.mrf.mxu0
        %v5306 = vadd.f32 %v5193, %v5305
        %v5307 = vpop.f32.mrf.mxu0
        %5308 = vmatprep.mubr.bf16.mxu0 0
        %5309 = vmatmul.mubr.bf16.gmra.mxu0 %v5052
        %v5310 = vpop.f32.mrf.mxu0
        %v5311 = vadd.f32 %v5198, %v5310
        %v5312 = vpop.f32.mrf.mxu0
        %v5313 = vpop.f32.mrf.mxu0
        %v5314 = vadd.f32 %v5201, %v5313
        %v5315 = vpop.f32.mrf.mxu0
        %5316 = vmatprep.mubr.bf16.mxu0 0
        %5317 = vmatmul.mubr.bf16.gmra.mxu0 %v5053
        %v5318 = vpop.f32.mrf.mxu0
        %v5319 = vadd.f32 %v5206, %v5318
        %v5320 = vpop.f32.mrf.mxu0
        %v5321 = vpop.f32.mrf.mxu0
        %v5322 = vadd.f32 %v5209, %v5321
        %v5323 = vpop.f32.mrf.mxu0
        %5324 = vdwg.mxu0
        %v5325 = vld [vmem:[#allocation3 + $0x2] sm:$0xff]
        %v5326 = vld [vmem:[#allocation3 + $0x12] sm:$0xff]
        %v5327 = vld [vmem:[#allocation3 + $0x22] sm:$0xff]
        %v5328 = vld [vmem:[#allocation3 + $0x32] sm:$0xff]
        %v5329 = vld [vmem:[#allocation3 + $0x42] sm:$0xff]
        %v5330 = vld [vmem:[#allocation3 + $0x52] sm:$0xff]
        %v5331 = vld [vmem:[#allocation3 + $0x62] sm:$0xff]
        %v5332 = vld [vmem:[#allocation3 + $0x72] sm:$0xff]
        %v5333 = vpack.c.bf16 %v5326, %v5325
        %v5334 = vpack.c.bf16 %v5328, %v5327
        %v5335 = vpack.c.bf16 %v5330, %v5329
        %v5336 = vpack.c.bf16 %v5332, %v5331
        %s5337 = scalar_lea.vmem %s3, 128
        %v5338 = vld [vmem:[%s5337] sm:$0xf]
        %v5339 = vld [vmem:[%s5337 + $0x4] sm:$0xf]
        %v5340 = vld [vmem:[%s5337 + $0x8] sm:$0xf]
        %v5341 = vld [vmem:[%s5337 + $0xc] sm:$0xf]
        %v5342 = vld [vmem:[%s5337 + $0x10] sm:$0xf]
        %v5343 = vld [vmem:[%s5337 + $0x14] sm:$0xf]
        %v5344 = vld [vmem:[%s5337 + $0x18] sm:$0xf]
        %v5345 = vld [vmem:[%s5337 + $0x1c] sm:$0xf]
        %v5346 = vld [vmem:[%s5337 + $0x20] sm:$0xf]
        %v5347 = vld [vmem:[%s5337 + $0x24] sm:$0xf]
        %v5348 = vld [vmem:[%s5337 + $0x28] sm:$0xf]
        %v5349 = vld [vmem:[%s5337 + $0x2c] sm:$0xf]
        %v5350 = vld [vmem:[%s5337 + $0x30] sm:$0xf]
        %v5351 = vld [vmem:[%s5337 + $0x34] sm:$0xf]
        %v5352 = vld [vmem:[%s5337 + $0x38] sm:$0xf]
        %v5353 = vld [vmem:[%s5337 + $0x3c] sm:$0xf]
        %v5370 = vunpack.c.l.b16 %v5338
        %v5371 = vunpack.c.l.b16 %v5339
        %v5372 = vunpack.c.l.b16 %v5340
        %v5373 = vunpack.c.l.b16 %v5341
        %v5374 = vunpack.c.l.b16 %v5342
        %v5375 = vunpack.c.l.b16 %v5343
        %v5376 = vunpack.c.l.b16 %v5344
        %v5377 = vunpack.c.l.b16 %v5345
        %v5378 = vunpack.c.l.b16 %v5346
        %v5379 = vunpack.c.l.b16 %v5347
        %v5380 = vunpack.c.l.b16 %v5348
        %v5381 = vunpack.c.l.b16 %v5349
        %v5382 = vunpack.c.l.b16 %v5350
        %v5383 = vunpack.c.l.b16 %v5351
        %v5384 = vunpack.c.l.b16 %v5352
        %v5385 = vunpack.c.l.b16 %v5353
        %v5386 = vpack.c.b16 %v5371, %v5370
        %v5387 = vpack.c.b16 %v5373, %v5372
        %v5388 = vpack.c.b16 %v5375, %v5374
        %v5389 = vpack.c.b16 %v5377, %v5376
        %v5390 = vpack.c.b16 %v5379, %v5378
        %v5391 = vpack.c.b16 %v5381, %v5380
        %v5392 = vpack.c.b16 %v5383, %v5382
        %v5393 = vpack.c.b16 %v5385, %v5384
        %5402 = vmatprep.subr.bf16.mxu0 0
        %5403 = vmatpush1.bf16.msra.mxu0 %v5393
        %5404 = vmatprep.subr.bf16.mxu0 0
        %5405 = vmatpush1.bf16.msra.mxu0 %v5392
        %5406 = vmatprep.subr.bf16.mxu0 0
        %5407 = vmatpush1.bf16.msra.mxu0 %v5391
        %5408 = vmatprep.subr.bf16.mxu0 0
        %5409 = vmatpush1.bf16.msra.mxu0 %v5390
        %5410 = vmatprep.subr.bf16.mxu0 0
        %5411 = vmatpush1.bf16.msra.mxu0 %v5389
        %5412 = vmatprep.subr.bf16.mxu0 0
        %5413 = vmatpush1.bf16.msra.mxu0 %v5388
        %5414 = vmatprep.subr.bf16.mxu0 0
        %5415 = vmatpush1.bf16.msra.mxu0 %v5387
        %5416 = vmatprep.subr.bf16.mxu0 0
        %5417 = vmatpush1.bf16.msra.mxu0 %v5386
        %5418 = vmatprep.subr.bf16.mxu0 0
        %5419 = vmatpush2.bf16.msra.mxu0 0
        %5420 = vmatprep.subr.bf16.mxu0 0
        %5421 = vmatpush2.bf16.msra.mxu0 0
        %5422 = vmatprep.subr.bf16.mxu0 0
        %5423 = vmatpush2.bf16.msra.mxu0 0
        %5424 = vmatprep.subr.bf16.mxu0 0
        %5425 = vmatpush2.bf16.msra.mxu0 0
        %5426 = vmatprep.subr.bf16.mxu0 0
        %5427 = vmatpush2.bf16.msra.mxu0 0
        %5428 = vmatprep.subr.bf16.mxu0 0
        %5429 = vmatpush2.bf16.msra.mxu0 0
        %5430 = vmatprep.subr.bf16.mxu0 0
        %5431 = vmatpush2.bf16.msra.mxu0 0
        %5432 = vmatprep.subr.bf16.mxu0 0
        %5433 = vmatpush2.bf16.msra.mxu0 0
        %5434 = vmatprep.mubr.bf16.mxu0 0
        %5435 = vmatmul.mubr.bf16.gmra.mxu0 %v5333
        %v5436 = vpop.f32.mrf.mxu0
        %v5437 = vadd.f32 0.0, %v5436
        %v5438 = vpop.f32.mrf.mxu0
        %v5439 = vpop.f32.mrf.mxu0
        %v5440 = vadd.f32 0.0, %v5439
        %v5441 = vpop.f32.mrf.mxu0
        %5442 = vmatprep.mubr.bf16.mxu0 0
        %5443 = vmatmul.mubr.bf16.gmra.mxu0 %v5334
        %v5444 = vpop.f32.mrf.mxu0
        %v5445 = vadd.f32 0.0, %v5444
        %v5446 = vpop.f32.mrf.mxu0
        %v5447 = vpop.f32.mrf.mxu0
        %v5448 = vadd.f32 0.0, %v5447
        %v5449 = vpop.f32.mrf.mxu0
        %5450 = vmatprep.mubr.bf16.mxu0 0
        %5451 = vmatmul.mubr.bf16.gmra.mxu0 %v5335
        %v5452 = vpop.f32.mrf.mxu0
        %v5453 = vadd.f32 0.0, %v5452
        %v5454 = vpop.f32.mrf.mxu0
        %v5455 = vpop.f32.mrf.mxu0
        %v5456 = vadd.f32 0.0, %v5455
        %v5457 = vpop.f32.mrf.mxu0
        %5458 = vmatprep.mubr.bf16.mxu0 0
        %5459 = vmatmul.mubr.bf16.gmra.mxu0 %v5336
        %v5460 = vpop.f32.mrf.mxu0
        %v5461 = vadd.f32 0.0, %v5460
        %v5462 = vpop.f32.mrf.mxu0
        %v5463 = vpop.f32.mrf.mxu0
        %v5464 = vadd.f32 0.0, %v5463
        %v5465 = vpop.f32.mrf.mxu0
        %5466 = vdwg.mxu0
        %v5467 = vadd.f32 %v5295, %v5437
        %v5468 = vadd.f32 %v5298, %v5440
        %v5469 = vadd.f32 %v5303, %v5445
        %v5470 = vadd.f32 %v5306, %v5448
        %v5471 = vadd.f32 %v5311, %v5453
        %v5472 = vadd.f32 %v5314, %v5456
        %v5473 = vadd.f32 %v5319, %v5461
        %v5474 = vadd.f32 %v5322, %v5464
        %v5475 = vld [vmem:[%s5034] sm:$0xff]
        %v5476 = vld [vmem:[%s5034 + $0x10] sm:$0xff]
        %v5477 = vld [vmem:[%s5034 + $0x20] sm:$0xff]
        %v5478 = vld [vmem:[%s5034 + $0x30] sm:$0xff]
        %v5479 = vld [vmem:[%s5034 + $0x40] sm:$0xff]
        %v5480 = vld [vmem:[%s5034 + $0x50] sm:$0xff]
        %v5481 = vld [vmem:[%s5034 + $0x60] sm:$0xff]
        %v5482 = vld [vmem:[%s5034 + $0x70] sm:$0xff]
        %v5483 = vpack.c.bf16 %v5476, %v5475
        %v5484 = vpack.c.bf16 %v5478, %v5477
        %v5485 = vpack.c.bf16 %v5480, %v5479
        %v5486 = vpack.c.bf16 %v5482, %v5481
        %s5487 = scalar_lea.vmem %s3, 192
        %v5488 = vld [vmem:[%s5487] sm:$0xf]
        %v5489 = vld [vmem:[%s5487 + $0x4] sm:$0xf]
        %v5490 = vld [vmem:[%s5487 + $0x8] sm:$0xf]
        %v5491 = vld [vmem:[%s5487 + $0xc] sm:$0xf]
        %v5492 = vld [vmem:[%s5487 + $0x10] sm:$0xf]
        %v5493 = vld [vmem:[%s5487 + $0x14] sm:$0xf]
        %v5494 = vld [vmem:[%s5487 + $0x18] sm:$0xf]
        %v5495 = vld [vmem:[%s5487 + $0x1c] sm:$0xf]
        %v5496 = vld [vmem:[%s5487 + $0x20] sm:$0xf]
        %v5497 = vld [vmem:[%s5487 + $0x24] sm:$0xf]
        %v5498 = vld [vmem:[%s5487 + $0x28] sm:$0xf]
        %v5499 = vld [vmem:[%s5487 + $0x2c] sm:$0xf]
        %v5500 = vld [vmem:[%s5487 + $0x30] sm:$0xf]
        %v5501 = vld [vmem:[%s5487 + $0x34] sm:$0xf]
        %v5502 = vld [vmem:[%s5487 + $0x38] sm:$0xf]
        %v5503 = vld [vmem:[%s5487 + $0x3c] sm:$0xf]
        %v5520 = vunpack.c.l.b16 %v5488
        %v5521 = vunpack.c.l.b16 %v5489
        %v5522 = vunpack.c.l.b16 %v5490
        %v5523 = vunpack.c.l.b16 %v5491
        %v5524 = vunpack.c.l.b16 %v5492
        %v5525 = vunpack.c.l.b16 %v5493
        %v5526 = vunpack.c.l.b16 %v5494
        %v5527 = vunpack.c.l.b16 %v5495
        %v5528 = vunpack.c.l.b16 %v5496
        %v5529 = vunpack.c.l.b16 %v5497
        %v5530 = vunpack.c.l.b16 %v5498
        %v5531 = vunpack.c.l.b16 %v5499
        %v5532 = vunpack.c.l.b16 %v5500
        %v5533 = vunpack.c.l.b16 %v5501
        %v5534 = vunpack.c.l.b16 %v5502
        %v5535 = vunpack.c.l.b16 %v5503
        %v5536 = vpack.c.b16 %v5521, %v5520
        %v5537 = vpack.c.b16 %v5523, %v5522
        %v5538 = vpack.c.b16 %v5525, %v5524
        %v5539 = vpack.c.b16 %v5527, %v5526
        %v5540 = vpack.c.b16 %v5529, %v5528
        %v5541 = vpack.c.b16 %v5531, %v5530
        %v5542 = vpack.c.b16 %v5533, %v5532
        %v5543 = vpack.c.b16 %v5535, %v5534
        %5552 = vmatprep.subr.bf16.mxu0 0
        %5553 = vmatpush1.bf16.msra.mxu0 %v5543
        %5554 = vmatprep.subr.bf16.mxu0 0
        %5555 = vmatpush1.bf16.msra.mxu0 %v5542
        %5556 = vmatprep.subr.bf16.mxu0 0
        %5557 = vmatpush1.bf16.msra.mxu0 %v5541
        %5558 = vmatprep.subr.bf16.mxu0 0
        %5559 = vmatpush1.bf16.msra.mxu0 %v5540
        %5560 = vmatprep.subr.bf16.mxu0 0
        %5561 = vmatpush1.bf16.msra.mxu0 %v5539
        %5562 = vmatprep.subr.bf16.mxu0 0
        %5563 = vmatpush1.bf16.msra.mxu0 %v5538
        %5564 = vmatprep.subr.bf16.mxu0 0
        %5565 = vmatpush1.bf16.msra.mxu0 %v5537
        %5566 = vmatprep.subr.bf16.mxu0 0
        %5567 = vmatpush1.bf16.msra.mxu0 %v5536
        %5568 = vmatprep.subr.bf16.mxu0 0
        %5569 = vmatpush2.bf16.msra.mxu0 0
        %5570 = vmatprep.subr.bf16.mxu0 0
        %5571 = vmatpush2.bf16.msra.mxu0 0
        %5572 = vmatprep.subr.bf16.mxu0 0
        %5573 = vmatpush2.bf16.msra.mxu0 0
        %5574 = vmatprep.subr.bf16.mxu0 0
        %5575 = vmatpush2.bf16.msra.mxu0 0
        %5576 = vmatprep.subr.bf16.mxu0 0
        %5577 = vmatpush2.bf16.msra.mxu0 0
        %5578 = vmatprep.subr.bf16.mxu0 0
        %5579 = vmatpush2.bf16.msra.mxu0 0
        %5580 = vmatprep.subr.bf16.mxu0 0
        %5581 = vmatpush2.bf16.msra.mxu0 0
        %5582 = vmatprep.subr.bf16.mxu0 0
        %5583 = vmatpush2.bf16.msra.mxu0 0
        %5584 = vmatprep.mubr.bf16.mxu0 0
        %5585 = vmatmul.mubr.bf16.gmra.mxu0 %v5483
        %v5586 = vpop.f32.mrf.mxu0
        %v5587 = vadd.f32 0.0, %v5586
        %v5588 = vpop.f32.mrf.mxu0
        %v5589 = vpop.f32.mrf.mxu0
        %v5590 = vadd.f32 0.0, %v5589
        %v5591 = vpop.f32.mrf.mxu0
        %5592 = vmatprep.mubr.bf16.mxu0 0
        %5593 = vmatmul.mubr.bf16.gmra.mxu0 %v5484
        %v5594 = vpop.f32.mrf.mxu0
        %v5595 = vadd.f32 0.0, %v5594
        %v5596 = vpop.f32.mrf.mxu0
        %v5597 = vpop.f32.mrf.mxu0
        %v5598 = vadd.f32 0.0, %v5597
        %v5599 = vpop.f32.mrf.mxu0
        %5600 = vmatprep.mubr.bf16.mxu0 0
        %5601 = vmatmul.mubr.bf16.gmra.mxu0 %v5485
        %v5602 = vpop.f32.mrf.mxu0
        %v5603 = vadd.f32 0.0, %v5602
        %v5604 = vpop.f32.mrf.mxu0
        %v5605 = vpop.f32.mrf.mxu0
        %v5606 = vadd.f32 0.0, %v5605
        %v5607 = vpop.f32.mrf.mxu0
        %5608 = vmatprep.mubr.bf16.mxu0 0
        %5609 = vmatmul.mubr.bf16.gmra.mxu0 %v5486
        %v5610 = vpop.f32.mrf.mxu0
        %v5611 = vadd.f32 0.0, %v5610
        %v5612 = vpop.f32.mrf.mxu0
        %v5613 = vpop.f32.mrf.mxu0
        %v5614 = vadd.f32 0.0, %v5613
        %v5615 = vpop.f32.mrf.mxu0
        %5616 = vdwg.mxu0
        %v5617 = vadd.f32 %v5467, %v5587
        %v5618 = vadd.f32 %v5468, %v5590
        %v5619 = vadd.f32 %v5469, %v5595
        %v5620 = vadd.f32 %v5470, %v5598
        %v5621 = vadd.f32 %v5471, %v5603
        %v5622 = vadd.f32 %v5472, %v5606
        %v5623 = vadd.f32 %v5473, %v5611
        %v5624 = vadd.f32 %v5474, %v5614
        %v5625 = vld [vmem:[%s5034 + $0x1] sm:$0xff]
        %v5626 = vld [vmem:[%s5034 + $0x11] sm:$0xff]
        %v5627 = vld [vmem:[%s5034 + $0x21] sm:$0xff]
        %v5628 = vld [vmem:[%s5034 + $0x31] sm:$0xff]
        %v5629 = vld [vmem:[%s5034 + $0x41] sm:$0xff]
        %v5630 = vld [vmem:[%s5034 + $0x51] sm:$0xff]
        %v5631 = vld [vmem:[%s5034 + $0x61] sm:$0xff]
        %v5632 = vld [vmem:[%s5034 + $0x71] sm:$0xff]
        %v5633 = vpack.c.bf16 %v5626, %v5625
        %v5634 = vpack.c.bf16 %v5628, %v5627
        %v5635 = vpack.c.bf16 %v5630, %v5629
        %v5636 = vpack.c.bf16 %v5632, %v5631
        %s5637 = scalar_lea.vmem %s3, 256
        %v5638 = vld [vmem:[%s5637] sm:$0xf]
        %v5639 = vld [vmem:[%s5637 + $0x4] sm:$0xf]
        %v5640 = vld [vmem:[%s5637 + $0x8] sm:$0xf]
        %v5641 = vld [vmem:[%s5637 + $0xc] sm:$0xf]
        %v5642 = vld [vmem:[%s5637 + $0x10] sm:$0xf]
        %v5643 = vld [vmem:[%s5637 + $0x14] sm:$0xf]
        %v5644 = vld [vmem:[%s5637 + $0x18] sm:$0xf]
        %v5645 = vld [vmem:[%s5637 + $0x1c] sm:$0xf]
        %v5646 = vld [vmem:[%s5637 + $0x20] sm:$0xf]
        %v5647 = vld [vmem:[%s5637 + $0x24] sm:$0xf]
        %v5648 = vld [vmem:[%s5637 + $0x28] sm:$0xf]
        %v5649 = vld [vmem:[%s5637 + $0x2c] sm:$0xf]
        %v5650 = vld [vmem:[%s5637 + $0x30] sm:$0xf]
        %v5651 = vld [vmem:[%s5637 + $0x34] sm:$0xf]
        %v5652 = vld [vmem:[%s5637 + $0x38] sm:$0xf]
        %v5653 = vld [vmem:[%s5637 + $0x3c] sm:$0xf]
        %v5670 = vunpack.c.l.b16 %v5638
        %v5671 = vunpack.c.l.b16 %v5639
        %v5672 = vunpack.c.l.b16 %v5640
        %v5673 = vunpack.c.l.b16 %v5641
        %v5674 = vunpack.c.l.b16 %v5642
        %v5675 = vunpack.c.l.b16 %v5643
        %v5676 = vunpack.c.l.b16 %v5644
        %v5677 = vunpack.c.l.b16 %v5645
        %v5678 = vunpack.c.l.b16 %v5646
        %v5679 = vunpack.c.l.b16 %v5647
        %v5680 = vunpack.c.l.b16 %v5648
        %v5681 = vunpack.c.l.b16 %v5649
        %v5682 = vunpack.c.l.b16 %v5650
        %v5683 = vunpack.c.l.b16 %v5651
        %v5684 = vunpack.c.l.b16 %v5652
        %v5685 = vunpack.c.l.b16 %v5653
        %v5686 = vpack.c.b16 %v5671, %v5670
        %v5687 = vpack.c.b16 %v5673, %v5672
        %v5688 = vpack.c.b16 %v5675, %v5674
        %v5689 = vpack.c.b16 %v5677, %v5676
        %v5690 = vpack.c.b16 %v5679, %v5678
        %v5691 = vpack.c.b16 %v5681, %v5680
        %v5692 = vpack.c.b16 %v5683, %v5682
        %v5693 = vpack.c.b16 %v5685, %v5684
        %5702 = vmatprep.subr.bf16.mxu0 0
        %5703 = vmatpush1.bf16.msra.mxu0 %v5693
        %5704 = vmatprep.subr.bf16.mxu0 0
        %5705 = vmatpush1.bf16.msra.mxu0 %v5692
        %5706 = vmatprep.subr.bf16.mxu0 0
        %5707 = vmatpush1.bf16.msra.mxu0 %v5691
        %5708 = vmatprep.subr.bf16.mxu0 0
        %5709 = vmatpush1.bf16.msra.mxu0 %v5690
        %5710 = vmatprep.subr.bf16.mxu0 0
        %5711 = vmatpush1.bf16.msra.mxu0 %v5689
        %5712 = vmatprep.subr.bf16.mxu0 0
        %5713 = vmatpush1.bf16.msra.mxu0 %v5688
        %5714 = vmatprep.subr.bf16.mxu0 0
        %5715 = vmatpush1.bf16.msra.mxu0 %v5687
        %5716 = vmatprep.subr.bf16.mxu0 0
        %5717 = vmatpush1.bf16.msra.mxu0 %v5686
        %5718 = vmatprep.subr.bf16.mxu0 0
        %5719 = vmatpush2.bf16.msra.mxu0 0
        %5720 = vmatprep.subr.bf16.mxu0 0
        %5721 = vmatpush2.bf16.msra.mxu0 0
        %5722 = vmatprep.subr.bf16.mxu0 0
        %5723 = vmatpush2.bf16.msra.mxu0 0
        %5724 = vmatprep.subr.bf16.mxu0 0
        %5725 = vmatpush2.bf16.msra.mxu0 0
        %5726 = vmatprep.subr.bf16.mxu0 0
        %5727 = vmatpush2.bf16.msra.mxu0 0
        %5728 = vmatprep.subr.bf16.mxu0 0
        %5729 = vmatpush2.bf16.msra.mxu0 0
        %5730 = vmatprep.subr.bf16.mxu0 0
        %5731 = vmatpush2.bf16.msra.mxu0 0
        %5732 = vmatprep.subr.bf16.mxu0 0
        %5733 = vmatpush2.bf16.msra.mxu0 0
        %5734 = vmatprep.mubr.bf16.mxu0 0
        %5735 = vmatmul.mubr.bf16.gmra.mxu0 %v5633
        %v5736 = vpop.f32.mrf.mxu0
        %v5737 = vadd.f32 0.0, %v5736
        %v5738 = vpop.f32.mrf.mxu0
        %v5739 = vpop.f32.mrf.mxu0
        %v5740 = vadd.f32 0.0, %v5739
        %v5741 = vpop.f32.mrf.mxu0
        %5742 = vmatprep.mubr.bf16.mxu0 0
        %5743 = vmatmul.mubr.bf16.gmra.mxu0 %v5634
        %v5744 = vpop.f32.mrf.mxu0
        %v5745 = vadd.f32 0.0, %v5744
        %v5746 = vpop.f32.mrf.mxu0
        %v5747 = vpop.f32.mrf.mxu0
        %v5748 = vadd.f32 0.0, %v5747
        %v5749 = vpop.f32.mrf.mxu0
        %5750 = vmatprep.mubr.bf16.mxu0 0
        %5751 = vmatmul.mubr.bf16.gmra.mxu0 %v5635
        %v5752 = vpop.f32.mrf.mxu0
        %v5753 = vadd.f32 0.0, %v5752
        %v5754 = vpop.f32.mrf.mxu0
        %v5755 = vpop.f32.mrf.mxu0
        %v5756 = vadd.f32 0.0, %v5755
        %v5757 = vpop.f32.mrf.mxu0
        %5758 = vmatprep.mubr.bf16.mxu0 0
        %5759 = vmatmul.mubr.bf16.gmra.mxu0 %v5636
        %v5760 = vpop.f32.mrf.mxu0
        %v5761 = vadd.f32 0.0, %v5760
        %v5762 = vpop.f32.mrf.mxu0
        %v5763 = vpop.f32.mrf.mxu0
        %v5764 = vadd.f32 0.0, %v5763
        %v5765 = vpop.f32.mrf.mxu0
        %5766 = vdwg.mxu0
        %v5767 = vadd.f32 %v5617, %v5737
        %v5768 = vadd.f32 %v5618, %v5740
        %v5769 = vadd.f32 %v5619, %v5745
        %v5770 = vadd.f32 %v5620, %v5748
        %v5771 = vadd.f32 %v5621, %v5753
        %v5772 = vadd.f32 %v5622, %v5756
        %v5773 = vadd.f32 %v5623, %v5761
        %v5774 = vadd.f32 %v5624, %v5764
        %v5775 = vld [vmem:[%s5034 + $0x2] sm:$0xff]
        %v5776 = vld [vmem:[%s5034 + $0x12] sm:$0xff]
        %v5777 = vld [vmem:[%s5034 + $0x22] sm:$0xff]
        %v5778 = vld [vmem:[%s5034 + $0x32] sm:$0xff]
        %v5779 = vld [vmem:[%s5034 + $0x42] sm:$0xff]
        %v5780 = vld [vmem:[%s5034 + $0x52] sm:$0xff]
        %v5781 = vld [vmem:[%s5034 + $0x62] sm:$0xff]
        %v5782 = vld [vmem:[%s5034 + $0x72] sm:$0xff]
        %v5783 = vpack.c.bf16 %v5776, %v5775
        %v5784 = vpack.c.bf16 %v5778, %v5777
        %v5785 = vpack.c.bf16 %v5780, %v5779
        %v5786 = vpack.c.bf16 %v5782, %v5781
        %s5787 = scalar_lea.vmem %s3, 320
        %v5788 = vld [vmem:[%s5787] sm:$0xf]
        %v5789 = vld [vmem:[%s5787 + $0x4] sm:$0xf]
        %v5790 = vld [vmem:[%s5787 + $0x8] sm:$0xf]
        %v5791 = vld [vmem:[%s5787 + $0xc] sm:$0xf]
        %v5792 = vld [vmem:[%s5787 + $0x10] sm:$0xf]
        %v5793 = vld [vmem:[%s5787 + $0x14] sm:$0xf]
        %v5794 = vld [vmem:[%s5787 + $0x18] sm:$0xf]
        %v5795 = vld [vmem:[%s5787 + $0x1c] sm:$0xf]
        %v5796 = vld [vmem:[%s5787 + $0x20] sm:$0xf]
        %v5797 = vld [vmem:[%s5787 + $0x24] sm:$0xf]
        %v5798 = vld [vmem:[%s5787 + $0x28] sm:$0xf]
        %v5799 = vld [vmem:[%s5787 + $0x2c] sm:$0xf]
        %v5800 = vld [vmem:[%s5787 + $0x30] sm:$0xf]
        %v5801 = vld [vmem:[%s5787 + $0x34] sm:$0xf]
        %v5802 = vld [vmem:[%s5787 + $0x38] sm:$0xf]
        %v5803 = vld [vmem:[%s5787 + $0x3c] sm:$0xf]
        %v5820 = vunpack.c.l.b16 %v5788
        %v5821 = vunpack.c.l.b16 %v5789
        %v5822 = vunpack.c.l.b16 %v5790
        %v5823 = vunpack.c.l.b16 %v5791
        %v5824 = vunpack.c.l.b16 %v5792
        %v5825 = vunpack.c.l.b16 %v5793
        %v5826 = vunpack.c.l.b16 %v5794
        %v5827 = vunpack.c.l.b16 %v5795
        %v5828 = vunpack.c.l.b16 %v5796
        %v5829 = vunpack.c.l.b16 %v5797
        %v5830 = vunpack.c.l.b16 %v5798
        %v5831 = vunpack.c.l.b16 %v5799
        %v5832 = vunpack.c.l.b16 %v5800
        %v5833 = vunpack.c.l.b16 %v5801
        %v5834 = vunpack.c.l.b16 %v5802
        %v5835 = vunpack.c.l.b16 %v5803
        %v5836 = vpack.c.b16 %v5821, %v5820
        %v5837 = vpack.c.b16 %v5823, %v5822
        %v5838 = vpack.c.b16 %v5825, %v5824
        %v5839 = vpack.c.b16 %v5827, %v5826
        %v5840 = vpack.c.b16 %v5829, %v5828
        %v5841 = vpack.c.b16 %v5831, %v5830
        %v5842 = vpack.c.b16 %v5833, %v5832
        %v5843 = vpack.c.b16 %v5835, %v5834
        %5852 = vmatprep.subr.bf16.mxu0 0
        %5853 = vmatpush1.bf16.msra.mxu0 %v5843
        %5854 = vmatprep.subr.bf16.mxu0 0
        %5855 = vmatpush1.bf16.msra.mxu0 %v5842
        %5856 = vmatprep.subr.bf16.mxu0 0
        %5857 = vmatpush1.bf16.msra.mxu0 %v5841
        %5858 = vmatprep.subr.bf16.mxu0 0
        %5859 = vmatpush1.bf16.msra.mxu0 %v5840
        %5860 = vmatprep.subr.bf16.mxu0 0
        %5861 = vmatpush1.bf16.msra.mxu0 %v5839
        %5862 = vmatprep.subr.bf16.mxu0 0
        %5863 = vmatpush1.bf16.msra.mxu0 %v5838
        %5864 = vmatprep.subr.bf16.mxu0 0
        %5865 = vmatpush1.bf16.msra.mxu0 %v5837
        %5866 = vmatprep.subr.bf16.mxu0 0
        %5867 = vmatpush1.bf16.msra.mxu0 %v5836
        %5868 = vmatprep.subr.bf16.mxu0 0
        %5869 = vmatpush2.bf16.msra.mxu0 0
        %5870 = vmatprep.subr.bf16.mxu0 0
        %5871 = vmatpush2.bf16.msra.mxu0 0
        %5872 = vmatprep.subr.bf16.mxu0 0
        %5873 = vmatpush2.bf16.msra.mxu0 0
        %5874 = vmatprep.subr.bf16.mxu0 0
        %5875 = vmatpush2.bf16.msra.mxu0 0
        %5876 = vmatprep.subr.bf16.mxu0 0
        %5877 = vmatpush2.bf16.msra.mxu0 0
        %5878 = vmatprep.subr.bf16.mxu0 0
        %5879 = vmatpush2.bf16.msra.mxu0 0
        %5880 = vmatprep.subr.bf16.mxu0 0
        %5881 = vmatpush2.bf16.msra.mxu0 0
        %5882 = vmatprep.subr.bf16.mxu0 0
        %5883 = vmatpush2.bf16.msra.mxu0 0
        %5884 = vmatprep.mubr.bf16.mxu0 0
        %5885 = vmatmul.mubr.bf16.gmra.mxu0 %v5783
        %v5886 = vpop.f32.mrf.mxu0
        %v5887 = vadd.f32 0.0, %v5886
        %v5888 = vpop.f32.mrf.mxu0
        %v5889 = vpop.f32.mrf.mxu0
        %v5890 = vadd.f32 0.0, %v5889
        %v5891 = vpop.f32.mrf.mxu0
        %5892 = vmatprep.mubr.bf16.mxu0 0
        %5893 = vmatmul.mubr.bf16.gmra.mxu0 %v5784
        %v5894 = vpop.f32.mrf.mxu0
        %v5895 = vadd.f32 0.0, %v5894
        %v5896 = vpop.f32.mrf.mxu0
        %v5897 = vpop.f32.mrf.mxu0
        %v5898 = vadd.f32 0.0, %v5897
        %v5899 = vpop.f32.mrf.mxu0
        %5900 = vmatprep.mubr.bf16.mxu0 0
        %5901 = vmatmul.mubr.bf16.gmra.mxu0 %v5785
        %v5902 = vpop.f32.mrf.mxu0
        %v5903 = vadd.f32 0.0, %v5902
        %v5904 = vpop.f32.mrf.mxu0
        %v5905 = vpop.f32.mrf.mxu0
        %v5906 = vadd.f32 0.0, %v5905
        %v5907 = vpop.f32.mrf.mxu0
        %5908 = vmatprep.mubr.bf16.mxu0 0
        %5909 = vmatmul.mubr.bf16.gmra.mxu0 %v5786
        %v5910 = vpop.f32.mrf.mxu0
        %v5911 = vadd.f32 0.0, %v5910
        %v5912 = vpop.f32.mrf.mxu0
        %v5913 = vpop.f32.mrf.mxu0
        %v5914 = vadd.f32 0.0, %v5913
        %v5915 = vpop.f32.mrf.mxu0
        %5916 = vdwg.mxu0
        %v5917 = vadd.f32 %v5767, %v5887
        %v5918 = vadd.f32 %v5768, %v5890
        %v5919 = vadd.f32 %v5769, %v5895
        %v5920 = vadd.f32 %v5770, %v5898
        %v5921 = vadd.f32 %v5771, %v5903
        %v5922 = vadd.f32 %v5772, %v5906
        %v5923 = vadd.f32 %v5773, %v5911
        %v5924 = vadd.f32 %v5774, %v5914
        %s5925 = scalar_lea.vmem [#allocation3], 32
        %v5926 = vld [vmem:[%s5925] sm:$0xff]
        %v5927 = vld [vmem:[%s5925 + $0x10] sm:$0xff]
        %v5928 = vld [vmem:[%s5925 + $0x20] sm:$0xff]
        %v5929 = vld [vmem:[%s5925 + $0x30] sm:$0xff]
        %v5930 = vld [vmem:[%s5925 + $0x40] sm:$0xff]
        %v5931 = vld [vmem:[%s5925 + $0x50] sm:$0xff]
        %v5932 = vld [vmem:[%s5925 + $0x60] sm:$0xff]
        %v5933 = vld [vmem:[%s5925 + $0x70] sm:$0xff]
        %v5934 = vpack.c.bf16 %v5927, %v5926
        %v5935 = vpack.c.bf16 %v5929, %v5928
        %v5936 = vpack.c.bf16 %v5931, %v5930
        %v5937 = vpack.c.bf16 %v5933, %v5932
        %s5938 = scalar_lea.vmem %s3, 384
        %v5939 = vld [vmem:[%s5938] sm:$0xf]
        %v5940 = vld [vmem:[%s5938 + $0x4] sm:$0xf]
        %v5941 = vld [vmem:[%s5938 + $0x8] sm:$0xf]
        %v5942 = vld [vmem:[%s5938 + $0xc] sm:$0xf]
        %v5943 = vld [vmem:[%s5938 + $0x10] sm:$0xf]
        %v5944 = vld [vmem:[%s5938 + $0x14] sm:$0xf]
        %v5945 = vld [vmem:[%s5938 + $0x18] sm:$0xf]
        %v5946 = vld [vmem:[%s5938 + $0x1c] sm:$0xf]
        %v5947 = vld [vmem:[%s5938 + $0x20] sm:$0xf]
        %v5948 = vld [vmem:[%s5938 + $0x24] sm:$0xf]
        %v5949 = vld [vmem:[%s5938 + $0x28] sm:$0xf]
        %v5950 = vld [vmem:[%s5938 + $0x2c] sm:$0xf]
        %v5951 = vld [vmem:[%s5938 + $0x30] sm:$0xf]
        %v5952 = vld [vmem:[%s5938 + $0x34] sm:$0xf]
        %v5953 = vld [vmem:[%s5938 + $0x38] sm:$0xf]
        %v5954 = vld [vmem:[%s5938 + $0x3c] sm:$0xf]
        %v5971 = vunpack.c.l.b16 %v5939
        %v5972 = vunpack.c.l.b16 %v5940
        %v5973 = vunpack.c.l.b16 %v5941
        %v5974 = vunpack.c.l.b16 %v5942
        %v5975 = vunpack.c.l.b16 %v5943
        %v5976 = vunpack.c.l.b16 %v5944
        %v5977 = vunpack.c.l.b16 %v5945
        %v5978 = vunpack.c.l.b16 %v5946
        %v5979 = vunpack.c.l.b16 %v5947
        %v5980 = vunpack.c.l.b16 %v5948
        %v5981 = vunpack.c.l.b16 %v5949
        %v5982 = vunpack.c.l.b16 %v5950
        %v5983 = vunpack.c.l.b16 %v5951
        %v5984 = vunpack.c.l.b16 %v5952
        %v5985 = vunpack.c.l.b16 %v5953
        %v5986 = vunpack.c.l.b16 %v5954
        %v5987 = vpack.c.b16 %v5972, %v5971
        %v5988 = vpack.c.b16 %v5974, %v5973
        %v5989 = vpack.c.b16 %v5976, %v5975
        %v5990 = vpack.c.b16 %v5978, %v5977
        %v5991 = vpack.c.b16 %v5980, %v5979
        %v5992 = vpack.c.b16 %v5982, %v5981
        %v5993 = vpack.c.b16 %v5984, %v5983
        %v5994 = vpack.c.b16 %v5986, %v5985
        %6003 = vmatprep.subr.bf16.mxu0 0
        %6004 = vmatpush1.bf16.msra.mxu0 %v5994
        %6005 = vmatprep.subr.bf16.mxu0 0
        %6006 = vmatpush1.bf16.msra.mxu0 %v5993
        %6007 = vmatprep.subr.bf16.mxu0 0
        %6008 = vmatpush1.bf16.msra.mxu0 %v5992
        %6009 = vmatprep.subr.bf16.mxu0 0
        %6010 = vmatpush1.bf16.msra.mxu0 %v5991
        %6011 = vmatprep.subr.bf16.mxu0 0
        %6012 = vmatpush1.bf16.msra.mxu0 %v5990
        %6013 = vmatprep.subr.bf16.mxu0 0
        %6014 = vmatpush1.bf16.msra.mxu0 %v5989
        %6015 = vmatprep.subr.bf16.mxu0 0
        %6016 = vmatpush1.bf16.msra.mxu0 %v5988
        %6017 = vmatprep.subr.bf16.mxu0 0
        %6018 = vmatpush1.bf16.msra.mxu0 %v5987
        %6019 = vmatprep.subr.bf16.mxu0 0
        %6020 = vmatpush2.bf16.msra.mxu0 0
        %6021 = vmatprep.subr.bf16.mxu0 0
        %6022 = vmatpush2.bf16.msra.mxu0 0
        %6023 = vmatprep.subr.bf16.mxu0 0
        %6024 = vmatpush2.bf16.msra.mxu0 0
        %6025 = vmatprep.subr.bf16.mxu0 0
        %6026 = vmatpush2.bf16.msra.mxu0 0
        %6027 = vmatprep.subr.bf16.mxu0 0
        %6028 = vmatpush2.bf16.msra.mxu0 0
        %6029 = vmatprep.subr.bf16.mxu0 0
        %6030 = vmatpush2.bf16.msra.mxu0 0
        %6031 = vmatprep.subr.bf16.mxu0 0
        %6032 = vmatpush2.bf16.msra.mxu0 0
        %6033 = vmatprep.subr.bf16.mxu0 0
        %6034 = vmatpush2.bf16.msra.mxu0 0
        %6035 = vmatprep.mubr.bf16.mxu0 0
        %6036 = vmatmul.mubr.bf16.gmra.mxu0 %v5934
        %v6037 = vpop.f32.mrf.mxu0
        %v6038 = vadd.f32 0.0, %v6037
        %v6039 = vpop.f32.mrf.mxu0
        %v6040 = vpop.f32.mrf.mxu0
        %v6041 = vadd.f32 0.0, %v6040
        %v6042 = vpop.f32.mrf.mxu0
        %6043 = vmatprep.mubr.bf16.mxu0 0
        %6044 = vmatmul.mubr.bf16.gmra.mxu0 %v5935
        %v6045 = vpop.f32.mrf.mxu0
        %v6046 = vadd.f32 0.0, %v6045
        %v6047 = vpop.f32.mrf.mxu0
        %v6048 = vpop.f32.mrf.mxu0
        %v6049 = vadd.f32 0.0, %v6048
        %v6050 = vpop.f32.mrf.mxu0
        %6051 = vmatprep.mubr.bf16.mxu0 0
        %6052 = vmatmul.mubr.bf16.gmra.mxu0 %v5936
        %v6053 = vpop.f32.mrf.mxu0
        %v6054 = vadd.f32 0.0, %v6053
        %v6055 = vpop.f32.mrf.mxu0
        %v6056 = vpop.f32.mrf.mxu0
        %v6057 = vadd.f32 0.0, %v6056
        %v6058 = vpop.f32.mrf.mxu0
        %6059 = vmatprep.mubr.bf16.mxu0 0
        %6060 = vmatmul.mubr.bf16.gmra.mxu0 %v5937
        %v6061 = vpop.f32.mrf.mxu0
        %v6062 = vadd.f32 0.0, %v6061
        %v6063 = vpop.f32.mrf.mxu0
        %v6064 = vpop.f32.mrf.mxu0
        %v6065 = vadd.f32 0.0, %v6064
        %v6066 = vpop.f32.mrf.mxu0
        %6067 = vdwg.mxu0
        %v6068 = vadd.f32 %v5917, %v6038
        %v6069 = vadd.f32 %v5918, %v6041
        %v6070 = vadd.f32 %v5919, %v6046
        %v6071 = vadd.f32 %v5920, %v6049
        %v6072 = vadd.f32 %v5921, %v6054
        %v6073 = vadd.f32 %v5922, %v6057
        %v6074 = vadd.f32 %v5923, %v6062
        %v6075 = vadd.f32 %v5924, %v6065
        %v6076 = vld [vmem:[%s5925 + $0x1] sm:$0xff]
        %v6077 = vld [vmem:[%s5925 + $0x11] sm:$0xff]
        %v6078 = vld [vmem:[%s5925 + $0x21] sm:$0xff]
        %v6079 = vld [vmem:[%s5925 + $0x31] sm:$0xff]
        %v6080 = vld [vmem:[%s5925 + $0x41] sm:$0xff]
        %v6081 = vld [vmem:[%s5925 + $0x51] sm:$0xff]
        %v6082 = vld [vmem:[%s5925 + $0x61] sm:$0xff]
        %v6083 = vld [vmem:[%s5925 + $0x71] sm:$0xff]
        %v6084 = vpack.c.bf16 %v6077, %v6076
        %v6085 = vpack.c.bf16 %v6079, %v6078
        %v6086 = vpack.c.bf16 %v6081, %v6080
        %v6087 = vpack.c.bf16 %v6083, %v6082
        %s6088 = scalar_lea.vmem %s3, 448
        %v6089 = vld [vmem:[%s6088] sm:$0xf]
        %v6090 = vld [vmem:[%s6088 + $0x4] sm:$0xf]
        %v6091 = vld [vmem:[%s6088 + $0x8] sm:$0xf]
        %v6092 = vld [vmem:[%s6088 + $0xc] sm:$0xf]
        %v6093 = vld [vmem:[%s6088 + $0x10] sm:$0xf]
        %v6094 = vld [vmem:[%s6088 + $0x14] sm:$0xf]
        %v6095 = vld [vmem:[%s6088 + $0x18] sm:$0xf]
        %v6096 = vld [vmem:[%s6088 + $0x1c] sm:$0xf]
        %v6097 = vld [vmem:[%s6088 + $0x20] sm:$0xf]
        %v6098 = vld [vmem:[%s6088 + $0x24] sm:$0xf]
        %v6099 = vld [vmem:[%s6088 + $0x28] sm:$0xf]
        %v6100 = vld [vmem:[%s6088 + $0x2c] sm:$0xf]
        %v6101 = vld [vmem:[%s6088 + $0x30] sm:$0xf]
        %v6102 = vld [vmem:[%s6088 + $0x34] sm:$0xf]
        %v6103 = vld [vmem:[%s6088 + $0x38] sm:$0xf]
        %v6104 = vld [vmem:[%s6088 + $0x3c] sm:$0xf]
        %v6121 = vunpack.c.l.b16 %v6089
        %v6122 = vunpack.c.l.b16 %v6090
        %v6123 = vunpack.c.l.b16 %v6091
        %v6124 = vunpack.c.l.b16 %v6092
        %v6125 = vunpack.c.l.b16 %v6093
        %v6126 = vunpack.c.l.b16 %v6094
        %v6127 = vunpack.c.l.b16 %v6095
        %v6128 = vunpack.c.l.b16 %v6096
        %v6129 = vunpack.c.l.b16 %v6097
        %v6130 = vunpack.c.l.b16 %v6098
        %v6131 = vunpack.c.l.b16 %v6099
        %v6132 = vunpack.c.l.b16 %v6100
        %v6133 = vunpack.c.l.b16 %v6101
        %v6134 = vunpack.c.l.b16 %v6102
        %v6135 = vunpack.c.l.b16 %v6103
        %v6136 = vunpack.c.l.b16 %v6104
        %v6137 = vpack.c.b16 %v6122, %v6121
        %v6138 = vpack.c.b16 %v6124, %v6123
        %v6139 = vpack.c.b16 %v6126, %v6125
        %v6140 = vpack.c.b16 %v6128, %v6127
        %v6141 = vpack.c.b16 %v6130, %v6129
        %v6142 = vpack.c.b16 %v6132, %v6131
        %v6143 = vpack.c.b16 %v6134, %v6133
        %v6144 = vpack.c.b16 %v6136, %v6135
        %6153 = vmatprep.subr.bf16.mxu0 0
        %6154 = vmatpush1.bf16.msra.mxu0 %v6144
        %6155 = vmatprep.subr.bf16.mxu0 0
        %6156 = vmatpush1.bf16.msra.mxu0 %v6143
        %6157 = vmatprep.subr.bf16.mxu0 0
        %6158 = vmatpush1.bf16.msra.mxu0 %v6142
        %6159 = vmatprep.subr.bf16.mxu0 0
        %6160 = vmatpush1.bf16.msra.mxu0 %v6141
        %6161 = vmatprep.subr.bf16.mxu0 0
        %6162 = vmatpush1.bf16.msra.mxu0 %v6140
        %6163 = vmatprep.subr.bf16.mxu0 0
        %6164 = vmatpush1.bf16.msra.mxu0 %v6139
        %6165 = vmatprep.subr.bf16.mxu0 0
        %6166 = vmatpush1.bf16.msra.mxu0 %v6138
        %6167 = vmatprep.subr.bf16.mxu0 0
        %6168 = vmatpush1.bf16.msra.mxu0 %v6137
        %6169 = vmatprep.subr.bf16.mxu0 0
        %6170 = vmatpush2.bf16.msra.mxu0 0
        %6171 = vmatprep.subr.bf16.mxu0 0
        %6172 = vmatpush2.bf16.msra.mxu0 0
        %6173 = vmatprep.subr.bf16.mxu0 0
        %6174 = vmatpush2.bf16.msra.mxu0 0
        %6175 = vmatprep.subr.bf16.mxu0 0
        %6176 = vmatpush2.bf16.msra.mxu0 0
        %6177 = vmatprep.subr.bf16.mxu0 0
        %6178 = vmatpush2.bf16.msra.mxu0 0
        %6179 = vmatprep.subr.bf16.mxu0 0
        %6180 = vmatpush2.bf16.msra.mxu0 0
        %6181 = vmatprep.subr.bf16.mxu0 0
        %6182 = vmatpush2.bf16.msra.mxu0 0
        %6183 = vmatprep.subr.bf16.mxu0 0
        %6184 = vmatpush2.bf16.msra.mxu0 0
        %6185 = vmatprep.mubr.bf16.mxu0 0
        %6186 = vmatmul.mubr.bf16.gmra.mxu0 %v6084
        %v6187 = vpop.f32.mrf.mxu0
        %v6188 = vadd.f32 0.0, %v6187
        %v6189 = vpop.f32.mrf.mxu0
        %v6190 = vpop.f32.mrf.mxu0
        %v6191 = vadd.f32 0.0, %v6190
        %v6192 = vpop.f32.mrf.mxu0
        %6193 = vmatprep.mubr.bf16.mxu0 0
        %6194 = vmatmul.mubr.bf16.gmra.mxu0 %v6085
        %v6195 = vpop.f32.mrf.mxu0
        %v6196 = vadd.f32 0.0, %v6195
        %v6197 = vpop.f32.mrf.mxu0
        %v6198 = vpop.f32.mrf.mxu0
        %v6199 = vadd.f32 0.0, %v6198
        %v6200 = vpop.f32.mrf.mxu0
        %6201 = vmatprep.mubr.bf16.mxu0 0
        %6202 = vmatmul.mubr.bf16.gmra.mxu0 %v6086
        %v6203 = vpop.f32.mrf.mxu0
        %v6204 = vadd.f32 0.0, %v6203
        %v6205 = vpop.f32.mrf.mxu0
        %v6206 = vpop.f32.mrf.mxu0
        %v6207 = vadd.f32 0.0, %v6206
        %v6208 = vpop.f32.mrf.mxu0
        %6209 = vmatprep.mubr.bf16.mxu0 0
        %6210 = vmatmul.mubr.bf16.gmra.mxu0 %v6087
        %v6211 = vpop.f32.mrf.mxu0
        %v6212 = vadd.f32 0.0, %v6211
        %v6213 = vpop.f32.mrf.mxu0
        %v6214 = vpop.f32.mrf.mxu0
        %v6215 = vadd.f32 0.0, %v6214
        %v6216 = vpop.f32.mrf.mxu0
        %6217 = vdwg.mxu0
        %v6218 = vadd.f32 %v6068, %v6188
        %v6219 = vadd.f32 %v6069, %v6191
        %v6220 = vadd.f32 %v6070, %v6196
        %v6221 = vadd.f32 %v6071, %v6199
        %v6222 = vadd.f32 %v6072, %v6204
        %v6223 = vadd.f32 %v6073, %v6207
        %v6224 = vadd.f32 %v6074, %v6212
        %v6225 = vadd.f32 %v6075, %v6215
        %v6226 = vld [vmem:[%s5925 + $0x2] sm:$0xff]
        %v6227 = vld [vmem:[%s5925 + $0x12] sm:$0xff]
        %v6228 = vld [vmem:[%s5925 + $0x22] sm:$0xff]
        %v6229 = vld [vmem:[%s5925 + $0x32] sm:$0xff]
        %v6230 = vld [vmem:[%s5925 + $0x42] sm:$0xff]
        %v6231 = vld [vmem:[%s5925 + $0x52] sm:$0xff]
        %v6232 = vld [vmem:[%s5925 + $0x62] sm:$0xff]
        %v6233 = vld [vmem:[%s5925 + $0x72] sm:$0xff]
        %v6234 = vpack.c.bf16 %v6227, %v6226
        %v6235 = vpack.c.bf16 %v6229, %v6228
        %v6236 = vpack.c.bf16 %v6231, %v6230
        %v6237 = vpack.c.bf16 %v6233, %v6232
        %s6238 = scalar_lea.vmem %s3, 512
        %v6239 = vld [vmem:[%s6238] sm:$0xf]
        %v6240 = vld [vmem:[%s6238 + $0x4] sm:$0xf]
        %v6241 = vld [vmem:[%s6238 + $0x8] sm:$0xf]
        %v6242 = vld [vmem:[%s6238 + $0xc] sm:$0xf]
        %v6243 = vld [vmem:[%s6238 + $0x10] sm:$0xf]
        %v6244 = vld [vmem:[%s6238 + $0x14] sm:$0xf]
        %v6245 = vld [vmem:[%s6238 + $0x18] sm:$0xf]
        %v6246 = vld [vmem:[%s6238 + $0x1c] sm:$0xf]
        %v6247 = vld [vmem:[%s6238 + $0x20] sm:$0xf]
        %v6248 = vld [vmem:[%s6238 + $0x24] sm:$0xf]
        %v6249 = vld [vmem:[%s6238 + $0x28] sm:$0xf]
        %v6250 = vld [vmem:[%s6238 + $0x2c] sm:$0xf]
        %v6251 = vld [vmem:[%s6238 + $0x30] sm:$0xf]
        %v6252 = vld [vmem:[%s6238 + $0x34] sm:$0xf]
        %v6253 = vld [vmem:[%s6238 + $0x38] sm:$0xf]
        %v6254 = vld [vmem:[%s6238 + $0x3c] sm:$0xf]
        %v6271 = vunpack.c.l.b16 %v6239
        %v6272 = vunpack.c.l.b16 %v6240
        %v6273 = vunpack.c.l.b16 %v6241
        %v6274 = vunpack.c.l.b16 %v6242
        %v6275 = vunpack.c.l.b16 %v6243
        %v6276 = vunpack.c.l.b16 %v6244
        %v6277 = vunpack.c.l.b16 %v6245
        %v6278 = vunpack.c.l.b16 %v6246
        %v6279 = vunpack.c.l.b16 %v6247
        %v6280 = vunpack.c.l.b16 %v6248
        %v6281 = vunpack.c.l.b16 %v6249
        %v6282 = vunpack.c.l.b16 %v6250
        %v6283 = vunpack.c.l.b16 %v6251
        %v6284 = vunpack.c.l.b16 %v6252
        %v6285 = vunpack.c.l.b16 %v6253
        %v6286 = vunpack.c.l.b16 %v6254
        %v6287 = vpack.c.b16 %v6272, %v6271
        %v6288 = vpack.c.b16 %v6274, %v6273
        %v6289 = vpack.c.b16 %v6276, %v6275
        %v6290 = vpack.c.b16 %v6278, %v6277
        %v6291 = vpack.c.b16 %v6280, %v6279
        %v6292 = vpack.c.b16 %v6282, %v6281
        %v6293 = vpack.c.b16 %v6284, %v6283
        %v6294 = vpack.c.b16 %v6286, %v6285
        %6303 = vmatprep.subr.bf16.mxu0 0
        %6304 = vmatpush1.bf16.msra.mxu0 %v6294
        %6305 = vmatprep.subr.bf16.mxu0 0
        %6306 = vmatpush1.bf16.msra.mxu0 %v6293
        %6307 = vmatprep.subr.bf16.mxu0 0
        %6308 = vmatpush1.bf16.msra.mxu0 %v6292
        %6309 = vmatprep.subr.bf16.mxu0 0
        %6310 = vmatpush1.bf16.msra.mxu0 %v6291
        %6311 = vmatprep.subr.bf16.mxu0 0
        %6312 = vmatpush1.bf16.msra.mxu0 %v6290
        %6313 = vmatprep.subr.bf16.mxu0 0
        %6314 = vmatpush1.bf16.msra.mxu0 %v6289
        %6315 = vmatprep.subr.bf16.mxu0 0
        %6316 = vmatpush1.bf16.msra.mxu0 %v6288
        %6317 = vmatprep.subr.bf16.mxu0 0
        %6318 = vmatpush1.bf16.msra.mxu0 %v6287
        %6319 = vmatprep.subr.bf16.mxu0 0
        %6320 = vmatpush2.bf16.msra.mxu0 0
        %6321 = vmatprep.subr.bf16.mxu0 0
        %6322 = vmatpush2.bf16.msra.mxu0 0
        %6323 = vmatprep.subr.bf16.mxu0 0
        %6324 = vmatpush2.bf16.msra.mxu0 0
        %6325 = vmatprep.subr.bf16.mxu0 0
        %6326 = vmatpush2.bf16.msra.mxu0 0
        %6327 = vmatprep.subr.bf16.mxu0 0
        %6328 = vmatpush2.bf16.msra.mxu0 0
        %6329 = vmatprep.subr.bf16.mxu0 0
        %6330 = vmatpush2.bf16.msra.mxu0 0
        %6331 = vmatprep.subr.bf16.mxu0 0
        %6332 = vmatpush2.bf16.msra.mxu0 0
        %6333 = vmatprep.subr.bf16.mxu0 0
        %6334 = vmatpush2.bf16.msra.mxu0 0
        %6335 = vmatprep.mubr.bf16.mxu0 0
        %6336 = vmatmul.mubr.bf16.gmra.mxu0 %v6234
        %v6337 = vpop.f32.mrf.mxu0
        %v6338 = vadd.f32 0.0, %v6337
        %v6339 = vpop.f32.mrf.mxu0
        %v6340 = vpop.f32.mrf.mxu0
        %v6341 = vadd.f32 0.0, %v6340
        %v6342 = vpop.f32.mrf.mxu0
        %6343 = vmatprep.mubr.bf16.mxu0 0
        %6344 = vmatmul.mubr.bf16.gmra.mxu0 %v6235
        %v6345 = vpop.f32.mrf.mxu0
        %v6346 = vadd.f32 0.0, %v6345
        %v6347 = vpop.f32.mrf.mxu0
        %v6348 = vpop.f32.mrf.mxu0
        %v6349 = vadd.f32 0.0, %v6348
        %v6350 = vpop.f32.mrf.mxu0
        %6351 = vmatprep.mubr.bf16.mxu0 0
        %6352 = vmatmul.mubr.bf16.gmra.mxu0 %v6236
        %v6353 = vpop.f32.mrf.mxu0
        %v6354 = vadd.f32 0.0, %v6353
        %v6355 = vpop.f32.mrf.mxu0
        %v6356 = vpop.f32.mrf.mxu0
        %v6357 = vadd.f32 0.0, %v6356
        %v6358 = vpop.f32.mrf.mxu0
        %6359 = vmatprep.mubr.bf16.mxu0 0
        %6360 = vmatmul.mubr.bf16.gmra.mxu0 %v6237
        %v6361 = vpop.f32.mrf.mxu0
        %v6362 = vadd.f32 0.0, %v6361
        %v6363 = vpop.f32.mrf.mxu0
        %v6364 = vpop.f32.mrf.mxu0
        %v6365 = vadd.f32 0.0, %v6364
        %v6366 = vpop.f32.mrf.mxu0
        %6367 = vdwg.mxu0
        %v6368 = vadd.f32 %v6218, %v6338
        %v6369 = vadd.f32 %v6219, %v6341
        %v6370 = vadd.f32 %v6220, %v6346
        %v6371 = vadd.f32 %v6221, %v6349
        %v6372 = vadd.f32 %v6222, %v6354
        %v6373 = vadd.f32 %v6223, %v6357
        %v6374 = vadd.f32 %v6224, %v6362
        %v6375 = vadd.f32 %v6225, %v6365
        %v6376 = vld [vmem:[%s7] sm:$0x1]
        %v6378 = vlaneseq
        %v6379 = vshrl.u32 %v6378, 7
        %v6380 = vsub.s32 0, %v6379
        %v6381 = vrot.slane %v6376, %v6380
        %v6383 = vadd.f32 %v6368, %v6381
        %v6384 = vadd.f32 %v6369, %v6381
        %v6385 = vadd.f32 %v6370, %v6381
        %v6386 = vadd.f32 %v6371, %v6381
        %v6387 = vadd.f32 %v6372, %v6381
        %v6388 = vadd.f32 %v6373, %v6381
        %v6389 = vadd.f32 %v6374, %v6381
        %v6390 = vadd.f32 %v6375, %v6381
        %v6391 = vmax.f32 %v6383, 0.0
        %v6392 = vmax.f32 %v6384, 0.0
        %v6393 = vmax.f32 %v6385, 0.0
        %v6394 = vmax.f32 %v6386, 0.0
        %v6395 = vmax.f32 %v6387, 0.0
        %v6396 = vmax.f32 %v6388, 0.0
        %v6397 = vmax.f32 %v6389, 0.0
        %v6398 = vmax.f32 %v6390, 0.0
        %v6399 = vlaneseq
        %v6400 = vand.u32 %v6399, 127
        %v6401 = vld [vmem:[%s8] sm:$0x1]
        %v6402 = vld [vmem:[%s4] sm:$0xf]
        %v6403 = vld [vmem:[%s4 + $0x4] sm:$0xf]
        %v6404 = vld [vmem:[%s4 + $0x8] sm:$0xf]
        %v6405 = vld [vmem:[%s4 + $0xc] sm:$0xf]
        %v6406 = vld [vmem:[%s4 + $0x10] sm:$0xf]
        %v6407 = vld [vmem:[%s4 + $0x14] sm:$0xf]
        %v6408 = vld [vmem:[%s4 + $0x18] sm:$0xf]
        %v6409 = vld [vmem:[%s4 + $0x1c] sm:$0xf]
        %v6410 = vunpack.c.l.bf16 %v6402
        %v6411 = vunpack.c.l.bf16 %v6403
        %v6412 = vunpack.c.l.bf16 %v6404
        %v6413 = vunpack.c.l.bf16 %v6405
        %v6414 = vunpack.c.l.bf16 %v6406
        %v6415 = vunpack.c.l.bf16 %v6407
        %v6416 = vunpack.c.l.bf16 %v6408
        %v6417 = vunpack.c.l.bf16 %v6409
        %v6418 = vmul.f32 %v6391, %v6410
        %v6419 = vmul.f32 %v6392, %v6411
        %v6420 = vmul.f32 %v6393, %v6412
        %v6421 = vmul.f32 %v6394, %v6413
        %v6422 = vmul.f32 %v6395, %v6414
        %v6423 = vmul.f32 %v6396, %v6415
        %v6424 = vmul.f32 %v6397, %v6416
        %v6425 = vmul.f32 %v6398, %v6417
        %v6426 = vadd.f32 %v6418, %v6419
        %v6427 = vadd.f32 %v6426, %v6420
        %v6428 = vadd.f32 %v6427, %v6421
        %v6429 = vadd.f32 %v6428, %v6422
        %v6430 = vadd.f32 %v6429, %v6423
        %v6431 = vadd.f32 %v6430, %v6424
        %v6432 = vadd.f32 %v6431, %v6425
        %6433 = vadd.xlane.f32.xlu0 %v6432
        %v6434 = vpop.xlane.xlu0 %6433
        %v6435 = vrot.slane %v6434, 4
        %v6436 = vadd.f32 %v6434, %v6435
        %v6437 = vrot.slane %v6436, 2
        %v6438 = vadd.f32 %v6436, %v6437
        %v6439 = vrot.slane %v6438, 1
        %v6440 = vadd.f32 %v6438, %v6439
        %s6441 = vtos %v6440
        %vm6442 = vcmp.eq.s32.totalorder %v6400, 0
        %v6443 = vstv %s6441
        %v6444 = vsel %vm6442, %v6443, 0.0
        %v6445 = vadd.f32 %v6401, %v6444
        %s6446 = scalar_lea.vmem %s4, 32
        %v6447 = vld [vmem:[%s6446] sm:$0xf]
        %v6448 = vld [vmem:[%s6446 + $0x4] sm:$0xf]
        %v6449 = vld [vmem:[%s6446 + $0x8] sm:$0xf]
        %v6450 = vld [vmem:[%s6446 + $0xc] sm:$0xf]
        %v6451 = vld [vmem:[%s6446 + $0x10] sm:$0xf]
        %v6452 = vld [vmem:[%s6446 + $0x14] sm:$0xf]
        %v6453 = vld [vmem:[%s6446 + $0x18] sm:$0xf]
        %v6454 = vld [vmem:[%s6446 + $0x1c] sm:$0xf]
        %v6455 = vunpack.c.l.bf16 %v6447
        %v6456 = vunpack.c.l.bf16 %v6448
        %v6457 = vunpack.c.l.bf16 %v6449
        %v6458 = vunpack.c.l.bf16 %v6450
        %v6459 = vunpack.c.l.bf16 %v6451
        %v6460 = vunpack.c.l.bf16 %v6452
        %v6461 = vunpack.c.l.bf16 %v6453
        %v6462 = vunpack.c.l.bf16 %v6454
        %v6463 = vmul.f32 %v6391, %v6455
        %v6464 = vmul.f32 %v6392, %v6456
        %v6465 = vmul.f32 %v6393, %v6457
        %v6466 = vmul.f32 %v6394, %v6458
        %v6467 = vmul.f32 %v6395, %v6459
        %v6468 = vmul.f32 %v6396, %v6460
        %v6469 = vmul.f32 %v6397, %v6461
        %v6470 = vmul.f32 %v6398, %v6462
        %v6471 = vadd.f32 %v6463, %v6464
        %v6472 = vadd.f32 %v6471, %v6465
        %v6473 = vadd.f32 %v6472, %v6466
        %v6474 = vadd.f32 %v6473, %v6467
        %v6475 = vadd.f32 %v6474, %v6468
        %v6476 = vadd.f32 %v6475, %v6469
        %v6477 = vadd.f32 %v6476, %v6470
        %6478 = vadd.xlane.f32.xlu0 %v6477
        %v6479 = vpop.xlane.xlu0 %6478
        %v6480 = vrot.slane %v6479, 4
        %v6481 = vadd.f32 %v6479, %v6480
        %v6482 = vrot.slane %v6481, 2
        %v6483 = vadd.f32 %v6481, %v6482
        %v6484 = vrot.slane %v6483, 1
        %v6485 = vadd.f32 %v6483, %v6484
        %s6486 = vtos %v6485
        %vm6487 = vcmp.eq.s32.totalorder %v6400, 1
        %v6488 = vstv %s6486
        %v6489 = vsel %vm6487, %v6488, 0.0
        %v6490 = vadd.f32 %v6445, %v6489
        %s6491 = scalar_lea.vmem %s4, 64
        %v6492 = vld [vmem:[%s6491] sm:$0xf]
        %v6493 = vld [vmem:[%s6491 + $0x4] sm:$0xf]
        %v6494 = vld [vmem:[%s6491 + $0x8] sm:$0xf]
        %v6495 = vld [vmem:[%s6491 + $0xc] sm:$0xf]
        %v6496 = vld [vmem:[%s6491 + $0x10] sm:$0xf]
        %v6497 = vld [vmem:[%s6491 + $0x14] sm:$0xf]
        %v6498 = vld [vmem:[%s6491 + $0x18] sm:$0xf]
        %v6499 = vld [vmem:[%s6491 + $0x1c] sm:$0xf]
        %v6500 = vunpack.c.l.bf16 %v6492
        %v6501 = vunpack.c.l.bf16 %v6493
        %v6502 = vunpack.c.l.bf16 %v6494
        %v6503 = vunpack.c.l.bf16 %v6495
        %v6504 = vunpack.c.l.bf16 %v6496
        %v6505 = vunpack.c.l.bf16 %v6497
        %v6506 = vunpack.c.l.bf16 %v6498
        %v6507 = vunpack.c.l.bf16 %v6499
        %v6508 = vmul.f32 %v6391, %v6500
        %v6509 = vmul.f32 %v6392, %v6501
        %v6510 = vmul.f32 %v6393, %v6502
        %v6511 = vmul.f32 %v6394, %v6503
        %v6512 = vmul.f32 %v6395, %v6504
        %v6513 = vmul.f32 %v6396, %v6505
        %v6514 = vmul.f32 %v6397, %v6506
        %v6515 = vmul.f32 %v6398, %v6507
        %v6516 = vadd.f32 %v6508, %v6509
        %v6517 = vadd.f32 %v6516, %v6510
        %v6518 = vadd.f32 %v6517, %v6511
        %v6519 = vadd.f32 %v6518, %v6512
        %v6520 = vadd.f32 %v6519, %v6513
        %v6521 = vadd.f32 %v6520, %v6514
        %v6522 = vadd.f32 %v6521, %v6515
        %6523 = vadd.xlane.f32.xlu0 %v6522
        %v6524 = vpop.xlane.xlu0 %6523
        %v6525 = vrot.slane %v6524, 4
        %v6526 = vadd.f32 %v6524, %v6525
        %v6527 = vrot.slane %v6526, 2
        %v6528 = vadd.f32 %v6526, %v6527
        %v6529 = vrot.slane %v6528, 1
        %v6530 = vadd.f32 %v6528, %v6529
        %s6531 = vtos %v6530
        %vm6532 = vcmp.eq.s32.totalorder %v6400, 2
        %v6533 = vstv %s6531
        %v6534 = vsel %vm6532, %v6533, 0.0
        %v6535 = vadd.f32 %v6490, %v6534
        %s6536 = scalar_lea.vmem %s4, 96
        %v6537 = vld [vmem:[%s6536] sm:$0xf]
        %v6538 = vld [vmem:[%s6536 + $0x4] sm:$0xf]
        %v6539 = vld [vmem:[%s6536 + $0x8] sm:$0xf]
        %v6540 = vld [vmem:[%s6536 + $0xc] sm:$0xf]
        %v6541 = vld [vmem:[%s6536 + $0x10] sm:$0xf]
        %v6542 = vld [vmem:[%s6536 + $0x14] sm:$0xf]
        %v6543 = vld [vmem:[%s6536 + $0x18] sm:$0xf]
        %v6544 = vld [vmem:[%s6536 + $0x1c] sm:$0xf]
        %v6545 = vunpack.c.l.bf16 %v6537
        %v6546 = vunpack.c.l.bf16 %v6538
        %v6547 = vunpack.c.l.bf16 %v6539
        %v6548 = vunpack.c.l.bf16 %v6540
        %v6549 = vunpack.c.l.bf16 %v6541
        %v6550 = vunpack.c.l.bf16 %v6542
        %v6551 = vunpack.c.l.bf16 %v6543
        %v6552 = vunpack.c.l.bf16 %v6544
        %v6553 = vmul.f32 %v6391, %v6545
        %v6554 = vmul.f32 %v6392, %v6546
        %v6555 = vmul.f32 %v6393, %v6547
        %v6556 = vmul.f32 %v6394, %v6548
        %v6557 = vmul.f32 %v6395, %v6549
        %v6558 = vmul.f32 %v6396, %v6550
        %v6559 = vmul.f32 %v6397, %v6551
        %v6560 = vmul.f32 %v6398, %v6552
        %v6561 = vadd.f32 %v6553, %v6554
        %v6562 = vadd.f32 %v6561, %v6555
        %v6563 = vadd.f32 %v6562, %v6556
        %v6564 = vadd.f32 %v6563, %v6557
        %v6565 = vadd.f32 %v6564, %v6558
        %v6566 = vadd.f32 %v6565, %v6559
        %v6567 = vadd.f32 %v6566, %v6560
        %6568 = vadd.xlane.f32.xlu0 %v6567
        %v6569 = vpop.xlane.xlu0 %6568
        %v6570 = vrot.slane %v6569, 4
        %v6571 = vadd.f32 %v6569, %v6570
        %v6572 = vrot.slane %v6571, 2
        %v6573 = vadd.f32 %v6571, %v6572
        %v6574 = vrot.slane %v6573, 1
        %v6575 = vadd.f32 %v6573, %v6574
        %s6576 = vtos %v6575
        %vm6577 = vcmp.eq.s32.totalorder %v6400, 3
        %v6578 = vstv %s6576
        %v6579 = vsel %vm6577, %v6578, 0.0
        %v6580 = vadd.f32 %v6535, %v6579
        %s6581 = scalar_lea.vmem %s4, 128
        %v6582 = vld [vmem:[%s6581] sm:$0xf]
        %v6583 = vld [vmem:[%s6581 + $0x4] sm:$0xf]
        %v6584 = vld [vmem:[%s6581 + $0x8] sm:$0xf]
        %v6585 = vld [vmem:[%s6581 + $0xc] sm:$0xf]
        %v6586 = vld [vmem:[%s6581 + $0x10] sm:$0xf]
        %v6587 = vld [vmem:[%s6581 + $0x14] sm:$0xf]
        %v6588 = vld [vmem:[%s6581 + $0x18] sm:$0xf]
        %v6589 = vld [vmem:[%s6581 + $0x1c] sm:$0xf]
        %v6590 = vunpack.c.l.bf16 %v6582
        %v6591 = vunpack.c.l.bf16 %v6583
        %v6592 = vunpack.c.l.bf16 %v6584
        %v6593 = vunpack.c.l.bf16 %v6585
        %v6594 = vunpack.c.l.bf16 %v6586
        %v6595 = vunpack.c.l.bf16 %v6587
        %v6596 = vunpack.c.l.bf16 %v6588
        %v6597 = vunpack.c.l.bf16 %v6589
        %v6598 = vmul.f32 %v6391, %v6590
        %v6599 = vmul.f32 %v6392, %v6591
        %v6600 = vmul.f32 %v6393, %v6592
        %v6601 = vmul.f32 %v6394, %v6593
        %v6602 = vmul.f32 %v6395, %v6594
        %v6603 = vmul.f32 %v6396, %v6595
        %v6604 = vmul.f32 %v6397, %v6596
        %v6605 = vmul.f32 %v6398, %v6597
        %v6606 = vadd.f32 %v6598, %v6599
        %v6607 = vadd.f32 %v6606, %v6600
        %v6608 = vadd.f32 %v6607, %v6601
        %v6609 = vadd.f32 %v6608, %v6602
        %v6610 = vadd.f32 %v6609, %v6603
        %v6611 = vadd.f32 %v6610, %v6604
        %v6612 = vadd.f32 %v6611, %v6605
        %6613 = vadd.xlane.f32.xlu0 %v6612
        %v6614 = vpop.xlane.xlu0 %6613
        %v6615 = vrot.slane %v6614, 4
        %v6616 = vadd.f32 %v6614, %v6615
        %v6617 = vrot.slane %v6616, 2
        %v6618 = vadd.f32 %v6616, %v6617
        %v6619 = vrot.slane %v6618, 1
        %v6620 = vadd.f32 %v6618, %v6619
        %s6621 = vtos %v6620
        %vm6622 = vcmp.eq.s32.totalorder %v6400, 4
        %v6623 = vstv %s6621
        %v6624 = vsel %vm6622, %v6623, 0.0
        %v6625 = vadd.f32 %v6580, %v6624
        %s6626 = scalar_lea.vmem %s4, 160
        %v6627 = vld [vmem:[%s6626] sm:$0xf]
        %v6628 = vld [vmem:[%s6626 + $0x4] sm:$0xf]
        %v6629 = vld [vmem:[%s6626 + $0x8] sm:$0xf]
        %v6630 = vld [vmem:[%s6626 + $0xc] sm:$0xf]
        %v6631 = vld [vmem:[%s6626 + $0x10] sm:$0xf]
        %v6632 = vld [vmem:[%s6626 + $0x14] sm:$0xf]
        %v6633 = vld [vmem:[%s6626 + $0x18] sm:$0xf]
        %v6634 = vld [vmem:[%s6626 + $0x1c] sm:$0xf]
        %v6635 = vunpack.c.l.bf16 %v6627
        %v6636 = vunpack.c.l.bf16 %v6628
        %v6637 = vunpack.c.l.bf16 %v6629
        %v6638 = vunpack.c.l.bf16 %v6630
        %v6639 = vunpack.c.l.bf16 %v6631
        %v6640 = vunpack.c.l.bf16 %v6632
        %v6641 = vunpack.c.l.bf16 %v6633
        %v6642 = vunpack.c.l.bf16 %v6634
        %v6643 = vmul.f32 %v6391, %v6635
        %v6644 = vmul.f32 %v6392, %v6636
        %v6645 = vmul.f32 %v6393, %v6637
        %v6646 = vmul.f32 %v6394, %v6638
        %v6647 = vmul.f32 %v6395, %v6639
        %v6648 = vmul.f32 %v6396, %v6640
        %v6649 = vmul.f32 %v6397, %v6641
        %v6650 = vmul.f32 %v6398, %v6642
        %v6651 = vadd.f32 %v6643, %v6644
        %v6652 = vadd.f32 %v6651, %v6645
        %v6653 = vadd.f32 %v6652, %v6646
        %v6654 = vadd.f32 %v6653, %v6647
        %v6655 = vadd.f32 %v6654, %v6648
        %v6656 = vadd.f32 %v6655, %v6649
        %v6657 = vadd.f32 %v6656, %v6650
        %6658 = vadd.xlane.f32.xlu0 %v6657
        %v6659 = vpop.xlane.xlu0 %6658
        %v6660 = vrot.slane %v6659, 4
        %v6661 = vadd.f32 %v6659, %v6660
        %v6662 = vrot.slane %v6661, 2
        %v6663 = vadd.f32 %v6661, %v6662
        %v6664 = vrot.slane %v6663, 1
        %v6665 = vadd.f32 %v6663, %v6664
        %s6666 = vtos %v6665
        %vm6667 = vcmp.eq.s32.totalorder %v6400, 5
        %v6668 = vstv %s6666
        %v6669 = vsel %vm6667, %v6668, 0.0
        %v6670 = vadd.f32 %v6625, %v6669
        %s6671 = scalar_lea.vmem %s4, 192
        %v6672 = vld [vmem:[%s6671] sm:$0xf]
        %v6673 = vld [vmem:[%s6671 + $0x4] sm:$0xf]
        %v6674 = vld [vmem:[%s6671 + $0x8] sm:$0xf]
        %v6675 = vld [vmem:[%s6671 + $0xc] sm:$0xf]
        %v6676 = vld [vmem:[%s6671 + $0x10] sm:$0xf]
        %v6677 = vld [vmem:[%s6671 + $0x14] sm:$0xf]
        %v6678 = vld [vmem:[%s6671 + $0x18] sm:$0xf]
        %v6679 = vld [vmem:[%s6671 + $0x1c] sm:$0xf]
        %v6680 = vunpack.c.l.bf16 %v6672
        %v6681 = vunpack.c.l.bf16 %v6673
        %v6682 = vunpack.c.l.bf16 %v6674
        %v6683 = vunpack.c.l.bf16 %v6675
        %v6684 = vunpack.c.l.bf16 %v6676
        %v6685 = vunpack.c.l.bf16 %v6677
        %v6686 = vunpack.c.l.bf16 %v6678
        %v6687 = vunpack.c.l.bf16 %v6679
        %v6688 = vmul.f32 %v6391, %v6680
        %v6689 = vmul.f32 %v6392, %v6681
        %v6690 = vmul.f32 %v6393, %v6682
        %v6691 = vmul.f32 %v6394, %v6683
        %v6692 = vmul.f32 %v6395, %v6684
        %v6693 = vmul.f32 %v6396, %v6685
        %v6694 = vmul.f32 %v6397, %v6686
        %v6695 = vmul.f32 %v6398, %v6687
        %v6696 = vadd.f32 %v6688, %v6689
        %v6697 = vadd.f32 %v6696, %v6690
        %v6698 = vadd.f32 %v6697, %v6691
        %v6699 = vadd.f32 %v6698, %v6692
        %v6700 = vadd.f32 %v6699, %v6693
        %v6701 = vadd.f32 %v6700, %v6694
        %v6702 = vadd.f32 %v6701, %v6695
        %6703 = vadd.xlane.f32.xlu0 %v6702
        %v6704 = vpop.xlane.xlu0 %6703
        %v6705 = vrot.slane %v6704, 4
        %v6706 = vadd.f32 %v6704, %v6705
        %v6707 = vrot.slane %v6706, 2
        %v6708 = vadd.f32 %v6706, %v6707
        %v6709 = vrot.slane %v6708, 1
        %v6710 = vadd.f32 %v6708, %v6709
        %s6711 = vtos %v6710
        %vm6712 = vcmp.eq.s32.totalorder %v6400, 6
        %v6713 = vstv %s6711
        %v6714 = vsel %vm6712, %v6713, 0.0
        %v6715 = vadd.f32 %v6670, %v6714
        %s6716 = scalar_lea.vmem %s4, 224
        %v6717 = vld [vmem:[%s6716] sm:$0xf]
        %v6718 = vld [vmem:[%s6716 + $0x4] sm:$0xf]
        %v6719 = vld [vmem:[%s6716 + $0x8] sm:$0xf]
        %v6720 = vld [vmem:[%s6716 + $0xc] sm:$0xf]
        %v6721 = vld [vmem:[%s6716 + $0x10] sm:$0xf]
        %v6722 = vld [vmem:[%s6716 + $0x14] sm:$0xf]
        %v6723 = vld [vmem:[%s6716 + $0x18] sm:$0xf]
        %v6724 = vld [vmem:[%s6716 + $0x1c] sm:$0xf]
        %v6725 = vunpack.c.l.bf16 %v6717
        %v6726 = vunpack.c.l.bf16 %v6718
        %v6727 = vunpack.c.l.bf16 %v6719
        %v6728 = vunpack.c.l.bf16 %v6720
        %v6729 = vunpack.c.l.bf16 %v6721
        %v6730 = vunpack.c.l.bf16 %v6722
        %v6731 = vunpack.c.l.bf16 %v6723
        %v6732 = vunpack.c.l.bf16 %v6724
        %v6733 = vmul.f32 %v6391, %v6725
        %v6734 = vmul.f32 %v6392, %v6726
        %v6735 = vmul.f32 %v6393, %v6727
        %v6736 = vmul.f32 %v6394, %v6728
        %v6737 = vmul.f32 %v6395, %v6729
        %v6738 = vmul.f32 %v6396, %v6730
        %v6739 = vmul.f32 %v6397, %v6731
        %v6740 = vmul.f32 %v6398, %v6732
        %v6741 = vadd.f32 %v6733, %v6734
        %v6742 = vadd.f32 %v6741, %v6735
        %v6743 = vadd.f32 %v6742, %v6736
        %v6744 = vadd.f32 %v6743, %v6737
        %v6745 = vadd.f32 %v6744, %v6738
        %v6746 = vadd.f32 %v6745, %v6739
        %v6747 = vadd.f32 %v6746, %v6740
        %6748 = vadd.xlane.f32.xlu0 %v6747
        %v6749 = vpop.xlane.xlu0 %6748
        %v6750 = vrot.slane %v6749, 4
        %v6751 = vadd.f32 %v6749, %v6750
        %v6752 = vrot.slane %v6751, 2
        %v6753 = vadd.f32 %v6751, %v6752
        %v6754 = vrot.slane %v6753, 1
        %v6755 = vadd.f32 %v6753, %v6754
        %s6756 = vtos %v6755
        %vm6757 = vcmp.eq.s32.totalorder %v6400, 7
        %v6758 = vstv %s6756
        %v6759 = vsel %vm6757, %v6758, 0.0
        %v6760 = vadd.f32 %v6715, %v6759
        %s6761 = scalar_lea.vmem %s4, 256
        %v6762 = vld [vmem:[%s6761] sm:$0xf]
        %v6763 = vld [vmem:[%s6761 + $0x4] sm:$0xf]
        %v6764 = vld [vmem:[%s6761 + $0x8] sm:$0xf]
        %v6765 = vld [vmem:[%s6761 + $0xc] sm:$0xf]
        %v6766 = vld [vmem:[%s6761 + $0x10] sm:$0xf]
        %v6767 = vld [vmem:[%s6761 + $0x14] sm:$0xf]
        %v6768 = vld [vmem:[%s6761 + $0x18] sm:$0xf]
        %v6769 = vld [vmem:[%s6761 + $0x1c] sm:$0xf]
        %v6770 = vunpack.c.l.bf16 %v6762
        %v6771 = vunpack.c.l.bf16 %v6763
        %v6772 = vunpack.c.l.bf16 %v6764
        %v6773 = vunpack.c.l.bf16 %v6765
        %v6774 = vunpack.c.l.bf16 %v6766
        %v6775 = vunpack.c.l.bf16 %v6767
        %v6776 = vunpack.c.l.bf16 %v6768
        %v6777 = vunpack.c.l.bf16 %v6769
        %v6778 = vmul.f32 %v6391, %v6770
        %v6779 = vmul.f32 %v6392, %v6771
        %v6780 = vmul.f32 %v6393, %v6772
        %v6781 = vmul.f32 %v6394, %v6773
        %v6782 = vmul.f32 %v6395, %v6774
        %v6783 = vmul.f32 %v6396, %v6775
        %v6784 = vmul.f32 %v6397, %v6776
        %v6785 = vmul.f32 %v6398, %v6777
        %v6786 = vadd.f32 %v6778, %v6779
        %v6787 = vadd.f32 %v6786, %v6780
        %v6788 = vadd.f32 %v6787, %v6781
        %v6789 = vadd.f32 %v6788, %v6782
        %v6790 = vadd.f32 %v6789, %v6783
        %v6791 = vadd.f32 %v6790, %v6784
        %v6792 = vadd.f32 %v6791, %v6785
        %6793 = vadd.xlane.f32.xlu0 %v6792
        %v6794 = vpop.xlane.xlu0 %6793
        %v6795 = vrot.slane %v6794, 4
        %v6796 = vadd.f32 %v6794, %v6795
        %v6797 = vrot.slane %v6796, 2
        %v6798 = vadd.f32 %v6796, %v6797
        %v6799 = vrot.slane %v6798, 1
        %v6800 = vadd.f32 %v6798, %v6799
        %s6801 = vtos %v6800
        %vm6802 = vcmp.eq.s32.totalorder %v6400, 8
        %v6803 = vstv %s6801
        %v6804 = vsel %vm6802, %v6803, 0.0
        %v6805 = vadd.f32 %v6760, %v6804
        %s6806 = scalar_lea.vmem %s4, 288
        %v6807 = vld [vmem:[%s6806] sm:$0xf]
        %v6808 = vld [vmem:[%s6806 + $0x4] sm:$0xf]
        %v6809 = vld [vmem:[%s6806 + $0x8] sm:$0xf]
        %v6810 = vld [vmem:[%s6806 + $0xc] sm:$0xf]
        %v6811 = vld [vmem:[%s6806 + $0x10] sm:$0xf]
        %v6812 = vld [vmem:[%s6806 + $0x14] sm:$0xf]
        %v6813 = vld [vmem:[%s6806 + $0x18] sm:$0xf]
        %v6814 = vld [vmem:[%s6806 + $0x1c] sm:$0xf]
        %v6815 = vunpack.c.l.bf16 %v6807
        %v6816 = vunpack.c.l.bf16 %v6808
        %v6817 = vunpack.c.l.bf16 %v6809
        %v6818 = vunpack.c.l.bf16 %v6810
        %v6819 = vunpack.c.l.bf16 %v6811
        %v6820 = vunpack.c.l.bf16 %v6812
        %v6821 = vunpack.c.l.bf16 %v6813
        %v6822 = vunpack.c.l.bf16 %v6814
        %v6823 = vmul.f32 %v6391, %v6815
        %v6824 = vmul.f32 %v6392, %v6816
        %v6825 = vmul.f32 %v6393, %v6817
        %v6826 = vmul.f32 %v6394, %v6818
        %v6827 = vmul.f32 %v6395, %v6819
        %v6828 = vmul.f32 %v6396, %v6820
        %v6829 = vmul.f32 %v6397, %v6821
        %v6830 = vmul.f32 %v6398, %v6822
        %v6831 = vadd.f32 %v6823, %v6824
        %v6832 = vadd.f32 %v6831, %v6825
        %v6833 = vadd.f32 %v6832, %v6826
        %v6834 = vadd.f32 %v6833, %v6827
        %v6835 = vadd.f32 %v6834, %v6828
        %v6836 = vadd.f32 %v6835, %v6829
        %v6837 = vadd.f32 %v6836, %v6830
        %6838 = vadd.xlane.f32.xlu0 %v6837
        %v6839 = vpop.xlane.xlu0 %6838
        %v6840 = vrot.slane %v6839, 4
        %v6841 = vadd.f32 %v6839, %v6840
        %v6842 = vrot.slane %v6841, 2
        %v6843 = vadd.f32 %v6841, %v6842
        %v6844 = vrot.slane %v6843, 1
        %v6845 = vadd.f32 %v6843, %v6844
        %s6846 = vtos %v6845
        %vm6847 = vcmp.eq.s32.totalorder %v6400, 9
        %v6848 = vstv %s6846
        %v6849 = vsel %vm6847, %v6848, 0.0
        %v6850 = vadd.f32 %v6805, %v6849
        %vm6851 = vcmask 73728
        %6852 = vst.msk [vmem:[%s324] sm:$0x1] %vm6851, %v6850
        %s6853 = sand.u32 %s225, 1
        %s6854 = scalar_lea.sflag [#allocation5], %s6853
        %s6855 = sand.u32 %s225, 1
        %s6856 = scalar_lea.vmem [#allocation4], %s6855
        // Predicated region
        $region57: #{mynet_forward.1} parent=55 // pred_check
          %p6857 = pneg %p235
        $region58: #{mynet_forward.1} parent=55 // pred_check_branch
          %6859 = sbr.rel (%p6857) target = $region60
        $region59: #{mynet_forward.1} parent=55 // pred_region
          %s6861 = ssub.s32 16, 16
          %6862 = vsyncadd %s6854, %s6861
          %s6863 = smul.addr %s23, 16
          %s6864 = scalar_lea.hbm %s9, %s6863
          %s6866 = sshll.u32 %s6856, 4
          %s6867 = int_to_ptr.vmem [resolvable:$true] %s6866
          %6869 = dma.vmem_to_hbm [thread:$0]  %s6867, 16, %s6864, %s6854
        $region60: #{mynet_forward.1} parent=55 // pred_fallthru
          _
      $region56: #{mynet_forward.1} parent=5 // pred_fallthru
        _
      %p6870 = scmp.le.s32.totalorder 2, %s18
      // Predicated region
      $region61: #{mynet_forward.1} parent=5 // pred_check
        %p6871 = pneg %p6870
      $region62: #{mynet_forward.1} parent=5 // pred_check_branch
        %6873 = sbr.rel (%p6871) target = $region64
      $region63: #{mynet_forward.1} parent=5 // pred_region
        %s6874 = ssub.s32 %s18, 2
        // Predicated region
        $region65: #{mynet_forward.1} parent=63 // pred_check
          %p6875 = pneg %p241
        $region66: #{mynet_forward.1} parent=63 // pred_check_branch
          %6877 = sbr.rel (%p6875) target = $region68
        $region67: #{mynet_forward.1} parent=63 // pred_region
          %s6878 = sand.u32 %s226, 1
          %s6879 = scalar_lea.sflag [#allocation5], %s6878
          %s6880 = sand.u32 %s226, 1
          %s6881 = scalar_lea.vmem [#allocation4], %s6880
          %6882 = dma.done %s6879, 16
        $region68: #{mynet_forward.1} parent=63 // pred_fallthru
          _
      $region64: #{mynet_forward.1} parent=5 // pred_fallthru
        _
    $region6: #{mynet_forward.1} parent=1 // loop_footer
      %s22 = sadd.s32 1, %s18
    $region7: #{mynet_forward.1} parent=1 // loop_footer_branch
      %17 = sbr.rel target = $region3
    $region8: #{mynet_forward.1} parent=1 // loop_exit
      _
    %6883 = vsyncpa [#allocation5], 1
    %s6884 = scalar_lea.sflag [#allocation5], 1
    %6885 = vsyncpa %s6884, 1

</llo_original>
